<compile_context>
chip_gen: v6e
topology: v6e:2x2x1
jax: 0.10.0
libtpu: 0.0.40
codegen_flags: <defaults>
</compile_context>

<pallas_src>
import functools

import jax
import jax.numpy as jnp
from jax.experimental import pallas as pl
from jax.experimental.pallas import tpu as pltpu


# ------------------------------ Fused kernel --------------------------------

def _make_resnet_block_kernel(N, H, W, C, dilation, eps, has_proj):
    """Builds the fused ResnetBlock kernel for static shapes / config."""
    NHW = N * H * W
    inv_count = 1.0 / float(NHW)

    def reflect_pad(xs, d):
        # xs: (N, H, W, C) f32. ReflectionPad2d(d) built from static slices:
        # H axis first (leading dim, free), then W axis (sublane dim).
        top = [xs[:, d - i:d - i + 1, :, :] for i in range(d)]
        bot = [xs[:, H - 2 - i:H - 1 - i, :, :] for i in range(d)]
        xs = jnp.concatenate(top + [xs] + bot, axis=1)
        left = [xs[:, :, d - i:d - i + 1, :] for i in range(d)]
        right = [xs[:, :, W - 2 - i:W - 1 - i, :] for i in range(d)]
        return jnp.concatenate(left + [xs] + right, axis=2)

    def conv3x3(z, w_ref, b_ref, d):
        # z: (N*H*W, C) f32; w_ref: (9*C, C) bf16; b_ref: (1, C) f32.
        # im2col: stack the 9 dilated taps along the contraction dim and do a
        # single deep-K matmul on the MXU (bf16 inputs, f32 accumulation).
        xp = reflect_pad(z.reshape(N, H, W, C), d)
        cols = []
        for ky in range(3):
            for kx in range(3):
                p = xp[:, ky * d:ky * d + H, kx * d:kx * d + W, :]
                cols.append(p.reshape(NHW, C))
        xcol = jnp.concatenate(cols, axis=1).astype(jnp.bfloat16)  # (NHW, 9C)
        y = jnp.dot(xcol, w_ref[...], preferred_element_type=jnp.float32)
        return y + b_ref[...]

    def batchnorm(y, g_ref, b_ref):
        # Training-mode BatchNorm2d (batch stats, biased variance), two-pass
        # for numerical stability (all in f32, data already VMEM-resident).
        mean = jnp.sum(y, axis=0, keepdims=True) * inv_count
        cen = y - mean
        var = jnp.sum(cen * cen, axis=0, keepdims=True) * inv_count
        return cen * (jax.lax.rsqrt(var + eps) * g_ref[...]) + b_ref[...]

    def kernel(*refs):
        if has_proj:
            (x_ref, pw_ref, w1_ref, b1_ref, g1_ref, be1_ref,
             w2_ref, b2_ref, g2_ref, be2_ref, out_ref) = refs
        else:
            (x_ref, w1_ref, b1_ref, g1_ref, be1_ref,
             w2_ref, b2_ref, g2_ref, be2_ref, out_ref) = refs
            pw_ref = None

        x = x_ref[...]                                          # (NHW, Cin)
        if has_proj:                                            # 1x1 projection
            x = jnp.dot(x.astype(jnp.bfloat16), pw_ref[...],
                        preferred_element_type=jnp.float32)     # (NHW, C)

        y1 = conv3x3(x, w1_ref, b1_ref, dilation)               # conv1
        z1 = jnp.maximum(batchnorm(y1, g1_ref, be1_ref), 0.0)   # BN1 + ReLU
        y2 = conv3x3(z1, w2_ref, b2_ref, 1)                     # conv2
        out_ref[...] = x + batchnorm(y2, g2_ref, be2_ref)       # BN2 + residual

    return kernel


# -------------------------------- Wrapper ------------------------------------

def resnet_block_forward(x_nchw, params, *, dilation):
    """ResnetBlock.forward. Input/output are NCHW float32 (PyTorch layout)."""
    N, Cin, H, W = x_nchw.shape
    pw = params.get("proj_w")
    has_proj = pw is not None
    C = pw.shape[1] if has_proj else Cin

    # Boundary layout change only (vanishes if the surrounding model is NHWC).
    x_flat = jnp.transpose(x_nchw.astype(jnp.float32), (0, 2, 3, 1))
    x_flat = x_flat.reshape(N * H * W, Cin)

    args = [x_flat]
    if has_proj:
        args.append(pw.astype(jnp.bfloat16))
    args += [
        params["conv1_w"].reshape(9 * C, C).astype(jnp.bfloat16),
        params["conv1_b"].astype(jnp.float32),
        params["bn1_gamma"].astype(jnp.float32),
        params["bn1_beta"].astype(jnp.float32),
        params["conv2_w"].reshape(9 * C, C).astype(jnp.bfloat16),
        params["conv2_b"].astype(jnp.float32),
        params["bn2_gamma"].astype(jnp.float32),
        params["bn2_beta"].astype(jnp.float32),
    ]

    kernel = _make_resnet_block_kernel(N, H, W, C, dilation, 1e-5, has_proj)
    out_flat = pl.pallas_call(
        kernel,
        out_shape=jax.ShapeDtypeStruct((N * H * W, C), jnp.float32),
        compiler_params=pltpu.CompilerParams(
            vmem_limit_bytes=32 * 1024 * 1024),
    )(*args)
    return jnp.transpose(out_flat.reshape(N, H, W, C), (0, 3, 1, 2))


# ------------------------- Pure-JAX f32 reference ----------------------------

def ref_forward(x_nchw, params, dilation):
    x = x_nchw.astype(jnp.float32)
    if params.get("proj_w") is not None:
        x = jnp.einsum("nchw,cd->ndhw", x, params["proj_w"])

    def conv(xin, w9, b, d):
        xp = jnp.pad(xin, ((0, 0), (0, 0), (d, d), (d, d)), mode="reflect")
        w = w9.reshape(3, 3, w9.shape[1], w9.shape[2])  # HWIO
        y = jax.lax.conv_general_dilated(
            xp, w, window_strides=(1, 1), padding="VALID", rhs_dilation=(d, d),
            dimension_numbers=("NCHW", "HWIO", "NCHW"))
        return y + b.reshape(1, -1, 1, 1)

    def bn(y, gamma, beta, eps=1e-5):
        mean = jnp.mean(y, axis=(0, 2, 3), keepdims=True)
        var = jnp.mean((y - mean) ** 2, axis=(0, 2, 3), keepdims=True)
        return ((y - mean) / jnp.sqrt(var + eps)) * gamma.reshape(1, -1, 1, 1) \
            + beta.reshape(1, -1, 1, 1)

    y = conv(x, params["conv1_w"], params["conv1_b"], dilation)
    y = jax.nn.relu(bn(y, params["bn1_gamma"], params["bn1_beta"]))
    y = conv(y, params["conv2_w"], params["conv2_b"], 1)
    y = bn(y, params["bn2_gamma"], params["bn2_beta"])
    return x + y


# --------------------------------- Main ---------------------------------------

if __name__ == "__main__":
    key = jax.random.PRNGKey(0)
    N, Cin, H, W = 2, 4, 16, 16
    Cout = 8          # out_dim != input_dim -> exercises the 1x1 projection
    dilation = 2

    keys = jax.random.split(key, 6)

    def uinit(k, shape, fan_in):
        bound = 1.0 / float(fan_in) ** 0.5
        return jax.random.uniform(k, shape, jnp.float32, -bound, bound)

    params = {
        # proj: Conv2d(Cin, Cout, 1, bias=False) stored as (Cin, Cout)
        "proj_w": uinit(keys[0], (Cin, Cout), Cin),
        # conv1/conv2: Conv2d(Cout, Cout, 3, bias=True) stored as (9, Cin, Cout)
        "conv1_w": uinit(keys[1], (9, Cout, Cout), 9 * Cout),
        "conv1_b": uinit(keys[2], (1, Cout), 9 * Cout),
        "conv2_w": uinit(keys[3], (9, Cout, Cout), 9 * Cout),
        "conv2_b": uinit(keys[4], (1, Cout), 9 * Cout),
        # BatchNorm2d default init: weight=1, bias=0
        "bn1_gamma": jnp.ones((1, Cout), jnp.float32),
        "bn1_beta": jnp.zeros((1, Cout), jnp.float32),
        "bn2_gamma": jnp.ones((1, Cout), jnp.float32),
        "bn2_beta": jnp.zeros((1, Cout), jnp.float32),
    }

    x = jax.random.normal(keys[5], (N, Cin, H, W), jnp.float32)

    fwd = jax.jit(functools.partial(resnet_block_forward, dilation=dilation))
    out = jax.block_until_ready(fwd(x, params))
    assert out.shape == (N, Cout, H, W)

    # The kernel feeds the MXU bf16 operands (per the perf review) while the
    # reference is pure f32, so allow a correspondingly looser tolerance.
    ref = ref_forward(x, params, dilation)
    max_err = float(jnp.max(jnp.abs(out - ref)))
    assert max_err < 5e-2, f"mismatch vs reference: {max_err}"

    print("KERNEL_OK")
</pallas_src>

<mosaic_0001>
module attributes {stable_mosaic.version = 11 : i64} {
  func.func @kernel(%arg0: memref<512x4xf32, #tpu.memory_space<vmem>>, %arg1: memref<4x8xbf16, #tpu.memory_space<vmem>>, %arg2: memref<72x8xbf16, #tpu.memory_space<vmem>>, %arg3: memref<1x8xf32, #tpu.memory_space<vmem>>, %arg4: memref<1x8xf32, #tpu.memory_space<vmem>>, %arg5: memref<1x8xf32, #tpu.memory_space<vmem>>, %arg6: memref<72x8xbf16, #tpu.memory_space<vmem>>, %arg7: memref<1x8xf32, #tpu.memory_space<vmem>>, %arg8: memref<1x8xf32, #tpu.memory_space<vmem>>, %arg9: memref<1x8xf32, #tpu.memory_space<vmem>>, %arg10: memref<512x8xf32, #tpu.memory_space<vmem>>) attributes {dimension_semantics = [], scalar_prefetch = 0 : i64, scratch_operands = 0 : i64, tpu.core_type = #tpu.core_type<tc>} {
    %c0 = arith.constant 0 : index
    %c0_0 = arith.constant 0 : index
    %0 = vector.load %arg0[%c0, %c0_0] : memref<512x4xf32, #tpu.memory_space<vmem>>, vector<512x4xf32>
    %1 = arith.truncf %0 : vector<512x4xf32> to vector<512x4xbf16>
    %c0_1 = arith.constant 0 : index
    %c0_2 = arith.constant 0 : index
    %2 = vector.load %arg1[%c0_1, %c0_2] : memref<4x8xbf16, #tpu.memory_space<vmem>>, vector<4x8xbf16>
    %cst = arith.constant dense<0.000000e+00> : vector<512x8xf32>
    %3 = tpu.matmul %1, %2, %cst {dimension_numbers = #tpu.dot_dimension_numbers<[1], [0], [0], [1], [0, 0, 1, 1], [], []>} : vector<512x4xbf16>, vector<4x8xbf16>, vector<512x8xf32> -> vector<512x8xf32>
    %4 = vector.shape_cast %3 : vector<512x8xf32> to vector<2x16x16x8xf32>
    %5 = vector.extract_strided_slice %4 {offsets = [0, 2, 0, 0], sizes = [2, 1, 16, 8], strides = [1, 1, 1, 1]} : vector<2x16x16x8xf32> to vector<2x1x16x8xf32>
    %6 = vector.extract_strided_slice %4 {offsets = [0, 1, 0, 0], sizes = [2, 1, 16, 8], strides = [1, 1, 1, 1]} : vector<2x16x16x8xf32> to vector<2x1x16x8xf32>
    %7 = vector.extract_strided_slice %4 {offsets = [0, 14, 0, 0], sizes = [2, 1, 16, 8], strides = [1, 1, 1, 1]} : vector<2x16x16x8xf32> to vector<2x1x16x8xf32>
    %8 = vector.extract_strided_slice %4 {offsets = [0, 13, 0, 0], sizes = [2, 1, 16, 8], strides = [1, 1, 1, 1]} : vector<2x16x16x8xf32> to vector<2x1x16x8xf32>
    %9 = tpu.concatenate %5, %6, %4, %7, %8 in 1 : vector<2x1x16x8xf32>, vector<2x1x16x8xf32>, vector<2x16x16x8xf32>, vector<2x1x16x8xf32>, vector<2x1x16x8xf32> -> vector<2x20x16x8xf32>
    %10 = vector.extract_strided_slice %9 {offsets = [0, 0, 2, 0], sizes = [2, 20, 1, 8], strides = [1, 1, 1, 1]} : vector<2x20x16x8xf32> to vector<2x20x1x8xf32>
    %11 = vector.extract_strided_slice %9 {offsets = [0, 0, 1, 0], sizes = [2, 20, 1, 8], strides = [1, 1, 1, 1]} : vector<2x20x16x8xf32> to vector<2x20x1x8xf32>
    %12 = vector.extract_strided_slice %9 {offsets = [0, 0, 14, 0], sizes = [2, 20, 1, 8], strides = [1, 1, 1, 1]} : vector<2x20x16x8xf32> to vector<2x20x1x8xf32>
    %13 = vector.extract_strided_slice %9 {offsets = [0, 0, 13, 0], sizes = [2, 20, 1, 8], strides = [1, 1, 1, 1]} : vector<2x20x16x8xf32> to vector<2x20x1x8xf32>
    %14 = tpu.concatenate %10, %11, %9, %12, %13 in 2 : vector<2x20x1x8xf32>, vector<2x20x1x8xf32>, vector<2x20x16x8xf32>, vector<2x20x1x8xf32>, vector<2x20x1x8xf32> -> vector<2x20x20x8xf32>
    %15 = vector.extract_strided_slice %14 {offsets = [0, 0, 0, 0], sizes = [2, 16, 16, 8], strides = [1, 1, 1, 1]} : vector<2x20x20x8xf32> to vector<2x16x16x8xf32>
    %16 = vector.shape_cast %15 : vector<2x16x16x8xf32> to vector<512x8xf32>
    %17 = vector.extract_strided_slice %14 {offsets = [0, 0, 2, 0], sizes = [2, 16, 16, 8], strides = [1, 1, 1, 1]} : vector<2x20x20x8xf32> to vector<2x16x16x8xf32>
    %18 = vector.shape_cast %17 : vector<2x16x16x8xf32> to vector<512x8xf32>
    %19 = vector.extract_strided_slice %14 {offsets = [0, 0, 4, 0], sizes = [2, 16, 16, 8], strides = [1, 1, 1, 1]} : vector<2x20x20x8xf32> to vector<2x16x16x8xf32>
    %20 = vector.shape_cast %19 : vector<2x16x16x8xf32> to vector<512x8xf32>
    %21 = vector.extract_strided_slice %14 {offsets = [0, 2, 0, 0], sizes = [2, 16, 16, 8], strides = [1, 1, 1, 1]} : vector<2x20x20x8xf32> to vector<2x16x16x8xf32>
    %22 = vector.shape_cast %21 : vector<2x16x16x8xf32> to vector<512x8xf32>
    %23 = vector.extract_strided_slice %14 {offsets = [0, 2, 2, 0], sizes = [2, 16, 16, 8], strides = [1, 1, 1, 1]} : vector<2x20x20x8xf32> to vector<2x16x16x8xf32>
    %24 = vector.shape_cast %23 : vector<2x16x16x8xf32> to vector<512x8xf32>
    %25 = vector.extract_strided_slice %14 {offsets = [0, 2, 4, 0], sizes = [2, 16, 16, 8], strides = [1, 1, 1, 1]} : vector<2x20x20x8xf32> to vector<2x16x16x8xf32>
    %26 = vector.shape_cast %25 : vector<2x16x16x8xf32> to vector<512x8xf32>
    %27 = vector.extract_strided_slice %14 {offsets = [0, 4, 0, 0], sizes = [2, 16, 16, 8], strides = [1, 1, 1, 1]} : vector<2x20x20x8xf32> to vector<2x16x16x8xf32>
    %28 = vector.shape_cast %27 : vector<2x16x16x8xf32> to vector<512x8xf32>
    %29 = vector.extract_strided_slice %14 {offsets = [0, 4, 2, 0], sizes = [2, 16, 16, 8], strides = [1, 1, 1, 1]} : vector<2x20x20x8xf32> to vector<2x16x16x8xf32>
    %30 = vector.shape_cast %29 : vector<2x16x16x8xf32> to vector<512x8xf32>
    %31 = vector.extract_strided_slice %14 {offsets = [0, 4, 4, 0], sizes = [2, 16, 16, 8], strides = [1, 1, 1, 1]} : vector<2x20x20x8xf32> to vector<2x16x16x8xf32>
    %32 = vector.shape_cast %31 : vector<2x16x16x8xf32> to vector<512x8xf32>
    %33 = tpu.concatenate %16, %18, %20, %22, %24, %26, %28, %30, %32 in 1 : vector<512x8xf32>, vector<512x8xf32>, vector<512x8xf32>, vector<512x8xf32>, vector<512x8xf32>, vector<512x8xf32>, vector<512x8xf32>, vector<512x8xf32>, vector<512x8xf32> -> vector<512x72xf32>
    %34 = arith.truncf %33 : vector<512x72xf32> to vector<512x72xbf16>
    %c0_3 = arith.constant 0 : index
    %c0_4 = arith.constant 0 : index
    %35 = vector.load %arg2[%c0_3, %c0_4] : memref<72x8xbf16, #tpu.memory_space<vmem>>, vector<72x8xbf16>
    %cst_5 = arith.constant dense<0.000000e+00> : vector<512x8xf32>
    %36 = tpu.matmul %34, %35, %cst_5 {dimension_numbers = #tpu.dot_dimension_numbers<[1], [0], [0], [1], [0, 0, 1, 1], [], []>} : vector<512x72xbf16>, vector<72x8xbf16>, vector<512x8xf32> -> vector<512x8xf32>
    %c0_6 = arith.constant 0 : index
    %c0_7 = arith.constant 0 : index
    %37 = vector.load %arg3[%c0_6, %c0_7] : memref<1x8xf32, #tpu.memory_space<vmem>>, vector<1x8xf32>
    %38 = vector.broadcast %37 : vector<1x8xf32> to vector<512x8xf32>
    %39 = arith.addf %36, %38 : vector<512x8xf32>
    %cst_8 = arith.constant dense<0.000000e+00> : vector<8xf32>
    %40 = vector.multi_reduction <add>, %39, %cst_8 [0] : vector<512x8xf32> to vector<8xf32>
    %41 = vector.shape_cast %40 : vector<8xf32> to vector<1x8xf32>
    %cst_9 = arith.constant 0.001953125 : f32
    %42 = vector.broadcast %cst_9 : f32 to vector<1x8xf32>
    %43 = arith.mulf %41, %42 : vector<1x8xf32>
    %44 = vector.broadcast %43 : vector<1x8xf32> to vector<512x8xf32>
    %45 = arith.subf %39, %44 : vector<512x8xf32>
    %46 = arith.mulf %45, %45 : vector<512x8xf32>
    %cst_10 = arith.constant dense<0.000000e+00> : vector<8xf32>
    %47 = vector.multi_reduction <add>, %46, %cst_10 [0] : vector<512x8xf32> to vector<8xf32>
    %48 = vector.shape_cast %47 : vector<8xf32> to vector<1x8xf32>
    %cst_11 = arith.constant 0.001953125 : f32
    %49 = vector.broadcast %cst_11 : f32 to vector<1x8xf32>
    %50 = arith.mulf %48, %49 : vector<1x8xf32>
    %cst_12 = arith.constant 9.99999974E-6 : f32
    %51 = vector.broadcast %cst_12 : f32 to vector<1x8xf32>
    %52 = arith.addf %50, %51 : vector<1x8xf32>
    %53 = math.rsqrt %52 : vector<1x8xf32>
    %c0_13 = arith.constant 0 : index
    %c0_14 = arith.constant 0 : index
    %54 = vector.load %arg4[%c0_13, %c0_14] : memref<1x8xf32, #tpu.memory_space<vmem>>, vector<1x8xf32>
    %55 = arith.mulf %53, %54 : vector<1x8xf32>
    %56 = vector.broadcast %55 : vector<1x8xf32> to vector<512x8xf32>
    %57 = arith.mulf %45, %56 : vector<512x8xf32>
    %c0_15 = arith.constant 0 : index
    %c0_16 = arith.constant 0 : index
    %58 = vector.load %arg5[%c0_15, %c0_16] : memref<1x8xf32, #tpu.memory_space<vmem>>, vector<1x8xf32>
    %59 = vector.broadcast %58 : vector<1x8xf32> to vector<512x8xf32>
    %60 = arith.addf %57, %59 : vector<512x8xf32>
    %cst_17 = arith.constant 0.000000e+00 : f32
    %61 = vector.broadcast %cst_17 : f32 to vector<512x8xf32>
    %62 = arith.maximumf %60, %61 : vector<512x8xf32>
    %63 = vector.shape_cast %62 : vector<512x8xf32> to vector<2x16x16x8xf32>
    %64 = vector.extract_strided_slice %63 {offsets = [0, 1, 0, 0], sizes = [2, 1, 16, 8], strides = [1, 1, 1, 1]} : vector<2x16x16x8xf32> to vector<2x1x16x8xf32>
    %65 = vector.extract_strided_slice %63 {offsets = [0, 14, 0, 0], sizes = [2, 1, 16, 8], strides = [1, 1, 1, 1]} : vector<2x16x16x8xf32> to vector<2x1x16x8xf32>
    %66 = tpu.concatenate %64, %63, %65 in 1 : vector<2x1x16x8xf32>, vector<2x16x16x8xf32>, vector<2x1x16x8xf32> -> vector<2x18x16x8xf32>
    %67 = vector.extract_strided_slice %66 {offsets = [0, 0, 1, 0], sizes = [2, 18, 1, 8], strides = [1, 1, 1, 1]} : vector<2x18x16x8xf32> to vector<2x18x1x8xf32>
    %68 = vector.extract_strided_slice %66 {offsets = [0, 0, 14, 0], sizes = [2, 18, 1, 8], strides = [1, 1, 1, 1]} : vector<2x18x16x8xf32> to vector<2x18x1x8xf32>
    %69 = tpu.concatenate %67, %66, %68 in 2 : vector<2x18x1x8xf32>, vector<2x18x16x8xf32>, vector<2x18x1x8xf32> -> vector<2x18x18x8xf32>
    %70 = vector.extract_strided_slice %69 {offsets = [0, 0, 0, 0], sizes = [2, 16, 16, 8], strides = [1, 1, 1, 1]} : vector<2x18x18x8xf32> to vector<2x16x16x8xf32>
    %71 = vector.shape_cast %70 : vector<2x16x16x8xf32> to vector<512x8xf32>
    %72 = vector.extract_strided_slice %69 {offsets = [0, 0, 1, 0], sizes = [2, 16, 16, 8], strides = [1, 1, 1, 1]} : vector<2x18x18x8xf32> to vector<2x16x16x8xf32>
    %73 = vector.shape_cast %72 : vector<2x16x16x8xf32> to vector<512x8xf32>
    %74 = vector.extract_strided_slice %69 {offsets = [0, 0, 2, 0], sizes = [2, 16, 16, 8], strides = [1, 1, 1, 1]} : vector<2x18x18x8xf32> to vector<2x16x16x8xf32>
    %75 = vector.shape_cast %74 : vector<2x16x16x8xf32> to vector<512x8xf32>
    %76 = vector.extract_strided_slice %69 {offsets = [0, 1, 0, 0], sizes = [2, 16, 16, 8], strides = [1, 1, 1, 1]} : vector<2x18x18x8xf32> to vector<2x16x16x8xf32>
    %77 = vector.shape_cast %76 : vector<2x16x16x8xf32> to vector<512x8xf32>
    %78 = vector.extract_strided_slice %69 {offsets = [0, 1, 1, 0], sizes = [2, 16, 16, 8], strides = [1, 1, 1, 1]} : vector<2x18x18x8xf32> to vector<2x16x16x8xf32>
    %79 = vector.shape_cast %78 : vector<2x16x16x8xf32> to vector<512x8xf32>
    %80 = vector.extract_strided_slice %69 {offsets = [0, 1, 2, 0], sizes = [2, 16, 16, 8], strides = [1, 1, 1, 1]} : vector<2x18x18x8xf32> to vector<2x16x16x8xf32>
    %81 = vector.shape_cast %80 : vector<2x16x16x8xf32> to vector<512x8xf32>
    %82 = vector.extract_strided_slice %69 {offsets = [0, 2, 0, 0], sizes = [2, 16, 16, 8], strides = [1, 1, 1, 1]} : vector<2x18x18x8xf32> to vector<2x16x16x8xf32>
    %83 = vector.shape_cast %82 : vector<2x16x16x8xf32> to vector<512x8xf32>
    %84 = vector.extract_strided_slice %69 {offsets = [0, 2, 1, 0], sizes = [2, 16, 16, 8], strides = [1, 1, 1, 1]} : vector<2x18x18x8xf32> to vector<2x16x16x8xf32>
    %85 = vector.shape_cast %84 : vector<2x16x16x8xf32> to vector<512x8xf32>
    %86 = vector.extract_strided_slice %69 {offsets = [0, 2, 2, 0], sizes = [2, 16, 16, 8], strides = [1, 1, 1, 1]} : vector<2x18x18x8xf32> to vector<2x16x16x8xf32>
    %87 = vector.shape_cast %86 : vector<2x16x16x8xf32> to vector<512x8xf32>
    %88 = tpu.concatenate %71, %73, %75, %77, %79, %81, %83, %85, %87 in 1 : vector<512x8xf32>, vector<512x8xf32>, vector<512x8xf32>, vector<512x8xf32>, vector<512x8xf32>, vector<512x8xf32>, vector<512x8xf32>, vector<512x8xf32>, vector<512x8xf32> -> vector<512x72xf32>
    %89 = arith.truncf %88 : vector<512x72xf32> to vector<512x72xbf16>
    %c0_18 = arith.constant 0 : index
    %c0_19 = arith.constant 0 : index
    %90 = vector.load %arg6[%c0_18, %c0_19] : memref<72x8xbf16, #tpu.memory_space<vmem>>, vector<72x8xbf16>
    %cst_20 = arith.constant dense<0.000000e+00> : vector<512x8xf32>
    %91 = tpu.matmul %89, %90, %cst_20 {dimension_numbers = #tpu.dot_dimension_numbers<[1], [0], [0], [1], [0, 0, 1, 1], [], []>} : vector<512x72xbf16>, vector<72x8xbf16>, vector<512x8xf32> -> vector<512x8xf32>
    %c0_21 = arith.constant 0 : index
    %c0_22 = arith.constant 0 : index
    %92 = vector.load %arg7[%c0_21, %c0_22] : memref<1x8xf32, #tpu.memory_space<vmem>>, vector<1x8xf32>
    %93 = vector.broadcast %92 : vector<1x8xf32> to vector<512x8xf32>
    %94 = arith.addf %91, %93 : vector<512x8xf32>
    %cst_23 = arith.constant dense<0.000000e+00> : vector<8xf32>
    %95 = vector.multi_reduction <add>, %94, %cst_23 [0] : vector<512x8xf32> to vector<8xf32>
    %96 = vector.shape_cast %95 : vector<8xf32> to vector<1x8xf32>
    %cst_24 = arith.constant 0.001953125 : f32
    %97 = vector.broadcast %cst_24 : f32 to vector<1x8xf32>
    %98 = arith.mulf %96, %97 : vector<1x8xf32>
    %99 = vector.broadcast %98 : vector<1x8xf32> to vector<512x8xf32>
    %100 = arith.subf %94, %99 : vector<512x8xf32>
    %101 = arith.mulf %100, %100 : vector<512x8xf32>
    %cst_25 = arith.constant dense<0.000000e+00> : vector<8xf32>
    %102 = vector.multi_reduction <add>, %101, %cst_25 [0] : vector<512x8xf32> to vector<8xf32>
    %103 = vector.shape_cast %102 : vector<8xf32> to vector<1x8xf32>
    %cst_26 = arith.constant 0.001953125 : f32
    %104 = vector.broadcast %cst_26 : f32 to vector<1x8xf32>
    %105 = arith.mulf %103, %104 : vector<1x8xf32>
    %cst_27 = arith.constant 9.99999974E-6 : f32
    %106 = vector.broadcast %cst_27 : f32 to vector<1x8xf32>
    %107 = arith.addf %105, %106 : vector<1x8xf32>
    %108 = math.rsqrt %107 : vector<1x8xf32>
    %c0_28 = arith.constant 0 : index
    %c0_29 = arith.constant 0 : index
    %109 = vector.load %arg8[%c0_28, %c0_29] : memref<1x8xf32, #tpu.memory_space<vmem>>, vector<1x8xf32>
    %110 = arith.mulf %108, %109 : vector<1x8xf32>
    %111 = vector.broadcast %110 : vector<1x8xf32> to vector<512x8xf32>
    %112 = arith.mulf %100, %111 : vector<512x8xf32>
    %c0_30 = arith.constant 0 : index
    %c0_31 = arith.constant 0 : index
    %113 = vector.load %arg9[%c0_30, %c0_31] : memref<1x8xf32, #tpu.memory_space<vmem>>, vector<1x8xf32>
    %114 = vector.broadcast %113 : vector<1x8xf32> to vector<512x8xf32>
    %115 = arith.addf %112, %114 : vector<512x8xf32>
    %116 = arith.addf %3, %115 : vector<512x8xf32>
    %c0_32 = arith.constant 0 : index
    %c0_33 = arith.constant 0 : index
    %117 = vector.load %arg10[%c0_32, %c0_33] : memref<512x8xf32, #tpu.memory_space<vmem>>, vector<512x8xf32>
    tpu.vector_store %arg10[%c0_32, %c0_33], %116 {strides = array<i32>} : memref<512x8xf32, #tpu.memory_space<vmem>>, vector<512x8xf32>,
    return
  }
}

</mosaic_0001>

<llo_original>
// kernel: resnet_block_forward.1
$region0: #{resnet_block_forward.1}
  #allocation0 [shape = 'u32[]', space=smem, size = 0x4, offset = 0x4, fixed_abs, tag = 'smem constant byte address 0x4 - core index']
  #allocation1 [shape = 'u32[144,128]{1,0:T(1,128)}', space=vmem, size = 0x12000, scoped, tag = 'internal scratch']
  %s0 = inlined_call_operand.vmem [shape: f32[512,4], index: 0, kind: input, shape index: {}]
  %s1 = inlined_call_operand.vmem [shape: bf16[4,8], index: 1, kind: input, shape index: {}]
  %s2 = inlined_call_operand.vmem [shape: bf16[72,8], index: 2, kind: input, shape index: {}]
  %s3 = inlined_call_operand.vmem [shape: f32[1,8], index: 3, kind: input, shape index: {}]
  %s4 = inlined_call_operand.vmem [shape: f32[1,8], index: 4, kind: input, shape index: {}]
  %s5 = inlined_call_operand.vmem [shape: f32[1,8], index: 5, kind: input, shape index: {}]
  %s6 = inlined_call_operand.vmem [shape: bf16[72,8], index: 6, kind: input, shape index: {}]
  %s7 = inlined_call_operand.vmem [shape: f32[1,8], index: 7, kind: input, shape index: {}]
  %s8 = inlined_call_operand.vmem [shape: f32[1,8], index: 8, kind: input, shape index: {}]
  %s9 = inlined_call_operand.vmem [shape: f32[1,8], index: 9, kind: input, shape index: {}]
  %s10 = inlined_call_operand.vmem [shape: f32[512,8], index: 10, kind: output, shape index: {}]
  %s11 = sld [smem:[#allocation0]]
  $region50: #{resnet_block_forward.1} parent=0
    _
  %s13 = ssub.s32 1, %s11
  %s14 = scalar_select 0, %s13, %s11
  // Predicated region
  $region2: #{resnet_block_forward.1} parent=0 // pred_check
    _
  $region3: #{resnet_block_forward.1} parent=0 // pred_check_branch
    %16 = sbr.rel (0) target = $region5
  $region4: #{resnet_block_forward.1} parent=0 // pred_region
    _
  $region5: #{resnet_block_forward.1} parent=0 // pred_fallthru
    _
  // Predicated region
  $region6: #{resnet_block_forward.1} parent=0 // pred_check
    _
  $region7: #{resnet_block_forward.1} parent=0 // pred_check_branch
    %18 = sbr.rel (0) target = $region9
  $region8: #{resnet_block_forward.1} parent=0 // pred_region
    _
  $region9: #{resnet_block_forward.1} parent=0 // pred_fallthru
    _
  // Predicated region
  $region10: #{resnet_block_forward.1} parent=0 // pred_check
    _
  $region11: #{resnet_block_forward.1} parent=0 // pred_check_branch
    %20 = sbr.rel (0) target = $region13
  $region12: #{resnet_block_forward.1} parent=0 // pred_region
    _
  $region13: #{resnet_block_forward.1} parent=0 // pred_fallthru
    _
  // Predicated region
  $region14: #{resnet_block_forward.1} parent=0 // pred_check
    _
  $region15: #{resnet_block_forward.1} parent=0 // pred_check_branch
    %22 = sbr.rel (0) target = $region17
  $region16: #{resnet_block_forward.1} parent=0 // pred_region
    _
  $region17: #{resnet_block_forward.1} parent=0 // pred_fallthru
    _
  // Predicated region
  $region18: #{resnet_block_forward.1} parent=0 // pred_check
    _
  $region19: #{resnet_block_forward.1} parent=0 // pred_check_branch
    %24 = sbr.rel (0) target = $region21
  $region20: #{resnet_block_forward.1} parent=0 // pred_region
    _
  $region21: #{resnet_block_forward.1} parent=0 // pred_fallthru
    _
  // Predicated region
  $region22: #{resnet_block_forward.1} parent=0 // pred_check
    _
  $region23: #{resnet_block_forward.1} parent=0 // pred_check_branch
    %26 = sbr.rel (0) target = $region25
  $region24: #{resnet_block_forward.1} parent=0 // pred_region
    _
  $region25: #{resnet_block_forward.1} parent=0 // pred_fallthru
    _
  // Predicated region
  $region26: #{resnet_block_forward.1} parent=0 // pred_check
    _
  $region27: #{resnet_block_forward.1} parent=0 // pred_check_branch
    %28 = sbr.rel (0) target = $region29
  $region28: #{resnet_block_forward.1} parent=0 // pred_region
    _
  $region29: #{resnet_block_forward.1} parent=0 // pred_fallthru
    _
  // Predicated region
  $region30: #{resnet_block_forward.1} parent=0 // pred_check
    _
  $region31: #{resnet_block_forward.1} parent=0 // pred_check_branch
    %30 = sbr.rel (0) target = $region33
  $region32: #{resnet_block_forward.1} parent=0 // pred_region
    _
  $region33: #{resnet_block_forward.1} parent=0 // pred_fallthru
    _
  // Predicated region
  $region34: #{resnet_block_forward.1} parent=0 // pred_check
    _
  $region35: #{resnet_block_forward.1} parent=0 // pred_check_branch
    %32 = sbr.rel (0) target = $region37
  $region36: #{resnet_block_forward.1} parent=0 // pred_region
    _
  $region37: #{resnet_block_forward.1} parent=0 // pred_fallthru
    _
  // Predicated region
  $region38: #{resnet_block_forward.1} parent=0 // pred_check
    _
  $region39: #{resnet_block_forward.1} parent=0 // pred_check_branch
    %34 = sbr.rel (0) target = $region41
  $region40: #{resnet_block_forward.1} parent=0 // pred_region
    _
  $region41: #{resnet_block_forward.1} parent=0 // pred_fallthru
    _
  %v36 = vld [vmem:[%s0] sm:$0xff]
  %v37 = vld [vmem:[%s0 + $0x8] sm:$0xff]
  %v38 = vld [vmem:[%s0 + $0x10] sm:$0xff]
  %v39 = vld [vmem:[%s0 + $0x18] sm:$0xff]
  %v40 = vld [vmem:[%s0 + $0x20] sm:$0xff]
  %v41 = vld [vmem:[%s0 + $0x28] sm:$0xff]
  %v42 = vld [vmem:[%s0 + $0x30] sm:$0xff]
  %v43 = vld [vmem:[%s0 + $0x38] sm:$0xff]
  %v44 = vld [vmem:[%s0 + $0x40] sm:$0xff]
  %v45 = vld [vmem:[%s0 + $0x48] sm:$0xff]
  %v46 = vld [vmem:[%s0 + $0x50] sm:$0xff]
  %v47 = vld [vmem:[%s0 + $0x58] sm:$0xff]
  %v48 = vld [vmem:[%s0 + $0x60] sm:$0xff]
  %v49 = vld [vmem:[%s0 + $0x68] sm:$0xff]
  %v50 = vld [vmem:[%s0 + $0x70] sm:$0xff]
  %v51 = vld [vmem:[%s0 + $0x78] sm:$0xff]
  %v52 = vld [vmem:[%s0 + $0x80] sm:$0xff]
  %v53 = vld [vmem:[%s0 + $0x88] sm:$0xff]
  %v54 = vld [vmem:[%s0 + $0x90] sm:$0xff]
  %v55 = vld [vmem:[%s0 + $0x98] sm:$0xff]
  %v56 = vld [vmem:[%s0 + $0xa0] sm:$0xff]
  %v57 = vld [vmem:[%s0 + $0xa8] sm:$0xff]
  %v58 = vld [vmem:[%s0 + $0xb0] sm:$0xff]
  %v59 = vld [vmem:[%s0 + $0xb8] sm:$0xff]
  %v60 = vld [vmem:[%s0 + $0xc0] sm:$0xff]
  %v61 = vld [vmem:[%s0 + $0xc8] sm:$0xff]
  %v62 = vld [vmem:[%s0 + $0xd0] sm:$0xff]
  %v63 = vld [vmem:[%s0 + $0xd8] sm:$0xff]
  %v64 = vld [vmem:[%s0 + $0xe0] sm:$0xff]
  %v65 = vld [vmem:[%s0 + $0xe8] sm:$0xff]
  %v66 = vld [vmem:[%s0 + $0xf0] sm:$0xff]
  %v67 = vld [vmem:[%s0 + $0xf8] sm:$0xff]
  %v68 = vld [vmem:[%s0 + $0x100] sm:$0xff]
  %v69 = vld [vmem:[%s0 + $0x108] sm:$0xff]
  %v70 = vld [vmem:[%s0 + $0x110] sm:$0xff]
  %v71 = vld [vmem:[%s0 + $0x118] sm:$0xff]
  %v72 = vld [vmem:[%s0 + $0x120] sm:$0xff]
  %v73 = vld [vmem:[%s0 + $0x128] sm:$0xff]
  %v74 = vld [vmem:[%s0 + $0x130] sm:$0xff]
  %v75 = vld [vmem:[%s0 + $0x138] sm:$0xff]
  %v76 = vld [vmem:[%s0 + $0x140] sm:$0xff]
  %v77 = vld [vmem:[%s0 + $0x148] sm:$0xff]
  %v78 = vld [vmem:[%s0 + $0x150] sm:$0xff]
  %v79 = vld [vmem:[%s0 + $0x158] sm:$0xff]
  %v80 = vld [vmem:[%s0 + $0x160] sm:$0xff]
  %v81 = vld [vmem:[%s0 + $0x168] sm:$0xff]
  %v82 = vld [vmem:[%s0 + $0x170] sm:$0xff]
  %v83 = vld [vmem:[%s0 + $0x178] sm:$0xff]
  %v84 = vld [vmem:[%s0 + $0x180] sm:$0xff]
  %v85 = vld [vmem:[%s0 + $0x188] sm:$0xff]
  %v86 = vld [vmem:[%s0 + $0x190] sm:$0xff]
  %v87 = vld [vmem:[%s0 + $0x198] sm:$0xff]
  %v88 = vld [vmem:[%s0 + $0x1a0] sm:$0xff]
  %v89 = vld [vmem:[%s0 + $0x1a8] sm:$0xff]
  %v90 = vld [vmem:[%s0 + $0x1b0] sm:$0xff]
  %v91 = vld [vmem:[%s0 + $0x1b8] sm:$0xff]
  %v92 = vld [vmem:[%s0 + $0x1c0] sm:$0xff]
  %v93 = vld [vmem:[%s0 + $0x1c8] sm:$0xff]
  %v94 = vld [vmem:[%s0 + $0x1d0] sm:$0xff]
  %v95 = vld [vmem:[%s0 + $0x1d8] sm:$0xff]
  %v96 = vld [vmem:[%s0 + $0x1e0] sm:$0xff]
  %v97 = vld [vmem:[%s0 + $0x1e8] sm:$0xff]
  %v98 = vld [vmem:[%s0 + $0x1f0] sm:$0xff]
  %v99 = vld [vmem:[%s0 + $0x1f8] sm:$0xff]
  %v100 = vpack.c.bf16 %v37, %v36
  %v101 = vpack.c.bf16 %v39, %v38
  %v102 = vpack.c.bf16 %v41, %v40
  %v103 = vpack.c.bf16 %v43, %v42
  %v104 = vpack.c.bf16 %v45, %v44
  %v105 = vpack.c.bf16 %v47, %v46
  %v106 = vpack.c.bf16 %v49, %v48
  %v107 = vpack.c.bf16 %v51, %v50
  %v108 = vpack.c.bf16 %v53, %v52
  %v109 = vpack.c.bf16 %v55, %v54
  %v110 = vpack.c.bf16 %v57, %v56
  %v111 = vpack.c.bf16 %v59, %v58
  %v112 = vpack.c.bf16 %v61, %v60
  %v113 = vpack.c.bf16 %v63, %v62
  %v114 = vpack.c.bf16 %v65, %v64
  %v115 = vpack.c.bf16 %v67, %v66
  %v116 = vpack.c.bf16 %v69, %v68
  %v117 = vpack.c.bf16 %v71, %v70
  %v118 = vpack.c.bf16 %v73, %v72
  %v119 = vpack.c.bf16 %v75, %v74
  %v120 = vpack.c.bf16 %v77, %v76
  %v121 = vpack.c.bf16 %v79, %v78
  %v122 = vpack.c.bf16 %v81, %v80
  %v123 = vpack.c.bf16 %v83, %v82
  %v124 = vpack.c.bf16 %v85, %v84
  %v125 = vpack.c.bf16 %v87, %v86
  %v126 = vpack.c.bf16 %v89, %v88
  %v127 = vpack.c.bf16 %v91, %v90
  %v128 = vpack.c.bf16 %v93, %v92
  %v129 = vpack.c.bf16 %v95, %v94
  %v130 = vpack.c.bf16 %v97, %v96
  %v131 = vpack.c.bf16 %v99, %v98
  %v132 = vld [vmem:[%s1] sm:$0x3]
  %vm133 = vcmask 31744
  %v135 = vsel %vm133, %v100, 0
  %v138 = vsel %vm133, %v101, 0
  %v141 = vsel %vm133, %v102, 0
  %v144 = vsel %vm133, %v103, 0
  %v147 = vsel %vm133, %v104, 0
  %v150 = vsel %vm133, %v105, 0
  %v153 = vsel %vm133, %v106, 0
  %v156 = vsel %vm133, %v107, 0
  %v159 = vsel %vm133, %v108, 0
  %v162 = vsel %vm133, %v109, 0
  %v165 = vsel %vm133, %v110, 0
  %v168 = vsel %vm133, %v111, 0
  %v171 = vsel %vm133, %v112, 0
  %v174 = vsel %vm133, %v113, 0
  %v177 = vsel %vm133, %v114, 0
  %v180 = vsel %vm133, %v115, 0
  %v183 = vsel %vm133, %v116, 0
  %v186 = vsel %vm133, %v117, 0
  %v189 = vsel %vm133, %v118, 0
  %v192 = vsel %vm133, %v119, 0
  %v195 = vsel %vm133, %v120, 0
  %v198 = vsel %vm133, %v121, 0
  %v201 = vsel %vm133, %v122, 0
  %v204 = vsel %vm133, %v123, 0
  %v207 = vsel %vm133, %v124, 0
  %v210 = vsel %vm133, %v125, 0
  %v213 = vsel %vm133, %v126, 0
  %v216 = vsel %vm133, %v127, 0
  %v219 = vsel %vm133, %v128, 0
  %v222 = vsel %vm133, %v129, 0
  %v225 = vsel %vm133, %v130, 0
  %v228 = vsel %vm133, %v131, 0
  %vm230 = vcmask 1041408
  %v232 = vsel %vm230, %v132, 0
  %234 = vmatprep.subr.bf16.mxu0 0
  %235 = vmatpush1.bf16.msra.mxu0 0
  %236 = vmatprep.subr.bf16.mxu0 0
  %237 = vmatpush1.bf16.msra.mxu0 0
  %238 = vmatprep.subr.bf16.mxu0 0
  %239 = vmatpush1.bf16.msra.mxu0 0
  %240 = vmatprep.subr.bf16.mxu0 0
  %241 = vmatpush1.bf16.msra.mxu0 0
  %242 = vmatprep.subr.bf16.mxu0 0
  %243 = vmatpush1.bf16.msra.mxu0 0
  %244 = vmatprep.subr.bf16.mxu0 0
  %245 = vmatpush1.bf16.msra.mxu0 0
  %246 = vmatprep.subr.bf16.mxu0 0
  %247 = vmatpush1.bf16.msra.mxu0 0
  %248 = vmatprep.subr.bf16.mxu0 0
  %249 = vmatpush1.bf16.msra.mxu0 %v232
  %250 = vmatprep.subr.bf16.mxu0 0
  %251 = vmatpush2.bf16.msra.mxu0 0
  %252 = vmatprep.subr.bf16.mxu0 0
  %253 = vmatpush2.bf16.msra.mxu0 0
  %254 = vmatprep.subr.bf16.mxu0 0
  %255 = vmatpush2.bf16.msra.mxu0 0
  %256 = vmatprep.subr.bf16.mxu0 0
  %257 = vmatpush2.bf16.msra.mxu0 0
  %258 = vmatprep.subr.bf16.mxu0 0
  %259 = vmatpush2.bf16.msra.mxu0 0
  %260 = vmatprep.subr.bf16.mxu0 0
  %261 = vmatpush2.bf16.msra.mxu0 0
  %262 = vmatprep.subr.bf16.mxu0 0
  %263 = vmatpush2.bf16.msra.mxu0 0
  %264 = vmatprep.subr.bf16.mxu0 0
  %265 = vmatpush2.bf16.msra.mxu0 0
  %266 = vmatprep.mubr.bf16.mxu0 0
  %267 = vmatmul.mubr.bf16.gmra.mxu0 %v135
  %v268 = vpop.f32.mrf.mxu0
  %v269 = vadd.f32 0.0, %v268
  %v270 = vpop.f32.mrf.mxu0
  %v271 = vpop.f32.mrf.mxu0
  %v272 = vadd.f32 0.0, %v271
  %v273 = vpop.f32.mrf.mxu0
  %274 = vmatprep.mubr.bf16.mxu0 0
  %275 = vmatmul.mubr.bf16.gmra.mxu0 %v138
  %v276 = vpop.f32.mrf.mxu0
  %v277 = vadd.f32 0.0, %v276
  %v278 = vpop.f32.mrf.mxu0
  %v279 = vpop.f32.mrf.mxu0
  %v280 = vadd.f32 0.0, %v279
  %v281 = vpop.f32.mrf.mxu0
  %282 = vmatprep.mubr.bf16.mxu0 0
  %283 = vmatmul.mubr.bf16.gmra.mxu0 %v141
  %v284 = vpop.f32.mrf.mxu0
  %v285 = vadd.f32 0.0, %v284
  %v286 = vpop.f32.mrf.mxu0
  %v287 = vpop.f32.mrf.mxu0
  %v288 = vadd.f32 0.0, %v287
  %v289 = vpop.f32.mrf.mxu0
  %290 = vmatprep.mubr.bf16.mxu0 0
  %291 = vmatmul.mubr.bf16.gmra.mxu0 %v144
  %v292 = vpop.f32.mrf.mxu0
  %v293 = vadd.f32 0.0, %v292
  %v294 = vpop.f32.mrf.mxu0
  %v295 = vpop.f32.mrf.mxu0
  %v296 = vadd.f32 0.0, %v295
  %v297 = vpop.f32.mrf.mxu0
  %298 = vmatprep.mubr.bf16.mxu0 0
  %299 = vmatmul.mubr.bf16.gmra.mxu0 %v147
  %v300 = vpop.f32.mrf.mxu0
  %v301 = vadd.f32 0.0, %v300
  %v302 = vpop.f32.mrf.mxu0
  %v303 = vpop.f32.mrf.mxu0
  %v304 = vadd.f32 0.0, %v303
  %v305 = vpop.f32.mrf.mxu0
  %306 = vmatprep.mubr.bf16.mxu0 0
  %307 = vmatmul.mubr.bf16.gmra.mxu0 %v150
  %v308 = vpop.f32.mrf.mxu0
  %v309 = vadd.f32 0.0, %v308
  %v310 = vpop.f32.mrf.mxu0
  %v311 = vpop.f32.mrf.mxu0
  %v312 = vadd.f32 0.0, %v311
  %v313 = vpop.f32.mrf.mxu0
  %314 = vmatprep.mubr.bf16.mxu0 0
  %315 = vmatmul.mubr.bf16.gmra.mxu0 %v153
  %v316 = vpop.f32.mrf.mxu0
  %v317 = vadd.f32 0.0, %v316
  %v318 = vpop.f32.mrf.mxu0
  %v319 = vpop.f32.mrf.mxu0
  %v320 = vadd.f32 0.0, %v319
  %v321 = vpop.f32.mrf.mxu0
  %322 = vmatprep.mubr.bf16.mxu0 0
  %323 = vmatmul.mubr.bf16.gmra.mxu0 %v156
  %v324 = vpop.f32.mrf.mxu0
  %v325 = vadd.f32 0.0, %v324
  %v326 = vpop.f32.mrf.mxu0
  %v327 = vpop.f32.mrf.mxu0
  %v328 = vadd.f32 0.0, %v327
  %v329 = vpop.f32.mrf.mxu0
  %330 = vmatprep.mubr.bf16.mxu0 0
  %331 = vmatmul.mubr.bf16.gmra.mxu0 %v159
  %v332 = vpop.f32.mrf.mxu0
  %v333 = vadd.f32 0.0, %v332
  %v334 = vpop.f32.mrf.mxu0
  %v335 = vpop.f32.mrf.mxu0
  %v336 = vadd.f32 0.0, %v335
  %v337 = vpop.f32.mrf.mxu0
  %338 = vmatprep.mubr.bf16.mxu0 0
  %339 = vmatmul.mubr.bf16.gmra.mxu0 %v162
  %v340 = vpop.f32.mrf.mxu0
  %v341 = vadd.f32 0.0, %v340
  %v342 = vpop.f32.mrf.mxu0
  %v343 = vpop.f32.mrf.mxu0
  %v344 = vadd.f32 0.0, %v343
  %v345 = vpop.f32.mrf.mxu0
  %346 = vmatprep.mubr.bf16.mxu0 0
  %347 = vmatmul.mubr.bf16.gmra.mxu0 %v165
  %v348 = vpop.f32.mrf.mxu0
  %v349 = vadd.f32 0.0, %v348
  %v350 = vpop.f32.mrf.mxu0
  %v351 = vpop.f32.mrf.mxu0
  %v352 = vadd.f32 0.0, %v351
  %v353 = vpop.f32.mrf.mxu0
  %354 = vmatprep.mubr.bf16.mxu0 0
  %355 = vmatmul.mubr.bf16.gmra.mxu0 %v168
  %v356 = vpop.f32.mrf.mxu0
  %v357 = vadd.f32 0.0, %v356
  %v358 = vpop.f32.mrf.mxu0
  %v359 = vpop.f32.mrf.mxu0
  %v360 = vadd.f32 0.0, %v359
  %v361 = vpop.f32.mrf.mxu0
  %362 = vmatprep.mubr.bf16.mxu0 0
  %363 = vmatmul.mubr.bf16.gmra.mxu0 %v171
  %v364 = vpop.f32.mrf.mxu0
  %v365 = vadd.f32 0.0, %v364
  %v366 = vpop.f32.mrf.mxu0
  %v367 = vpop.f32.mrf.mxu0
  %v368 = vadd.f32 0.0, %v367
  %v369 = vpop.f32.mrf.mxu0
  %370 = vmatprep.mubr.bf16.mxu0 0
  %371 = vmatmul.mubr.bf16.gmra.mxu0 %v174
  %v372 = vpop.f32.mrf.mxu0
  %v373 = vadd.f32 0.0, %v372
  %v374 = vpop.f32.mrf.mxu0
  %v375 = vpop.f32.mrf.mxu0
  %v376 = vadd.f32 0.0, %v375
  %v377 = vpop.f32.mrf.mxu0
  %378 = vmatprep.mubr.bf16.mxu0 0
  %379 = vmatmul.mubr.bf16.gmra.mxu0 %v177
  %v380 = vpop.f32.mrf.mxu0
  %v381 = vadd.f32 0.0, %v380
  %v382 = vpop.f32.mrf.mxu0
  %v383 = vpop.f32.mrf.mxu0
  %v384 = vadd.f32 0.0, %v383
  %v385 = vpop.f32.mrf.mxu0
  %386 = vmatprep.mubr.bf16.mxu0 0
  %387 = vmatmul.mubr.bf16.gmra.mxu0 %v180
  %v388 = vpop.f32.mrf.mxu0
  %v389 = vadd.f32 0.0, %v388
  %v390 = vpop.f32.mrf.mxu0
  %v391 = vpop.f32.mrf.mxu0
  %v392 = vadd.f32 0.0, %v391
  %v393 = vpop.f32.mrf.mxu0
  %394 = vmatprep.mubr.bf16.mxu0 0
  %395 = vmatmul.mubr.bf16.gmra.mxu0 %v183
  %v396 = vpop.f32.mrf.mxu0
  %v397 = vadd.f32 0.0, %v396
  %v398 = vpop.f32.mrf.mxu0
  %v399 = vpop.f32.mrf.mxu0
  %v400 = vadd.f32 0.0, %v399
  %v401 = vpop.f32.mrf.mxu0
  %402 = vmatprep.mubr.bf16.mxu0 0
  %403 = vmatmul.mubr.bf16.gmra.mxu0 %v186
  %v404 = vpop.f32.mrf.mxu0
  %v405 = vadd.f32 0.0, %v404
  %v406 = vpop.f32.mrf.mxu0
  %v407 = vpop.f32.mrf.mxu0
  %v408 = vadd.f32 0.0, %v407
  %v409 = vpop.f32.mrf.mxu0
  %410 = vmatprep.mubr.bf16.mxu0 0
  %411 = vmatmul.mubr.bf16.gmra.mxu0 %v189
  %v412 = vpop.f32.mrf.mxu0
  %v413 = vadd.f32 0.0, %v412
  %v414 = vpop.f32.mrf.mxu0
  %v415 = vpop.f32.mrf.mxu0
  %v416 = vadd.f32 0.0, %v415
  %v417 = vpop.f32.mrf.mxu0
  %418 = vmatprep.mubr.bf16.mxu0 0
  %419 = vmatmul.mubr.bf16.gmra.mxu0 %v192
  %v420 = vpop.f32.mrf.mxu0
  %v421 = vadd.f32 0.0, %v420
  %v422 = vpop.f32.mrf.mxu0
  %v423 = vpop.f32.mrf.mxu0
  %v424 = vadd.f32 0.0, %v423
  %v425 = vpop.f32.mrf.mxu0
  %426 = vmatprep.mubr.bf16.mxu0 0
  %427 = vmatmul.mubr.bf16.gmra.mxu0 %v195
  %v428 = vpop.f32.mrf.mxu0
  %v429 = vadd.f32 0.0, %v428
  %v430 = vpop.f32.mrf.mxu0
  %v431 = vpop.f32.mrf.mxu0
  %v432 = vadd.f32 0.0, %v431
  %v433 = vpop.f32.mrf.mxu0
  %434 = vmatprep.mubr.bf16.mxu0 0
  %435 = vmatmul.mubr.bf16.gmra.mxu0 %v198
  %v436 = vpop.f32.mrf.mxu0
  %v437 = vadd.f32 0.0, %v436
  %v438 = vpop.f32.mrf.mxu0
  %v439 = vpop.f32.mrf.mxu0
  %v440 = vadd.f32 0.0, %v439
  %v441 = vpop.f32.mrf.mxu0
  %442 = vmatprep.mubr.bf16.mxu0 0
  %443 = vmatmul.mubr.bf16.gmra.mxu0 %v201
  %v444 = vpop.f32.mrf.mxu0
  %v445 = vadd.f32 0.0, %v444
  %v446 = vpop.f32.mrf.mxu0
  %v447 = vpop.f32.mrf.mxu0
  %v448 = vadd.f32 0.0, %v447
  %v449 = vpop.f32.mrf.mxu0
  %450 = vmatprep.mubr.bf16.mxu0 0
  %451 = vmatmul.mubr.bf16.gmra.mxu0 %v204
  %v452 = vpop.f32.mrf.mxu0
  %v453 = vadd.f32 0.0, %v452
  %v454 = vpop.f32.mrf.mxu0
  %v455 = vpop.f32.mrf.mxu0
  %v456 = vadd.f32 0.0, %v455
  %v457 = vpop.f32.mrf.mxu0
  %458 = vmatprep.mubr.bf16.mxu0 0
  %459 = vmatmul.mubr.bf16.gmra.mxu0 %v207
  %v460 = vpop.f32.mrf.mxu0
  %v461 = vadd.f32 0.0, %v460
  %v462 = vpop.f32.mrf.mxu0
  %v463 = vpop.f32.mrf.mxu0
  %v464 = vadd.f32 0.0, %v463
  %v465 = vpop.f32.mrf.mxu0
  %466 = vmatprep.mubr.bf16.mxu0 0
  %467 = vmatmul.mubr.bf16.gmra.mxu0 %v210
  %v468 = vpop.f32.mrf.mxu0
  %v469 = vadd.f32 0.0, %v468
  %v470 = vpop.f32.mrf.mxu0
  %v471 = vpop.f32.mrf.mxu0
  %v472 = vadd.f32 0.0, %v471
  %v473 = vpop.f32.mrf.mxu0
  %474 = vmatprep.mubr.bf16.mxu0 0
  %475 = vmatmul.mubr.bf16.gmra.mxu0 %v213
  %v476 = vpop.f32.mrf.mxu0
  %v477 = vadd.f32 0.0, %v476
  %v478 = vpop.f32.mrf.mxu0
  %v479 = vpop.f32.mrf.mxu0
  %v480 = vadd.f32 0.0, %v479
  %v481 = vpop.f32.mrf.mxu0
  %482 = vmatprep.mubr.bf16.mxu0 0
  %483 = vmatmul.mubr.bf16.gmra.mxu0 %v216
  %v484 = vpop.f32.mrf.mxu0
  %v485 = vadd.f32 0.0, %v484
  %v486 = vpop.f32.mrf.mxu0
  %v487 = vpop.f32.mrf.mxu0
  %v488 = vadd.f32 0.0, %v487
  %v489 = vpop.f32.mrf.mxu0
  %490 = vmatprep.mubr.bf16.mxu0 0
  %491 = vmatmul.mubr.bf16.gmra.mxu0 %v219
  %v492 = vpop.f32.mrf.mxu0
  %v493 = vadd.f32 0.0, %v492
  %v494 = vpop.f32.mrf.mxu0
  %v495 = vpop.f32.mrf.mxu0
  %v496 = vadd.f32 0.0, %v495
  %v497 = vpop.f32.mrf.mxu0
  %498 = vmatprep.mubr.bf16.mxu0 0
  %499 = vmatmul.mubr.bf16.gmra.mxu0 %v222
  %v500 = vpop.f32.mrf.mxu0
  %v501 = vadd.f32 0.0, %v500
  %v502 = vpop.f32.mrf.mxu0
  %v503 = vpop.f32.mrf.mxu0
  %v504 = vadd.f32 0.0, %v503
  %v505 = vpop.f32.mrf.mxu0
  %506 = vmatprep.mubr.bf16.mxu0 0
  %507 = vmatmul.mubr.bf16.gmra.mxu0 %v225
  %v508 = vpop.f32.mrf.mxu0
  %v509 = vadd.f32 0.0, %v508
  %v510 = vpop.f32.mrf.mxu0
  %v511 = vpop.f32.mrf.mxu0
  %v512 = vadd.f32 0.0, %v511
  %v513 = vpop.f32.mrf.mxu0
  %514 = vmatprep.mubr.bf16.mxu0 0
  %515 = vmatmul.mubr.bf16.gmra.mxu0 %v228
  %v516 = vpop.f32.mrf.mxu0
  %v517 = vadd.f32 0.0, %v516
  %v518 = vpop.f32.mrf.mxu0
  %v519 = vpop.f32.mrf.mxu0
  %v520 = vadd.f32 0.0, %v519
  %v521 = vpop.f32.mrf.mxu0
  %522 = vdwg.mxu0
  %v555 = vrot.slane %v285, 2
  %v556 = vrot.slane %v277, 2
  %v557 = vrot.slane %v269, 2
  %v558 = vrot.slane %v293, 2
  %v559 = vrot.slane %v301, 2
  %v560 = vrot.slane %v309, 2
  %v561 = vrot.slane %v317, 2
  %v562 = vrot.slane %v325, 2
  %v563 = vrot.slane %v333, 2
  %v564 = vrot.slane %v341, 2
  %v565 = vrot.slane %v349, 2
  %v566 = vrot.slane %v357, 2
  %v567 = vrot.slane %v365, 2
  %v568 = vrot.slane %v373, 2
  %v569 = vrot.slane %v381, 2
  %v570 = vrot.slane %v389, 2
  %v571 = vrot.slane %v413, 2
  %v572 = vrot.slane %v405, 2
  %v573 = vrot.slane %v397, 2
  %v574 = vrot.slane %v421, 2
  %v575 = vrot.slane %v429, 2
  %v576 = vrot.slane %v437, 2
  %v577 = vrot.slane %v445, 2
  %v578 = vrot.slane %v453, 2
  %v579 = vrot.slane %v461, 2
  %v580 = vrot.slane %v469, 2
  %v581 = vrot.slane %v477, 2
  %v582 = vrot.slane %v485, 2
  %v583 = vrot.slane %v493, 2
  %v584 = vrot.slane %v501, 2
  %v585 = vrot.slane %v509, 2
  %v586 = vrot.slane %v517, 2
  %v651 = vrot.slane %v285, 6
  %v652 = vrot.slane %v288, 6
  %v653 = vsel %vm230, %v651, %v652
  %v654 = vrot.slane %v277, 6
  %v655 = vrot.slane %v280, 6
  %v656 = vsel %vm230, %v654, %v655
  %v657 = vrot.slane %v269, 6
  %v658 = vrot.slane %v272, 6
  %v659 = vsel %vm230, %v657, %v658
  %v660 = vrot.slane %v293, 6
  %v661 = vrot.slane %v296, 6
  %v662 = vsel %vm230, %v660, %v661
  %v663 = vrot.slane %v301, 6
  %v664 = vrot.slane %v304, 6
  %v665 = vsel %vm230, %v663, %v664
  %v666 = vrot.slane %v309, 6
  %v667 = vrot.slane %v312, 6
  %v668 = vsel %vm230, %v666, %v667
  %v669 = vrot.slane %v317, 6
  %v670 = vrot.slane %v320, 6
  %v671 = vsel %vm230, %v669, %v670
  %v672 = vrot.slane %v325, 6
  %v673 = vrot.slane %v328, 6
  %v674 = vsel %vm230, %v672, %v673
  %v675 = vrot.slane %v333, 6
  %v676 = vrot.slane %v336, 6
  %v677 = vsel %vm230, %v675, %v676
  %v678 = vrot.slane %v341, 6
  %v679 = vrot.slane %v344, 6
  %v680 = vsel %vm230, %v678, %v679
  %v681 = vrot.slane %v349, 6
  %v682 = vrot.slane %v352, 6
  %v683 = vsel %vm230, %v681, %v682
  %v684 = vrot.slane %v357, 6
  %v685 = vrot.slane %v360, 6
  %v686 = vsel %vm230, %v684, %v685
  %v687 = vrot.slane %v365, 6
  %v688 = vrot.slane %v368, 6
  %v689 = vsel %vm230, %v687, %v688
  %v690 = vrot.slane %v373, 6
  %v691 = vrot.slane %v376, 6
  %v692 = vsel %vm230, %v690, %v691
  %v693 = vrot.slane %v381, 6
  %v694 = vrot.slane %v384, 6
  %v695 = vsel %vm230, %v693, %v694
  %v696 = vrot.slane %v389, 6
  %v697 = vrot.slane %v392, 6
  %v698 = vsel %vm230, %v696, %v697
  %v699 = vrot.slane %v413, 6
  %v700 = vrot.slane %v416, 6
  %v701 = vsel %vm230, %v699, %v700
  %v702 = vrot.slane %v405, 6
  %v703 = vrot.slane %v408, 6
  %v704 = vsel %vm230, %v702, %v703
  %v705 = vrot.slane %v397, 6
  %v706 = vrot.slane %v400, 6
  %v707 = vsel %vm230, %v705, %v706
  %v708 = vrot.slane %v421, 6
  %v709 = vrot.slane %v424, 6
  %v710 = vsel %vm230, %v708, %v709
  %v711 = vrot.slane %v429, 6
  %v712 = vrot.slane %v432, 6
  %v713 = vsel %vm230, %v711, %v712
  %v714 = vrot.slane %v437, 6
  %v715 = vrot.slane %v440, 6
  %v716 = vsel %vm230, %v714, %v715
  %v717 = vrot.slane %v445, 6
  %v718 = vrot.slane %v448, 6
  %v719 = vsel %vm230, %v717, %v718
  %v720 = vrot.slane %v453, 6
  %v721 = vrot.slane %v456, 6
  %v722 = vsel %vm230, %v720, %v721
  %v723 = vrot.slane %v461, 6
  %v724 = vrot.slane %v464, 6
  %v725 = vsel %vm230, %v723, %v724
  %v726 = vrot.slane %v469, 6
  %v727 = vrot.slane %v472, 6
  %v728 = vsel %vm230, %v726, %v727
  %v729 = vrot.slane %v477, 6
  %v730 = vrot.slane %v480, 6
  %v731 = vsel %vm230, %v729, %v730
  %v732 = vrot.slane %v485, 6
  %v733 = vrot.slane %v488, 6
  %v734 = vsel %vm230, %v732, %v733
  %v735 = vrot.slane %v493, 6
  %v736 = vrot.slane %v496, 6
  %v737 = vsel %vm230, %v735, %v736
  %v738 = vrot.slane %v501, 6
  %v739 = vrot.slane %v504, 6
  %v740 = vsel %vm230, %v738, %v739
  %v741 = vrot.slane %v509, 6
  %v742 = vrot.slane %v512, 6
  %v743 = vsel %vm230, %v741, %v742
  %v744 = vrot.slane %v517, 6
  %v745 = vrot.slane %v520, 6
  %v746 = vsel %vm230, %v744, %v745
  %v839 = vrot.slane %v288, 4
  %v840 = vrot.slane %v280, 4
  %v841 = vrot.slane %v272, 4
  %v842 = vrot.slane %v296, 4
  %v843 = vrot.slane %v304, 4
  %v844 = vrot.slane %v312, 4
  %v845 = vrot.slane %v320, 4
  %v846 = vrot.slane %v328, 4
  %v847 = vrot.slane %v336, 4
  %v848 = vrot.slane %v344, 4
  %v849 = vrot.slane %v352, 4
  %v850 = vrot.slane %v360, 4
  %v851 = vrot.slane %v368, 4
  %v852 = vrot.slane %v376, 4
  %v853 = vrot.slane %v384, 4
  %v854 = vrot.slane %v392, 4
  %v855 = vrot.slane %v416, 4
  %v856 = vrot.slane %v408, 4
  %v857 = vrot.slane %v400, 4
  %v858 = vrot.slane %v424, 4
  %v859 = vrot.slane %v432, 4
  %v860 = vrot.slane %v440, 4
  %v861 = vrot.slane %v448, 4
  %v862 = vrot.slane %v456, 4
  %v863 = vrot.slane %v464, 4
  %v864 = vrot.slane %v472, 4
  %v865 = vrot.slane %v480, 4
  %v866 = vrot.slane %v488, 4
  %v867 = vrot.slane %v496, 4
  %v868 = vrot.slane %v504, 4
  %v869 = vrot.slane %v512, 4
  %v870 = vrot.slane %v520, 4
  %v903 = vrot.slane %v288, 2
  %v904 = vrot.slane %v280, 2
  %v905 = vrot.slane %v272, 2
  %v906 = vrot.slane %v296, 2
  %v907 = vrot.slane %v304, 2
  %v908 = vrot.slane %v312, 2
  %v909 = vrot.slane %v320, 2
  %v910 = vrot.slane %v328, 2
  %v911 = vrot.slane %v336, 2
  %v912 = vrot.slane %v344, 2
  %v913 = vrot.slane %v352, 2
  %v914 = vrot.slane %v360, 2
  %v915 = vrot.slane %v368, 2
  %v916 = vrot.slane %v376, 2
  %v917 = vrot.slane %v384, 2
  %v918 = vrot.slane %v392, 2
  %v919 = vrot.slane %v416, 2
  %v920 = vrot.slane %v408, 2
  %v921 = vrot.slane %v400, 2
  %v922 = vrot.slane %v424, 2
  %v923 = vrot.slane %v432, 2
  %v924 = vrot.slane %v440, 2
  %v925 = vrot.slane %v448, 2
  %v926 = vrot.slane %v456, 2
  %v927 = vrot.slane %v464, 2
  %v928 = vrot.slane %v472, 2
  %v929 = vrot.slane %v480, 2
  %v930 = vrot.slane %v488, 2
  %v931 = vrot.slane %v496, 2
  %v932 = vrot.slane %v504, 2
  %v933 = vrot.slane %v512, 2
  %v934 = vrot.slane %v520, 2
  %vm967 = vcmask 1040384
  %v968 = vsel %vm967, %v555, %v285
  %v969 = vsel %vm967, %v556, %v277
  %v970 = vsel %vm967, %v557, %v269
  %v971 = vsel %vm967, %v558, %v293
  %v972 = vsel %vm967, %v559, %v301
  %v973 = vsel %vm967, %v560, %v309
  %v974 = vsel %vm967, %v561, %v317
  %v975 = vsel %vm967, %v562, %v325
  %v976 = vsel %vm967, %v563, %v333
  %v977 = vsel %vm967, %v564, %v341
  %v978 = vsel %vm967, %v565, %v349
  %v979 = vsel %vm967, %v566, %v357
  %v980 = vsel %vm967, %v567, %v365
  %v981 = vsel %vm967, %v568, %v373
  %v982 = vsel %vm967, %v569, %v381
  %v983 = vsel %vm967, %v570, %v389
  %v984 = vsel %vm967, %v571, %v413
  %v985 = vsel %vm967, %v572, %v405
  %v986 = vsel %vm967, %v573, %v397
  %v987 = vsel %vm967, %v574, %v421
  %v988 = vsel %vm967, %v575, %v429
  %v989 = vsel %vm967, %v576, %v437
  %v990 = vsel %vm967, %v577, %v445
  %v991 = vsel %vm967, %v578, %v453
  %v992 = vsel %vm967, %v579, %v461
  %v993 = vsel %vm967, %v580, %v469
  %v994 = vsel %vm967, %v581, %v477
  %v995 = vsel %vm967, %v582, %v485
  %v996 = vsel %vm967, %v583, %v493
  %v997 = vsel %vm967, %v584, %v501
  %v998 = vsel %vm967, %v585, %v509
  %v999 = vsel %vm967, %v586, %v517
  %v1000 = vsel %vm230, %v968, %v651
  %v1001 = vsel %vm230, %v969, %v654
  %v1002 = vsel %vm230, %v970, %v657
  %v1003 = vsel %vm230, %v971, %v660
  %v1004 = vsel %vm230, %v972, %v663
  %v1005 = vsel %vm230, %v973, %v666
  %v1006 = vsel %vm230, %v974, %v669
  %v1007 = vsel %vm230, %v975, %v672
  %v1008 = vsel %vm230, %v976, %v675
  %v1009 = vsel %vm230, %v977, %v678
  %v1010 = vsel %vm230, %v978, %v681
  %v1011 = vsel %vm230, %v979, %v684
  %v1012 = vsel %vm230, %v980, %v687
  %v1013 = vsel %vm230, %v981, %v690
  %v1014 = vsel %vm230, %v982, %v693
  %v1015 = vsel %vm230, %v983, %v696
  %v1016 = vsel %vm230, %v984, %v699
  %v1017 = vsel %vm230, %v985, %v702
  %v1018 = vsel %vm230, %v986, %v705
  %v1019 = vsel %vm230, %v987, %v708
  %v1020 = vsel %vm230, %v988, %v711
  %v1021 = vsel %vm230, %v989, %v714
  %v1022 = vsel %vm230, %v990, %v717
  %v1023 = vsel %vm230, %v991, %v720
  %v1024 = vsel %vm230, %v992, %v723
  %v1025 = vsel %vm230, %v993, %v726
  %v1026 = vsel %vm230, %v994, %v729
  %v1027 = vsel %vm230, %v995, %v732
  %v1028 = vsel %vm230, %v996, %v735
  %v1029 = vsel %vm230, %v997, %v738
  %v1030 = vsel %vm230, %v998, %v741
  %v1031 = vsel %vm230, %v999, %v744
  %v1032 = vsel %vm230, %v652, %v839
  %v1033 = vsel %vm230, %v655, %v840
  %v1034 = vsel %vm230, %v658, %v841
  %v1035 = vsel %vm230, %v661, %v842
  %v1036 = vsel %vm230, %v664, %v843
  %v1037 = vsel %vm230, %v667, %v844
  %v1038 = vsel %vm230, %v670, %v845
  %v1039 = vsel %vm230, %v673, %v846
  %v1040 = vsel %vm230, %v676, %v847
  %v1041 = vsel %vm230, %v679, %v848
  %v1042 = vsel %vm230, %v682, %v849
  %v1043 = vsel %vm230, %v685, %v850
  %v1044 = vsel %vm230, %v688, %v851
  %v1045 = vsel %vm230, %v691, %v852
  %v1046 = vsel %vm230, %v694, %v853
  %v1047 = vsel %vm230, %v697, %v854
  %v1048 = vsel %vm230, %v700, %v855
  %v1049 = vsel %vm230, %v703, %v856
  %v1050 = vsel %vm230, %v706, %v857
  %v1051 = vsel %vm230, %v709, %v858
  %v1052 = vsel %vm230, %v712, %v859
  %v1053 = vsel %vm230, %v715, %v860
  %v1054 = vsel %vm230, %v718, %v861
  %v1055 = vsel %vm230, %v721, %v862
  %v1056 = vsel %vm230, %v724, %v863
  %v1057 = vsel %vm230, %v727, %v864
  %v1058 = vsel %vm230, %v730, %v865
  %v1059 = vsel %vm230, %v733, %v866
  %v1060 = vsel %vm230, %v736, %v867
  %v1061 = vsel %vm230, %v739, %v868
  %v1062 = vsel %vm230, %v742, %v869
  %v1063 = vsel %vm230, %v745, %v870
  %vm1064 = vcmask 1042432
  %v1065 = vsel %vm1064, %v1032, %v903
  %v1066 = vsel %vm1064, %v1033, %v904
  %v1067 = vsel %vm1064, %v1034, %v905
  %v1068 = vsel %vm1064, %v1035, %v906
  %v1069 = vsel %vm1064, %v1036, %v907
  %v1070 = vsel %vm1064, %v1037, %v908
  %v1071 = vsel %vm1064, %v1038, %v909
  %v1072 = vsel %vm1064, %v1039, %v910
  %v1073 = vsel %vm1064, %v1040, %v911
  %v1074 = vsel %vm1064, %v1041, %v912
  %v1075 = vsel %vm1064, %v1042, %v913
  %v1076 = vsel %vm1064, %v1043, %v914
  %v1077 = vsel %vm1064, %v1044, %v915
  %v1078 = vsel %vm1064, %v1045, %v916
  %v1079 = vsel %vm1064, %v1046, %v917
  %v1080 = vsel %vm1064, %v1047, %v918
  %v1081 = vsel %vm1064, %v1048, %v919
  %v1082 = vsel %vm1064, %v1049, %v920
  %v1083 = vsel %vm1064, %v1050, %v921
  %v1084 = vsel %vm1064, %v1051, %v922
  %v1085 = vsel %vm1064, %v1052, %v923
  %v1086 = vsel %vm1064, %v1053, %v924
  %v1087 = vsel %vm1064, %v1054, %v925
  %v1088 = vsel %vm1064, %v1055, %v926
  %v1089 = vsel %vm1064, %v1056, %v927
  %v1090 = vsel %vm1064, %v1057, %v928
  %v1091 = vsel %vm1064, %v1058, %v929
  %v1092 = vsel %vm1064, %v1059, %v930
  %v1093 = vsel %vm1064, %v1060, %v931
  %v1094 = vsel %vm1064, %v1061, %v932
  %v1095 = vsel %vm1064, %v1062, %v933
  %v1096 = vsel %vm1064, %v1063, %v934
  %vm1153 = vcmask 1045504
  %v1154 = vrot.slane %v1000, 2
  %v1155 = vrot.slane %v653, 2
  %v1156 = vsel %vm1153, %v1154, %v1155
  %v1157 = vrot.slane %v1065, 2
  %v1158 = vsel %vm1153, %v1155, %v1157
  %v1159 = vrot.slane %v1001, 2
  %v1160 = vrot.slane %v656, 2
  %v1161 = vsel %vm1153, %v1159, %v1160
  %v1162 = vrot.slane %v1066, 2
  %v1163 = vsel %vm1153, %v1160, %v1162
  %v1164 = vrot.slane %v1002, 2
  %v1165 = vrot.slane %v659, 2
  %v1166 = vsel %vm1153, %v1164, %v1165
  %v1167 = vrot.slane %v1067, 2
  %v1168 = vsel %vm1153, %v1165, %v1167
  %v1169 = vrot.slane %v1003, 2
  %v1170 = vrot.slane %v662, 2
  %v1171 = vsel %vm1153, %v1169, %v1170
  %v1172 = vrot.slane %v1068, 2
  %v1173 = vsel %vm1153, %v1170, %v1172
  %v1174 = vrot.slane %v1004, 2
  %v1175 = vrot.slane %v665, 2
  %v1176 = vsel %vm1153, %v1174, %v1175
  %v1177 = vrot.slane %v1069, 2
  %v1178 = vsel %vm1153, %v1175, %v1177
  %v1179 = vrot.slane %v1005, 2
  %v1180 = vrot.slane %v668, 2
  %v1181 = vsel %vm1153, %v1179, %v1180
  %v1182 = vrot.slane %v1070, 2
  %v1183 = vsel %vm1153, %v1180, %v1182
  %v1184 = vrot.slane %v1006, 2
  %v1185 = vrot.slane %v671, 2
  %v1186 = vsel %vm1153, %v1184, %v1185
  %v1187 = vrot.slane %v1071, 2
  %v1188 = vsel %vm1153, %v1185, %v1187
  %v1189 = vrot.slane %v1007, 2
  %v1190 = vrot.slane %v674, 2
  %v1191 = vsel %vm1153, %v1189, %v1190
  %v1192 = vrot.slane %v1072, 2
  %v1193 = vsel %vm1153, %v1190, %v1192
  %v1194 = vrot.slane %v1008, 2
  %v1195 = vrot.slane %v677, 2
  %v1196 = vsel %vm1153, %v1194, %v1195
  %v1197 = vrot.slane %v1073, 2
  %v1198 = vsel %vm1153, %v1195, %v1197
  %v1199 = vrot.slane %v1009, 2
  %v1200 = vrot.slane %v680, 2
  %v1201 = vsel %vm1153, %v1199, %v1200
  %v1202 = vrot.slane %v1074, 2
  %v1203 = vsel %vm1153, %v1200, %v1202
  %v1204 = vrot.slane %v1010, 2
  %v1205 = vrot.slane %v683, 2
  %v1206 = vsel %vm1153, %v1204, %v1205
  %v1207 = vrot.slane %v1075, 2
  %v1208 = vsel %vm1153, %v1205, %v1207
  %v1209 = vrot.slane %v1011, 2
  %v1210 = vrot.slane %v686, 2
  %v1211 = vsel %vm1153, %v1209, %v1210
  %v1212 = vrot.slane %v1076, 2
  %v1213 = vsel %vm1153, %v1210, %v1212
  %v1214 = vrot.slane %v1012, 2
  %v1215 = vrot.slane %v689, 2
  %v1216 = vsel %vm1153, %v1214, %v1215
  %v1217 = vrot.slane %v1077, 2
  %v1218 = vsel %vm1153, %v1215, %v1217
  %v1219 = vrot.slane %v1013, 2
  %v1220 = vrot.slane %v692, 2
  %v1221 = vsel %vm1153, %v1219, %v1220
  %v1222 = vrot.slane %v1078, 2
  %v1223 = vsel %vm1153, %v1220, %v1222
  %v1224 = vrot.slane %v1016, 2
  %v1225 = vrot.slane %v701, 2
  %v1226 = vsel %vm1153, %v1224, %v1225
  %v1227 = vrot.slane %v1081, 2
  %v1228 = vsel %vm1153, %v1225, %v1227
  %v1229 = vrot.slane %v1017, 2
  %v1230 = vrot.slane %v704, 2
  %v1231 = vsel %vm1153, %v1229, %v1230
  %v1232 = vrot.slane %v1082, 2
  %v1233 = vsel %vm1153, %v1230, %v1232
  %v1234 = vrot.slane %v1018, 2
  %v1235 = vrot.slane %v707, 2
  %v1236 = vsel %vm1153, %v1234, %v1235
  %v1237 = vrot.slane %v1083, 2
  %v1238 = vsel %vm1153, %v1235, %v1237
  %v1239 = vrot.slane %v1019, 2
  %v1240 = vrot.slane %v710, 2
  %v1241 = vsel %vm1153, %v1239, %v1240
  %v1242 = vrot.slane %v1084, 2
  %v1243 = vsel %vm1153, %v1240, %v1242
  %v1244 = vrot.slane %v1020, 2
  %v1245 = vrot.slane %v713, 2
  %v1246 = vsel %vm1153, %v1244, %v1245
  %v1247 = vrot.slane %v1085, 2
  %v1248 = vsel %vm1153, %v1245, %v1247
  %v1249 = vrot.slane %v1021, 2
  %v1250 = vrot.slane %v716, 2
  %v1251 = vsel %vm1153, %v1249, %v1250
  %v1252 = vrot.slane %v1086, 2
  %v1253 = vsel %vm1153, %v1250, %v1252
  %v1254 = vrot.slane %v1022, 2
  %v1255 = vrot.slane %v719, 2
  %v1256 = vsel %vm1153, %v1254, %v1255
  %v1257 = vrot.slane %v1087, 2
  %v1258 = vsel %vm1153, %v1255, %v1257
  %v1259 = vrot.slane %v1023, 2
  %v1260 = vrot.slane %v722, 2
  %v1261 = vsel %vm1153, %v1259, %v1260
  %v1262 = vrot.slane %v1088, 2
  %v1263 = vsel %vm1153, %v1260, %v1262
  %v1264 = vrot.slane %v1024, 2
  %v1265 = vrot.slane %v725, 2
  %v1266 = vsel %vm1153, %v1264, %v1265
  %v1267 = vrot.slane %v1089, 2
  %v1268 = vsel %vm1153, %v1265, %v1267
  %v1269 = vrot.slane %v1025, 2
  %v1270 = vrot.slane %v728, 2
  %v1271 = vsel %vm1153, %v1269, %v1270
  %v1272 = vrot.slane %v1090, 2
  %v1273 = vsel %vm1153, %v1270, %v1272
  %v1274 = vrot.slane %v1026, 2
  %v1275 = vrot.slane %v731, 2
  %v1276 = vsel %vm1153, %v1274, %v1275
  %v1277 = vrot.slane %v1091, 2
  %v1278 = vsel %vm1153, %v1275, %v1277
  %v1279 = vrot.slane %v1027, 2
  %v1280 = vrot.slane %v734, 2
  %v1281 = vsel %vm1153, %v1279, %v1280
  %v1282 = vrot.slane %v1092, 2
  %v1283 = vsel %vm1153, %v1280, %v1282
  %v1284 = vrot.slane %v1028, 2
  %v1285 = vrot.slane %v737, 2
  %v1286 = vsel %vm1153, %v1284, %v1285
  %v1287 = vrot.slane %v1093, 2
  %v1288 = vsel %vm1153, %v1285, %v1287
  %v1289 = vrot.slane %v1029, 2
  %v1290 = vrot.slane %v740, 2
  %v1291 = vsel %vm1153, %v1289, %v1290
  %v1292 = vrot.slane %v1094, 2
  %v1293 = vsel %vm1153, %v1290, %v1292
  %vm1294 = vcmask 1043456
  %v1295 = vrot.slane %v1000, 4
  %v1296 = vrot.slane %v653, 4
  %v1297 = vsel %vm1294, %v1295, %v1296
  %v1298 = vrot.slane %v1065, 4
  %v1299 = vsel %vm1294, %v1296, %v1298
  %v1300 = vrot.slane %v1001, 4
  %v1301 = vrot.slane %v656, 4
  %v1302 = vsel %vm1294, %v1300, %v1301
  %v1303 = vrot.slane %v1066, 4
  %v1304 = vsel %vm1294, %v1301, %v1303
  %v1305 = vrot.slane %v1002, 4
  %v1306 = vrot.slane %v659, 4
  %v1307 = vsel %vm1294, %v1305, %v1306
  %v1308 = vrot.slane %v1067, 4
  %v1309 = vsel %vm1294, %v1306, %v1308
  %v1310 = vrot.slane %v1003, 4
  %v1311 = vrot.slane %v662, 4
  %v1312 = vsel %vm1294, %v1310, %v1311
  %v1313 = vrot.slane %v1068, 4
  %v1314 = vsel %vm1294, %v1311, %v1313
  %v1315 = vrot.slane %v1004, 4
  %v1316 = vrot.slane %v665, 4
  %v1317 = vsel %vm1294, %v1315, %v1316
  %v1318 = vrot.slane %v1069, 4
  %v1319 = vsel %vm1294, %v1316, %v1318
  %v1320 = vrot.slane %v1005, 4
  %v1321 = vrot.slane %v668, 4
  %v1322 = vsel %vm1294, %v1320, %v1321
  %v1323 = vrot.slane %v1070, 4
  %v1324 = vsel %vm1294, %v1321, %v1323
  %v1325 = vrot.slane %v1006, 4
  %v1326 = vrot.slane %v671, 4
  %v1327 = vsel %vm1294, %v1325, %v1326
  %v1328 = vrot.slane %v1071, 4
  %v1329 = vsel %vm1294, %v1326, %v1328
  %v1330 = vrot.slane %v1007, 4
  %v1331 = vrot.slane %v674, 4
  %v1332 = vsel %vm1294, %v1330, %v1331
  %v1333 = vrot.slane %v1072, 4
  %v1334 = vsel %vm1294, %v1331, %v1333
  %v1335 = vrot.slane %v1008, 4
  %v1336 = vrot.slane %v677, 4
  %v1337 = vsel %vm1294, %v1335, %v1336
  %v1338 = vrot.slane %v1073, 4
  %v1339 = vsel %vm1294, %v1336, %v1338
  %v1340 = vrot.slane %v1009, 4
  %v1341 = vrot.slane %v680, 4
  %v1342 = vsel %vm1294, %v1340, %v1341
  %v1343 = vrot.slane %v1074, 4
  %v1344 = vsel %vm1294, %v1341, %v1343
  %v1345 = vrot.slane %v1010, 4
  %v1346 = vrot.slane %v683, 4
  %v1347 = vsel %vm1294, %v1345, %v1346
  %v1348 = vrot.slane %v1075, 4
  %v1349 = vsel %vm1294, %v1346, %v1348
  %v1350 = vrot.slane %v1011, 4
  %v1351 = vrot.slane %v686, 4
  %v1352 = vsel %vm1294, %v1350, %v1351
  %v1353 = vrot.slane %v1076, 4
  %v1354 = vsel %vm1294, %v1351, %v1353
  %v1355 = vrot.slane %v1012, 4
  %v1356 = vrot.slane %v689, 4
  %v1357 = vsel %vm1294, %v1355, %v1356
  %v1358 = vrot.slane %v1077, 4
  %v1359 = vsel %vm1294, %v1356, %v1358
  %v1360 = vrot.slane %v1013, 4
  %v1361 = vrot.slane %v692, 4
  %v1362 = vsel %vm1294, %v1360, %v1361
  %v1363 = vrot.slane %v1078, 4
  %v1364 = vsel %vm1294, %v1361, %v1363
  %v1365 = vrot.slane %v1016, 4
  %v1366 = vrot.slane %v701, 4
  %v1367 = vsel %vm1294, %v1365, %v1366
  %v1368 = vrot.slane %v1081, 4
  %v1369 = vsel %vm1294, %v1366, %v1368
  %v1370 = vrot.slane %v1017, 4
  %v1371 = vrot.slane %v704, 4
  %v1372 = vsel %vm1294, %v1370, %v1371
  %v1373 = vrot.slane %v1082, 4
  %v1374 = vsel %vm1294, %v1371, %v1373
  %v1375 = vrot.slane %v1018, 4
  %v1376 = vrot.slane %v707, 4
  %v1377 = vsel %vm1294, %v1375, %v1376
  %v1378 = vrot.slane %v1083, 4
  %v1379 = vsel %vm1294, %v1376, %v1378
  %v1380 = vrot.slane %v1019, 4
  %v1381 = vrot.slane %v710, 4
  %v1382 = vsel %vm1294, %v1380, %v1381
  %v1383 = vrot.slane %v1084, 4
  %v1384 = vsel %vm1294, %v1381, %v1383
  %v1385 = vrot.slane %v1020, 4
  %v1386 = vrot.slane %v713, 4
  %v1387 = vsel %vm1294, %v1385, %v1386
  %v1388 = vrot.slane %v1085, 4
  %v1389 = vsel %vm1294, %v1386, %v1388
  %v1390 = vrot.slane %v1021, 4
  %v1391 = vrot.slane %v716, 4
  %v1392 = vsel %vm1294, %v1390, %v1391
  %v1393 = vrot.slane %v1086, 4
  %v1394 = vsel %vm1294, %v1391, %v1393
  %v1395 = vrot.slane %v1022, 4
  %v1396 = vrot.slane %v719, 4
  %v1397 = vsel %vm1294, %v1395, %v1396
  %v1398 = vrot.slane %v1087, 4
  %v1399 = vsel %vm1294, %v1396, %v1398
  %v1400 = vrot.slane %v1023, 4
  %v1401 = vrot.slane %v722, 4
  %v1402 = vsel %vm1294, %v1400, %v1401
  %v1403 = vrot.slane %v1088, 4
  %v1404 = vsel %vm1294, %v1401, %v1403
  %v1405 = vrot.slane %v1024, 4
  %v1406 = vrot.slane %v725, 4
  %v1407 = vsel %vm1294, %v1405, %v1406
  %v1408 = vrot.slane %v1089, 4
  %v1409 = vsel %vm1294, %v1406, %v1408
  %v1410 = vrot.slane %v1025, 4
  %v1411 = vrot.slane %v728, 4
  %v1412 = vsel %vm1294, %v1410, %v1411
  %v1413 = vrot.slane %v1090, 4
  %v1414 = vsel %vm1294, %v1411, %v1413
  %v1415 = vrot.slane %v1026, 4
  %v1416 = vrot.slane %v731, 4
  %v1417 = vsel %vm1294, %v1415, %v1416
  %v1418 = vrot.slane %v1091, 4
  %v1419 = vsel %vm1294, %v1416, %v1418
  %v1420 = vrot.slane %v1027, 4
  %v1421 = vrot.slane %v734, 4
  %v1422 = vsel %vm1294, %v1420, %v1421
  %v1423 = vrot.slane %v1092, 4
  %v1424 = vsel %vm1294, %v1421, %v1423
  %v1425 = vrot.slane %v1028, 4
  %v1426 = vrot.slane %v737, 4
  %v1427 = vsel %vm1294, %v1425, %v1426
  %v1428 = vrot.slane %v1093, 4
  %v1429 = vsel %vm1294, %v1426, %v1428
  %v1430 = vrot.slane %v1029, 4
  %v1431 = vrot.slane %v740, 4
  %v1432 = vsel %vm1294, %v1430, %v1431
  %v1433 = vrot.slane %v1094, 4
  %v1434 = vsel %vm1294, %v1431, %v1433
  %v1443 = vrot.slane %v1014, 2
  %v1444 = vrot.slane %v695, 2
  %v1445 = vsel %vm1153, %v1443, %v1444
  %v1446 = vrot.slane %v1079, 2
  %v1447 = vsel %vm1153, %v1444, %v1446
  %v1448 = vrot.slane %v1015, 2
  %v1449 = vrot.slane %v698, 2
  %v1450 = vsel %vm1153, %v1448, %v1449
  %v1451 = vrot.slane %v1080, 2
  %v1452 = vsel %vm1153, %v1449, %v1451
  %v1453 = vrot.slane %v1030, 2
  %v1454 = vrot.slane %v743, 2
  %v1455 = vsel %vm1153, %v1453, %v1454
  %v1456 = vrot.slane %v1095, 2
  %v1457 = vsel %vm1153, %v1454, %v1456
  %v1458 = vrot.slane %v1031, 2
  %v1459 = vrot.slane %v746, 2
  %v1460 = vsel %vm1153, %v1458, %v1459
  %v1461 = vrot.slane %v1096, 2
  %v1462 = vsel %vm1153, %v1459, %v1461
  %v1463 = vrot.slane %v1014, 4
  %v1464 = vrot.slane %v695, 4
  %v1465 = vsel %vm1294, %v1463, %v1464
  %v1466 = vrot.slane %v1079, 4
  %v1467 = vsel %vm1294, %v1464, %v1466
  %v1468 = vrot.slane %v1015, 4
  %v1469 = vrot.slane %v698, 4
  %v1470 = vsel %vm1294, %v1468, %v1469
  %v1471 = vrot.slane %v1080, 4
  %v1472 = vsel %vm1294, %v1469, %v1471
  %v1473 = vrot.slane %v1030, 4
  %v1474 = vrot.slane %v743, 4
  %v1475 = vsel %vm1294, %v1473, %v1474
  %v1476 = vrot.slane %v1095, 4
  %v1477 = vsel %vm1294, %v1474, %v1476
  %v1478 = vrot.slane %v1031, 4
  %v1479 = vrot.slane %v746, 4
  %v1480 = vsel %vm1294, %v1478, %v1479
  %v1481 = vrot.slane %v1096, 4
  %v1482 = vsel %vm1294, %v1479, %v1481
  %1483 = vrot.lane.b32.xlu0 %v1156, 8
  %v1484 = vpop.permute.xlu0 %1483
  %1485 = vrot.lane.b32.xlu0 %v1158, 8
  %v1486 = vpop.permute.xlu0 %1485
  %1487 = vrot.lane.b32.xlu0 %v1161, 8
  %v1488 = vpop.permute.xlu0 %1487
  %1489 = vrot.lane.b32.xlu0 %v1163, 8
  %v1490 = vpop.permute.xlu0 %1489
  %1491 = vrot.lane.b32.xlu0 %v1166, 8
  %v1492 = vpop.permute.xlu0 %1491
  %1493 = vrot.lane.b32.xlu0 %v1168, 8
  %v1494 = vpop.permute.xlu0 %1493
  %1495 = vrot.lane.b32.xlu0 %v1171, 8
  %v1496 = vpop.permute.xlu0 %1495
  %1497 = vrot.lane.b32.xlu0 %v1173, 8
  %v1498 = vpop.permute.xlu0 %1497
  %1499 = vrot.lane.b32.xlu0 %v1176, 8
  %v1500 = vpop.permute.xlu0 %1499
  %1501 = vrot.lane.b32.xlu0 %v1178, 8
  %v1502 = vpop.permute.xlu0 %1501
  %1503 = vrot.lane.b32.xlu0 %v1181, 8
  %v1504 = vpop.permute.xlu0 %1503
  %1505 = vrot.lane.b32.xlu0 %v1183, 8
  %v1506 = vpop.permute.xlu0 %1505
  %1507 = vrot.lane.b32.xlu0 %v1186, 8
  %v1508 = vpop.permute.xlu0 %1507
  %1509 = vrot.lane.b32.xlu0 %v1188, 8
  %v1510 = vpop.permute.xlu0 %1509
  %1511 = vrot.lane.b32.xlu0 %v1191, 8
  %v1512 = vpop.permute.xlu0 %1511
  %1513 = vrot.lane.b32.xlu0 %v1193, 8
  %v1514 = vpop.permute.xlu0 %1513
  %1515 = vrot.lane.b32.xlu0 %v1196, 8
  %v1516 = vpop.permute.xlu0 %1515
  %1517 = vrot.lane.b32.xlu0 %v1198, 8
  %v1518 = vpop.permute.xlu0 %1517
  %1519 = vrot.lane.b32.xlu0 %v1201, 8
  %v1520 = vpop.permute.xlu0 %1519
  %1521 = vrot.lane.b32.xlu0 %v1203, 8
  %v1522 = vpop.permute.xlu0 %1521
  %1523 = vrot.lane.b32.xlu0 %v1206, 8
  %v1524 = vpop.permute.xlu0 %1523
  %1525 = vrot.lane.b32.xlu0 %v1208, 8
  %v1526 = vpop.permute.xlu0 %1525
  %1527 = vrot.lane.b32.xlu0 %v1211, 8
  %v1528 = vpop.permute.xlu0 %1527
  %1529 = vrot.lane.b32.xlu0 %v1213, 8
  %v1530 = vpop.permute.xlu0 %1529
  %1531 = vrot.lane.b32.xlu0 %v1216, 8
  %v1532 = vpop.permute.xlu0 %1531
  %1533 = vrot.lane.b32.xlu0 %v1218, 8
  %v1534 = vpop.permute.xlu0 %1533
  %1535 = vrot.lane.b32.xlu0 %v1221, 8
  %v1536 = vpop.permute.xlu0 %1535
  %1537 = vrot.lane.b32.xlu0 %v1223, 8
  %v1538 = vpop.permute.xlu0 %1537
  %1539 = vrot.lane.b32.xlu0 %v1226, 8
  %v1540 = vpop.permute.xlu0 %1539
  %1541 = vrot.lane.b32.xlu0 %v1228, 8
  %v1542 = vpop.permute.xlu0 %1541
  %1543 = vrot.lane.b32.xlu0 %v1231, 8
  %v1544 = vpop.permute.xlu0 %1543
  %1545 = vrot.lane.b32.xlu0 %v1233, 8
  %v1546 = vpop.permute.xlu0 %1545
  %1547 = vrot.lane.b32.xlu0 %v1236, 8
  %v1548 = vpop.permute.xlu0 %1547
  %1549 = vrot.lane.b32.xlu0 %v1238, 8
  %v1550 = vpop.permute.xlu0 %1549
  %1551 = vrot.lane.b32.xlu0 %v1241, 8
  %v1552 = vpop.permute.xlu0 %1551
  %1553 = vrot.lane.b32.xlu0 %v1243, 8
  %v1554 = vpop.permute.xlu0 %1553
  %1555 = vrot.lane.b32.xlu0 %v1246, 8
  %v1556 = vpop.permute.xlu0 %1555
  %1557 = vrot.lane.b32.xlu0 %v1248, 8
  %v1558 = vpop.permute.xlu0 %1557
  %1559 = vrot.lane.b32.xlu0 %v1251, 8
  %v1560 = vpop.permute.xlu0 %1559
  %1561 = vrot.lane.b32.xlu0 %v1253, 8
  %v1562 = vpop.permute.xlu0 %1561
  %1563 = vrot.lane.b32.xlu0 %v1256, 8
  %v1564 = vpop.permute.xlu0 %1563
  %1565 = vrot.lane.b32.xlu0 %v1258, 8
  %v1566 = vpop.permute.xlu0 %1565
  %1567 = vrot.lane.b32.xlu0 %v1261, 8
  %v1568 = vpop.permute.xlu0 %1567
  %1569 = vrot.lane.b32.xlu0 %v1263, 8
  %v1570 = vpop.permute.xlu0 %1569
  %1571 = vrot.lane.b32.xlu0 %v1266, 8
  %v1572 = vpop.permute.xlu0 %1571
  %1573 = vrot.lane.b32.xlu0 %v1268, 8
  %v1574 = vpop.permute.xlu0 %1573
  %1575 = vrot.lane.b32.xlu0 %v1271, 8
  %v1576 = vpop.permute.xlu0 %1575
  %1577 = vrot.lane.b32.xlu0 %v1273, 8
  %v1578 = vpop.permute.xlu0 %1577
  %1579 = vrot.lane.b32.xlu0 %v1276, 8
  %v1580 = vpop.permute.xlu0 %1579
  %1581 = vrot.lane.b32.xlu0 %v1278, 8
  %v1582 = vpop.permute.xlu0 %1581
  %1583 = vrot.lane.b32.xlu0 %v1281, 8
  %v1584 = vpop.permute.xlu0 %1583
  %1585 = vrot.lane.b32.xlu0 %v1283, 8
  %v1586 = vpop.permute.xlu0 %1585
  %1587 = vrot.lane.b32.xlu0 %v1286, 8
  %v1588 = vpop.permute.xlu0 %1587
  %1589 = vrot.lane.b32.xlu0 %v1288, 8
  %v1590 = vpop.permute.xlu0 %1589
  %1591 = vrot.lane.b32.xlu0 %v1291, 8
  %v1592 = vpop.permute.xlu0 %1591
  %1593 = vrot.lane.b32.xlu0 %v1293, 8
  %v1594 = vpop.permute.xlu0 %1593
  %1651 = vrot.lane.b32.xlu0 %v1297, 16
  %v1652 = vpop.permute.xlu0 %1651
  %1653 = vrot.lane.b32.xlu0 %v1299, 16
  %v1654 = vpop.permute.xlu0 %1653
  %1655 = vrot.lane.b32.xlu0 %v1302, 16
  %v1656 = vpop.permute.xlu0 %1655
  %1657 = vrot.lane.b32.xlu0 %v1304, 16
  %v1658 = vpop.permute.xlu0 %1657
  %1659 = vrot.lane.b32.xlu0 %v1307, 16
  %v1660 = vpop.permute.xlu0 %1659
  %1661 = vrot.lane.b32.xlu0 %v1309, 16
  %v1662 = vpop.permute.xlu0 %1661
  %1663 = vrot.lane.b32.xlu0 %v1312, 16
  %v1664 = vpop.permute.xlu0 %1663
  %1665 = vrot.lane.b32.xlu0 %v1314, 16
  %v1666 = vpop.permute.xlu0 %1665
  %1667 = vrot.lane.b32.xlu0 %v1317, 16
  %v1668 = vpop.permute.xlu0 %1667
  %1669 = vrot.lane.b32.xlu0 %v1319, 16
  %v1670 = vpop.permute.xlu0 %1669
  %1671 = vrot.lane.b32.xlu0 %v1322, 16
  %v1672 = vpop.permute.xlu0 %1671
  %1673 = vrot.lane.b32.xlu0 %v1324, 16
  %v1674 = vpop.permute.xlu0 %1673
  %1675 = vrot.lane.b32.xlu0 %v1327, 16
  %v1676 = vpop.permute.xlu0 %1675
  %1677 = vrot.lane.b32.xlu0 %v1329, 16
  %v1678 = vpop.permute.xlu0 %1677
  %1679 = vrot.lane.b32.xlu0 %v1332, 16
  %v1680 = vpop.permute.xlu0 %1679
  %1681 = vrot.lane.b32.xlu0 %v1334, 16
  %v1682 = vpop.permute.xlu0 %1681
  %1683 = vrot.lane.b32.xlu0 %v1337, 16
  %v1684 = vpop.permute.xlu0 %1683
  %1685 = vrot.lane.b32.xlu0 %v1339, 16
  %v1686 = vpop.permute.xlu0 %1685
  %1687 = vrot.lane.b32.xlu0 %v1342, 16
  %v1688 = vpop.permute.xlu0 %1687
  %1689 = vrot.lane.b32.xlu0 %v1344, 16
  %v1690 = vpop.permute.xlu0 %1689
  %1691 = vrot.lane.b32.xlu0 %v1347, 16
  %v1692 = vpop.permute.xlu0 %1691
  %1693 = vrot.lane.b32.xlu0 %v1349, 16
  %v1694 = vpop.permute.xlu0 %1693
  %1695 = vrot.lane.b32.xlu0 %v1352, 16
  %v1696 = vpop.permute.xlu0 %1695
  %1697 = vrot.lane.b32.xlu0 %v1354, 16
  %v1698 = vpop.permute.xlu0 %1697
  %1699 = vrot.lane.b32.xlu0 %v1357, 16
  %v1700 = vpop.permute.xlu0 %1699
  %1701 = vrot.lane.b32.xlu0 %v1359, 16
  %v1702 = vpop.permute.xlu0 %1701
  %1703 = vrot.lane.b32.xlu0 %v1362, 16
  %v1704 = vpop.permute.xlu0 %1703
  %1705 = vrot.lane.b32.xlu0 %v1364, 16
  %v1706 = vpop.permute.xlu0 %1705
  %1707 = vrot.lane.b32.xlu0 %v1367, 16
  %v1708 = vpop.permute.xlu0 %1707
  %1709 = vrot.lane.b32.xlu0 %v1369, 16
  %v1710 = vpop.permute.xlu0 %1709
  %1711 = vrot.lane.b32.xlu0 %v1372, 16
  %v1712 = vpop.permute.xlu0 %1711
  %1713 = vrot.lane.b32.xlu0 %v1374, 16
  %v1714 = vpop.permute.xlu0 %1713
  %1715 = vrot.lane.b32.xlu0 %v1377, 16
  %v1716 = vpop.permute.xlu0 %1715
  %1717 = vrot.lane.b32.xlu0 %v1379, 16
  %v1718 = vpop.permute.xlu0 %1717
  %1719 = vrot.lane.b32.xlu0 %v1382, 16
  %v1720 = vpop.permute.xlu0 %1719
  %1721 = vrot.lane.b32.xlu0 %v1384, 16
  %v1722 = vpop.permute.xlu0 %1721
  %1723 = vrot.lane.b32.xlu0 %v1387, 16
  %v1724 = vpop.permute.xlu0 %1723
  %1725 = vrot.lane.b32.xlu0 %v1389, 16
  %v1726 = vpop.permute.xlu0 %1725
  %1727 = vrot.lane.b32.xlu0 %v1392, 16
  %v1728 = vpop.permute.xlu0 %1727
  %1729 = vrot.lane.b32.xlu0 %v1394, 16
  %v1730 = vpop.permute.xlu0 %1729
  %1731 = vrot.lane.b32.xlu0 %v1397, 16
  %v1732 = vpop.permute.xlu0 %1731
  %1733 = vrot.lane.b32.xlu0 %v1399, 16
  %v1734 = vpop.permute.xlu0 %1733
  %1735 = vrot.lane.b32.xlu0 %v1402, 16
  %v1736 = vpop.permute.xlu0 %1735
  %1737 = vrot.lane.b32.xlu0 %v1404, 16
  %v1738 = vpop.permute.xlu0 %1737
  %1739 = vrot.lane.b32.xlu0 %v1407, 16
  %v1740 = vpop.permute.xlu0 %1739
  %1741 = vrot.lane.b32.xlu0 %v1409, 16
  %v1742 = vpop.permute.xlu0 %1741
  %1743 = vrot.lane.b32.xlu0 %v1412, 16
  %v1744 = vpop.permute.xlu0 %1743
  %1745 = vrot.lane.b32.xlu0 %v1414, 16
  %v1746 = vpop.permute.xlu0 %1745
  %1747 = vrot.lane.b32.xlu0 %v1417, 16
  %v1748 = vpop.permute.xlu0 %1747
  %1749 = vrot.lane.b32.xlu0 %v1419, 16
  %v1750 = vpop.permute.xlu0 %1749
  %1751 = vrot.lane.b32.xlu0 %v1422, 16
  %v1752 = vpop.permute.xlu0 %1751
  %1753 = vrot.lane.b32.xlu0 %v1424, 16
  %v1754 = vpop.permute.xlu0 %1753
  %1755 = vrot.lane.b32.xlu0 %v1427, 16
  %v1756 = vpop.permute.xlu0 %1755
  %1757 = vrot.lane.b32.xlu0 %v1429, 16
  %v1758 = vpop.permute.xlu0 %1757
  %1759 = vrot.lane.b32.xlu0 %v1432, 16
  %v1760 = vpop.permute.xlu0 %1759
  %1761 = vrot.lane.b32.xlu0 %v1434, 16
  %v1762 = vpop.permute.xlu0 %1761
  %1819 = vrot.lane.b32.xlu0 %v1002, 24
  %v1820 = vpop.permute.xlu0 %1819
  %1821 = vrot.lane.b32.xlu0 %v659, 24
  %v1822 = vpop.permute.xlu0 %1821
  %1823 = vrot.lane.b32.xlu0 %v1001, 24
  %v1824 = vpop.permute.xlu0 %1823
  %1825 = vrot.lane.b32.xlu0 %v656, 24
  %v1826 = vpop.permute.xlu0 %1825
  %1827 = vrot.lane.b32.xlu0 %v1000, 24
  %v1828 = vpop.permute.xlu0 %1827
  %1829 = vrot.lane.b32.xlu0 %v653, 24
  %v1830 = vpop.permute.xlu0 %1829
  %1831 = vrot.lane.b32.xlu0 %v1003, 24
  %v1832 = vpop.permute.xlu0 %1831
  %1833 = vrot.lane.b32.xlu0 %v662, 24
  %v1834 = vpop.permute.xlu0 %1833
  %1835 = vrot.lane.b32.xlu0 %v1004, 24
  %v1836 = vpop.permute.xlu0 %1835
  %1837 = vrot.lane.b32.xlu0 %v665, 24
  %v1838 = vpop.permute.xlu0 %1837
  %1839 = vrot.lane.b32.xlu0 %v1005, 24
  %v1840 = vpop.permute.xlu0 %1839
  %1841 = vrot.lane.b32.xlu0 %v668, 24
  %v1842 = vpop.permute.xlu0 %1841
  %1843 = vrot.lane.b32.xlu0 %v1006, 24
  %v1844 = vpop.permute.xlu0 %1843
  %1845 = vrot.lane.b32.xlu0 %v671, 24
  %v1846 = vpop.permute.xlu0 %1845
  %1847 = vrot.lane.b32.xlu0 %v1007, 24
  %v1848 = vpop.permute.xlu0 %1847
  %1849 = vrot.lane.b32.xlu0 %v674, 24
  %v1850 = vpop.permute.xlu0 %1849
  %1851 = vrot.lane.b32.xlu0 %v1008, 24
  %v1852 = vpop.permute.xlu0 %1851
  %1853 = vrot.lane.b32.xlu0 %v677, 24
  %v1854 = vpop.permute.xlu0 %1853
  %1855 = vrot.lane.b32.xlu0 %v1009, 24
  %v1856 = vpop.permute.xlu0 %1855
  %1857 = vrot.lane.b32.xlu0 %v680, 24
  %v1858 = vpop.permute.xlu0 %1857
  %1859 = vrot.lane.b32.xlu0 %v1010, 24
  %v1860 = vpop.permute.xlu0 %1859
  %1861 = vrot.lane.b32.xlu0 %v683, 24
  %v1862 = vpop.permute.xlu0 %1861
  %1863 = vrot.lane.b32.xlu0 %v1011, 24
  %v1864 = vpop.permute.xlu0 %1863
  %1865 = vrot.lane.b32.xlu0 %v686, 24
  %v1866 = vpop.permute.xlu0 %1865
  %1867 = vrot.lane.b32.xlu0 %v1012, 24
  %v1868 = vpop.permute.xlu0 %1867
  %1869 = vrot.lane.b32.xlu0 %v689, 24
  %v1870 = vpop.permute.xlu0 %1869
  %1871 = vrot.lane.b32.xlu0 %v1013, 24
  %v1872 = vpop.permute.xlu0 %1871
  %1873 = vrot.lane.b32.xlu0 %v692, 24
  %v1874 = vpop.permute.xlu0 %1873
  %1875 = vrot.lane.b32.xlu0 %v1014, 24
  %v1876 = vpop.permute.xlu0 %1875
  %1877 = vrot.lane.b32.xlu0 %v695, 24
  %v1878 = vpop.permute.xlu0 %1877
  %1879 = vrot.lane.b32.xlu0 %v1015, 24
  %v1880 = vpop.permute.xlu0 %1879
  %1881 = vrot.lane.b32.xlu0 %v698, 24
  %v1882 = vpop.permute.xlu0 %1881
  %1883 = vrot.lane.b32.xlu0 %v1018, 24
  %v1884 = vpop.permute.xlu0 %1883
  %1885 = vrot.lane.b32.xlu0 %v707, 24
  %v1886 = vpop.permute.xlu0 %1885
  %1887 = vrot.lane.b32.xlu0 %v1017, 24
  %v1888 = vpop.permute.xlu0 %1887
  %1889 = vrot.lane.b32.xlu0 %v704, 24
  %v1890 = vpop.permute.xlu0 %1889
  %1891 = vrot.lane.b32.xlu0 %v1016, 24
  %v1892 = vpop.permute.xlu0 %1891
  %1893 = vrot.lane.b32.xlu0 %v701, 24
  %v1894 = vpop.permute.xlu0 %1893
  %1895 = vrot.lane.b32.xlu0 %v1019, 24
  %v1896 = vpop.permute.xlu0 %1895
  %1897 = vrot.lane.b32.xlu0 %v710, 24
  %v1898 = vpop.permute.xlu0 %1897
  %1899 = vrot.lane.b32.xlu0 %v1020, 24
  %v1900 = vpop.permute.xlu0 %1899
  %1901 = vrot.lane.b32.xlu0 %v713, 24
  %v1902 = vpop.permute.xlu0 %1901
  %1903 = vrot.lane.b32.xlu0 %v1021, 24
  %v1904 = vpop.permute.xlu0 %1903
  %1905 = vrot.lane.b32.xlu0 %v716, 24
  %v1906 = vpop.permute.xlu0 %1905
  %1907 = vrot.lane.b32.xlu0 %v1022, 24
  %v1908 = vpop.permute.xlu0 %1907
  %1909 = vrot.lane.b32.xlu0 %v719, 24
  %v1910 = vpop.permute.xlu0 %1909
  %1911 = vrot.lane.b32.xlu0 %v1023, 24
  %v1912 = vpop.permute.xlu0 %1911
  %1913 = vrot.lane.b32.xlu0 %v722, 24
  %v1914 = vpop.permute.xlu0 %1913
  %1915 = vrot.lane.b32.xlu0 %v1024, 24
  %v1916 = vpop.permute.xlu0 %1915
  %1917 = vrot.lane.b32.xlu0 %v725, 24
  %v1918 = vpop.permute.xlu0 %1917
  %1919 = vrot.lane.b32.xlu0 %v1025, 24
  %v1920 = vpop.permute.xlu0 %1919
  %1921 = vrot.lane.b32.xlu0 %v728, 24
  %v1922 = vpop.permute.xlu0 %1921
  %1923 = vrot.lane.b32.xlu0 %v1026, 24
  %v1924 = vpop.permute.xlu0 %1923
  %1925 = vrot.lane.b32.xlu0 %v731, 24
  %v1926 = vpop.permute.xlu0 %1925
  %1927 = vrot.lane.b32.xlu0 %v1027, 24
  %v1928 = vpop.permute.xlu0 %1927
  %1929 = vrot.lane.b32.xlu0 %v734, 24
  %v1930 = vpop.permute.xlu0 %1929
  %1931 = vrot.lane.b32.xlu0 %v1028, 24
  %v1932 = vpop.permute.xlu0 %1931
  %1933 = vrot.lane.b32.xlu0 %v737, 24
  %v1934 = vpop.permute.xlu0 %1933
  %1935 = vrot.lane.b32.xlu0 %v1029, 24
  %v1936 = vpop.permute.xlu0 %1935
  %1937 = vrot.lane.b32.xlu0 %v740, 24
  %v1938 = vpop.permute.xlu0 %1937
  %1939 = vrot.lane.b32.xlu0 %v1030, 24
  %v1940 = vpop.permute.xlu0 %1939
  %1941 = vrot.lane.b32.xlu0 %v743, 24
  %v1942 = vpop.permute.xlu0 %1941
  %1943 = vrot.lane.b32.xlu0 %v1031, 24
  %v1944 = vpop.permute.xlu0 %1943
  %1945 = vrot.lane.b32.xlu0 %v746, 24
  %v1946 = vpop.permute.xlu0 %1945
  %2011 = vrot.lane.b32.xlu0 %v1166, 32
  %v2012 = vpop.permute.xlu0 %2011
  %2013 = vrot.lane.b32.xlu0 %v1168, 32
  %v2014 = vpop.permute.xlu0 %2013
  %2015 = vrot.lane.b32.xlu0 %v1161, 32
  %v2016 = vpop.permute.xlu0 %2015
  %2017 = vrot.lane.b32.xlu0 %v1163, 32
  %v2018 = vpop.permute.xlu0 %2017
  %2019 = vrot.lane.b32.xlu0 %v1156, 32
  %v2020 = vpop.permute.xlu0 %2019
  %2021 = vrot.lane.b32.xlu0 %v1158, 32
  %v2022 = vpop.permute.xlu0 %2021
  %2023 = vrot.lane.b32.xlu0 %v1171, 32
  %v2024 = vpop.permute.xlu0 %2023
  %2025 = vrot.lane.b32.xlu0 %v1173, 32
  %v2026 = vpop.permute.xlu0 %2025
  %2027 = vrot.lane.b32.xlu0 %v1176, 32
  %v2028 = vpop.permute.xlu0 %2027
  %2029 = vrot.lane.b32.xlu0 %v1178, 32
  %v2030 = vpop.permute.xlu0 %2029
  %2031 = vrot.lane.b32.xlu0 %v1181, 32
  %v2032 = vpop.permute.xlu0 %2031
  %2033 = vrot.lane.b32.xlu0 %v1183, 32
  %v2034 = vpop.permute.xlu0 %2033
  %2035 = vrot.lane.b32.xlu0 %v1186, 32
  %v2036 = vpop.permute.xlu0 %2035
  %2037 = vrot.lane.b32.xlu0 %v1188, 32
  %v2038 = vpop.permute.xlu0 %2037
  %2039 = vrot.lane.b32.xlu0 %v1191, 32
  %v2040 = vpop.permute.xlu0 %2039
  %2041 = vrot.lane.b32.xlu0 %v1193, 32
  %v2042 = vpop.permute.xlu0 %2041
  %2043 = vrot.lane.b32.xlu0 %v1196, 32
  %v2044 = vpop.permute.xlu0 %2043
  %2045 = vrot.lane.b32.xlu0 %v1198, 32
  %v2046 = vpop.permute.xlu0 %2045
  %2047 = vrot.lane.b32.xlu0 %v1201, 32
  %v2048 = vpop.permute.xlu0 %2047
  %2049 = vrot.lane.b32.xlu0 %v1203, 32
  %v2050 = vpop.permute.xlu0 %2049
  %2051 = vrot.lane.b32.xlu0 %v1206, 32
  %v2052 = vpop.permute.xlu0 %2051
  %2053 = vrot.lane.b32.xlu0 %v1208, 32
  %v2054 = vpop.permute.xlu0 %2053
  %2055 = vrot.lane.b32.xlu0 %v1211, 32
  %v2056 = vpop.permute.xlu0 %2055
  %2057 = vrot.lane.b32.xlu0 %v1213, 32
  %v2058 = vpop.permute.xlu0 %2057
  %2059 = vrot.lane.b32.xlu0 %v1216, 32
  %v2060 = vpop.permute.xlu0 %2059
  %2061 = vrot.lane.b32.xlu0 %v1218, 32
  %v2062 = vpop.permute.xlu0 %2061
  %2063 = vrot.lane.b32.xlu0 %v1221, 32
  %v2064 = vpop.permute.xlu0 %2063
  %2065 = vrot.lane.b32.xlu0 %v1223, 32
  %v2066 = vpop.permute.xlu0 %2065
  %2067 = vrot.lane.b32.xlu0 %v1445, 32
  %v2068 = vpop.permute.xlu0 %2067
  %2069 = vrot.lane.b32.xlu0 %v1447, 32
  %v2070 = vpop.permute.xlu0 %2069
  %2071 = vrot.lane.b32.xlu0 %v1450, 32
  %v2072 = vpop.permute.xlu0 %2071
  %2073 = vrot.lane.b32.xlu0 %v1452, 32
  %v2074 = vpop.permute.xlu0 %2073
  %2075 = vrot.lane.b32.xlu0 %v1236, 32
  %v2076 = vpop.permute.xlu0 %2075
  %2077 = vrot.lane.b32.xlu0 %v1238, 32
  %v2078 = vpop.permute.xlu0 %2077
  %2079 = vrot.lane.b32.xlu0 %v1231, 32
  %v2080 = vpop.permute.xlu0 %2079
  %2081 = vrot.lane.b32.xlu0 %v1233, 32
  %v2082 = vpop.permute.xlu0 %2081
  %2083 = vrot.lane.b32.xlu0 %v1226, 32
  %v2084 = vpop.permute.xlu0 %2083
  %2085 = vrot.lane.b32.xlu0 %v1228, 32
  %v2086 = vpop.permute.xlu0 %2085
  %2087 = vrot.lane.b32.xlu0 %v1241, 32
  %v2088 = vpop.permute.xlu0 %2087
  %2089 = vrot.lane.b32.xlu0 %v1243, 32
  %v2090 = vpop.permute.xlu0 %2089
  %2091 = vrot.lane.b32.xlu0 %v1246, 32
  %v2092 = vpop.permute.xlu0 %2091
  %2093 = vrot.lane.b32.xlu0 %v1248, 32
  %v2094 = vpop.permute.xlu0 %2093
  %2095 = vrot.lane.b32.xlu0 %v1251, 32
  %v2096 = vpop.permute.xlu0 %2095
  %2097 = vrot.lane.b32.xlu0 %v1253, 32
  %v2098 = vpop.permute.xlu0 %2097
  %2099 = vrot.lane.b32.xlu0 %v1256, 32
  %v2100 = vpop.permute.xlu0 %2099
  %2101 = vrot.lane.b32.xlu0 %v1258, 32
  %v2102 = vpop.permute.xlu0 %2101
  %2103 = vrot.lane.b32.xlu0 %v1261, 32
  %v2104 = vpop.permute.xlu0 %2103
  %2105 = vrot.lane.b32.xlu0 %v1263, 32
  %v2106 = vpop.permute.xlu0 %2105
  %2107 = vrot.lane.b32.xlu0 %v1266, 32
  %v2108 = vpop.permute.xlu0 %2107
  %2109 = vrot.lane.b32.xlu0 %v1268, 32
  %v2110 = vpop.permute.xlu0 %2109
  %2111 = vrot.lane.b32.xlu0 %v1271, 32
  %v2112 = vpop.permute.xlu0 %2111
  %2113 = vrot.lane.b32.xlu0 %v1273, 32
  %v2114 = vpop.permute.xlu0 %2113
  %2115 = vrot.lane.b32.xlu0 %v1276, 32
  %v2116 = vpop.permute.xlu0 %2115
  %2117 = vrot.lane.b32.xlu0 %v1278, 32
  %v2118 = vpop.permute.xlu0 %2117
  %2119 = vrot.lane.b32.xlu0 %v1281, 32
  %v2120 = vpop.permute.xlu0 %2119
  %2121 = vrot.lane.b32.xlu0 %v1283, 32
  %v2122 = vpop.permute.xlu0 %2121
  %2123 = vrot.lane.b32.xlu0 %v1286, 32
  %v2124 = vpop.permute.xlu0 %2123
  %2125 = vrot.lane.b32.xlu0 %v1288, 32
  %v2126 = vpop.permute.xlu0 %2125
  %2127 = vrot.lane.b32.xlu0 %v1291, 32
  %v2128 = vpop.permute.xlu0 %2127
  %2129 = vrot.lane.b32.xlu0 %v1293, 32
  %v2130 = vpop.permute.xlu0 %2129
  %2131 = vrot.lane.b32.xlu0 %v1455, 32
  %v2132 = vpop.permute.xlu0 %2131
  %2133 = vrot.lane.b32.xlu0 %v1457, 32
  %v2134 = vpop.permute.xlu0 %2133
  %2135 = vrot.lane.b32.xlu0 %v1460, 32
  %v2136 = vpop.permute.xlu0 %2135
  %2137 = vrot.lane.b32.xlu0 %v1462, 32
  %v2138 = vpop.permute.xlu0 %2137
  %2203 = vrot.lane.b32.xlu0 %v1307, 40
  %v2204 = vpop.permute.xlu0 %2203
  %2205 = vrot.lane.b32.xlu0 %v1309, 40
  %v2206 = vpop.permute.xlu0 %2205
  %2207 = vrot.lane.b32.xlu0 %v1302, 40
  %v2208 = vpop.permute.xlu0 %2207
  %2209 = vrot.lane.b32.xlu0 %v1304, 40
  %v2210 = vpop.permute.xlu0 %2209
  %2211 = vrot.lane.b32.xlu0 %v1297, 40
  %v2212 = vpop.permute.xlu0 %2211
  %2213 = vrot.lane.b32.xlu0 %v1299, 40
  %v2214 = vpop.permute.xlu0 %2213
  %2215 = vrot.lane.b32.xlu0 %v1312, 40
  %v2216 = vpop.permute.xlu0 %2215
  %2217 = vrot.lane.b32.xlu0 %v1314, 40
  %v2218 = vpop.permute.xlu0 %2217
  %2219 = vrot.lane.b32.xlu0 %v1317, 40
  %v2220 = vpop.permute.xlu0 %2219
  %2221 = vrot.lane.b32.xlu0 %v1319, 40
  %v2222 = vpop.permute.xlu0 %2221
  %2223 = vrot.lane.b32.xlu0 %v1322, 40
  %v2224 = vpop.permute.xlu0 %2223
  %2225 = vrot.lane.b32.xlu0 %v1324, 40
  %v2226 = vpop.permute.xlu0 %2225
  %2227 = vrot.lane.b32.xlu0 %v1327, 40
  %v2228 = vpop.permute.xlu0 %2227
  %2229 = vrot.lane.b32.xlu0 %v1329, 40
  %v2230 = vpop.permute.xlu0 %2229
  %2231 = vrot.lane.b32.xlu0 %v1332, 40
  %v2232 = vpop.permute.xlu0 %2231
  %2233 = vrot.lane.b32.xlu0 %v1334, 40
  %v2234 = vpop.permute.xlu0 %2233
  %2235 = vrot.lane.b32.xlu0 %v1337, 40
  %v2236 = vpop.permute.xlu0 %2235
  %2237 = vrot.lane.b32.xlu0 %v1339, 40
  %v2238 = vpop.permute.xlu0 %2237
  %2239 = vrot.lane.b32.xlu0 %v1342, 40
  %v2240 = vpop.permute.xlu0 %2239
  %2241 = vrot.lane.b32.xlu0 %v1344, 40
  %v2242 = vpop.permute.xlu0 %2241
  %2243 = vrot.lane.b32.xlu0 %v1347, 40
  %v2244 = vpop.permute.xlu0 %2243
  %2245 = vrot.lane.b32.xlu0 %v1349, 40
  %v2246 = vpop.permute.xlu0 %2245
  %2247 = vrot.lane.b32.xlu0 %v1352, 40
  %v2248 = vpop.permute.xlu0 %2247
  %2249 = vrot.lane.b32.xlu0 %v1354, 40
  %v2250 = vpop.permute.xlu0 %2249
  %2251 = vrot.lane.b32.xlu0 %v1357, 40
  %v2252 = vpop.permute.xlu0 %2251
  %2253 = vrot.lane.b32.xlu0 %v1359, 40
  %v2254 = vpop.permute.xlu0 %2253
  %2255 = vrot.lane.b32.xlu0 %v1362, 40
  %v2256 = vpop.permute.xlu0 %2255
  %2257 = vrot.lane.b32.xlu0 %v1364, 40
  %v2258 = vpop.permute.xlu0 %2257
  %2259 = vrot.lane.b32.xlu0 %v1465, 40
  %v2260 = vpop.permute.xlu0 %2259
  %2261 = vrot.lane.b32.xlu0 %v1467, 40
  %v2262 = vpop.permute.xlu0 %2261
  %2263 = vrot.lane.b32.xlu0 %v1470, 40
  %v2264 = vpop.permute.xlu0 %2263
  %2265 = vrot.lane.b32.xlu0 %v1472, 40
  %v2266 = vpop.permute.xlu0 %2265
  %2267 = vrot.lane.b32.xlu0 %v1377, 40
  %v2268 = vpop.permute.xlu0 %2267
  %2269 = vrot.lane.b32.xlu0 %v1379, 40
  %v2270 = vpop.permute.xlu0 %2269
  %2271 = vrot.lane.b32.xlu0 %v1372, 40
  %v2272 = vpop.permute.xlu0 %2271
  %2273 = vrot.lane.b32.xlu0 %v1374, 40
  %v2274 = vpop.permute.xlu0 %2273
  %2275 = vrot.lane.b32.xlu0 %v1367, 40
  %v2276 = vpop.permute.xlu0 %2275
  %2277 = vrot.lane.b32.xlu0 %v1369, 40
  %v2278 = vpop.permute.xlu0 %2277
  %2279 = vrot.lane.b32.xlu0 %v1382, 40
  %v2280 = vpop.permute.xlu0 %2279
  %2281 = vrot.lane.b32.xlu0 %v1384, 40
  %v2282 = vpop.permute.xlu0 %2281
  %2283 = vrot.lane.b32.xlu0 %v1387, 40
  %v2284 = vpop.permute.xlu0 %2283
  %2285 = vrot.lane.b32.xlu0 %v1389, 40
  %v2286 = vpop.permute.xlu0 %2285
  %2287 = vrot.lane.b32.xlu0 %v1392, 40
  %v2288 = vpop.permute.xlu0 %2287
  %2289 = vrot.lane.b32.xlu0 %v1394, 40
  %v2290 = vpop.permute.xlu0 %2289
  %2291 = vrot.lane.b32.xlu0 %v1397, 40
  %v2292 = vpop.permute.xlu0 %2291
  %2293 = vrot.lane.b32.xlu0 %v1399, 40
  %v2294 = vpop.permute.xlu0 %2293
  %2295 = vrot.lane.b32.xlu0 %v1402, 40
  %v2296 = vpop.permute.xlu0 %2295
  %2297 = vrot.lane.b32.xlu0 %v1404, 40
  %v2298 = vpop.permute.xlu0 %2297
  %2299 = vrot.lane.b32.xlu0 %v1407, 40
  %v2300 = vpop.permute.xlu0 %2299
  %2301 = vrot.lane.b32.xlu0 %v1409, 40
  %v2302 = vpop.permute.xlu0 %2301
  %2303 = vrot.lane.b32.xlu0 %v1412, 40
  %v2304 = vpop.permute.xlu0 %2303
  %2305 = vrot.lane.b32.xlu0 %v1414, 40
  %v2306 = vpop.permute.xlu0 %2305
  %2307 = vrot.lane.b32.xlu0 %v1417, 40
  %v2308 = vpop.permute.xlu0 %2307
  %2309 = vrot.lane.b32.xlu0 %v1419, 40
  %v2310 = vpop.permute.xlu0 %2309
  %2311 = vrot.lane.b32.xlu0 %v1422, 40
  %v2312 = vpop.permute.xlu0 %2311
  %2313 = vrot.lane.b32.xlu0 %v1424, 40
  %v2314 = vpop.permute.xlu0 %2313
  %2315 = vrot.lane.b32.xlu0 %v1427, 40
  %v2316 = vpop.permute.xlu0 %2315
  %2317 = vrot.lane.b32.xlu0 %v1429, 40
  %v2318 = vpop.permute.xlu0 %2317
  %2319 = vrot.lane.b32.xlu0 %v1432, 40
  %v2320 = vpop.permute.xlu0 %2319
  %2321 = vrot.lane.b32.xlu0 %v1434, 40
  %v2322 = vpop.permute.xlu0 %2321
  %2323 = vrot.lane.b32.xlu0 %v1475, 40
  %v2324 = vpop.permute.xlu0 %2323
  %2325 = vrot.lane.b32.xlu0 %v1477, 40
  %v2326 = vpop.permute.xlu0 %2325
  %2327 = vrot.lane.b32.xlu0 %v1480, 40
  %v2328 = vpop.permute.xlu0 %2327
  %2329 = vrot.lane.b32.xlu0 %v1482, 40
  %v2330 = vpop.permute.xlu0 %2329
  %2395 = vrot.lane.b32.xlu0 %v1000, 48
  %v2396 = vpop.permute.xlu0 %2395
  %2397 = vrot.lane.b32.xlu0 %v653, 48
  %v2398 = vpop.permute.xlu0 %2397
  %2399 = vrot.lane.b32.xlu0 %v1003, 48
  %v2400 = vpop.permute.xlu0 %2399
  %2401 = vrot.lane.b32.xlu0 %v662, 48
  %v2402 = vpop.permute.xlu0 %2401
  %2403 = vrot.lane.b32.xlu0 %v1004, 48
  %v2404 = vpop.permute.xlu0 %2403
  %2405 = vrot.lane.b32.xlu0 %v665, 48
  %v2406 = vpop.permute.xlu0 %2405
  %2407 = vrot.lane.b32.xlu0 %v1005, 48
  %v2408 = vpop.permute.xlu0 %2407
  %2409 = vrot.lane.b32.xlu0 %v668, 48
  %v2410 = vpop.permute.xlu0 %2409
  %2411 = vrot.lane.b32.xlu0 %v1006, 48
  %v2412 = vpop.permute.xlu0 %2411
  %2413 = vrot.lane.b32.xlu0 %v671, 48
  %v2414 = vpop.permute.xlu0 %2413
  %2415 = vrot.lane.b32.xlu0 %v1007, 48
  %v2416 = vpop.permute.xlu0 %2415
  %2417 = vrot.lane.b32.xlu0 %v674, 48
  %v2418 = vpop.permute.xlu0 %2417
  %2419 = vrot.lane.b32.xlu0 %v1008, 48
  %v2420 = vpop.permute.xlu0 %2419
  %2421 = vrot.lane.b32.xlu0 %v677, 48
  %v2422 = vpop.permute.xlu0 %2421
  %2423 = vrot.lane.b32.xlu0 %v1009, 48
  %v2424 = vpop.permute.xlu0 %2423
  %2425 = vrot.lane.b32.xlu0 %v680, 48
  %v2426 = vpop.permute.xlu0 %2425
  %2427 = vrot.lane.b32.xlu0 %v1010, 48
  %v2428 = vpop.permute.xlu0 %2427
  %2429 = vrot.lane.b32.xlu0 %v683, 48
  %v2430 = vpop.permute.xlu0 %2429
  %2431 = vrot.lane.b32.xlu0 %v1011, 48
  %v2432 = vpop.permute.xlu0 %2431
  %2433 = vrot.lane.b32.xlu0 %v686, 48
  %v2434 = vpop.permute.xlu0 %2433
  %2435 = vrot.lane.b32.xlu0 %v1012, 48
  %v2436 = vpop.permute.xlu0 %2435
  %2437 = vrot.lane.b32.xlu0 %v689, 48
  %v2438 = vpop.permute.xlu0 %2437
  %2439 = vrot.lane.b32.xlu0 %v1013, 48
  %v2440 = vpop.permute.xlu0 %2439
  %2441 = vrot.lane.b32.xlu0 %v692, 48
  %v2442 = vpop.permute.xlu0 %2441
  %2443 = vrot.lane.b32.xlu0 %v1014, 48
  %v2444 = vpop.permute.xlu0 %2443
  %2445 = vrot.lane.b32.xlu0 %v695, 48
  %v2446 = vpop.permute.xlu0 %2445
  %2447 = vrot.lane.b32.xlu0 %v1015, 48
  %v2448 = vpop.permute.xlu0 %2447
  %2449 = vrot.lane.b32.xlu0 %v698, 48
  %v2450 = vpop.permute.xlu0 %2449
  %2451 = vrot.lane.b32.xlu0 %v1016, 48
  %v2452 = vpop.permute.xlu0 %2451
  %2453 = vrot.lane.b32.xlu0 %v701, 48
  %v2454 = vpop.permute.xlu0 %2453
  %2455 = vrot.lane.b32.xlu0 %v1019, 48
  %v2456 = vpop.permute.xlu0 %2455
  %2457 = vrot.lane.b32.xlu0 %v710, 48
  %v2458 = vpop.permute.xlu0 %2457
  %2459 = vrot.lane.b32.xlu0 %v1020, 48
  %v2460 = vpop.permute.xlu0 %2459
  %2461 = vrot.lane.b32.xlu0 %v713, 48
  %v2462 = vpop.permute.xlu0 %2461
  %2463 = vrot.lane.b32.xlu0 %v1021, 48
  %v2464 = vpop.permute.xlu0 %2463
  %2465 = vrot.lane.b32.xlu0 %v716, 48
  %v2466 = vpop.permute.xlu0 %2465
  %2467 = vrot.lane.b32.xlu0 %v1022, 48
  %v2468 = vpop.permute.xlu0 %2467
  %2469 = vrot.lane.b32.xlu0 %v719, 48
  %v2470 = vpop.permute.xlu0 %2469
  %2471 = vrot.lane.b32.xlu0 %v1023, 48
  %v2472 = vpop.permute.xlu0 %2471
  %2473 = vrot.lane.b32.xlu0 %v722, 48
  %v2474 = vpop.permute.xlu0 %2473
  %2475 = vrot.lane.b32.xlu0 %v1024, 48
  %v2476 = vpop.permute.xlu0 %2475
  %2477 = vrot.lane.b32.xlu0 %v725, 48
  %v2478 = vpop.permute.xlu0 %2477
  %2479 = vrot.lane.b32.xlu0 %v1025, 48
  %v2480 = vpop.permute.xlu0 %2479
  %2481 = vrot.lane.b32.xlu0 %v728, 48
  %v2482 = vpop.permute.xlu0 %2481
  %2483 = vrot.lane.b32.xlu0 %v1026, 48
  %v2484 = vpop.permute.xlu0 %2483
  %2485 = vrot.lane.b32.xlu0 %v731, 48
  %v2486 = vpop.permute.xlu0 %2485
  %2487 = vrot.lane.b32.xlu0 %v1027, 48
  %v2488 = vpop.permute.xlu0 %2487
  %2489 = vrot.lane.b32.xlu0 %v734, 48
  %v2490 = vpop.permute.xlu0 %2489
  %2491 = vrot.lane.b32.xlu0 %v1028, 48
  %v2492 = vpop.permute.xlu0 %2491
  %2493 = vrot.lane.b32.xlu0 %v737, 48
  %v2494 = vpop.permute.xlu0 %2493
  %2495 = vrot.lane.b32.xlu0 %v1029, 48
  %v2496 = vpop.permute.xlu0 %2495
  %2497 = vrot.lane.b32.xlu0 %v740, 48
  %v2498 = vpop.permute.xlu0 %2497
  %2499 = vrot.lane.b32.xlu0 %v1030, 48
  %v2500 = vpop.permute.xlu0 %2499
  %2501 = vrot.lane.b32.xlu0 %v743, 48
  %v2502 = vpop.permute.xlu0 %2501
  %2503 = vrot.lane.b32.xlu0 %v1031, 48
  %v2504 = vpop.permute.xlu0 %2503
  %2505 = vrot.lane.b32.xlu0 %v746, 48
  %v2506 = vpop.permute.xlu0 %2505
  %2563 = vrot.lane.b32.xlu0 %v1156, 56
  %v2564 = vpop.permute.xlu0 %2563
  %2565 = vrot.lane.b32.xlu0 %v1158, 56
  %v2566 = vpop.permute.xlu0 %2565
  %2567 = vrot.lane.b32.xlu0 %v1171, 56
  %v2568 = vpop.permute.xlu0 %2567
  %2569 = vrot.lane.b32.xlu0 %v1173, 56
  %v2570 = vpop.permute.xlu0 %2569
  %2571 = vrot.lane.b32.xlu0 %v1176, 56
  %v2572 = vpop.permute.xlu0 %2571
  %2573 = vrot.lane.b32.xlu0 %v1178, 56
  %v2574 = vpop.permute.xlu0 %2573
  %2575 = vrot.lane.b32.xlu0 %v1181, 56
  %v2576 = vpop.permute.xlu0 %2575
  %2577 = vrot.lane.b32.xlu0 %v1183, 56
  %v2578 = vpop.permute.xlu0 %2577
  %2579 = vrot.lane.b32.xlu0 %v1186, 56
  %v2580 = vpop.permute.xlu0 %2579
  %2581 = vrot.lane.b32.xlu0 %v1188, 56
  %v2582 = vpop.permute.xlu0 %2581
  %2583 = vrot.lane.b32.xlu0 %v1191, 56
  %v2584 = vpop.permute.xlu0 %2583
  %2585 = vrot.lane.b32.xlu0 %v1193, 56
  %v2586 = vpop.permute.xlu0 %2585
  %2587 = vrot.lane.b32.xlu0 %v1196, 56
  %v2588 = vpop.permute.xlu0 %2587
  %2589 = vrot.lane.b32.xlu0 %v1198, 56
  %v2590 = vpop.permute.xlu0 %2589
  %2591 = vrot.lane.b32.xlu0 %v1201, 56
  %v2592 = vpop.permute.xlu0 %2591
  %2593 = vrot.lane.b32.xlu0 %v1203, 56
  %v2594 = vpop.permute.xlu0 %2593
  %2595 = vrot.lane.b32.xlu0 %v1206, 56
  %v2596 = vpop.permute.xlu0 %2595
  %2597 = vrot.lane.b32.xlu0 %v1208, 56
  %v2598 = vpop.permute.xlu0 %2597
  %2599 = vrot.lane.b32.xlu0 %v1211, 56
  %v2600 = vpop.permute.xlu0 %2599
  %2601 = vrot.lane.b32.xlu0 %v1213, 56
  %v2602 = vpop.permute.xlu0 %2601
  %2603 = vrot.lane.b32.xlu0 %v1216, 56
  %v2604 = vpop.permute.xlu0 %2603
  %2605 = vrot.lane.b32.xlu0 %v1218, 56
  %v2606 = vpop.permute.xlu0 %2605
  %2607 = vrot.lane.b32.xlu0 %v1221, 56
  %v2608 = vpop.permute.xlu0 %2607
  %2609 = vrot.lane.b32.xlu0 %v1223, 56
  %v2610 = vpop.permute.xlu0 %2609
  %2611 = vrot.lane.b32.xlu0 %v1445, 56
  %v2612 = vpop.permute.xlu0 %2611
  %2613 = vrot.lane.b32.xlu0 %v1447, 56
  %v2614 = vpop.permute.xlu0 %2613
  %2615 = vrot.lane.b32.xlu0 %v1450, 56
  %v2616 = vpop.permute.xlu0 %2615
  %2617 = vrot.lane.b32.xlu0 %v1452, 56
  %v2618 = vpop.permute.xlu0 %2617
  %2619 = vrot.lane.b32.xlu0 %v1226, 56
  %v2620 = vpop.permute.xlu0 %2619
  %2621 = vrot.lane.b32.xlu0 %v1228, 56
  %v2622 = vpop.permute.xlu0 %2621
  %2623 = vrot.lane.b32.xlu0 %v1241, 56
  %v2624 = vpop.permute.xlu0 %2623
  %2625 = vrot.lane.b32.xlu0 %v1243, 56
  %v2626 = vpop.permute.xlu0 %2625
  %2627 = vrot.lane.b32.xlu0 %v1246, 56
  %v2628 = vpop.permute.xlu0 %2627
  %2629 = vrot.lane.b32.xlu0 %v1248, 56
  %v2630 = vpop.permute.xlu0 %2629
  %2631 = vrot.lane.b32.xlu0 %v1251, 56
  %v2632 = vpop.permute.xlu0 %2631
  %2633 = vrot.lane.b32.xlu0 %v1253, 56
  %v2634 = vpop.permute.xlu0 %2633
  %2635 = vrot.lane.b32.xlu0 %v1256, 56
  %v2636 = vpop.permute.xlu0 %2635
  %2637 = vrot.lane.b32.xlu0 %v1258, 56
  %v2638 = vpop.permute.xlu0 %2637
  %2639 = vrot.lane.b32.xlu0 %v1261, 56
  %v2640 = vpop.permute.xlu0 %2639
  %2641 = vrot.lane.b32.xlu0 %v1263, 56
  %v2642 = vpop.permute.xlu0 %2641
  %2643 = vrot.lane.b32.xlu0 %v1266, 56
  %v2644 = vpop.permute.xlu0 %2643
  %2645 = vrot.lane.b32.xlu0 %v1268, 56
  %v2646 = vpop.permute.xlu0 %2645
  %2647 = vrot.lane.b32.xlu0 %v1271, 56
  %v2648 = vpop.permute.xlu0 %2647
  %2649 = vrot.lane.b32.xlu0 %v1273, 56
  %v2650 = vpop.permute.xlu0 %2649
  %2651 = vrot.lane.b32.xlu0 %v1276, 56
  %v2652 = vpop.permute.xlu0 %2651
  %2653 = vrot.lane.b32.xlu0 %v1278, 56
  %v2654 = vpop.permute.xlu0 %2653
  %2655 = vrot.lane.b32.xlu0 %v1281, 56
  %v2656 = vpop.permute.xlu0 %2655
  %2657 = vrot.lane.b32.xlu0 %v1283, 56
  %v2658 = vpop.permute.xlu0 %2657
  %2659 = vrot.lane.b32.xlu0 %v1286, 56
  %v2660 = vpop.permute.xlu0 %2659
  %2661 = vrot.lane.b32.xlu0 %v1288, 56
  %v2662 = vpop.permute.xlu0 %2661
  %2663 = vrot.lane.b32.xlu0 %v1291, 56
  %v2664 = vpop.permute.xlu0 %2663
  %2665 = vrot.lane.b32.xlu0 %v1293, 56
  %v2666 = vpop.permute.xlu0 %2665
  %2667 = vrot.lane.b32.xlu0 %v1455, 56
  %v2668 = vpop.permute.xlu0 %2667
  %2669 = vrot.lane.b32.xlu0 %v1457, 56
  %v2670 = vpop.permute.xlu0 %2669
  %2671 = vrot.lane.b32.xlu0 %v1460, 56
  %v2672 = vpop.permute.xlu0 %2671
  %2673 = vrot.lane.b32.xlu0 %v1462, 56
  %v2674 = vpop.permute.xlu0 %2673
  %2731 = vrot.lane.b32.xlu0 %v1297, 64
  %v2732 = vpop.permute.xlu0 %2731
  %2733 = vrot.lane.b32.xlu0 %v1299, 64
  %v2734 = vpop.permute.xlu0 %2733
  %2735 = vrot.lane.b32.xlu0 %v1312, 64
  %v2736 = vpop.permute.xlu0 %2735
  %2737 = vrot.lane.b32.xlu0 %v1314, 64
  %v2738 = vpop.permute.xlu0 %2737
  %2739 = vrot.lane.b32.xlu0 %v1317, 64
  %v2740 = vpop.permute.xlu0 %2739
  %2741 = vrot.lane.b32.xlu0 %v1319, 64
  %v2742 = vpop.permute.xlu0 %2741
  %2743 = vrot.lane.b32.xlu0 %v1322, 64
  %v2744 = vpop.permute.xlu0 %2743
  %2745 = vrot.lane.b32.xlu0 %v1324, 64
  %v2746 = vpop.permute.xlu0 %2745
  %2747 = vrot.lane.b32.xlu0 %v1327, 64
  %v2748 = vpop.permute.xlu0 %2747
  %2749 = vrot.lane.b32.xlu0 %v1329, 64
  %v2750 = vpop.permute.xlu0 %2749
  %2751 = vrot.lane.b32.xlu0 %v1332, 64
  %v2752 = vpop.permute.xlu0 %2751
  %2753 = vrot.lane.b32.xlu0 %v1334, 64
  %v2754 = vpop.permute.xlu0 %2753
  %2755 = vrot.lane.b32.xlu0 %v1337, 64
  %v2756 = vpop.permute.xlu0 %2755
  %2757 = vrot.lane.b32.xlu0 %v1339, 64
  %v2758 = vpop.permute.xlu0 %2757
  %2759 = vrot.lane.b32.xlu0 %v1342, 64
  %v2760 = vpop.permute.xlu0 %2759
  %2761 = vrot.lane.b32.xlu0 %v1344, 64
  %v2762 = vpop.permute.xlu0 %2761
  %2763 = vrot.lane.b32.xlu0 %v1347, 64
  %v2764 = vpop.permute.xlu0 %2763
  %2765 = vrot.lane.b32.xlu0 %v1349, 64
  %v2766 = vpop.permute.xlu0 %2765
  %2767 = vrot.lane.b32.xlu0 %v1352, 64
  %v2768 = vpop.permute.xlu0 %2767
  %2769 = vrot.lane.b32.xlu0 %v1354, 64
  %v2770 = vpop.permute.xlu0 %2769
  %2771 = vrot.lane.b32.xlu0 %v1357, 64
  %v2772 = vpop.permute.xlu0 %2771
  %2773 = vrot.lane.b32.xlu0 %v1359, 64
  %v2774 = vpop.permute.xlu0 %2773
  %2775 = vrot.lane.b32.xlu0 %v1362, 64
  %v2776 = vpop.permute.xlu0 %2775
  %2777 = vrot.lane.b32.xlu0 %v1364, 64
  %v2778 = vpop.permute.xlu0 %2777
  %2779 = vrot.lane.b32.xlu0 %v1465, 64
  %v2780 = vpop.permute.xlu0 %2779
  %2781 = vrot.lane.b32.xlu0 %v1467, 64
  %v2782 = vpop.permute.xlu0 %2781
  %2783 = vrot.lane.b32.xlu0 %v1470, 64
  %v2784 = vpop.permute.xlu0 %2783
  %2785 = vrot.lane.b32.xlu0 %v1472, 64
  %v2786 = vpop.permute.xlu0 %2785
  %2787 = vrot.lane.b32.xlu0 %v1367, 64
  %v2788 = vpop.permute.xlu0 %2787
  %2789 = vrot.lane.b32.xlu0 %v1369, 64
  %v2790 = vpop.permute.xlu0 %2789
  %2791 = vrot.lane.b32.xlu0 %v1382, 64
  %v2792 = vpop.permute.xlu0 %2791
  %2793 = vrot.lane.b32.xlu0 %v1384, 64
  %v2794 = vpop.permute.xlu0 %2793
  %2795 = vrot.lane.b32.xlu0 %v1387, 64
  %v2796 = vpop.permute.xlu0 %2795
  %2797 = vrot.lane.b32.xlu0 %v1389, 64
  %v2798 = vpop.permute.xlu0 %2797
  %2799 = vrot.lane.b32.xlu0 %v1392, 64
  %v2800 = vpop.permute.xlu0 %2799
  %2801 = vrot.lane.b32.xlu0 %v1394, 64
  %v2802 = vpop.permute.xlu0 %2801
  %2803 = vrot.lane.b32.xlu0 %v1397, 64
  %v2804 = vpop.permute.xlu0 %2803
  %2805 = vrot.lane.b32.xlu0 %v1399, 64
  %v2806 = vpop.permute.xlu0 %2805
  %2807 = vrot.lane.b32.xlu0 %v1402, 64
  %v2808 = vpop.permute.xlu0 %2807
  %2809 = vrot.lane.b32.xlu0 %v1404, 64
  %v2810 = vpop.permute.xlu0 %2809
  %2811 = vrot.lane.b32.xlu0 %v1407, 64
  %v2812 = vpop.permute.xlu0 %2811
  %2813 = vrot.lane.b32.xlu0 %v1409, 64
  %v2814 = vpop.permute.xlu0 %2813
  %2815 = vrot.lane.b32.xlu0 %v1412, 64
  %v2816 = vpop.permute.xlu0 %2815
  %2817 = vrot.lane.b32.xlu0 %v1414, 64
  %v2818 = vpop.permute.xlu0 %2817
  %2819 = vrot.lane.b32.xlu0 %v1417, 64
  %v2820 = vpop.permute.xlu0 %2819
  %2821 = vrot.lane.b32.xlu0 %v1419, 64
  %v2822 = vpop.permute.xlu0 %2821
  %2823 = vrot.lane.b32.xlu0 %v1422, 64
  %v2824 = vpop.permute.xlu0 %2823
  %2825 = vrot.lane.b32.xlu0 %v1424, 64
  %v2826 = vpop.permute.xlu0 %2825
  %2827 = vrot.lane.b32.xlu0 %v1427, 64
  %v2828 = vpop.permute.xlu0 %2827
  %2829 = vrot.lane.b32.xlu0 %v1429, 64
  %v2830 = vpop.permute.xlu0 %2829
  %2831 = vrot.lane.b32.xlu0 %v1432, 64
  %v2832 = vpop.permute.xlu0 %2831
  %2833 = vrot.lane.b32.xlu0 %v1434, 64
  %v2834 = vpop.permute.xlu0 %2833
  %2835 = vrot.lane.b32.xlu0 %v1475, 64
  %v2836 = vpop.permute.xlu0 %2835
  %2837 = vrot.lane.b32.xlu0 %v1477, 64
  %v2838 = vpop.permute.xlu0 %2837
  %2839 = vrot.lane.b32.xlu0 %v1480, 64
  %v2840 = vpop.permute.xlu0 %2839
  %2841 = vrot.lane.b32.xlu0 %v1482, 64
  %v2842 = vpop.permute.xlu0 %2841
  %vm2899 = vcmask 64512
  %v2900 = vsel %vm2899, %v1000, %v1484
  %v2901 = vsel %vm2899, %v653, %v1486
  %v2902 = vsel %vm2899, %v1001, %v1488
  %v2903 = vsel %vm2899, %v656, %v1490
  %v2904 = vsel %vm2899, %v1002, %v1492
  %v2905 = vsel %vm2899, %v659, %v1494
  %v2906 = vsel %vm2899, %v1003, %v1496
  %v2907 = vsel %vm2899, %v662, %v1498
  %v2908 = vsel %vm2899, %v1004, %v1500
  %v2909 = vsel %vm2899, %v665, %v1502
  %v2910 = vsel %vm2899, %v1005, %v1504
  %v2911 = vsel %vm2899, %v668, %v1506
  %v2912 = vsel %vm2899, %v1006, %v1508
  %v2913 = vsel %vm2899, %v671, %v1510
  %v2914 = vsel %vm2899, %v1007, %v1512
  %v2915 = vsel %vm2899, %v674, %v1514
  %v2916 = vsel %vm2899, %v1008, %v1516
  %v2917 = vsel %vm2899, %v677, %v1518
  %v2918 = vsel %vm2899, %v1009, %v1520
  %v2919 = vsel %vm2899, %v680, %v1522
  %v2920 = vsel %vm2899, %v1010, %v1524
  %v2921 = vsel %vm2899, %v683, %v1526
  %v2922 = vsel %vm2899, %v1011, %v1528
  %v2923 = vsel %vm2899, %v686, %v1530
  %v2924 = vsel %vm2899, %v1012, %v1532
  %v2925 = vsel %vm2899, %v689, %v1534
  %v2926 = vsel %vm2899, %v1013, %v1536
  %v2927 = vsel %vm2899, %v692, %v1538
  %v2928 = vsel %vm2899, %v1016, %v1540
  %v2929 = vsel %vm2899, %v701, %v1542
  %v2930 = vsel %vm2899, %v1017, %v1544
  %v2931 = vsel %vm2899, %v704, %v1546
  %v2932 = vsel %vm2899, %v1018, %v1548
  %v2933 = vsel %vm2899, %v707, %v1550
  %v2934 = vsel %vm2899, %v1019, %v1552
  %v2935 = vsel %vm2899, %v710, %v1554
  %v2936 = vsel %vm2899, %v1020, %v1556
  %v2937 = vsel %vm2899, %v713, %v1558
  %v2938 = vsel %vm2899, %v1021, %v1560
  %v2939 = vsel %vm2899, %v716, %v1562
  %v2940 = vsel %vm2899, %v1022, %v1564
  %v2941 = vsel %vm2899, %v719, %v1566
  %v2942 = vsel %vm2899, %v1023, %v1568
  %v2943 = vsel %vm2899, %v722, %v1570
  %v2944 = vsel %vm2899, %v1024, %v1572
  %v2945 = vsel %vm2899, %v725, %v1574
  %v2946 = vsel %vm2899, %v1025, %v1576
  %v2947 = vsel %vm2899, %v728, %v1578
  %v2948 = vsel %vm2899, %v1026, %v1580
  %v2949 = vsel %vm2899, %v731, %v1582
  %v2950 = vsel %vm2899, %v1027, %v1584
  %v2951 = vsel %vm2899, %v734, %v1586
  %v2952 = vsel %vm2899, %v1028, %v1588
  %v2953 = vsel %vm2899, %v737, %v1590
  %v2954 = vsel %vm2899, %v1029, %v1592
  %v2955 = vsel %vm2899, %v740, %v1594
  %vm2956 = vcmask 130048
  %v2957 = vsel %vm2956, %v2900, %v1652
  %v2958 = vsel %vm2956, %v2901, %v1654
  %v2959 = vsel %vm2956, %v2902, %v1656
  %v2960 = vsel %vm2956, %v2903, %v1658
  %v2961 = vsel %vm2956, %v2904, %v1660
  %v2962 = vsel %vm2956, %v2905, %v1662
  %v2963 = vsel %vm2956, %v2906, %v1664
  %v2964 = vsel %vm2956, %v2907, %v1666
  %v2965 = vsel %vm2956, %v2908, %v1668
  %v2966 = vsel %vm2956, %v2909, %v1670
  %v2967 = vsel %vm2956, %v2910, %v1672
  %v2968 = vsel %vm2956, %v2911, %v1674
  %v2969 = vsel %vm2956, %v2912, %v1676
  %v2970 = vsel %vm2956, %v2913, %v1678
  %v2971 = vsel %vm2956, %v2914, %v1680
  %v2972 = vsel %vm2956, %v2915, %v1682
  %v2973 = vsel %vm2956, %v2916, %v1684
  %v2974 = vsel %vm2956, %v2917, %v1686
  %v2975 = vsel %vm2956, %v2918, %v1688
  %v2976 = vsel %vm2956, %v2919, %v1690
  %v2977 = vsel %vm2956, %v2920, %v1692
  %v2978 = vsel %vm2956, %v2921, %v1694
  %v2979 = vsel %vm2956, %v2922, %v1696
  %v2980 = vsel %vm2956, %v2923, %v1698
  %v2981 = vsel %vm2956, %v2924, %v1700
  %v2982 = vsel %vm2956, %v2925, %v1702
  %v2983 = vsel %vm2956, %v2926, %v1704
  %v2984 = vsel %vm2956, %v2927, %v1706
  %v2985 = vsel %vm2956, %v2928, %v1708
  %v2986 = vsel %vm2956, %v2929, %v1710
  %v2987 = vsel %vm2956, %v2930, %v1712
  %v2988 = vsel %vm2956, %v2931, %v1714
  %v2989 = vsel %vm2956, %v2932, %v1716
  %v2990 = vsel %vm2956, %v2933, %v1718
  %v2991 = vsel %vm2956, %v2934, %v1720
  %v2992 = vsel %vm2956, %v2935, %v1722
  %v2993 = vsel %vm2956, %v2936, %v1724
  %v2994 = vsel %vm2956, %v2937, %v1726
  %v2995 = vsel %vm2956, %v2938, %v1728
  %v2996 = vsel %vm2956, %v2939, %v1730
  %v2997 = vsel %vm2956, %v2940, %v1732
  %v2998 = vsel %vm2956, %v2941, %v1734
  %v2999 = vsel %vm2956, %v2942, %v1736
  %v3000 = vsel %vm2956, %v2943, %v1738
  %v3001 = vsel %vm2956, %v2944, %v1740
  %v3002 = vsel %vm2956, %v2945, %v1742
  %v3003 = vsel %vm2956, %v2946, %v1744
  %v3004 = vsel %vm2956, %v2947, %v1746
  %v3005 = vsel %vm2956, %v2948, %v1748
  %v3006 = vsel %vm2956, %v2949, %v1750
  %v3007 = vsel %vm2956, %v2950, %v1752
  %v3008 = vsel %vm2956, %v2951, %v1754
  %v3009 = vsel %vm2956, %v2952, %v1756
  %v3010 = vsel %vm2956, %v2953, %v1758
  %v3011 = vsel %vm2956, %v2954, %v1760
  %v3012 = vsel %vm2956, %v2955, %v1762
  %vm3013 = vcmask 195584
  %v3014 = vsel %vm3013, %v2957, %v1820
  %v3015 = vsel %vm3013, %v2958, %v1822
  %v3016 = vsel %vm3013, %v2959, %v1824
  %v3017 = vsel %vm3013, %v2960, %v1826
  %v3018 = vsel %vm3013, %v2961, %v1828
  %v3019 = vsel %vm3013, %v2962, %v1830
  %v3020 = vsel %vm3013, %v2959, %v1832
  %v3021 = vsel %vm3013, %v2960, %v1834
  %v3022 = vsel %vm3013, %v2957, %v1836
  %v3023 = vsel %vm3013, %v2958, %v1838
  %v3024 = vsel %vm3013, %v2963, %v1840
  %v3025 = vsel %vm3013, %v2964, %v1842
  %v3026 = vsel %vm3013, %v2965, %v1844
  %v3027 = vsel %vm3013, %v2966, %v1846
  %v3028 = vsel %vm3013, %v2967, %v1848
  %v3029 = vsel %vm3013, %v2968, %v1850
  %v3030 = vsel %vm3013, %v2969, %v1852
  %v3031 = vsel %vm3013, %v2970, %v1854
  %v3032 = vsel %vm3013, %v2971, %v1856
  %v3033 = vsel %vm3013, %v2972, %v1858
  %v3034 = vsel %vm3013, %v2973, %v1860
  %v3035 = vsel %vm3013, %v2974, %v1862
  %v3036 = vsel %vm3013, %v2975, %v1864
  %v3037 = vsel %vm3013, %v2976, %v1866
  %v3038 = vsel %vm3013, %v2977, %v1868
  %v3039 = vsel %vm3013, %v2978, %v1870
  %v3040 = vsel %vm3013, %v2979, %v1872
  %v3041 = vsel %vm3013, %v2980, %v1874
  %v3042 = vsel %vm3013, %v2981, %v1876
  %v3043 = vsel %vm3013, %v2982, %v1878
  %v3044 = vsel %vm3013, %v2983, %v1880
  %v3045 = vsel %vm3013, %v2984, %v1882
  %v3046 = vsel %vm3013, %v2985, %v1884
  %v3047 = vsel %vm3013, %v2986, %v1886
  %v3048 = vsel %vm3013, %v2987, %v1888
  %v3049 = vsel %vm3013, %v2988, %v1890
  %v3050 = vsel %vm3013, %v2989, %v1892
  %v3051 = vsel %vm3013, %v2990, %v1894
  %v3052 = vsel %vm3013, %v2987, %v1896
  %v3053 = vsel %vm3013, %v2988, %v1898
  %v3054 = vsel %vm3013, %v2985, %v1900
  %v3055 = vsel %vm3013, %v2986, %v1902
  %v3056 = vsel %vm3013, %v2991, %v1904
  %v3057 = vsel %vm3013, %v2992, %v1906
  %v3058 = vsel %vm3013, %v2993, %v1908
  %v3059 = vsel %vm3013, %v2994, %v1910
  %v3060 = vsel %vm3013, %v2995, %v1912
  %v3061 = vsel %vm3013, %v2996, %v1914
  %v3062 = vsel %vm3013, %v2997, %v1916
  %v3063 = vsel %vm3013, %v2998, %v1918
  %v3064 = vsel %vm3013, %v2999, %v1920
  %v3065 = vsel %vm3013, %v3000, %v1922
  %v3066 = vsel %vm3013, %v3001, %v1924
  %v3067 = vsel %vm3013, %v3002, %v1926
  %v3068 = vsel %vm3013, %v3003, %v1928
  %v3069 = vsel %vm3013, %v3004, %v1930
  %v3070 = vsel %vm3013, %v3005, %v1932
  %v3071 = vsel %vm3013, %v3006, %v1934
  %v3072 = vsel %vm3013, %v3007, %v1936
  %v3073 = vsel %vm3013, %v3008, %v1938
  %v3074 = vsel %vm3013, %v3009, %v1940
  %v3075 = vsel %vm3013, %v3010, %v1942
  %v3076 = vsel %vm3013, %v3011, %v1944
  %v3077 = vsel %vm3013, %v3012, %v1946
  %vm3078 = vcmask 261120
  %v3079 = vsel %vm3078, %v3014, %v2012
  %v3080 = vsel %vm3078, %v3015, %v2014
  %v3081 = vsel %vm3078, %v3016, %v2016
  %v3082 = vsel %vm3078, %v3017, %v2018
  %v3083 = vsel %vm3078, %v3018, %v2020
  %v3084 = vsel %vm3078, %v3019, %v2022
  %v3085 = vsel %vm3078, %v3020, %v2024
  %v3086 = vsel %vm3078, %v3021, %v2026
  %v3087 = vsel %vm3078, %v3022, %v2028
  %v3088 = vsel %vm3078, %v3023, %v2030
  %v3089 = vsel %vm3078, %v3024, %v2032
  %v3090 = vsel %vm3078, %v3025, %v2034
  %v3091 = vsel %vm3078, %v3026, %v2036
  %v3092 = vsel %vm3078, %v3027, %v2038
  %v3093 = vsel %vm3078, %v3028, %v2040
  %v3094 = vsel %vm3078, %v3029, %v2042
  %v3095 = vsel %vm3078, %v3030, %v2044
  %v3096 = vsel %vm3078, %v3031, %v2046
  %v3097 = vsel %vm3078, %v3032, %v2048
  %v3098 = vsel %vm3078, %v3033, %v2050
  %v3099 = vsel %vm3078, %v3034, %v2052
  %v3100 = vsel %vm3078, %v3035, %v2054
  %v3101 = vsel %vm3078, %v3036, %v2056
  %v3102 = vsel %vm3078, %v3037, %v2058
  %v3103 = vsel %vm3078, %v3038, %v2060
  %v3104 = vsel %vm3078, %v3039, %v2062
  %v3105 = vsel %vm3078, %v3040, %v2064
  %v3106 = vsel %vm3078, %v3041, %v2066
  %v3107 = vsel %vm3078, %v3042, %v2068
  %v3108 = vsel %vm3078, %v3043, %v2070
  %v3109 = vsel %vm3078, %v3044, %v2072
  %v3110 = vsel %vm3078, %v3045, %v2074
  %v3111 = vsel %vm3078, %v3046, %v2076
  %v3112 = vsel %vm3078, %v3047, %v2078
  %v3113 = vsel %vm3078, %v3048, %v2080
  %v3114 = vsel %vm3078, %v3049, %v2082
  %v3115 = vsel %vm3078, %v3050, %v2084
  %v3116 = vsel %vm3078, %v3051, %v2086
  %v3117 = vsel %vm3078, %v3052, %v2088
  %v3118 = vsel %vm3078, %v3053, %v2090
  %v3119 = vsel %vm3078, %v3054, %v2092
  %v3120 = vsel %vm3078, %v3055, %v2094
  %v3121 = vsel %vm3078, %v3056, %v2096
  %v3122 = vsel %vm3078, %v3057, %v2098
  %v3123 = vsel %vm3078, %v3058, %v2100
  %v3124 = vsel %vm3078, %v3059, %v2102
  %v3125 = vsel %vm3078, %v3060, %v2104
  %v3126 = vsel %vm3078, %v3061, %v2106
  %v3127 = vsel %vm3078, %v3062, %v2108
  %v3128 = vsel %vm3078, %v3063, %v2110
  %v3129 = vsel %vm3078, %v3064, %v2112
  %v3130 = vsel %vm3078, %v3065, %v2114
  %v3131 = vsel %vm3078, %v3066, %v2116
  %v3132 = vsel %vm3078, %v3067, %v2118
  %v3133 = vsel %vm3078, %v3068, %v2120
  %v3134 = vsel %vm3078, %v3069, %v2122
  %v3135 = vsel %vm3078, %v3070, %v2124
  %v3136 = vsel %vm3078, %v3071, %v2126
  %v3137 = vsel %vm3078, %v3072, %v2128
  %v3138 = vsel %vm3078, %v3073, %v2130
  %v3139 = vsel %vm3078, %v3074, %v2132
  %v3140 = vsel %vm3078, %v3075, %v2134
  %v3141 = vsel %vm3078, %v3076, %v2136
  %v3142 = vsel %vm3078, %v3077, %v2138
  %vm3143 = vcmask 326656
  %v3144 = vsel %vm3143, %v3079, %v2204
  %v3145 = vsel %vm3143, %v3080, %v2206
  %v3146 = vsel %vm3143, %v3081, %v2208
  %v3147 = vsel %vm3143, %v3082, %v2210
  %v3148 = vsel %vm3143, %v3083, %v2212
  %v3149 = vsel %vm3143, %v3084, %v2214
  %v3150 = vsel %vm3143, %v3085, %v2216
  %v3151 = vsel %vm3143, %v3086, %v2218
  %v3152 = vsel %vm3143, %v3087, %v2220
  %v3153 = vsel %vm3143, %v3088, %v2222
  %v3154 = vsel %vm3143, %v3089, %v2224
  %v3155 = vsel %vm3143, %v3090, %v2226
  %v3156 = vsel %vm3143, %v3091, %v2228
  %v3157 = vsel %vm3143, %v3092, %v2230
  %v3158 = vsel %vm3143, %v3093, %v2232
  %v3159 = vsel %vm3143, %v3094, %v2234
  %v3160 = vsel %vm3143, %v3095, %v2236
  %v3161 = vsel %vm3143, %v3096, %v2238
  %v3162 = vsel %vm3143, %v3097, %v2240
  %v3163 = vsel %vm3143, %v3098, %v2242
  %v3164 = vsel %vm3143, %v3099, %v2244
  %v3165 = vsel %vm3143, %v3100, %v2246
  %v3166 = vsel %vm3143, %v3101, %v2248
  %v3167 = vsel %vm3143, %v3102, %v2250
  %v3168 = vsel %vm3143, %v3103, %v2252
  %v3169 = vsel %vm3143, %v3104, %v2254
  %v3170 = vsel %vm3143, %v3105, %v2256
  %v3171 = vsel %vm3143, %v3106, %v2258
  %v3172 = vsel %vm3143, %v3107, %v2260
  %v3173 = vsel %vm3143, %v3108, %v2262
  %v3174 = vsel %vm3143, %v3109, %v2264
  %v3175 = vsel %vm3143, %v3110, %v2266
  %v3176 = vsel %vm3143, %v3111, %v2268
  %v3177 = vsel %vm3143, %v3112, %v2270
  %v3178 = vsel %vm3143, %v3113, %v2272
  %v3179 = vsel %vm3143, %v3114, %v2274
  %v3180 = vsel %vm3143, %v3115, %v2276
  %v3181 = vsel %vm3143, %v3116, %v2278
  %v3182 = vsel %vm3143, %v3117, %v2280
  %v3183 = vsel %vm3143, %v3118, %v2282
  %v3184 = vsel %vm3143, %v3119, %v2284
  %v3185 = vsel %vm3143, %v3120, %v2286
  %v3186 = vsel %vm3143, %v3121, %v2288
  %v3187 = vsel %vm3143, %v3122, %v2290
  %v3188 = vsel %vm3143, %v3123, %v2292
  %v3189 = vsel %vm3143, %v3124, %v2294
  %v3190 = vsel %vm3143, %v3125, %v2296
  %v3191 = vsel %vm3143, %v3126, %v2298
  %v3192 = vsel %vm3143, %v3127, %v2300
  %v3193 = vsel %vm3143, %v3128, %v2302
  %v3194 = vsel %vm3143, %v3129, %v2304
  %v3195 = vsel %vm3143, %v3130, %v2306
  %v3196 = vsel %vm3143, %v3131, %v2308
  %v3197 = vsel %vm3143, %v3132, %v2310
  %v3198 = vsel %vm3143, %v3133, %v2312
  %v3199 = vsel %vm3143, %v3134, %v2314
  %v3200 = vsel %vm3143, %v3135, %v2316
  %v3201 = vsel %vm3143, %v3136, %v2318
  %v3202 = vsel %vm3143, %v3137, %v2320
  %v3203 = vsel %vm3143, %v3138, %v2322
  %v3204 = vsel %vm3143, %v3139, %v2324
  %v3205 = vsel %vm3143, %v3140, %v2326
  %v3206 = vsel %vm3143, %v3141, %v2328
  %v3207 = vsel %vm3143, %v3142, %v2330
  %vm3208 = vcmask 392192
  %v3209 = vsel %vm3208, %v3144, %v2396
  %v3210 = vsel %vm3208, %v3145, %v2398
  %v3211 = vsel %vm3208, %v3146, %v2400
  %v3212 = vsel %vm3208, %v3147, %v2402
  %v3213 = vsel %vm3208, %v3148, %v2404
  %v3214 = vsel %vm3208, %v3149, %v2406
  %v3215 = vsel %vm3208, %v3150, %v2408
  %v3216 = vsel %vm3208, %v3151, %v2410
  %v3217 = vsel %vm3208, %v3152, %v2412
  %v3218 = vsel %vm3208, %v3153, %v2414
  %v3219 = vsel %vm3208, %v3154, %v2416
  %v3220 = vsel %vm3208, %v3155, %v2418
  %v3221 = vsel %vm3208, %v3156, %v2420
  %v3222 = vsel %vm3208, %v3157, %v2422
  %v3223 = vsel %vm3208, %v3158, %v2424
  %v3224 = vsel %vm3208, %v3159, %v2426
  %v3225 = vsel %vm3208, %v3160, %v2428
  %v3226 = vsel %vm3208, %v3161, %v2430
  %v3227 = vsel %vm3208, %v3162, %v2432
  %v3228 = vsel %vm3208, %v3163, %v2434
  %v3229 = vsel %vm3208, %v3164, %v2436
  %v3230 = vsel %vm3208, %v3165, %v2438
  %v3231 = vsel %vm3208, %v3166, %v2440
  %v3232 = vsel %vm3208, %v3167, %v2442
  %v3233 = vsel %vm3208, %v3168, %v2444
  %v3234 = vsel %vm3208, %v3169, %v2446
  %v3235 = vsel %vm3208, %v3170, %v2448
  %v3236 = vsel %vm3208, %v3171, %v2450
  %v3237 = vsel %vm3208, %v3172, %v2444
  %v3238 = vsel %vm3208, %v3173, %v2446
  %v3239 = vsel %vm3208, %v3174, %v2440
  %v3240 = vsel %vm3208, %v3175, %v2442
  %v3241 = vsel %vm3208, %v3176, %v2452
  %v3242 = vsel %vm3208, %v3177, %v2454
  %v3243 = vsel %vm3208, %v3178, %v2456
  %v3244 = vsel %vm3208, %v3179, %v2458
  %v3245 = vsel %vm3208, %v3180, %v2460
  %v3246 = vsel %vm3208, %v3181, %v2462
  %v3247 = vsel %vm3208, %v3182, %v2464
  %v3248 = vsel %vm3208, %v3183, %v2466
  %v3249 = vsel %vm3208, %v3184, %v2468
  %v3250 = vsel %vm3208, %v3185, %v2470
  %v3251 = vsel %vm3208, %v3186, %v2472
  %v3252 = vsel %vm3208, %v3187, %v2474
  %v3253 = vsel %vm3208, %v3188, %v2476
  %v3254 = vsel %vm3208, %v3189, %v2478
  %v3255 = vsel %vm3208, %v3190, %v2480
  %v3256 = vsel %vm3208, %v3191, %v2482
  %v3257 = vsel %vm3208, %v3192, %v2484
  %v3258 = vsel %vm3208, %v3193, %v2486
  %v3259 = vsel %vm3208, %v3194, %v2488
  %v3260 = vsel %vm3208, %v3195, %v2490
  %v3261 = vsel %vm3208, %v3196, %v2492
  %v3262 = vsel %vm3208, %v3197, %v2494
  %v3263 = vsel %vm3208, %v3198, %v2496
  %v3264 = vsel %vm3208, %v3199, %v2498
  %v3265 = vsel %vm3208, %v3200, %v2500
  %v3266 = vsel %vm3208, %v3201, %v2502
  %v3267 = vsel %vm3208, %v3202, %v2504
  %v3268 = vsel %vm3208, %v3203, %v2506
  %v3269 = vsel %vm3208, %v3204, %v2500
  %v3270 = vsel %vm3208, %v3205, %v2502
  %v3271 = vsel %vm3208, %v3206, %v2496
  %v3272 = vsel %vm3208, %v3207, %v2498
  %vm3273 = vcmask 457728
  %v3274 = vsel %vm3273, %v3209, %v2564
  %v3275 = vsel %vm3273, %v3210, %v2566
  %v3276 = vsel %vm3273, %v3211, %v2568
  %v3277 = vsel %vm3273, %v3212, %v2570
  %v3278 = vsel %vm3273, %v3213, %v2572
  %v3279 = vsel %vm3273, %v3214, %v2574
  %v3280 = vsel %vm3273, %v3215, %v2576
  %v3281 = vsel %vm3273, %v3216, %v2578
  %v3282 = vsel %vm3273, %v3217, %v2580
  %v3283 = vsel %vm3273, %v3218, %v2582
  %v3284 = vsel %vm3273, %v3219, %v2584
  %v3285 = vsel %vm3273, %v3220, %v2586
  %v3286 = vsel %vm3273, %v3221, %v2588
  %v3287 = vsel %vm3273, %v3222, %v2590
  %v3288 = vsel %vm3273, %v3223, %v2592
  %v3289 = vsel %vm3273, %v3224, %v2594
  %v3290 = vsel %vm3273, %v3225, %v2596
  %v3291 = vsel %vm3273, %v3226, %v2598
  %v3292 = vsel %vm3273, %v3227, %v2600
  %v3293 = vsel %vm3273, %v3228, %v2602
  %v3294 = vsel %vm3273, %v3229, %v2604
  %v3295 = vsel %vm3273, %v3230, %v2606
  %v3296 = vsel %vm3273, %v3231, %v2608
  %v3297 = vsel %vm3273, %v3232, %v2610
  %v3298 = vsel %vm3273, %v3233, %v2612
  %v3299 = vsel %vm3273, %v3234, %v2614
  %v3300 = vsel %vm3273, %v3235, %v2616
  %v3301 = vsel %vm3273, %v3236, %v2618
  %v3302 = vsel %vm3273, %v3237, %v2612
  %v3303 = vsel %vm3273, %v3238, %v2614
  %v3304 = vsel %vm3273, %v3239, %v2608
  %v3305 = vsel %vm3273, %v3240, %v2610
  %v3306 = vsel %vm3273, %v3241, %v2620
  %v3307 = vsel %vm3273, %v3242, %v2622
  %v3308 = vsel %vm3273, %v3243, %v2624
  %v3309 = vsel %vm3273, %v3244, %v2626
  %v3310 = vsel %vm3273, %v3245, %v2628
  %v3311 = vsel %vm3273, %v3246, %v2630
  %v3312 = vsel %vm3273, %v3247, %v2632
  %v3313 = vsel %vm3273, %v3248, %v2634
  %v3314 = vsel %vm3273, %v3249, %v2636
  %v3315 = vsel %vm3273, %v3250, %v2638
  %v3316 = vsel %vm3273, %v3251, %v2640
  %v3317 = vsel %vm3273, %v3252, %v2642
  %v3318 = vsel %vm3273, %v3253, %v2644
  %v3319 = vsel %vm3273, %v3254, %v2646
  %v3320 = vsel %vm3273, %v3255, %v2648
  %v3321 = vsel %vm3273, %v3256, %v2650
  %v3322 = vsel %vm3273, %v3257, %v2652
  %v3323 = vsel %vm3273, %v3258, %v2654
  %v3324 = vsel %vm3273, %v3259, %v2656
  %v3325 = vsel %vm3273, %v3260, %v2658
  %v3326 = vsel %vm3273, %v3261, %v2660
  %v3327 = vsel %vm3273, %v3262, %v2662
  %v3328 = vsel %vm3273, %v3263, %v2664
  %v3329 = vsel %vm3273, %v3264, %v2666
  %v3330 = vsel %vm3273, %v3265, %v2668
  %v3331 = vsel %vm3273, %v3266, %v2670
  %v3332 = vsel %vm3273, %v3267, %v2672
  %v3333 = vsel %vm3273, %v3268, %v2674
  %v3334 = vsel %vm3273, %v3269, %v2668
  %v3335 = vsel %vm3273, %v3270, %v2670
  %v3336 = vsel %vm3273, %v3271, %v2664
  %v3337 = vsel %vm3273, %v3272, %v2666
  %vm3338 = vcmask 523264
  %v3339 = vsel %vm3338, %v3274, %v2732
  %v3340 = vsel %vm3338, %v3275, %v2734
  %v3341 = vsel %vm3338, %v3276, %v2736
  %v3342 = vsel %vm3338, %v3277, %v2738
  %v3343 = vsel %vm3338, %v3278, %v2740
  %v3344 = vsel %vm3338, %v3279, %v2742
  %v3345 = vsel %vm3338, %v3280, %v2744
  %v3346 = vsel %vm3338, %v3281, %v2746
  %v3347 = vsel %vm3338, %v3282, %v2748
  %v3348 = vsel %vm3338, %v3283, %v2750
  %v3349 = vsel %vm3338, %v3284, %v2752
  %v3350 = vsel %vm3338, %v3285, %v2754
  %v3351 = vsel %vm3338, %v3286, %v2756
  %v3352 = vsel %vm3338, %v3287, %v2758
  %v3353 = vsel %vm3338, %v3288, %v2760
  %v3354 = vsel %vm3338, %v3289, %v2762
  %v3355 = vsel %vm3338, %v3290, %v2764
  %v3356 = vsel %vm3338, %v3291, %v2766
  %v3357 = vsel %vm3338, %v3292, %v2768
  %v3358 = vsel %vm3338, %v3293, %v2770
  %v3359 = vsel %vm3338, %v3294, %v2772
  %v3360 = vsel %vm3338, %v3295, %v2774
  %v3361 = vsel %vm3338, %v3296, %v2776
  %v3362 = vsel %vm3338, %v3297, %v2778
  %v3363 = vsel %vm3338, %v3298, %v2780
  %v3364 = vsel %vm3338, %v3299, %v2782
  %v3365 = vsel %vm3338, %v3300, %v2784
  %v3366 = vsel %vm3338, %v3301, %v2786
  %v3367 = vsel %vm3338, %v3302, %v2780
  %v3368 = vsel %vm3338, %v3303, %v2782
  %v3369 = vsel %vm3338, %v3304, %v2776
  %v3370 = vsel %vm3338, %v3305, %v2778
  %v3371 = vsel %vm3338, %v3306, %v2788
  %v3372 = vsel %vm3338, %v3307, %v2790
  %v3373 = vsel %vm3338, %v3308, %v2792
  %v3374 = vsel %vm3338, %v3309, %v2794
  %v3375 = vsel %vm3338, %v3310, %v2796
  %v3376 = vsel %vm3338, %v3311, %v2798
  %v3377 = vsel %vm3338, %v3312, %v2800
  %v3378 = vsel %vm3338, %v3313, %v2802
  %v3379 = vsel %vm3338, %v3314, %v2804
  %v3380 = vsel %vm3338, %v3315, %v2806
  %v3381 = vsel %vm3338, %v3316, %v2808
  %v3382 = vsel %vm3338, %v3317, %v2810
  %v3383 = vsel %vm3338, %v3318, %v2812
  %v3384 = vsel %vm3338, %v3319, %v2814
  %v3385 = vsel %vm3338, %v3320, %v2816
  %v3386 = vsel %vm3338, %v3321, %v2818
  %v3387 = vsel %vm3338, %v3322, %v2820
  %v3388 = vsel %vm3338, %v3323, %v2822
  %v3389 = vsel %vm3338, %v3324, %v2824
  %v3390 = vsel %vm3338, %v3325, %v2826
  %v3391 = vsel %vm3338, %v3326, %v2828
  %v3392 = vsel %vm3338, %v3327, %v2830
  %v3393 = vsel %vm3338, %v3328, %v2832
  %v3394 = vsel %vm3338, %v3329, %v2834
  %v3395 = vsel %vm3338, %v3330, %v2836
  %v3396 = vsel %vm3338, %v3331, %v2838
  %v3397 = vsel %vm3338, %v3332, %v2840
  %v3398 = vsel %vm3338, %v3333, %v2842
  %v3399 = vsel %vm3338, %v3334, %v2836
  %v3400 = vsel %vm3338, %v3335, %v2838
  %v3401 = vsel %vm3338, %v3336, %v2832
  %v3402 = vsel %vm3338, %v3337, %v2834
  %v3403 = vpack.c.bf16 %v3340, %v3339
  %v3404 = vpack.c.bf16 %v3342, %v3341
  %v3405 = vpack.c.bf16 %v3344, %v3343
  %v3406 = vpack.c.bf16 %v3346, %v3345
  %v3407 = vpack.c.bf16 %v3348, %v3347
  %v3408 = vpack.c.bf16 %v3350, %v3349
  %v3409 = vpack.c.bf16 %v3352, %v3351
  %v3410 = vpack.c.bf16 %v3354, %v3353
  %v3411 = vpack.c.bf16 %v3356, %v3355
  %v3412 = vpack.c.bf16 %v3358, %v3357
  %v3413 = vpack.c.bf16 %v3360, %v3359
  %v3414 = vpack.c.bf16 %v3362, %v3361
  %v3415 = vpack.c.bf16 %v3364, %v3363
  %v3416 = vpack.c.bf16 %v3366, %v3365
  %v3417 = vpack.c.bf16 %v3368, %v3367
  %v3418 = vpack.c.bf16 %v3370, %v3369
  %v3419 = vpack.c.bf16 %v3372, %v3371
  %v3420 = vpack.c.bf16 %v3374, %v3373
  %v3421 = vpack.c.bf16 %v3376, %v3375
  %v3422 = vpack.c.bf16 %v3378, %v3377
  %v3423 = vpack.c.bf16 %v3380, %v3379
  %v3424 = vpack.c.bf16 %v3382, %v3381
  %v3425 = vpack.c.bf16 %v3384, %v3383
  %v3426 = vpack.c.bf16 %v3386, %v3385
  %v3427 = vpack.c.bf16 %v3388, %v3387
  %v3428 = vpack.c.bf16 %v3390, %v3389
  %v3429 = vpack.c.bf16 %v3392, %v3391
  %v3430 = vpack.c.bf16 %v3394, %v3393
  %v3431 = vpack.c.bf16 %v3396, %v3395
  %v3432 = vpack.c.bf16 %v3398, %v3397
  %v3433 = vpack.c.bf16 %v3400, %v3399
  %v3434 = vpack.c.bf16 %v3402, %v3401
  %v3435 = vld [vmem:[%s2] sm:$0xf]
  %v3436 = vld [vmem:[%s2 + $0x4] sm:$0xf]
  %v3437 = vld [vmem:[%s2 + $0x8] sm:$0xf]
  %v3438 = vld [vmem:[%s2 + $0xc] sm:$0xf]
  %v3439 = vld [vmem:[%s2 + $0x10] sm:$0xf]
  %v3440 = vld [vmem:[%s2 + $0x14] sm:$0xf]
  %v3441 = vld [vmem:[%s2 + $0x18] sm:$0xf]
  %v3442 = vld [vmem:[%s2 + $0x1c] sm:$0xf]
  %v3443 = vld [vmem:[%s2 + $0x20] sm:$0xf]
  %v3444 = vld [vmem:[%s3] sm:$0x1]
  %v3446 = vlaneseq
  %v3447 = vshrl.u32 %v3446, 7
  %v3448 = vsub.s32 0, %v3447
  %v3449 = vrot.slane %v3444, %v3448
  %v3460 = vunpack.c.l.b16 %v3435
  %v3461 = vunpack.c.l.b16 %v3436
  %v3462 = vunpack.c.l.b16 %v3437
  %v3463 = vunpack.c.l.b16 %v3438
  %v3464 = vunpack.c.l.b16 %v3439
  %v3465 = vunpack.c.l.b16 %v3440
  %v3466 = vunpack.c.l.b16 %v3441
  %v3467 = vunpack.c.l.b16 %v3442
  %v3468 = vunpack.c.l.b16 %v3443
  %v3469 = vpack.c.b16 %v3461, %v3460
  %v3470 = vpack.c.b16 %v3463, %v3462
  %v3471 = vpack.c.b16 %v3465, %v3464
  %v3472 = vpack.c.b16 %v3467, %v3466
  %v3473 = vpack.c.b16 %v3468, %v3468
  %vm3478 = vcmask 588800
  %v3480 = vsel %vm3478, %v3403, 0
  %v3483 = vsel %vm3478, %v3404, 0
  %v3486 = vsel %vm3478, %v3405, 0
  %v3489 = vsel %vm3478, %v3406, 0
  %v3492 = vsel %vm3478, %v3407, 0
  %v3495 = vsel %vm3478, %v3408, 0
  %v3498 = vsel %vm3478, %v3409, 0
  %v3501 = vsel %vm3478, %v3410, 0
  %v3504 = vsel %vm3478, %v3411, 0
  %v3507 = vsel %vm3478, %v3412, 0
  %v3510 = vsel %vm3478, %v3413, 0
  %v3513 = vsel %vm3478, %v3414, 0
  %v3516 = vsel %vm3478, %v3415, 0
  %v3519 = vsel %vm3478, %v3416, 0
  %v3522 = vsel %vm3478, %v3417, 0
  %v3525 = vsel %vm3478, %v3418, 0
  %v3528 = vsel %vm3478, %v3419, 0
  %v3531 = vsel %vm3478, %v3420, 0
  %v3534 = vsel %vm3478, %v3421, 0
  %v3537 = vsel %vm3478, %v3422, 0
  %v3540 = vsel %vm3478, %v3423, 0
  %v3543 = vsel %vm3478, %v3424, 0
  %v3546 = vsel %vm3478, %v3425, 0
  %v3549 = vsel %vm3478, %v3426, 0
  %v3552 = vsel %vm3478, %v3427, 0
  %v3555 = vsel %vm3478, %v3428, 0
  %v3558 = vsel %vm3478, %v3429, 0
  %v3561 = vsel %vm3478, %v3430, 0
  %v3564 = vsel %vm3478, %v3431, 0
  %v3567 = vsel %vm3478, %v3432, 0
  %v3570 = vsel %vm3478, %v3433, 0
  %v3573 = vsel %vm3478, %v3434, 0
  %v3576 = vsel %vm1294, %v3473, 0
  %3578 = vmatprep.subr.bf16.mxu0 0
  %3579 = vmatpush1.bf16.msra.mxu0 0
  %3580 = vmatprep.subr.bf16.mxu0 0
  %3581 = vmatpush1.bf16.msra.mxu0 0
  %3582 = vmatprep.subr.bf16.mxu0 0
  %3583 = vmatpush1.bf16.msra.mxu0 0
  %3584 = vmatprep.subr.bf16.mxu0 0
  %3585 = vmatpush1.bf16.msra.mxu0 %v3576
  %3586 = vmatprep.subr.bf16.mxu0 0
  %3587 = vmatpush1.bf16.msra.mxu0 %v3472
  %3588 = vmatprep.subr.bf16.mxu0 0
  %3589 = vmatpush1.bf16.msra.mxu0 %v3471
  %3590 = vmatprep.subr.bf16.mxu0 0
  %3591 = vmatpush1.bf16.msra.mxu0 %v3470
  %3592 = vmatprep.subr.bf16.mxu0 0
  %3593 = vmatpush1.bf16.msra.mxu0 %v3469
  %3594 = vmatprep.subr.bf16.mxu0 0
  %3595 = vmatpush2.bf16.msra.mxu0 0
  %3596 = vmatprep.subr.bf16.mxu0 0
  %3597 = vmatpush2.bf16.msra.mxu0 0
  %3598 = vmatprep.subr.bf16.mxu0 0
  %3599 = vmatpush2.bf16.msra.mxu0 0
  %3600 = vmatprep.subr.bf16.mxu0 0
  %3601 = vmatpush2.bf16.msra.mxu0 0
  %3602 = vmatprep.subr.bf16.mxu0 0
  %3603 = vmatpush2.bf16.msra.mxu0 0
  %3604 = vmatprep.subr.bf16.mxu0 0
  %3605 = vmatpush2.bf16.msra.mxu0 0
  %3606 = vmatprep.subr.bf16.mxu0 0
  %3607 = vmatpush2.bf16.msra.mxu0 0
  %3608 = vmatprep.subr.bf16.mxu0 0
  %3609 = vmatpush2.bf16.msra.mxu0 0
  %3610 = vmatprep.mubr.bf16.mxu0 0
  %3611 = vmatmul.mubr.bf16.gmra.mxu0 %v3480
  %v3612 = vpop.f32.mrf.mxu0
  %v3613 = vadd.f32 %v3449, %v3612
  %v3614 = vpop.f32.mrf.mxu0
  %v3615 = vpop.f32.mrf.mxu0
  %v3616 = vadd.f32 %v3449, %v3615
  %v3617 = vpop.f32.mrf.mxu0
  %3618 = vmatprep.mubr.bf16.mxu0 0
  %3619 = vmatmul.mubr.bf16.gmra.mxu0 %v3483
  %v3620 = vpop.f32.mrf.mxu0
  %v3621 = vadd.f32 %v3449, %v3620
  %v3622 = vpop.f32.mrf.mxu0
  %v3623 = vpop.f32.mrf.mxu0
  %v3624 = vadd.f32 %v3449, %v3623
  %v3625 = vpop.f32.mrf.mxu0
  %3626 = vmatprep.mubr.bf16.mxu0 0
  %3627 = vmatmul.mubr.bf16.gmra.mxu0 %v3486
  %v3628 = vpop.f32.mrf.mxu0
  %v3629 = vadd.f32 %v3449, %v3628
  %v3630 = vpop.f32.mrf.mxu0
  %v3631 = vpop.f32.mrf.mxu0
  %v3632 = vadd.f32 %v3449, %v3631
  %v3633 = vpop.f32.mrf.mxu0
  %3634 = vmatprep.mubr.bf16.mxu0 0
  %3635 = vmatmul.mubr.bf16.gmra.mxu0 %v3489
  %v3636 = vpop.f32.mrf.mxu0
  %v3637 = vadd.f32 %v3449, %v3636
  %v3638 = vpop.f32.mrf.mxu0
  %v3639 = vpop.f32.mrf.mxu0
  %v3640 = vadd.f32 %v3449, %v3639
  %v3641 = vpop.f32.mrf.mxu0
  %3642 = vmatprep.mubr.bf16.mxu0 0
  %3643 = vmatmul.mubr.bf16.gmra.mxu0 %v3492
  %v3644 = vpop.f32.mrf.mxu0
  %v3645 = vadd.f32 %v3449, %v3644
  %v3646 = vpop.f32.mrf.mxu0
  %v3647 = vpop.f32.mrf.mxu0
  %v3648 = vadd.f32 %v3449, %v3647
  %v3649 = vpop.f32.mrf.mxu0
  %3650 = vmatprep.mubr.bf16.mxu0 0
  %3651 = vmatmul.mubr.bf16.gmra.mxu0 %v3495
  %v3652 = vpop.f32.mrf.mxu0
  %v3653 = vadd.f32 %v3449, %v3652
  %v3654 = vpop.f32.mrf.mxu0
  %v3655 = vpop.f32.mrf.mxu0
  %v3656 = vadd.f32 %v3449, %v3655
  %v3657 = vpop.f32.mrf.mxu0
  %3658 = vmatprep.mubr.bf16.mxu0 0
  %3659 = vmatmul.mubr.bf16.gmra.mxu0 %v3498
  %v3660 = vpop.f32.mrf.mxu0
  %v3661 = vadd.f32 %v3449, %v3660
  %v3662 = vpop.f32.mrf.mxu0
  %v3663 = vpop.f32.mrf.mxu0
  %v3664 = vadd.f32 %v3449, %v3663
  %v3665 = vpop.f32.mrf.mxu0
  %3666 = vmatprep.mubr.bf16.mxu0 0
  %3667 = vmatmul.mubr.bf16.gmra.mxu0 %v3501
  %v3668 = vpop.f32.mrf.mxu0
  %v3669 = vadd.f32 %v3449, %v3668
  %v3670 = vpop.f32.mrf.mxu0
  %v3671 = vpop.f32.mrf.mxu0
  %v3672 = vadd.f32 %v3449, %v3671
  %v3673 = vpop.f32.mrf.mxu0
  %3674 = vmatprep.mubr.bf16.mxu0 0
  %3675 = vmatmul.mubr.bf16.gmra.mxu0 %v3504
  %v3676 = vpop.f32.mrf.mxu0
  %v3677 = vadd.f32 %v3449, %v3676
  %v3678 = vpop.f32.mrf.mxu0
  %v3679 = vpop.f32.mrf.mxu0
  %v3680 = vadd.f32 %v3449, %v3679
  %v3681 = vpop.f32.mrf.mxu0
  %3682 = vmatprep.mubr.bf16.mxu0 0
  %3683 = vmatmul.mubr.bf16.gmra.mxu0 %v3507
  %v3684 = vpop.f32.mrf.mxu0
  %v3685 = vadd.f32 %v3449, %v3684
  %v3686 = vpop.f32.mrf.mxu0
  %v3687 = vpop.f32.mrf.mxu0
  %v3688 = vadd.f32 %v3449, %v3687
  %v3689 = vpop.f32.mrf.mxu0
  %3690 = vmatprep.mubr.bf16.mxu0 0
  %3691 = vmatmul.mubr.bf16.gmra.mxu0 %v3510
  %v3692 = vpop.f32.mrf.mxu0
  %v3693 = vadd.f32 %v3449, %v3692
  %v3694 = vpop.f32.mrf.mxu0
  %v3695 = vpop.f32.mrf.mxu0
  %v3696 = vadd.f32 %v3449, %v3695
  %v3697 = vpop.f32.mrf.mxu0
  %3698 = vmatprep.mubr.bf16.mxu0 0
  %3699 = vmatmul.mubr.bf16.gmra.mxu0 %v3513
  %v3700 = vpop.f32.mrf.mxu0
  %v3701 = vadd.f32 %v3449, %v3700
  %v3702 = vpop.f32.mrf.mxu0
  %v3703 = vpop.f32.mrf.mxu0
  %v3704 = vadd.f32 %v3449, %v3703
  %v3705 = vpop.f32.mrf.mxu0
  %3706 = vmatprep.mubr.bf16.mxu0 0
  %3707 = vmatmul.mubr.bf16.gmra.mxu0 %v3516
  %v3708 = vpop.f32.mrf.mxu0
  %v3709 = vadd.f32 %v3449, %v3708
  %v3710 = vpop.f32.mrf.mxu0
  %v3711 = vpop.f32.mrf.mxu0
  %v3712 = vadd.f32 %v3449, %v3711
  %v3713 = vpop.f32.mrf.mxu0
  %3714 = vmatprep.mubr.bf16.mxu0 0
  %3715 = vmatmul.mubr.bf16.gmra.mxu0 %v3519
  %v3716 = vpop.f32.mrf.mxu0
  %v3717 = vadd.f32 %v3449, %v3716
  %v3718 = vpop.f32.mrf.mxu0
  %v3719 = vpop.f32.mrf.mxu0
  %v3720 = vadd.f32 %v3449, %v3719
  %v3721 = vpop.f32.mrf.mxu0
  %3722 = vmatprep.mubr.bf16.mxu0 0
  %3723 = vmatmul.mubr.bf16.gmra.mxu0 %v3522
  %v3724 = vpop.f32.mrf.mxu0
  %v3725 = vadd.f32 %v3449, %v3724
  %v3726 = vpop.f32.mrf.mxu0
  %v3727 = vpop.f32.mrf.mxu0
  %v3728 = vadd.f32 %v3449, %v3727
  %v3729 = vpop.f32.mrf.mxu0
  %3730 = vmatprep.mubr.bf16.mxu0 0
  %3731 = vmatmul.mubr.bf16.gmra.mxu0 %v3525
  %v3732 = vpop.f32.mrf.mxu0
  %v3733 = vadd.f32 %v3449, %v3732
  %v3734 = vpop.f32.mrf.mxu0
  %v3735 = vpop.f32.mrf.mxu0
  %v3736 = vadd.f32 %v3449, %v3735
  %v3737 = vpop.f32.mrf.mxu0
  %3738 = vmatprep.mubr.bf16.mxu0 0
  %3739 = vmatmul.mubr.bf16.gmra.mxu0 %v3528
  %v3740 = vpop.f32.mrf.mxu0
  %v3741 = vadd.f32 %v3449, %v3740
  %v3742 = vpop.f32.mrf.mxu0
  %v3743 = vpop.f32.mrf.mxu0
  %v3744 = vadd.f32 %v3449, %v3743
  %v3745 = vpop.f32.mrf.mxu0
  %3746 = vmatprep.mubr.bf16.mxu0 0
  %3747 = vmatmul.mubr.bf16.gmra.mxu0 %v3531
  %v3748 = vpop.f32.mrf.mxu0
  %v3749 = vadd.f32 %v3449, %v3748
  %v3750 = vpop.f32.mrf.mxu0
  %v3751 = vpop.f32.mrf.mxu0
  %v3752 = vadd.f32 %v3449, %v3751
  %v3753 = vpop.f32.mrf.mxu0
  %3754 = vmatprep.mubr.bf16.mxu0 0
  %3755 = vmatmul.mubr.bf16.gmra.mxu0 %v3534
  %v3756 = vpop.f32.mrf.mxu0
  %v3757 = vadd.f32 %v3449, %v3756
  %v3758 = vpop.f32.mrf.mxu0
  %v3759 = vpop.f32.mrf.mxu0
  %v3760 = vadd.f32 %v3449, %v3759
  %v3761 = vpop.f32.mrf.mxu0
  %3762 = vmatprep.mubr.bf16.mxu0 0
  %3763 = vmatmul.mubr.bf16.gmra.mxu0 %v3537
  %v3764 = vpop.f32.mrf.mxu0
  %v3765 = vadd.f32 %v3449, %v3764
  %v3766 = vpop.f32.mrf.mxu0
  %v3767 = vpop.f32.mrf.mxu0
  %v3768 = vadd.f32 %v3449, %v3767
  %v3769 = vpop.f32.mrf.mxu0
  %3770 = vmatprep.mubr.bf16.mxu0 0
  %3771 = vmatmul.mubr.bf16.gmra.mxu0 %v3540
  %v3772 = vpop.f32.mrf.mxu0
  %v3773 = vadd.f32 %v3449, %v3772
  %v3774 = vpop.f32.mrf.mxu0
  %v3775 = vpop.f32.mrf.mxu0
  %v3776 = vadd.f32 %v3449, %v3775
  %v3777 = vpop.f32.mrf.mxu0
  %3778 = vmatprep.mubr.bf16.mxu0 0
  %3779 = vmatmul.mubr.bf16.gmra.mxu0 %v3543
  %v3780 = vpop.f32.mrf.mxu0
  %v3781 = vadd.f32 %v3449, %v3780
  %v3782 = vpop.f32.mrf.mxu0
  %v3783 = vpop.f32.mrf.mxu0
  %v3784 = vadd.f32 %v3449, %v3783
  %v3785 = vpop.f32.mrf.mxu0
  %3786 = vmatprep.mubr.bf16.mxu0 0
  %3787 = vmatmul.mubr.bf16.gmra.mxu0 %v3546
  %v3788 = vpop.f32.mrf.mxu0
  %v3789 = vadd.f32 %v3449, %v3788
  %v3790 = vpop.f32.mrf.mxu0
  %v3791 = vpop.f32.mrf.mxu0
  %v3792 = vadd.f32 %v3449, %v3791
  %v3793 = vpop.f32.mrf.mxu0
  %3794 = vmatprep.mubr.bf16.mxu0 0
  %3795 = vmatmul.mubr.bf16.gmra.mxu0 %v3549
  %v3796 = vpop.f32.mrf.mxu0
  %v3797 = vadd.f32 %v3449, %v3796
  %v3798 = vpop.f32.mrf.mxu0
  %v3799 = vpop.f32.mrf.mxu0
  %v3800 = vadd.f32 %v3449, %v3799
  %v3801 = vpop.f32.mrf.mxu0
  %3802 = vmatprep.mubr.bf16.mxu0 0
  %3803 = vmatmul.mubr.bf16.gmra.mxu0 %v3552
  %v3804 = vpop.f32.mrf.mxu0
  %v3805 = vadd.f32 %v3449, %v3804
  %v3806 = vpop.f32.mrf.mxu0
  %v3807 = vpop.f32.mrf.mxu0
  %v3808 = vadd.f32 %v3449, %v3807
  %v3809 = vpop.f32.mrf.mxu0
  %3810 = vmatprep.mubr.bf16.mxu0 0
  %3811 = vmatmul.mubr.bf16.gmra.mxu0 %v3555
  %v3812 = vpop.f32.mrf.mxu0
  %v3813 = vadd.f32 %v3449, %v3812
  %v3814 = vpop.f32.mrf.mxu0
  %v3815 = vpop.f32.mrf.mxu0
  %v3816 = vadd.f32 %v3449, %v3815
  %v3817 = vpop.f32.mrf.mxu0
  %3818 = vmatprep.mubr.bf16.mxu0 0
  %3819 = vmatmul.mubr.bf16.gmra.mxu0 %v3558
  %v3820 = vpop.f32.mrf.mxu0
  %v3821 = vadd.f32 %v3449, %v3820
  %v3822 = vpop.f32.mrf.mxu0
  %v3823 = vpop.f32.mrf.mxu0
  %v3824 = vadd.f32 %v3449, %v3823
  %v3825 = vpop.f32.mrf.mxu0
  %3826 = vmatprep.mubr.bf16.mxu0 0
  %3827 = vmatmul.mubr.bf16.gmra.mxu0 %v3561
  %v3828 = vpop.f32.mrf.mxu0
  %v3829 = vadd.f32 %v3449, %v3828
  %v3830 = vpop.f32.mrf.mxu0
  %v3831 = vpop.f32.mrf.mxu0
  %v3832 = vadd.f32 %v3449, %v3831
  %v3833 = vpop.f32.mrf.mxu0
  %3834 = vmatprep.mubr.bf16.mxu0 0
  %3835 = vmatmul.mubr.bf16.gmra.mxu0 %v3564
  %v3836 = vpop.f32.mrf.mxu0
  %v3837 = vadd.f32 %v3449, %v3836
  %v3838 = vpop.f32.mrf.mxu0
  %v3839 = vpop.f32.mrf.mxu0
  %v3840 = vadd.f32 %v3449, %v3839
  %v3841 = vpop.f32.mrf.mxu0
  %3842 = vmatprep.mubr.bf16.mxu0 0
  %3843 = vmatmul.mubr.bf16.gmra.mxu0 %v3567
  %v3844 = vpop.f32.mrf.mxu0
  %v3845 = vadd.f32 %v3449, %v3844
  %v3846 = vpop.f32.mrf.mxu0
  %v3847 = vpop.f32.mrf.mxu0
  %v3848 = vadd.f32 %v3449, %v3847
  %v3849 = vpop.f32.mrf.mxu0
  %3850 = vmatprep.mubr.bf16.mxu0 0
  %3851 = vmatmul.mubr.bf16.gmra.mxu0 %v3570
  %v3852 = vpop.f32.mrf.mxu0
  %v3853 = vadd.f32 %v3449, %v3852
  %v3854 = vpop.f32.mrf.mxu0
  %v3855 = vpop.f32.mrf.mxu0
  %v3856 = vadd.f32 %v3449, %v3855
  %v3857 = vpop.f32.mrf.mxu0
  %3858 = vmatprep.mubr.bf16.mxu0 0
  %3859 = vmatmul.mubr.bf16.gmra.mxu0 %v3573
  %v3860 = vpop.f32.mrf.mxu0
  %v3861 = vadd.f32 %v3449, %v3860
  %v3862 = vpop.f32.mrf.mxu0
  %v3863 = vpop.f32.mrf.mxu0
  %v3864 = vadd.f32 %v3449, %v3863
  %v3865 = vpop.f32.mrf.mxu0
  %3866 = vdwg.mxu0
  %v3867 = vsel %vm2899, %v3613, 0.0
  %v3868 = vsel %vm2899, %v3616, 0.0
  %v3869 = vadd.f32 %v3867, %v3868
  %v3870 = vsel %vm2899, %v3621, 0.0
  %v3871 = vadd.f32 %v3869, %v3870
  %v3872 = vsel %vm2899, %v3624, 0.0
  %v3873 = vadd.f32 %v3871, %v3872
  %v3874 = vsel %vm2899, %v3629, 0.0
  %v3875 = vadd.f32 %v3873, %v3874
  %v3876 = vsel %vm2899, %v3632, 0.0
  %v3877 = vadd.f32 %v3875, %v3876
  %v3878 = vsel %vm2899, %v3637, 0.0
  %v3879 = vadd.f32 %v3877, %v3878
  %v3880 = vsel %vm2899, %v3640, 0.0
  %v3881 = vadd.f32 %v3879, %v3880
  %v3882 = vsel %vm2899, %v3645, 0.0
  %v3883 = vadd.f32 %v3881, %v3882
  %v3884 = vsel %vm2899, %v3648, 0.0
  %v3885 = vadd.f32 %v3883, %v3884
  %v3886 = vsel %vm2899, %v3653, 0.0
  %v3887 = vadd.f32 %v3885, %v3886
  %v3888 = vsel %vm2899, %v3656, 0.0
  %v3889 = vadd.f32 %v3887, %v3888
  %v3890 = vsel %vm2899, %v3661, 0.0
  %v3891 = vadd.f32 %v3889, %v3890
  %v3892 = vsel %vm2899, %v3664, 0.0
  %v3893 = vadd.f32 %v3891, %v3892
  %v3894 = vsel %vm2899, %v3669, 0.0
  %v3895 = vadd.f32 %v3893, %v3894
  %v3896 = vsel %vm2899, %v3672, 0.0
  %v3897 = vadd.f32 %v3895, %v3896
  %v3898 = vsel %vm2899, %v3677, 0.0
  %v3899 = vadd.f32 %v3897, %v3898
  %v3900 = vsel %vm2899, %v3680, 0.0
  %v3901 = vadd.f32 %v3899, %v3900
  %v3902 = vsel %vm2899, %v3685, 0.0
  %v3903 = vadd.f32 %v3901, %v3902
  %v3904 = vsel %vm2899, %v3688, 0.0
  %v3905 = vadd.f32 %v3903, %v3904
  %v3906 = vsel %vm2899, %v3693, 0.0
  %v3907 = vadd.f32 %v3905, %v3906
  %v3908 = vsel %vm2899, %v3696, 0.0
  %v3909 = vadd.f32 %v3907, %v3908
  %v3910 = vsel %vm2899, %v3701, 0.0
  %v3911 = vadd.f32 %v3909, %v3910
  %v3912 = vsel %vm2899, %v3704, 0.0
  %v3913 = vadd.f32 %v3911, %v3912
  %v3914 = vsel %vm2899, %v3709, 0.0
  %v3915 = vadd.f32 %v3913, %v3914
  %v3916 = vsel %vm2899, %v3712, 0.0
  %v3917 = vadd.f32 %v3915, %v3916
  %v3918 = vsel %vm2899, %v3717, 0.0
  %v3919 = vadd.f32 %v3917, %v3918
  %v3920 = vsel %vm2899, %v3720, 0.0
  %v3921 = vadd.f32 %v3919, %v3920
  %v3922 = vsel %vm2899, %v3725, 0.0
  %v3923 = vadd.f32 %v3921, %v3922
  %v3924 = vsel %vm2899, %v3728, 0.0
  %v3925 = vadd.f32 %v3923, %v3924
  %v3926 = vsel %vm2899, %v3733, 0.0
  %v3927 = vadd.f32 %v3925, %v3926
  %v3928 = vsel %vm2899, %v3736, 0.0
  %v3929 = vadd.f32 %v3927, %v3928
  %v3930 = vsel %vm2899, %v3741, 0.0
  %v3931 = vadd.f32 %v3929, %v3930
  %v3932 = vsel %vm2899, %v3744, 0.0
  %v3933 = vadd.f32 %v3931, %v3932
  %v3934 = vsel %vm2899, %v3749, 0.0
  %v3935 = vadd.f32 %v3933, %v3934
  %v3936 = vsel %vm2899, %v3752, 0.0
  %v3937 = vadd.f32 %v3935, %v3936
  %v3938 = vsel %vm2899, %v3757, 0.0
  %v3939 = vadd.f32 %v3937, %v3938
  %v3940 = vsel %vm2899, %v3760, 0.0
  %v3941 = vadd.f32 %v3939, %v3940
  %v3942 = vsel %vm2899, %v3765, 0.0
  %v3943 = vadd.f32 %v3941, %v3942
  %v3944 = vsel %vm2899, %v3768, 0.0
  %v3945 = vadd.f32 %v3943, %v3944
  %v3946 = vsel %vm2899, %v3773, 0.0
  %v3947 = vadd.f32 %v3945, %v3946
  %v3948 = vsel %vm2899, %v3776, 0.0
  %v3949 = vadd.f32 %v3947, %v3948
  %v3950 = vsel %vm2899, %v3781, 0.0
  %v3951 = vadd.f32 %v3949, %v3950
  %v3952 = vsel %vm2899, %v3784, 0.0
  %v3953 = vadd.f32 %v3951, %v3952
  %v3954 = vsel %vm2899, %v3789, 0.0
  %v3955 = vadd.f32 %v3953, %v3954
  %v3956 = vsel %vm2899, %v3792, 0.0
  %v3957 = vadd.f32 %v3955, %v3956
  %v3958 = vsel %vm2899, %v3797, 0.0
  %v3959 = vadd.f32 %v3957, %v3958
  %v3960 = vsel %vm2899, %v3800, 0.0
  %v3961 = vadd.f32 %v3959, %v3960
  %v3962 = vsel %vm2899, %v3805, 0.0
  %v3963 = vadd.f32 %v3961, %v3962
  %v3964 = vsel %vm2899, %v3808, 0.0
  %v3965 = vadd.f32 %v3963, %v3964
  %v3966 = vsel %vm2899, %v3813, 0.0
  %v3967 = vadd.f32 %v3965, %v3966
  %v3968 = vsel %vm2899, %v3816, 0.0
  %v3969 = vadd.f32 %v3967, %v3968
  %v3970 = vsel %vm2899, %v3821, 0.0
  %v3971 = vadd.f32 %v3969, %v3970
  %v3972 = vsel %vm2899, %v3824, 0.0
  %v3973 = vadd.f32 %v3971, %v3972
  %v3974 = vsel %vm2899, %v3829, 0.0
  %v3975 = vadd.f32 %v3973, %v3974
  %v3976 = vsel %vm2899, %v3832, 0.0
  %v3977 = vadd.f32 %v3975, %v3976
  %v3978 = vsel %vm2899, %v3837, 0.0
  %v3979 = vadd.f32 %v3977, %v3978
  %v3980 = vsel %vm2899, %v3840, 0.0
  %v3981 = vadd.f32 %v3979, %v3980
  %v3982 = vsel %vm2899, %v3845, 0.0
  %v3983 = vadd.f32 %v3981, %v3982
  %v3984 = vsel %vm2899, %v3848, 0.0
  %v3985 = vadd.f32 %v3983, %v3984
  %v3986 = vsel %vm2899, %v3853, 0.0
  %v3987 = vadd.f32 %v3985, %v3986
  %v3988 = vsel %vm2899, %v3856, 0.0
  %v3989 = vadd.f32 %v3987, %v3988
  %v3990 = vsel %vm2899, %v3861, 0.0
  %v3991 = vadd.f32 %v3989, %v3990
  %v3992 = vsel %vm2899, %v3864, 0.0
  %v3993 = vadd.f32 %v3991, %v3992
  %v3994 = vrot.slane %v3993, 4
  %v3995 = vadd.f32 %v3993, %v3994
  %v3996 = vrot.slane %v3995, 2
  %v3997 = vadd.f32 %v3995, %v3996
  %v3998 = vrot.slane %v3997, 1
  %v3999 = vadd.f32 %v3997, %v3998
  %v4000 = vmul.f32 %v3999, 0.001953125
  %v4001 = vsub.f32 %v3613, %v4000
  %v4002 = vsub.f32 %v3616, %v4000
  %v4003 = vsub.f32 %v3621, %v4000
  %v4004 = vsub.f32 %v3624, %v4000
  %v4005 = vsub.f32 %v3629, %v4000
  %v4006 = vsub.f32 %v3632, %v4000
  %v4007 = vsub.f32 %v3637, %v4000
  %v4008 = vsub.f32 %v3640, %v4000
  %v4009 = vsub.f32 %v3645, %v4000
  %v4010 = vsub.f32 %v3648, %v4000
  %v4011 = vsub.f32 %v3653, %v4000
  %v4012 = vsub.f32 %v3656, %v4000
  %v4013 = vsub.f32 %v3661, %v4000
  %v4014 = vsub.f32 %v3664, %v4000
  %v4015 = vsub.f32 %v3669, %v4000
  %v4016 = vsub.f32 %v3672, %v4000
  %v4017 = vsub.f32 %v3677, %v4000
  %v4018 = vsub.f32 %v3680, %v4000
  %v4019 = vsub.f32 %v3685, %v4000
  %v4020 = vsub.f32 %v3688, %v4000
  %v4021 = vsub.f32 %v3693, %v4000
  %v4022 = vsub.f32 %v3696, %v4000
  %v4023 = vsub.f32 %v3701, %v4000
  %v4024 = vsub.f32 %v3704, %v4000
  %v4025 = vsub.f32 %v3709, %v4000
  %v4026 = vsub.f32 %v3712, %v4000
  %v4027 = vsub.f32 %v3717, %v4000
  %v4028 = vsub.f32 %v3720, %v4000
  %v4029 = vsub.f32 %v3725, %v4000
  %v4030 = vsub.f32 %v3728, %v4000
  %v4031 = vsub.f32 %v3733, %v4000
  %v4032 = vsub.f32 %v3736, %v4000
  %v4033 = vsub.f32 %v3741, %v4000
  %v4034 = vsub.f32 %v3744, %v4000
  %v4035 = vsub.f32 %v3749, %v4000
  %v4036 = vsub.f32 %v3752, %v4000
  %v4037 = vsub.f32 %v3757, %v4000
  %v4038 = vsub.f32 %v3760, %v4000
  %v4039 = vsub.f32 %v3765, %v4000
  %v4040 = vsub.f32 %v3768, %v4000
  %v4041 = vsub.f32 %v3773, %v4000
  %v4042 = vsub.f32 %v3776, %v4000
  %v4043 = vsub.f32 %v3781, %v4000
  %v4044 = vsub.f32 %v3784, %v4000
  %v4045 = vsub.f32 %v3789, %v4000
  %v4046 = vsub.f32 %v3792, %v4000
  %v4047 = vsub.f32 %v3797, %v4000
  %v4048 = vsub.f32 %v3800, %v4000
  %v4049 = vsub.f32 %v3805, %v4000
  %v4050 = vsub.f32 %v3808, %v4000
  %v4051 = vsub.f32 %v3813, %v4000
  %v4052 = vsub.f32 %v3816, %v4000
  %v4053 = vsub.f32 %v3821, %v4000
  %v4054 = vsub.f32 %v3824, %v4000
  %v4055 = vsub.f32 %v3829, %v4000
  %v4056 = vsub.f32 %v3832, %v4000
  %v4057 = vsub.f32 %v3837, %v4000
  %v4058 = vsub.f32 %v3840, %v4000
  %v4059 = vsub.f32 %v3845, %v4000
  %v4060 = vsub.f32 %v3848, %v4000
  %v4061 = vsub.f32 %v3853, %v4000
  %v4062 = vsub.f32 %v3856, %v4000
  %v4063 = vsub.f32 %v3861, %v4000
  %v4064 = vsub.f32 %v3864, %v4000
  %v4065 = vmul.f32 %v4001, %v4001
  %v4066 = vmul.f32 %v4002, %v4002
  %v4067 = vmul.f32 %v4003, %v4003
  %v4068 = vmul.f32 %v4004, %v4004
  %v4069 = vmul.f32 %v4005, %v4005
  %v4070 = vmul.f32 %v4006, %v4006
  %v4071 = vmul.f32 %v4007, %v4007
  %v4072 = vmul.f32 %v4008, %v4008
  %v4073 = vmul.f32 %v4009, %v4009
  %v4074 = vmul.f32 %v4010, %v4010
  %v4075 = vmul.f32 %v4011, %v4011
  %v4076 = vmul.f32 %v4012, %v4012
  %v4077 = vmul.f32 %v4013, %v4013
  %v4078 = vmul.f32 %v4014, %v4014
  %v4079 = vmul.f32 %v4015, %v4015
  %v4080 = vmul.f32 %v4016, %v4016
  %v4081 = vmul.f32 %v4017, %v4017
  %v4082 = vmul.f32 %v4018, %v4018
  %v4083 = vmul.f32 %v4019, %v4019
  %v4084 = vmul.f32 %v4020, %v4020
  %v4085 = vmul.f32 %v4021, %v4021
  %v4086 = vmul.f32 %v4022, %v4022
  %v4087 = vmul.f32 %v4023, %v4023
  %v4088 = vmul.f32 %v4024, %v4024
  %v4089 = vmul.f32 %v4025, %v4025
  %v4090 = vmul.f32 %v4026, %v4026
  %v4091 = vmul.f32 %v4027, %v4027
  %v4092 = vmul.f32 %v4028, %v4028
  %v4093 = vmul.f32 %v4029, %v4029
  %v4094 = vmul.f32 %v4030, %v4030
  %v4095 = vmul.f32 %v4031, %v4031
  %v4096 = vmul.f32 %v4032, %v4032
  %v4097 = vmul.f32 %v4033, %v4033
  %v4098 = vmul.f32 %v4034, %v4034
  %v4099 = vmul.f32 %v4035, %v4035
  %v4100 = vmul.f32 %v4036, %v4036
  %v4101 = vmul.f32 %v4037, %v4037
  %v4102 = vmul.f32 %v4038, %v4038
  %v4103 = vmul.f32 %v4039, %v4039
  %v4104 = vmul.f32 %v4040, %v4040
  %v4105 = vmul.f32 %v4041, %v4041
  %v4106 = vmul.f32 %v4042, %v4042
  %v4107 = vmul.f32 %v4043, %v4043
  %v4108 = vmul.f32 %v4044, %v4044
  %v4109 = vmul.f32 %v4045, %v4045
  %v4110 = vmul.f32 %v4046, %v4046
  %v4111 = vmul.f32 %v4047, %v4047
  %v4112 = vmul.f32 %v4048, %v4048
  %v4113 = vmul.f32 %v4049, %v4049
  %v4114 = vmul.f32 %v4050, %v4050
  %v4115 = vmul.f32 %v4051, %v4051
  %v4116 = vmul.f32 %v4052, %v4052
  %v4117 = vmul.f32 %v4053, %v4053
  %v4118 = vmul.f32 %v4054, %v4054
  %v4119 = vmul.f32 %v4055, %v4055
  %v4120 = vmul.f32 %v4056, %v4056
  %v4121 = vmul.f32 %v4057, %v4057
  %v4122 = vmul.f32 %v4058, %v4058
  %v4123 = vmul.f32 %v4059, %v4059
  %v4124 = vmul.f32 %v4060, %v4060
  %v4125 = vmul.f32 %v4061, %v4061
  %v4126 = vmul.f32 %v4062, %v4062
  %v4127 = vmul.f32 %v4063, %v4063
  %v4128 = vmul.f32 %v4064, %v4064
  %v4129 = vsel %vm2899, %v4065, 0.0
  %v4130 = vsel %vm2899, %v4066, 0.0
  %v4131 = vadd.f32 %v4129, %v4130
  %v4132 = vsel %vm2899, %v4067, 0.0
  %v4133 = vadd.f32 %v4131, %v4132
  %v4134 = vsel %vm2899, %v4068, 0.0
  %v4135 = vadd.f32 %v4133, %v4134
  %v4136 = vsel %vm2899, %v4069, 0.0
  %v4137 = vadd.f32 %v4135, %v4136
  %v4138 = vsel %vm2899, %v4070, 0.0
  %v4139 = vadd.f32 %v4137, %v4138
  %v4140 = vsel %vm2899, %v4071, 0.0
  %v4141 = vadd.f32 %v4139, %v4140
  %v4142 = vsel %vm2899, %v4072, 0.0
  %v4143 = vadd.f32 %v4141, %v4142
  %v4144 = vsel %vm2899, %v4073, 0.0
  %v4145 = vadd.f32 %v4143, %v4144
  %v4146 = vsel %vm2899, %v4074, 0.0
  %v4147 = vadd.f32 %v4145, %v4146
  %v4148 = vsel %vm2899, %v4075, 0.0
  %v4149 = vadd.f32 %v4147, %v4148
  %v4150 = vsel %vm2899, %v4076, 0.0
  %v4151 = vadd.f32 %v4149, %v4150
  %v4152 = vsel %vm2899, %v4077, 0.0
  %v4153 = vadd.f32 %v4151, %v4152
  %v4154 = vsel %vm2899, %v4078, 0.0
  %v4155 = vadd.f32 %v4153, %v4154
  %v4156 = vsel %vm2899, %v4079, 0.0
  %v4157 = vadd.f32 %v4155, %v4156
  %v4158 = vsel %vm2899, %v4080, 0.0
  %v4159 = vadd.f32 %v4157, %v4158
  %v4160 = vsel %vm2899, %v4081, 0.0
  %v4161 = vadd.f32 %v4159, %v4160
  %v4162 = vsel %vm2899, %v4082, 0.0
  %v4163 = vadd.f32 %v4161, %v4162
  %v4164 = vsel %vm2899, %v4083, 0.0
  %v4165 = vadd.f32 %v4163, %v4164
  %v4166 = vsel %vm2899, %v4084, 0.0
  %v4167 = vadd.f32 %v4165, %v4166
  %v4168 = vsel %vm2899, %v4085, 0.0
  %v4169 = vadd.f32 %v4167, %v4168
  %v4170 = vsel %vm2899, %v4086, 0.0
  %v4171 = vadd.f32 %v4169, %v4170
  %v4172 = vsel %vm2899, %v4087, 0.0
  %v4173 = vadd.f32 %v4171, %v4172
  %v4174 = vsel %vm2899, %v4088, 0.0
  %v4175 = vadd.f32 %v4173, %v4174
  %v4176 = vsel %vm2899, %v4089, 0.0
  %v4177 = vadd.f32 %v4175, %v4176
  %v4178 = vsel %vm2899, %v4090, 0.0
  %v4179 = vadd.f32 %v4177, %v4178
  %v4180 = vsel %vm2899, %v4091, 0.0
  %v4181 = vadd.f32 %v4179, %v4180
  %v4182 = vsel %vm2899, %v4092, 0.0
  %v4183 = vadd.f32 %v4181, %v4182
  %v4184 = vsel %vm2899, %v4093, 0.0
  %v4185 = vadd.f32 %v4183, %v4184
  %v4186 = vsel %vm2899, %v4094, 0.0
  %v4187 = vadd.f32 %v4185, %v4186
  %v4188 = vsel %vm2899, %v4095, 0.0
  %v4189 = vadd.f32 %v4187, %v4188
  %v4190 = vsel %vm2899, %v4096, 0.0
  %v4191 = vadd.f32 %v4189, %v4190
  %v4192 = vsel %vm2899, %v4097, 0.0
  %v4193 = vadd.f32 %v4191, %v4192
  %v4194 = vsel %vm2899, %v4098, 0.0
  %v4195 = vadd.f32 %v4193, %v4194
  %v4196 = vsel %vm2899, %v4099, 0.0
  %v4197 = vadd.f32 %v4195, %v4196
  %v4198 = vsel %vm2899, %v4100, 0.0
  %v4199 = vadd.f32 %v4197, %v4198
  %v4200 = vsel %vm2899, %v4101, 0.0
  %v4201 = vadd.f32 %v4199, %v4200
  %v4202 = vsel %vm2899, %v4102, 0.0
  %v4203 = vadd.f32 %v4201, %v4202
  %v4204 = vsel %vm2899, %v4103, 0.0
  %v4205 = vadd.f32 %v4203, %v4204
  %v4206 = vsel %vm2899, %v4104, 0.0
  %v4207 = vadd.f32 %v4205, %v4206
  %v4208 = vsel %vm2899, %v4105, 0.0
  %v4209 = vadd.f32 %v4207, %v4208
  %v4210 = vsel %vm2899, %v4106, 0.0
  %v4211 = vadd.f32 %v4209, %v4210
  %v4212 = vsel %vm2899, %v4107, 0.0
  %v4213 = vadd.f32 %v4211, %v4212
  %v4214 = vsel %vm2899, %v4108, 0.0
  %v4215 = vadd.f32 %v4213, %v4214
  %v4216 = vsel %vm2899, %v4109, 0.0
  %v4217 = vadd.f32 %v4215, %v4216
  %v4218 = vsel %vm2899, %v4110, 0.0
  %v4219 = vadd.f32 %v4217, %v4218
  %v4220 = vsel %vm2899, %v4111, 0.0
  %v4221 = vadd.f32 %v4219, %v4220
  %v4222 = vsel %vm2899, %v4112, 0.0
  %v4223 = vadd.f32 %v4221, %v4222
  %v4224 = vsel %vm2899, %v4113, 0.0
  %v4225 = vadd.f32 %v4223, %v4224
  %v4226 = vsel %vm2899, %v4114, 0.0
  %v4227 = vadd.f32 %v4225, %v4226
  %v4228 = vsel %vm2899, %v4115, 0.0
  %v4229 = vadd.f32 %v4227, %v4228
  %v4230 = vsel %vm2899, %v4116, 0.0
  %v4231 = vadd.f32 %v4229, %v4230
  %v4232 = vsel %vm2899, %v4117, 0.0
  %v4233 = vadd.f32 %v4231, %v4232
  %v4234 = vsel %vm2899, %v4118, 0.0
  %v4235 = vadd.f32 %v4233, %v4234
  %v4236 = vsel %vm2899, %v4119, 0.0
  %v4237 = vadd.f32 %v4235, %v4236
  %v4238 = vsel %vm2899, %v4120, 0.0
  %v4239 = vadd.f32 %v4237, %v4238
  %v4240 = vsel %vm2899, %v4121, 0.0
  %v4241 = vadd.f32 %v4239, %v4240
  %v4242 = vsel %vm2899, %v4122, 0.0
  %v4243 = vadd.f32 %v4241, %v4242
  %v4244 = vsel %vm2899, %v4123, 0.0
  %v4245 = vadd.f32 %v4243, %v4244
  %v4246 = vsel %vm2899, %v4124, 0.0
  %v4247 = vadd.f32 %v4245, %v4246
  %v4248 = vsel %vm2899, %v4125, 0.0
  %v4249 = vadd.f32 %v4247, %v4248
  %v4250 = vsel %vm2899, %v4126, 0.0
  %v4251 = vadd.f32 %v4249, %v4250
  %v4252 = vsel %vm2899, %v4127, 0.0
  %v4253 = vadd.f32 %v4251, %v4252
  %v4254 = vsel %vm2899, %v4128, 0.0
  %v4255 = vadd.f32 %v4253, %v4254
  %v4256 = vrot.slane %v4255, 4
  %v4257 = vadd.f32 %v4255, %v4256
  %v4258 = vrot.slane %v4257, 2
  %v4259 = vadd.f32 %v4257, %v4258
  %v4260 = vrot.slane %v4259, 1
  %v4261 = vadd.f32 %v4259, %v4260
  %v4262 = vmul.f32 %v4261, 0.001953125
  %v4263 = vadd.f32 %v4262, 1e-05
  %v4264 = vrsqrt.pop %v4263
  %v4265 = vld [vmem:[%s4] sm:$0x1]
  %v4266 = vmul.f32 %v4264, %v4265
  %v4267 = vlaneseq
  %v4268 = vshrl.u32 %v4267, 7
  %v4269 = vsub.s32 0, %v4268
  %v4270 = vrot.slane %v4266, %v4269
  %v4271 = vmul.f32 %v4001, %v4270
  %v4272 = vmul.f32 %v4002, %v4270
  %v4273 = vmul.f32 %v4003, %v4270
  %v4274 = vmul.f32 %v4004, %v4270
  %v4275 = vmul.f32 %v4005, %v4270
  %v4276 = vmul.f32 %v4006, %v4270
  %v4277 = vmul.f32 %v4007, %v4270
  %v4278 = vmul.f32 %v4008, %v4270
  %v4279 = vmul.f32 %v4009, %v4270
  %v4280 = vmul.f32 %v4010, %v4270
  %v4281 = vmul.f32 %v4011, %v4270
  %v4282 = vmul.f32 %v4012, %v4270
  %v4283 = vmul.f32 %v4013, %v4270
  %v4284 = vmul.f32 %v4014, %v4270
  %v4285 = vmul.f32 %v4015, %v4270
  %v4286 = vmul.f32 %v4016, %v4270
  %v4287 = vmul.f32 %v4017, %v4270
  %v4288 = vmul.f32 %v4018, %v4270
  %v4289 = vmul.f32 %v4019, %v4270
  %v4290 = vmul.f32 %v4020, %v4270
  %v4291 = vmul.f32 %v4021, %v4270
  %v4292 = vmul.f32 %v4022, %v4270
  %v4293 = vmul.f32 %v4023, %v4270
  %v4294 = vmul.f32 %v4024, %v4270
  %v4295 = vmul.f32 %v4025, %v4270
  %v4296 = vmul.f32 %v4026, %v4270
  %v4297 = vmul.f32 %v4027, %v4270
  %v4298 = vmul.f32 %v4028, %v4270
  %v4299 = vmul.f32 %v4029, %v4270
  %v4300 = vmul.f32 %v4030, %v4270
  %v4301 = vmul.f32 %v4031, %v4270
  %v4302 = vmul.f32 %v4032, %v4270
  %v4303 = vmul.f32 %v4033, %v4270
  %v4304 = vmul.f32 %v4034, %v4270
  %v4305 = vmul.f32 %v4035, %v4270
  %v4306 = vmul.f32 %v4036, %v4270
  %v4307 = vmul.f32 %v4037, %v4270
  %v4308 = vmul.f32 %v4038, %v4270
  %v4309 = vmul.f32 %v4039, %v4270
  %v4310 = vmul.f32 %v4040, %v4270
  %v4311 = vmul.f32 %v4041, %v4270
  %v4312 = vmul.f32 %v4042, %v4270
  %v4313 = vmul.f32 %v4043, %v4270
  %v4314 = vmul.f32 %v4044, %v4270
  %v4315 = vmul.f32 %v4045, %v4270
  %v4316 = vmul.f32 %v4046, %v4270
  %v4317 = vmul.f32 %v4047, %v4270
  %v4318 = vmul.f32 %v4048, %v4270
  %v4319 = vmul.f32 %v4049, %v4270
  %v4320 = vmul.f32 %v4050, %v4270
  %v4321 = vmul.f32 %v4051, %v4270
  %v4322 = vmul.f32 %v4052, %v4270
  %v4323 = vmul.f32 %v4053, %v4270
  %v4324 = vmul.f32 %v4054, %v4270
  %v4325 = vmul.f32 %v4055, %v4270
  %v4326 = vmul.f32 %v4056, %v4270
  %v4327 = vmul.f32 %v4057, %v4270
  %v4328 = vmul.f32 %v4058, %v4270
  %v4329 = vmul.f32 %v4059, %v4270
  %v4330 = vmul.f32 %v4060, %v4270
  %v4331 = vmul.f32 %v4061, %v4270
  %v4332 = vmul.f32 %v4062, %v4270
  %v4333 = vmul.f32 %v4063, %v4270
  %v4334 = vmul.f32 %v4064, %v4270
  %v4335 = vld [vmem:[%s5] sm:$0x1]
  %v4337 = vlaneseq
  %v4338 = vshrl.u32 %v4337, 7
  %v4339 = vsub.s32 0, %v4338
  %v4340 = vrot.slane %v4335, %v4339
  %v4342 = vadd.f32 %v4271, %v4340
  %v4343 = vadd.f32 %v4272, %v4340
  %v4344 = vadd.f32 %v4273, %v4340
  %v4345 = vadd.f32 %v4274, %v4340
  %v4346 = vadd.f32 %v4275, %v4340
  %v4347 = vadd.f32 %v4276, %v4340
  %v4348 = vadd.f32 %v4277, %v4340
  %v4349 = vadd.f32 %v4278, %v4340
  %v4350 = vadd.f32 %v4279, %v4340
  %v4351 = vadd.f32 %v4280, %v4340
  %v4352 = vadd.f32 %v4281, %v4340
  %v4353 = vadd.f32 %v4282, %v4340
  %v4354 = vadd.f32 %v4283, %v4340
  %v4355 = vadd.f32 %v4284, %v4340
  %v4356 = vadd.f32 %v4285, %v4340
  %v4357 = vadd.f32 %v4286, %v4340
  %v4358 = vadd.f32 %v4287, %v4340
  %v4359 = vadd.f32 %v4288, %v4340
  %v4360 = vadd.f32 %v4289, %v4340
  %v4361 = vadd.f32 %v4290, %v4340
  %v4362 = vadd.f32 %v4291, %v4340
  %v4363 = vadd.f32 %v4292, %v4340
  %v4364 = vadd.f32 %v4293, %v4340
  %v4365 = vadd.f32 %v4294, %v4340
  %v4366 = vadd.f32 %v4295, %v4340
  %v4367 = vadd.f32 %v4296, %v4340
  %v4368 = vadd.f32 %v4297, %v4340
  %v4369 = vadd.f32 %v4298, %v4340
  %v4370 = vadd.f32 %v4299, %v4340
  %v4371 = vadd.f32 %v4300, %v4340
  %v4372 = vadd.f32 %v4301, %v4340
  %v4373 = vadd.f32 %v4302, %v4340
  %v4374 = vadd.f32 %v4303, %v4340
  %v4375 = vadd.f32 %v4304, %v4340
  %v4376 = vadd.f32 %v4305, %v4340
  %v4377 = vadd.f32 %v4306, %v4340
  %v4378 = vadd.f32 %v4307, %v4340
  %v4379 = vadd.f32 %v4308, %v4340
  %v4380 = vadd.f32 %v4309, %v4340
  %v4381 = vadd.f32 %v4310, %v4340
  %v4382 = vadd.f32 %v4311, %v4340
  %v4383 = vadd.f32 %v4312, %v4340
  %v4384 = vadd.f32 %v4313, %v4340
  %v4385 = vadd.f32 %v4314, %v4340
  %v4386 = vadd.f32 %v4315, %v4340
  %v4387 = vadd.f32 %v4316, %v4340
  %v4388 = vadd.f32 %v4317, %v4340
  %v4389 = vadd.f32 %v4318, %v4340
  %v4390 = vadd.f32 %v4319, %v4340
  %v4391 = vadd.f32 %v4320, %v4340
  %v4392 = vadd.f32 %v4321, %v4340
  %v4393 = vadd.f32 %v4322, %v4340
  %v4394 = vadd.f32 %v4323, %v4340
  %v4395 = vadd.f32 %v4324, %v4340
  %v4396 = vadd.f32 %v4325, %v4340
  %v4397 = vadd.f32 %v4326, %v4340
  %v4398 = vadd.f32 %v4327, %v4340
  %v4399 = vadd.f32 %v4328, %v4340
  %v4400 = vadd.f32 %v4329, %v4340
  %v4401 = vadd.f32 %v4330, %v4340
  %v4402 = vadd.f32 %v4331, %v4340
  %v4403 = vadd.f32 %v4332, %v4340
  %v4404 = vadd.f32 %v4333, %v4340
  %v4405 = vadd.f32 %v4334, %v4340
  %v4406 = vmax.f32 %v4342, 0.0
  %v4407 = vmax.f32 %v4343, 0.0
  %v4408 = vmax.f32 %v4344, 0.0
  %v4409 = vmax.f32 %v4345, 0.0
  %v4410 = vmax.f32 %v4346, 0.0
  %v4411 = vmax.f32 %v4347, 0.0
  %v4412 = vmax.f32 %v4348, 0.0
  %v4413 = vmax.f32 %v4349, 0.0
  %v4414 = vmax.f32 %v4350, 0.0
  %v4415 = vmax.f32 %v4351, 0.0
  %v4416 = vmax.f32 %v4352, 0.0
  %v4417 = vmax.f32 %v4353, 0.0
  %v4418 = vmax.f32 %v4354, 0.0
  %v4419 = vmax.f32 %v4355, 0.0
  %v4420 = vmax.f32 %v4356, 0.0
  %v4421 = vmax.f32 %v4357, 0.0
  %v4422 = vmax.f32 %v4358, 0.0
  %v4423 = vmax.f32 %v4359, 0.0
  %v4424 = vmax.f32 %v4360, 0.0
  %v4425 = vmax.f32 %v4361, 0.0
  %v4426 = vmax.f32 %v4362, 0.0
  %v4427 = vmax.f32 %v4363, 0.0
  %v4428 = vmax.f32 %v4364, 0.0
  %v4429 = vmax.f32 %v4365, 0.0
  %v4430 = vmax.f32 %v4366, 0.0
  %v4431 = vmax.f32 %v4367, 0.0
  %v4432 = vmax.f32 %v4368, 0.0
  %v4433 = vmax.f32 %v4369, 0.0
  %v4434 = vmax.f32 %v4370, 0.0
  %v4435 = vmax.f32 %v4371, 0.0
  %v4436 = vmax.f32 %v4372, 0.0
  %v4437 = vmax.f32 %v4373, 0.0
  %v4438 = vmax.f32 %v4374, 0.0
  %v4439 = vmax.f32 %v4375, 0.0
  %v4440 = vmax.f32 %v4376, 0.0
  %v4441 = vmax.f32 %v4377, 0.0
  %v4442 = vmax.f32 %v4378, 0.0
  %v4443 = vmax.f32 %v4379, 0.0
  %v4444 = vmax.f32 %v4380, 0.0
  %v4445 = vmax.f32 %v4381, 0.0
  %v4446 = vmax.f32 %v4382, 0.0
  %v4447 = vmax.f32 %v4383, 0.0
  %v4448 = vmax.f32 %v4384, 0.0
  %v4449 = vmax.f32 %v4385, 0.0
  %v4450 = vmax.f32 %v4386, 0.0
  %v4451 = vmax.f32 %v4387, 0.0
  %v4452 = vmax.f32 %v4388, 0.0
  %v4453 = vmax.f32 %v4389, 0.0
  %v4454 = vmax.f32 %v4390, 0.0
  %v4455 = vmax.f32 %v4391, 0.0
  %v4456 = vmax.f32 %v4392, 0.0
  %v4457 = vmax.f32 %v4393, 0.0
  %v4458 = vmax.f32 %v4394, 0.0
  %v4459 = vmax.f32 %v4395, 0.0
  %v4460 = vmax.f32 %v4396, 0.0
  %v4461 = vmax.f32 %v4397, 0.0
  %v4462 = vmax.f32 %v4398, 0.0
  %v4463 = vmax.f32 %v4399, 0.0
  %v4464 = vmax.f32 %v4400, 0.0
  %v4465 = vmax.f32 %v4401, 0.0
  %v4466 = vmax.f32 %v4402, 0.0
  %v4467 = vmax.f32 %v4403, 0.0
  %v4468 = vmax.f32 %v4404, 0.0
  %v4469 = vmax.f32 %v4405, 0.0
  %v4502 = vrot.slane %v4408, 1
  %v4503 = vrot.slane %v4406, 1
  %v4504 = vrot.slane %v4410, 1
  %v4505 = vrot.slane %v4412, 1
  %v4506 = vrot.slane %v4414, 1
  %v4507 = vrot.slane %v4416, 1
  %v4508 = vrot.slane %v4418, 1
  %v4509 = vrot.slane %v4420, 1
  %v4510 = vrot.slane %v4422, 1
  %v4511 = vrot.slane %v4424, 1
  %v4512 = vrot.slane %v4426, 1
  %v4513 = vrot.slane %v4428, 1
  %v4514 = vrot.slane %v4430, 1
  %v4515 = vrot.slane %v4432, 1
  %v4516 = vrot.slane %v4434, 1
  %v4517 = vrot.slane %v4436, 1
  %v4518 = vrot.slane %v4440, 1
  %v4519 = vrot.slane %v4438, 1
  %v4520 = vrot.slane %v4442, 1
  %v4521 = vrot.slane %v4444, 1
  %v4522 = vrot.slane %v4446, 1
  %v4523 = vrot.slane %v4448, 1
  %v4524 = vrot.slane %v4450, 1
  %v4525 = vrot.slane %v4452, 1
  %v4526 = vrot.slane %v4454, 1
  %v4527 = vrot.slane %v4456, 1
  %v4528 = vrot.slane %v4458, 1
  %v4529 = vrot.slane %v4460, 1
  %v4530 = vrot.slane %v4462, 1
  %v4531 = vrot.slane %v4464, 1
  %v4532 = vrot.slane %v4466, 1
  %v4533 = vrot.slane %v4468, 1
  %v4598 = vrot.slane %v4408, 7
  %v4599 = vrot.slane %v4409, 7
  %v4600 = vsel %vm967, %v4598, %v4599
  %v4601 = vrot.slane %v4406, 7
  %v4602 = vrot.slane %v4407, 7
  %v4603 = vsel %vm967, %v4601, %v4602
  %v4604 = vrot.slane %v4410, 7
  %v4605 = vrot.slane %v4411, 7
  %v4606 = vsel %vm967, %v4604, %v4605
  %v4607 = vrot.slane %v4412, 7
  %v4608 = vrot.slane %v4413, 7
  %v4609 = vsel %vm967, %v4607, %v4608
  %v4610 = vrot.slane %v4414, 7
  %v4611 = vrot.slane %v4415, 7
  %v4612 = vsel %vm967, %v4610, %v4611
  %v4613 = vrot.slane %v4416, 7
  %v4614 = vrot.slane %v4417, 7
  %v4615 = vsel %vm967, %v4613, %v4614
  %v4616 = vrot.slane %v4418, 7
  %v4617 = vrot.slane %v4419, 7
  %v4618 = vsel %vm967, %v4616, %v4617
  %v4619 = vrot.slane %v4420, 7
  %v4620 = vrot.slane %v4421, 7
  %v4621 = vsel %vm967, %v4619, %v4620
  %v4622 = vrot.slane %v4422, 7
  %v4623 = vrot.slane %v4423, 7
  %v4624 = vsel %vm967, %v4622, %v4623
  %v4625 = vrot.slane %v4424, 7
  %v4626 = vrot.slane %v4425, 7
  %v4627 = vsel %vm967, %v4625, %v4626
  %v4628 = vrot.slane %v4426, 7
  %v4629 = vrot.slane %v4427, 7
  %v4630 = vsel %vm967, %v4628, %v4629
  %v4631 = vrot.slane %v4428, 7
  %v4632 = vrot.slane %v4429, 7
  %v4633 = vsel %vm967, %v4631, %v4632
  %v4634 = vrot.slane %v4430, 7
  %v4635 = vrot.slane %v4431, 7
  %v4636 = vsel %vm967, %v4634, %v4635
  %v4637 = vrot.slane %v4432, 7
  %v4638 = vrot.slane %v4433, 7
  %v4639 = vsel %vm967, %v4637, %v4638
  %v4640 = vrot.slane %v4434, 7
  %v4641 = vrot.slane %v4435, 7
  %v4642 = vsel %vm967, %v4640, %v4641
  %v4643 = vrot.slane %v4436, 7
  %v4644 = vrot.slane %v4437, 7
  %v4645 = vsel %vm967, %v4643, %v4644
  %v4646 = vrot.slane %v4440, 7
  %v4647 = vrot.slane %v4441, 7
  %v4648 = vsel %vm967, %v4646, %v4647
  %v4649 = vrot.slane %v4438, 7
  %v4650 = vrot.slane %v4439, 7
  %v4651 = vsel %vm967, %v4649, %v4650
  %v4652 = vrot.slane %v4442, 7
  %v4653 = vrot.slane %v4443, 7
  %v4654 = vsel %vm967, %v4652, %v4653
  %v4655 = vrot.slane %v4444, 7
  %v4656 = vrot.slane %v4445, 7
  %v4657 = vsel %vm967, %v4655, %v4656
  %v4658 = vrot.slane %v4446, 7
  %v4659 = vrot.slane %v4447, 7
  %v4660 = vsel %vm967, %v4658, %v4659
  %v4661 = vrot.slane %v4448, 7
  %v4662 = vrot.slane %v4449, 7
  %v4663 = vsel %vm967, %v4661, %v4662
  %v4664 = vrot.slane %v4450, 7
  %v4665 = vrot.slane %v4451, 7
  %v4666 = vsel %vm967, %v4664, %v4665
  %v4667 = vrot.slane %v4452, 7
  %v4668 = vrot.slane %v4453, 7
  %v4669 = vsel %vm967, %v4667, %v4668
  %v4670 = vrot.slane %v4454, 7
  %v4671 = vrot.slane %v4455, 7
  %v4672 = vsel %vm967, %v4670, %v4671
  %v4673 = vrot.slane %v4456, 7
  %v4674 = vrot.slane %v4457, 7
  %v4675 = vsel %vm967, %v4673, %v4674
  %v4676 = vrot.slane %v4458, 7
  %v4677 = vrot.slane %v4459, 7
  %v4678 = vsel %vm967, %v4676, %v4677
  %v4679 = vrot.slane %v4460, 7
  %v4680 = vrot.slane %v4461, 7
  %v4681 = vsel %vm967, %v4679, %v4680
  %v4682 = vrot.slane %v4462, 7
  %v4683 = vrot.slane %v4463, 7
  %v4684 = vsel %vm967, %v4682, %v4683
  %v4685 = vrot.slane %v4464, 7
  %v4686 = vrot.slane %v4465, 7
  %v4687 = vsel %vm967, %v4685, %v4686
  %v4688 = vrot.slane %v4466, 7
  %v4689 = vrot.slane %v4467, 7
  %v4690 = vsel %vm967, %v4688, %v4689
  %v4691 = vrot.slane %v4468, 7
  %v4692 = vrot.slane %v4469, 7
  %v4693 = vsel %vm967, %v4691, %v4692
  %v4788 = vrot.slane %v4409, 5
  %v4789 = vrot.slane %v4407, 5
  %v4790 = vrot.slane %v4411, 5
  %v4791 = vrot.slane %v4413, 5
  %v4792 = vrot.slane %v4415, 5
  %v4793 = vrot.slane %v4417, 5
  %v4794 = vrot.slane %v4419, 5
  %v4795 = vrot.slane %v4421, 5
  %v4796 = vrot.slane %v4423, 5
  %v4797 = vrot.slane %v4425, 5
  %v4798 = vrot.slane %v4427, 5
  %v4799 = vrot.slane %v4429, 5
  %v4800 = vrot.slane %v4431, 5
  %v4801 = vrot.slane %v4433, 5
  %v4802 = vrot.slane %v4435, 5
  %v4803 = vrot.slane %v4437, 5
  %v4804 = vrot.slane %v4441, 5
  %v4805 = vrot.slane %v4439, 5
  %v4806 = vrot.slane %v4443, 5
  %v4807 = vrot.slane %v4445, 5
  %v4808 = vrot.slane %v4447, 5
  %v4809 = vrot.slane %v4449, 5
  %v4810 = vrot.slane %v4451, 5
  %v4811 = vrot.slane %v4453, 5
  %v4812 = vrot.slane %v4455, 5
  %v4813 = vrot.slane %v4457, 5
  %v4814 = vrot.slane %v4459, 5
  %v4815 = vrot.slane %v4461, 5
  %v4816 = vrot.slane %v4463, 5
  %v4817 = vrot.slane %v4465, 5
  %v4818 = vrot.slane %v4467, 5
  %v4819 = vrot.slane %v4469, 5
  %v4852 = vsel %vm967, %v4502, %v4598
  %v4853 = vsel %vm967, %v4503, %v4601
  %v4854 = vsel %vm967, %v4504, %v4604
  %v4855 = vsel %vm967, %v4505, %v4607
  %v4856 = vsel %vm967, %v4506, %v4610
  %v4857 = vsel %vm967, %v4507, %v4613
  %v4858 = vsel %vm967, %v4508, %v4616
  %v4859 = vsel %vm967, %v4509, %v4619
  %v4860 = vsel %vm967, %v4510, %v4622
  %v4861 = vsel %vm967, %v4511, %v4625
  %v4862 = vsel %vm967, %v4512, %v4628
  %v4863 = vsel %vm967, %v4513, %v4631
  %v4864 = vsel %vm967, %v4514, %v4634
  %v4865 = vsel %vm967, %v4515, %v4637
  %v4866 = vsel %vm967, %v4516, %v4640
  %v4867 = vsel %vm967, %v4517, %v4643
  %v4868 = vsel %vm967, %v4518, %v4646
  %v4869 = vsel %vm967, %v4519, %v4649
  %v4870 = vsel %vm967, %v4520, %v4652
  %v4871 = vsel %vm967, %v4521, %v4655
  %v4872 = vsel %vm967, %v4522, %v4658
  %v4873 = vsel %vm967, %v4523, %v4661
  %v4874 = vsel %vm967, %v4524, %v4664
  %v4875 = vsel %vm967, %v4525, %v4667
  %v4876 = vsel %vm967, %v4526, %v4670
  %v4877 = vsel %vm967, %v4527, %v4673
  %v4878 = vsel %vm967, %v4528, %v4676
  %v4879 = vsel %vm967, %v4529, %v4679
  %v4880 = vsel %vm967, %v4530, %v4682
  %v4881 = vsel %vm967, %v4531, %v4685
  %v4882 = vsel %vm967, %v4532, %v4688
  %v4883 = vsel %vm967, %v4533, %v4691
  %v4884 = vsel %vm967, %v4599, %v4788
  %v4885 = vsel %vm967, %v4602, %v4789
  %v4886 = vsel %vm967, %v4605, %v4790
  %v4887 = vsel %vm967, %v4608, %v4791
  %v4888 = vsel %vm967, %v4611, %v4792
  %v4889 = vsel %vm967, %v4614, %v4793
  %v4890 = vsel %vm967, %v4617, %v4794
  %v4891 = vsel %vm967, %v4620, %v4795
  %v4892 = vsel %vm967, %v4623, %v4796
  %v4893 = vsel %vm967, %v4626, %v4797
  %v4894 = vsel %vm967, %v4629, %v4798
  %v4895 = vsel %vm967, %v4632, %v4799
  %v4896 = vsel %vm967, %v4635, %v4800
  %v4897 = vsel %vm967, %v4638, %v4801
  %v4898 = vsel %vm967, %v4641, %v4802
  %v4899 = vsel %vm967, %v4644, %v4803
  %v4900 = vsel %vm967, %v4647, %v4804
  %v4901 = vsel %vm967, %v4650, %v4805
  %v4902 = vsel %vm967, %v4653, %v4806
  %v4903 = vsel %vm967, %v4656, %v4807
  %v4904 = vsel %vm967, %v4659, %v4808
  %v4905 = vsel %vm967, %v4662, %v4809
  %v4906 = vsel %vm967, %v4665, %v4810
  %v4907 = vsel %vm967, %v4668, %v4811
  %v4908 = vsel %vm967, %v4671, %v4812
  %v4909 = vsel %vm967, %v4674, %v4813
  %v4910 = vsel %vm967, %v4677, %v4814
  %v4911 = vsel %vm967, %v4680, %v4815
  %v4912 = vsel %vm967, %v4683, %v4816
  %v4913 = vsel %vm967, %v4686, %v4817
  %v4914 = vsel %vm967, %v4689, %v4818
  %v4915 = vsel %vm967, %v4692, %v4819
  %vm4976 = vcmask 1046528
  %v4977 = vrot.slane %v4852, 1
  %v4978 = vrot.slane %v4600, 1
  %v4979 = vsel %vm4976, %v4977, %v4978
  %v4980 = vrot.slane %v4884, 1
  %v4981 = vsel %vm4976, %v4978, %v4980
  %v4982 = vrot.slane %v4853, 1
  %v4983 = vrot.slane %v4603, 1
  %v4984 = vsel %vm4976, %v4982, %v4983
  %v4985 = vrot.slane %v4885, 1
  %v4986 = vsel %vm4976, %v4983, %v4985
  %v4987 = vrot.slane %v4854, 1
  %v4988 = vrot.slane %v4606, 1
  %v4989 = vsel %vm4976, %v4987, %v4988
  %v4990 = vrot.slane %v4886, 1
  %v4991 = vsel %vm4976, %v4988, %v4990
  %v4992 = vrot.slane %v4855, 1
  %v4993 = vrot.slane %v4609, 1
  %v4994 = vsel %vm4976, %v4992, %v4993
  %v4995 = vrot.slane %v4887, 1
  %v4996 = vsel %vm4976, %v4993, %v4995
  %v4997 = vrot.slane %v4856, 1
  %v4998 = vrot.slane %v4612, 1
  %v4999 = vsel %vm4976, %v4997, %v4998
  %v5000 = vrot.slane %v4888, 1
  %v5001 = vsel %vm4976, %v4998, %v5000
  %v5002 = vrot.slane %v4857, 1
  %v5003 = vrot.slane %v4615, 1
  %v5004 = vsel %vm4976, %v5002, %v5003
  %v5005 = vrot.slane %v4889, 1
  %v5006 = vsel %vm4976, %v5003, %v5005
  %v5007 = vrot.slane %v4858, 1
  %v5008 = vrot.slane %v4618, 1
  %v5009 = vsel %vm4976, %v5007, %v5008
  %v5010 = vrot.slane %v4890, 1
  %v5011 = vsel %vm4976, %v5008, %v5010
  %v5012 = vrot.slane %v4859, 1
  %v5013 = vrot.slane %v4621, 1
  %v5014 = vsel %vm4976, %v5012, %v5013
  %v5015 = vrot.slane %v4891, 1
  %v5016 = vsel %vm4976, %v5013, %v5015
  %v5017 = vrot.slane %v4860, 1
  %v5018 = vrot.slane %v4624, 1
  %v5019 = vsel %vm4976, %v5017, %v5018
  %v5020 = vrot.slane %v4892, 1
  %v5021 = vsel %vm4976, %v5018, %v5020
  %v5022 = vrot.slane %v4861, 1
  %v5023 = vrot.slane %v4627, 1
  %v5024 = vsel %vm4976, %v5022, %v5023
  %v5025 = vrot.slane %v4893, 1
  %v5026 = vsel %vm4976, %v5023, %v5025
  %v5027 = vrot.slane %v4862, 1
  %v5028 = vrot.slane %v4630, 1
  %v5029 = vsel %vm4976, %v5027, %v5028
  %v5030 = vrot.slane %v4894, 1
  %v5031 = vsel %vm4976, %v5028, %v5030
  %v5032 = vrot.slane %v4863, 1
  %v5033 = vrot.slane %v4633, 1
  %v5034 = vsel %vm4976, %v5032, %v5033
  %v5035 = vrot.slane %v4895, 1
  %v5036 = vsel %vm4976, %v5033, %v5035
  %v5037 = vrot.slane %v4864, 1
  %v5038 = vrot.slane %v4636, 1
  %v5039 = vsel %vm4976, %v5037, %v5038
  %v5040 = vrot.slane %v4896, 1
  %v5041 = vsel %vm4976, %v5038, %v5040
  %v5042 = vrot.slane %v4865, 1
  %v5043 = vrot.slane %v4639, 1
  %v5044 = vsel %vm4976, %v5042, %v5043
  %v5045 = vrot.slane %v4897, 1
  %v5046 = vsel %vm4976, %v5043, %v5045
  %v5047 = vrot.slane %v4866, 1
  %v5048 = vrot.slane %v4642, 1
  %v5049 = vsel %vm4976, %v5047, %v5048
  %v5050 = vrot.slane %v4898, 1
  %v5051 = vsel %vm4976, %v5048, %v5050
  %v5052 = vrot.slane %v4868, 1
  %v5053 = vrot.slane %v4648, 1
  %v5054 = vsel %vm4976, %v5052, %v5053
  %v5055 = vrot.slane %v4900, 1
  %v5056 = vsel %vm4976, %v5053, %v5055
  %v5057 = vrot.slane %v4869, 1
  %v5058 = vrot.slane %v4651, 1
  %v5059 = vsel %vm4976, %v5057, %v5058
  %v5060 = vrot.slane %v4901, 1
  %v5061 = vsel %vm4976, %v5058, %v5060
  %v5062 = vrot.slane %v4870, 1
  %v5063 = vrot.slane %v4654, 1
  %v5064 = vsel %vm4976, %v5062, %v5063
  %v5065 = vrot.slane %v4902, 1
  %v5066 = vsel %vm4976, %v5063, %v5065
  %v5067 = vrot.slane %v4871, 1
  %v5068 = vrot.slane %v4657, 1
  %v5069 = vsel %vm4976, %v5067, %v5068
  %v5070 = vrot.slane %v4903, 1
  %v5071 = vsel %vm4976, %v5068, %v5070
  %v5072 = vrot.slane %v4872, 1
  %v5073 = vrot.slane %v4660, 1
  %v5074 = vsel %vm4976, %v5072, %v5073
  %v5075 = vrot.slane %v4904, 1
  %v5076 = vsel %vm4976, %v5073, %v5075
  %v5077 = vrot.slane %v4873, 1
  %v5078 = vrot.slane %v4663, 1
  %v5079 = vsel %vm4976, %v5077, %v5078
  %v5080 = vrot.slane %v4905, 1
  %v5081 = vsel %vm4976, %v5078, %v5080
  %v5082 = vrot.slane %v4874, 1
  %v5083 = vrot.slane %v4666, 1
  %v5084 = vsel %vm4976, %v5082, %v5083
  %v5085 = vrot.slane %v4906, 1
  %v5086 = vsel %vm4976, %v5083, %v5085
  %v5087 = vrot.slane %v4875, 1
  %v5088 = vrot.slane %v4669, 1
  %v5089 = vsel %vm4976, %v5087, %v5088
  %v5090 = vrot.slane %v4907, 1
  %v5091 = vsel %vm4976, %v5088, %v5090
  %v5092 = vrot.slane %v4876, 1
  %v5093 = vrot.slane %v4672, 1
  %v5094 = vsel %vm4976, %v5092, %v5093
  %v5095 = vrot.slane %v4908, 1
  %v5096 = vsel %vm4976, %v5093, %v5095
  %v5097 = vrot.slane %v4877, 1
  %v5098 = vrot.slane %v4675, 1
  %v5099 = vsel %vm4976, %v5097, %v5098
  %v5100 = vrot.slane %v4909, 1
  %v5101 = vsel %vm4976, %v5098, %v5100
  %v5102 = vrot.slane %v4878, 1
  %v5103 = vrot.slane %v4678, 1
  %v5104 = vsel %vm4976, %v5102, %v5103
  %v5105 = vrot.slane %v4910, 1
  %v5106 = vsel %vm4976, %v5103, %v5105
  %v5107 = vrot.slane %v4879, 1
  %v5108 = vrot.slane %v4681, 1
  %v5109 = vsel %vm4976, %v5107, %v5108
  %v5110 = vrot.slane %v4911, 1
  %v5111 = vsel %vm4976, %v5108, %v5110
  %v5112 = vrot.slane %v4880, 1
  %v5113 = vrot.slane %v4684, 1
  %v5114 = vsel %vm4976, %v5112, %v5113
  %v5115 = vrot.slane %v4912, 1
  %v5116 = vsel %vm4976, %v5113, %v5115
  %v5117 = vrot.slane %v4881, 1
  %v5118 = vrot.slane %v4687, 1
  %v5119 = vsel %vm4976, %v5117, %v5118
  %v5120 = vrot.slane %v4913, 1
  %v5121 = vsel %vm4976, %v5118, %v5120
  %v5122 = vrot.slane %v4882, 1
  %v5123 = vrot.slane %v4690, 1
  %v5124 = vsel %vm4976, %v5122, %v5123
  %v5125 = vrot.slane %v4914, 1
  %v5126 = vsel %vm4976, %v5123, %v5125
  %v5127 = vrot.slane %v4852, 2
  %v5128 = vrot.slane %v4600, 2
  %v5129 = vsel %vm1153, %v5127, %v5128
  %v5130 = vrot.slane %v4884, 2
  %v5131 = vsel %vm1153, %v5128, %v5130
  %v5132 = vrot.slane %v4853, 2
  %v5133 = vrot.slane %v4603, 2
  %v5134 = vsel %vm1153, %v5132, %v5133
  %v5135 = vrot.slane %v4885, 2
  %v5136 = vsel %vm1153, %v5133, %v5135
  %v5137 = vrot.slane %v4854, 2
  %v5138 = vrot.slane %v4606, 2
  %v5139 = vsel %vm1153, %v5137, %v5138
  %v5140 = vrot.slane %v4886, 2
  %v5141 = vsel %vm1153, %v5138, %v5140
  %v5142 = vrot.slane %v4855, 2
  %v5143 = vrot.slane %v4609, 2
  %v5144 = vsel %vm1153, %v5142, %v5143
  %v5145 = vrot.slane %v4887, 2
  %v5146 = vsel %vm1153, %v5143, %v5145
  %v5147 = vrot.slane %v4856, 2
  %v5148 = vrot.slane %v4612, 2
  %v5149 = vsel %vm1153, %v5147, %v5148
  %v5150 = vrot.slane %v4888, 2
  %v5151 = vsel %vm1153, %v5148, %v5150
  %v5152 = vrot.slane %v4857, 2
  %v5153 = vrot.slane %v4615, 2
  %v5154 = vsel %vm1153, %v5152, %v5153
  %v5155 = vrot.slane %v4889, 2
  %v5156 = vsel %vm1153, %v5153, %v5155
  %v5157 = vrot.slane %v4858, 2
  %v5158 = vrot.slane %v4618, 2
  %v5159 = vsel %vm1153, %v5157, %v5158
  %v5160 = vrot.slane %v4890, 2
  %v5161 = vsel %vm1153, %v5158, %v5160
  %v5162 = vrot.slane %v4859, 2
  %v5163 = vrot.slane %v4621, 2
  %v5164 = vsel %vm1153, %v5162, %v5163
  %v5165 = vrot.slane %v4891, 2
  %v5166 = vsel %vm1153, %v5163, %v5165
  %v5167 = vrot.slane %v4860, 2
  %v5168 = vrot.slane %v4624, 2
  %v5169 = vsel %vm1153, %v5167, %v5168
  %v5170 = vrot.slane %v4892, 2
  %v5171 = vsel %vm1153, %v5168, %v5170
  %v5172 = vrot.slane %v4861, 2
  %v5173 = vrot.slane %v4627, 2
  %v5174 = vsel %vm1153, %v5172, %v5173
  %v5175 = vrot.slane %v4893, 2
  %v5176 = vsel %vm1153, %v5173, %v5175
  %v5177 = vrot.slane %v4862, 2
  %v5178 = vrot.slane %v4630, 2
  %v5179 = vsel %vm1153, %v5177, %v5178
  %v5180 = vrot.slane %v4894, 2
  %v5181 = vsel %vm1153, %v5178, %v5180
  %v5182 = vrot.slane %v4863, 2
  %v5183 = vrot.slane %v4633, 2
  %v5184 = vsel %vm1153, %v5182, %v5183
  %v5185 = vrot.slane %v4895, 2
  %v5186 = vsel %vm1153, %v5183, %v5185
  %v5187 = vrot.slane %v4864, 2
  %v5188 = vrot.slane %v4636, 2
  %v5189 = vsel %vm1153, %v5187, %v5188
  %v5190 = vrot.slane %v4896, 2
  %v5191 = vsel %vm1153, %v5188, %v5190
  %v5192 = vrot.slane %v4865, 2
  %v5193 = vrot.slane %v4639, 2
  %v5194 = vsel %vm1153, %v5192, %v5193
  %v5195 = vrot.slane %v4897, 2
  %v5196 = vsel %vm1153, %v5193, %v5195
  %v5197 = vrot.slane %v4866, 2
  %v5198 = vrot.slane %v4642, 2
  %v5199 = vsel %vm1153, %v5197, %v5198
  %v5200 = vrot.slane %v4898, 2
  %v5201 = vsel %vm1153, %v5198, %v5200
  %v5202 = vrot.slane %v4868, 2
  %v5203 = vrot.slane %v4648, 2
  %v5204 = vsel %vm1153, %v5202, %v5203
  %v5205 = vrot.slane %v4900, 2
  %v5206 = vsel %vm1153, %v5203, %v5205
  %v5207 = vrot.slane %v4869, 2
  %v5208 = vrot.slane %v4651, 2
  %v5209 = vsel %vm1153, %v5207, %v5208
  %v5210 = vrot.slane %v4901, 2
  %v5211 = vsel %vm1153, %v5208, %v5210
  %v5212 = vrot.slane %v4870, 2
  %v5213 = vrot.slane %v4654, 2
  %v5214 = vsel %vm1153, %v5212, %v5213
  %v5215 = vrot.slane %v4902, 2
  %v5216 = vsel %vm1153, %v5213, %v5215
  %v5217 = vrot.slane %v4871, 2
  %v5218 = vrot.slane %v4657, 2
  %v5219 = vsel %vm1153, %v5217, %v5218
  %v5220 = vrot.slane %v4903, 2
  %v5221 = vsel %vm1153, %v5218, %v5220
  %v5222 = vrot.slane %v4872, 2
  %v5223 = vrot.slane %v4660, 2
  %v5224 = vsel %vm1153, %v5222, %v5223
  %v5225 = vrot.slane %v4904, 2
  %v5226 = vsel %vm1153, %v5223, %v5225
  %v5227 = vrot.slane %v4873, 2
  %v5228 = vrot.slane %v4663, 2
  %v5229 = vsel %vm1153, %v5227, %v5228
  %v5230 = vrot.slane %v4905, 2
  %v5231 = vsel %vm1153, %v5228, %v5230
  %v5232 = vrot.slane %v4874, 2
  %v5233 = vrot.slane %v4666, 2
  %v5234 = vsel %vm1153, %v5232, %v5233
  %v5235 = vrot.slane %v4906, 2
  %v5236 = vsel %vm1153, %v5233, %v5235
  %v5237 = vrot.slane %v4875, 2
  %v5238 = vrot.slane %v4669, 2
  %v5239 = vsel %vm1153, %v5237, %v5238
  %v5240 = vrot.slane %v4907, 2
  %v5241 = vsel %vm1153, %v5238, %v5240
  %v5242 = vrot.slane %v4876, 2
  %v5243 = vrot.slane %v4672, 2
  %v5244 = vsel %vm1153, %v5242, %v5243
  %v5245 = vrot.slane %v4908, 2
  %v5246 = vsel %vm1153, %v5243, %v5245
  %v5247 = vrot.slane %v4877, 2
  %v5248 = vrot.slane %v4675, 2
  %v5249 = vsel %vm1153, %v5247, %v5248
  %v5250 = vrot.slane %v4909, 2
  %v5251 = vsel %vm1153, %v5248, %v5250
  %v5252 = vrot.slane %v4878, 2
  %v5253 = vrot.slane %v4678, 2
  %v5254 = vsel %vm1153, %v5252, %v5253
  %v5255 = vrot.slane %v4910, 2
  %v5256 = vsel %vm1153, %v5253, %v5255
  %v5257 = vrot.slane %v4879, 2
  %v5258 = vrot.slane %v4681, 2
  %v5259 = vsel %vm1153, %v5257, %v5258
  %v5260 = vrot.slane %v4911, 2
  %v5261 = vsel %vm1153, %v5258, %v5260
  %v5262 = vrot.slane %v4880, 2
  %v5263 = vrot.slane %v4684, 2
  %v5264 = vsel %vm1153, %v5262, %v5263
  %v5265 = vrot.slane %v4912, 2
  %v5266 = vsel %vm1153, %v5263, %v5265
  %v5267 = vrot.slane %v4881, 2
  %v5268 = vrot.slane %v4687, 2
  %v5269 = vsel %vm1153, %v5267, %v5268
  %v5270 = vrot.slane %v4913, 2
  %v5271 = vsel %vm1153, %v5268, %v5270
  %v5272 = vrot.slane %v4882, 2
  %v5273 = vrot.slane %v4690, 2
  %v5274 = vsel %vm1153, %v5272, %v5273
  %v5275 = vrot.slane %v4914, 2
  %v5276 = vsel %vm1153, %v5273, %v5275
  %v5281 = vrot.slane %v4867, 1
  %v5282 = vrot.slane %v4645, 1
  %v5283 = vsel %vm4976, %v5281, %v5282
  %v5284 = vrot.slane %v4899, 1
  %v5285 = vsel %vm4976, %v5282, %v5284
  %v5286 = vrot.slane %v4883, 1
  %v5287 = vrot.slane %v4693, 1
  %v5288 = vsel %vm4976, %v5286, %v5287
  %v5289 = vrot.slane %v4915, 1
  %v5290 = vsel %vm4976, %v5287, %v5289
  %v5291 = vrot.slane %v4867, 2
  %v5292 = vrot.slane %v4645, 2
  %v5293 = vsel %vm1153, %v5291, %v5292
  %v5294 = vrot.slane %v4899, 2
  %v5295 = vsel %vm1153, %v5292, %v5294
  %v5296 = vrot.slane %v4883, 2
  %v5297 = vrot.slane %v4693, 2
  %v5298 = vsel %vm1153, %v5296, %v5297
  %v5299 = vrot.slane %v4915, 2
  %v5300 = vsel %vm1153, %v5297, %v5299
  %5301 = vrot.lane.b32.xlu0 %v4979, 8
  %v5302 = vpop.permute.xlu0 %5301
  %5303 = vrot.lane.b32.xlu0 %v4981, 8
  %v5304 = vpop.permute.xlu0 %5303
  %5305 = vrot.lane.b32.xlu0 %v4984, 8
  %v5306 = vpop.permute.xlu0 %5305
  %5307 = vrot.lane.b32.xlu0 %v4986, 8
  %v5308 = vpop.permute.xlu0 %5307
  %5309 = vrot.lane.b32.xlu0 %v4989, 8
  %v5310 = vpop.permute.xlu0 %5309
  %5311 = vrot.lane.b32.xlu0 %v4991, 8
  %v5312 = vpop.permute.xlu0 %5311
  %5313 = vrot.lane.b32.xlu0 %v4994, 8
  %v5314 = vpop.permute.xlu0 %5313
  %5315 = vrot.lane.b32.xlu0 %v4996, 8
  %v5316 = vpop.permute.xlu0 %5315
  %5317 = vrot.lane.b32.xlu0 %v4999, 8
  %v5318 = vpop.permute.xlu0 %5317
  %5319 = vrot.lane.b32.xlu0 %v5001, 8
  %v5320 = vpop.permute.xlu0 %5319
  %5321 = vrot.lane.b32.xlu0 %v5004, 8
  %v5322 = vpop.permute.xlu0 %5321
  %5323 = vrot.lane.b32.xlu0 %v5006, 8
  %v5324 = vpop.permute.xlu0 %5323
  %5325 = vrot.lane.b32.xlu0 %v5009, 8
  %v5326 = vpop.permute.xlu0 %5325
  %5327 = vrot.lane.b32.xlu0 %v5011, 8
  %v5328 = vpop.permute.xlu0 %5327
  %5329 = vrot.lane.b32.xlu0 %v5014, 8
  %v5330 = vpop.permute.xlu0 %5329
  %5331 = vrot.lane.b32.xlu0 %v5016, 8
  %v5332 = vpop.permute.xlu0 %5331
  %5333 = vrot.lane.b32.xlu0 %v5019, 8
  %v5334 = vpop.permute.xlu0 %5333
  %5335 = vrot.lane.b32.xlu0 %v5021, 8
  %v5336 = vpop.permute.xlu0 %5335
  %5337 = vrot.lane.b32.xlu0 %v5024, 8
  %v5338 = vpop.permute.xlu0 %5337
  %5339 = vrot.lane.b32.xlu0 %v5026, 8
  %v5340 = vpop.permute.xlu0 %5339
  %5341 = vrot.lane.b32.xlu0 %v5029, 8
  %v5342 = vpop.permute.xlu0 %5341
  %5343 = vrot.lane.b32.xlu0 %v5031, 8
  %v5344 = vpop.permute.xlu0 %5343
  %5345 = vrot.lane.b32.xlu0 %v5034, 8
  %v5346 = vpop.permute.xlu0 %5345
  %5347 = vrot.lane.b32.xlu0 %v5036, 8
  %v5348 = vpop.permute.xlu0 %5347
  %5349 = vrot.lane.b32.xlu0 %v5039, 8
  %v5350 = vpop.permute.xlu0 %5349
  %5351 = vrot.lane.b32.xlu0 %v5041, 8
  %v5352 = vpop.permute.xlu0 %5351
  %5353 = vrot.lane.b32.xlu0 %v5044, 8
  %v5354 = vpop.permute.xlu0 %5353
  %5355 = vrot.lane.b32.xlu0 %v5046, 8
  %v5356 = vpop.permute.xlu0 %5355
  %5357 = vrot.lane.b32.xlu0 %v5049, 8
  %v5358 = vpop.permute.xlu0 %5357
  %5359 = vrot.lane.b32.xlu0 %v5051, 8
  %v5360 = vpop.permute.xlu0 %5359
  %5361 = vrot.lane.b32.xlu0 %v5054, 8
  %v5362 = vpop.permute.xlu0 %5361
  %5363 = vrot.lane.b32.xlu0 %v5056, 8
  %v5364 = vpop.permute.xlu0 %5363
  %5365 = vrot.lane.b32.xlu0 %v5059, 8
  %v5366 = vpop.permute.xlu0 %5365
  %5367 = vrot.lane.b32.xlu0 %v5061, 8
  %v5368 = vpop.permute.xlu0 %5367
  %5369 = vrot.lane.b32.xlu0 %v5064, 8
  %v5370 = vpop.permute.xlu0 %5369
  %5371 = vrot.lane.b32.xlu0 %v5066, 8
  %v5372 = vpop.permute.xlu0 %5371
  %5373 = vrot.lane.b32.xlu0 %v5069, 8
  %v5374 = vpop.permute.xlu0 %5373
  %5375 = vrot.lane.b32.xlu0 %v5071, 8
  %v5376 = vpop.permute.xlu0 %5375
  %5377 = vrot.lane.b32.xlu0 %v5074, 8
  %v5378 = vpop.permute.xlu0 %5377
  %5379 = vrot.lane.b32.xlu0 %v5076, 8
  %v5380 = vpop.permute.xlu0 %5379
  %5381 = vrot.lane.b32.xlu0 %v5079, 8
  %v5382 = vpop.permute.xlu0 %5381
  %5383 = vrot.lane.b32.xlu0 %v5081, 8
  %v5384 = vpop.permute.xlu0 %5383
  %5385 = vrot.lane.b32.xlu0 %v5084, 8
  %v5386 = vpop.permute.xlu0 %5385
  %5387 = vrot.lane.b32.xlu0 %v5086, 8
  %v5388 = vpop.permute.xlu0 %5387
  %5389 = vrot.lane.b32.xlu0 %v5089, 8
  %v5390 = vpop.permute.xlu0 %5389
  %5391 = vrot.lane.b32.xlu0 %v5091, 8
  %v5392 = vpop.permute.xlu0 %5391
  %5393 = vrot.lane.b32.xlu0 %v5094, 8
  %v5394 = vpop.permute.xlu0 %5393
  %5395 = vrot.lane.b32.xlu0 %v5096, 8
  %v5396 = vpop.permute.xlu0 %5395
  %5397 = vrot.lane.b32.xlu0 %v5099, 8
  %v5398 = vpop.permute.xlu0 %5397
  %5399 = vrot.lane.b32.xlu0 %v5101, 8
  %v5400 = vpop.permute.xlu0 %5399
  %5401 = vrot.lane.b32.xlu0 %v5104, 8
  %v5402 = vpop.permute.xlu0 %5401
  %5403 = vrot.lane.b32.xlu0 %v5106, 8
  %v5404 = vpop.permute.xlu0 %5403
  %5405 = vrot.lane.b32.xlu0 %v5109, 8
  %v5406 = vpop.permute.xlu0 %5405
  %5407 = vrot.lane.b32.xlu0 %v5111, 8
  %v5408 = vpop.permute.xlu0 %5407
  %5409 = vrot.lane.b32.xlu0 %v5114, 8
  %v5410 = vpop.permute.xlu0 %5409
  %5411 = vrot.lane.b32.xlu0 %v5116, 8
  %v5412 = vpop.permute.xlu0 %5411
  %5413 = vrot.lane.b32.xlu0 %v5119, 8
  %v5414 = vpop.permute.xlu0 %5413
  %5415 = vrot.lane.b32.xlu0 %v5121, 8
  %v5416 = vpop.permute.xlu0 %5415
  %5417 = vrot.lane.b32.xlu0 %v5124, 8
  %v5418 = vpop.permute.xlu0 %5417
  %5419 = vrot.lane.b32.xlu0 %v5126, 8
  %v5420 = vpop.permute.xlu0 %5419
  %5481 = vrot.lane.b32.xlu0 %v5129, 16
  %v5482 = vpop.permute.xlu0 %5481
  %5483 = vrot.lane.b32.xlu0 %v5131, 16
  %v5484 = vpop.permute.xlu0 %5483
  %5485 = vrot.lane.b32.xlu0 %v5134, 16
  %v5486 = vpop.permute.xlu0 %5485
  %5487 = vrot.lane.b32.xlu0 %v5136, 16
  %v5488 = vpop.permute.xlu0 %5487
  %5489 = vrot.lane.b32.xlu0 %v5139, 16
  %v5490 = vpop.permute.xlu0 %5489
  %5491 = vrot.lane.b32.xlu0 %v5141, 16
  %v5492 = vpop.permute.xlu0 %5491
  %5493 = vrot.lane.b32.xlu0 %v5144, 16
  %v5494 = vpop.permute.xlu0 %5493
  %5495 = vrot.lane.b32.xlu0 %v5146, 16
  %v5496 = vpop.permute.xlu0 %5495
  %5497 = vrot.lane.b32.xlu0 %v5149, 16
  %v5498 = vpop.permute.xlu0 %5497
  %5499 = vrot.lane.b32.xlu0 %v5151, 16
  %v5500 = vpop.permute.xlu0 %5499
  %5501 = vrot.lane.b32.xlu0 %v5154, 16
  %v5502 = vpop.permute.xlu0 %5501
  %5503 = vrot.lane.b32.xlu0 %v5156, 16
  %v5504 = vpop.permute.xlu0 %5503
  %5505 = vrot.lane.b32.xlu0 %v5159, 16
  %v5506 = vpop.permute.xlu0 %5505
  %5507 = vrot.lane.b32.xlu0 %v5161, 16
  %v5508 = vpop.permute.xlu0 %5507
  %5509 = vrot.lane.b32.xlu0 %v5164, 16
  %v5510 = vpop.permute.xlu0 %5509
  %5511 = vrot.lane.b32.xlu0 %v5166, 16
  %v5512 = vpop.permute.xlu0 %5511
  %5513 = vrot.lane.b32.xlu0 %v5169, 16
  %v5514 = vpop.permute.xlu0 %5513
  %5515 = vrot.lane.b32.xlu0 %v5171, 16
  %v5516 = vpop.permute.xlu0 %5515
  %5517 = vrot.lane.b32.xlu0 %v5174, 16
  %v5518 = vpop.permute.xlu0 %5517
  %5519 = vrot.lane.b32.xlu0 %v5176, 16
  %v5520 = vpop.permute.xlu0 %5519
  %5521 = vrot.lane.b32.xlu0 %v5179, 16
  %v5522 = vpop.permute.xlu0 %5521
  %5523 = vrot.lane.b32.xlu0 %v5181, 16
  %v5524 = vpop.permute.xlu0 %5523
  %5525 = vrot.lane.b32.xlu0 %v5184, 16
  %v5526 = vpop.permute.xlu0 %5525
  %5527 = vrot.lane.b32.xlu0 %v5186, 16
  %v5528 = vpop.permute.xlu0 %5527
  %5529 = vrot.lane.b32.xlu0 %v5189, 16
  %v5530 = vpop.permute.xlu0 %5529
  %5531 = vrot.lane.b32.xlu0 %v5191, 16
  %v5532 = vpop.permute.xlu0 %5531
  %5533 = vrot.lane.b32.xlu0 %v5194, 16
  %v5534 = vpop.permute.xlu0 %5533
  %5535 = vrot.lane.b32.xlu0 %v5196, 16
  %v5536 = vpop.permute.xlu0 %5535
  %5537 = vrot.lane.b32.xlu0 %v5199, 16
  %v5538 = vpop.permute.xlu0 %5537
  %5539 = vrot.lane.b32.xlu0 %v5201, 16
  %v5540 = vpop.permute.xlu0 %5539
  %5541 = vrot.lane.b32.xlu0 %v5204, 16
  %v5542 = vpop.permute.xlu0 %5541
  %5543 = vrot.lane.b32.xlu0 %v5206, 16
  %v5544 = vpop.permute.xlu0 %5543
  %5545 = vrot.lane.b32.xlu0 %v5209, 16
  %v5546 = vpop.permute.xlu0 %5545
  %5547 = vrot.lane.b32.xlu0 %v5211, 16
  %v5548 = vpop.permute.xlu0 %5547
  %5549 = vrot.lane.b32.xlu0 %v5214, 16
  %v5550 = vpop.permute.xlu0 %5549
  %5551 = vrot.lane.b32.xlu0 %v5216, 16
  %v5552 = vpop.permute.xlu0 %5551
  %5553 = vrot.lane.b32.xlu0 %v5219, 16
  %v5554 = vpop.permute.xlu0 %5553
  %5555 = vrot.lane.b32.xlu0 %v5221, 16
  %v5556 = vpop.permute.xlu0 %5555
  %5557 = vrot.lane.b32.xlu0 %v5224, 16
  %v5558 = vpop.permute.xlu0 %5557
  %5559 = vrot.lane.b32.xlu0 %v5226, 16
  %v5560 = vpop.permute.xlu0 %5559
  %5561 = vrot.lane.b32.xlu0 %v5229, 16
  %v5562 = vpop.permute.xlu0 %5561
  %5563 = vrot.lane.b32.xlu0 %v5231, 16
  %v5564 = vpop.permute.xlu0 %5563
  %5565 = vrot.lane.b32.xlu0 %v5234, 16
  %v5566 = vpop.permute.xlu0 %5565
  %5567 = vrot.lane.b32.xlu0 %v5236, 16
  %v5568 = vpop.permute.xlu0 %5567
  %5569 = vrot.lane.b32.xlu0 %v5239, 16
  %v5570 = vpop.permute.xlu0 %5569
  %5571 = vrot.lane.b32.xlu0 %v5241, 16
  %v5572 = vpop.permute.xlu0 %5571
  %5573 = vrot.lane.b32.xlu0 %v5244, 16
  %v5574 = vpop.permute.xlu0 %5573
  %5575 = vrot.lane.b32.xlu0 %v5246, 16
  %v5576 = vpop.permute.xlu0 %5575
  %5577 = vrot.lane.b32.xlu0 %v5249, 16
  %v5578 = vpop.permute.xlu0 %5577
  %5579 = vrot.lane.b32.xlu0 %v5251, 16
  %v5580 = vpop.permute.xlu0 %5579
  %5581 = vrot.lane.b32.xlu0 %v5254, 16
  %v5582 = vpop.permute.xlu0 %5581
  %5583 = vrot.lane.b32.xlu0 %v5256, 16
  %v5584 = vpop.permute.xlu0 %5583
  %5585 = vrot.lane.b32.xlu0 %v5259, 16
  %v5586 = vpop.permute.xlu0 %5585
  %5587 = vrot.lane.b32.xlu0 %v5261, 16
  %v5588 = vpop.permute.xlu0 %5587
  %5589 = vrot.lane.b32.xlu0 %v5264, 16
  %v5590 = vpop.permute.xlu0 %5589
  %5591 = vrot.lane.b32.xlu0 %v5266, 16
  %v5592 = vpop.permute.xlu0 %5591
  %5593 = vrot.lane.b32.xlu0 %v5269, 16
  %v5594 = vpop.permute.xlu0 %5593
  %5595 = vrot.lane.b32.xlu0 %v5271, 16
  %v5596 = vpop.permute.xlu0 %5595
  %5597 = vrot.lane.b32.xlu0 %v5274, 16
  %v5598 = vpop.permute.xlu0 %5597
  %5599 = vrot.lane.b32.xlu0 %v5276, 16
  %v5600 = vpop.permute.xlu0 %5599
  %5661 = vrot.lane.b32.xlu0 %v4853, 24
  %v5662 = vpop.permute.xlu0 %5661
  %5663 = vrot.lane.b32.xlu0 %v4603, 24
  %v5664 = vpop.permute.xlu0 %5663
  %5665 = vrot.lane.b32.xlu0 %v4852, 24
  %v5666 = vpop.permute.xlu0 %5665
  %5667 = vrot.lane.b32.xlu0 %v4600, 24
  %v5668 = vpop.permute.xlu0 %5667
  %5669 = vrot.lane.b32.xlu0 %v4854, 24
  %v5670 = vpop.permute.xlu0 %5669
  %5671 = vrot.lane.b32.xlu0 %v4606, 24
  %v5672 = vpop.permute.xlu0 %5671
  %5673 = vrot.lane.b32.xlu0 %v4855, 24
  %v5674 = vpop.permute.xlu0 %5673
  %5675 = vrot.lane.b32.xlu0 %v4609, 24
  %v5676 = vpop.permute.xlu0 %5675
  %5677 = vrot.lane.b32.xlu0 %v4856, 24
  %v5678 = vpop.permute.xlu0 %5677
  %5679 = vrot.lane.b32.xlu0 %v4612, 24
  %v5680 = vpop.permute.xlu0 %5679
  %5681 = vrot.lane.b32.xlu0 %v4857, 24
  %v5682 = vpop.permute.xlu0 %5681
  %5683 = vrot.lane.b32.xlu0 %v4615, 24
  %v5684 = vpop.permute.xlu0 %5683
  %5685 = vrot.lane.b32.xlu0 %v4858, 24
  %v5686 = vpop.permute.xlu0 %5685
  %5687 = vrot.lane.b32.xlu0 %v4618, 24
  %v5688 = vpop.permute.xlu0 %5687
  %5689 = vrot.lane.b32.xlu0 %v4859, 24
  %v5690 = vpop.permute.xlu0 %5689
  %5691 = vrot.lane.b32.xlu0 %v4621, 24
  %v5692 = vpop.permute.xlu0 %5691
  %5693 = vrot.lane.b32.xlu0 %v4860, 24
  %v5694 = vpop.permute.xlu0 %5693
  %5695 = vrot.lane.b32.xlu0 %v4624, 24
  %v5696 = vpop.permute.xlu0 %5695
  %5697 = vrot.lane.b32.xlu0 %v4861, 24
  %v5698 = vpop.permute.xlu0 %5697
  %5699 = vrot.lane.b32.xlu0 %v4627, 24
  %v5700 = vpop.permute.xlu0 %5699
  %5701 = vrot.lane.b32.xlu0 %v4862, 24
  %v5702 = vpop.permute.xlu0 %5701
  %5703 = vrot.lane.b32.xlu0 %v4630, 24
  %v5704 = vpop.permute.xlu0 %5703
  %5705 = vrot.lane.b32.xlu0 %v4863, 24
  %v5706 = vpop.permute.xlu0 %5705
  %5707 = vrot.lane.b32.xlu0 %v4633, 24
  %v5708 = vpop.permute.xlu0 %5707
  %5709 = vrot.lane.b32.xlu0 %v4864, 24
  %v5710 = vpop.permute.xlu0 %5709
  %5711 = vrot.lane.b32.xlu0 %v4636, 24
  %v5712 = vpop.permute.xlu0 %5711
  %5713 = vrot.lane.b32.xlu0 %v4865, 24
  %v5714 = vpop.permute.xlu0 %5713
  %5715 = vrot.lane.b32.xlu0 %v4639, 24
  %v5716 = vpop.permute.xlu0 %5715
  %5717 = vrot.lane.b32.xlu0 %v4866, 24
  %v5718 = vpop.permute.xlu0 %5717
  %5719 = vrot.lane.b32.xlu0 %v4642, 24
  %v5720 = vpop.permute.xlu0 %5719
  %5721 = vrot.lane.b32.xlu0 %v4867, 24
  %v5722 = vpop.permute.xlu0 %5721
  %5723 = vrot.lane.b32.xlu0 %v4645, 24
  %v5724 = vpop.permute.xlu0 %5723
  %5725 = vrot.lane.b32.xlu0 %v4869, 24
  %v5726 = vpop.permute.xlu0 %5725
  %5727 = vrot.lane.b32.xlu0 %v4651, 24
  %v5728 = vpop.permute.xlu0 %5727
  %5729 = vrot.lane.b32.xlu0 %v4868, 24
  %v5730 = vpop.permute.xlu0 %5729
  %5731 = vrot.lane.b32.xlu0 %v4648, 24
  %v5732 = vpop.permute.xlu0 %5731
  %5733 = vrot.lane.b32.xlu0 %v4870, 24
  %v5734 = vpop.permute.xlu0 %5733
  %5735 = vrot.lane.b32.xlu0 %v4654, 24
  %v5736 = vpop.permute.xlu0 %5735
  %5737 = vrot.lane.b32.xlu0 %v4871, 24
  %v5738 = vpop.permute.xlu0 %5737
  %5739 = vrot.lane.b32.xlu0 %v4657, 24
  %v5740 = vpop.permute.xlu0 %5739
  %5741 = vrot.lane.b32.xlu0 %v4872, 24
  %v5742 = vpop.permute.xlu0 %5741
  %5743 = vrot.lane.b32.xlu0 %v4660, 24
  %v5744 = vpop.permute.xlu0 %5743
  %5745 = vrot.lane.b32.xlu0 %v4873, 24
  %v5746 = vpop.permute.xlu0 %5745
  %5747 = vrot.lane.b32.xlu0 %v4663, 24
  %v5748 = vpop.permute.xlu0 %5747
  %5749 = vrot.lane.b32.xlu0 %v4874, 24
  %v5750 = vpop.permute.xlu0 %5749
  %5751 = vrot.lane.b32.xlu0 %v4666, 24
  %v5752 = vpop.permute.xlu0 %5751
  %5753 = vrot.lane.b32.xlu0 %v4875, 24
  %v5754 = vpop.permute.xlu0 %5753
  %5755 = vrot.lane.b32.xlu0 %v4669, 24
  %v5756 = vpop.permute.xlu0 %5755
  %5757 = vrot.lane.b32.xlu0 %v4876, 24
  %v5758 = vpop.permute.xlu0 %5757
  %5759 = vrot.lane.b32.xlu0 %v4672, 24
  %v5760 = vpop.permute.xlu0 %5759
  %5761 = vrot.lane.b32.xlu0 %v4877, 24
  %v5762 = vpop.permute.xlu0 %5761
  %5763 = vrot.lane.b32.xlu0 %v4675, 24
  %v5764 = vpop.permute.xlu0 %5763
  %5765 = vrot.lane.b32.xlu0 %v4878, 24
  %v5766 = vpop.permute.xlu0 %5765
  %5767 = vrot.lane.b32.xlu0 %v4678, 24
  %v5768 = vpop.permute.xlu0 %5767
  %5769 = vrot.lane.b32.xlu0 %v4879, 24
  %v5770 = vpop.permute.xlu0 %5769
  %5771 = vrot.lane.b32.xlu0 %v4681, 24
  %v5772 = vpop.permute.xlu0 %5771
  %5773 = vrot.lane.b32.xlu0 %v4880, 24
  %v5774 = vpop.permute.xlu0 %5773
  %5775 = vrot.lane.b32.xlu0 %v4684, 24
  %v5776 = vpop.permute.xlu0 %5775
  %5777 = vrot.lane.b32.xlu0 %v4881, 24
  %v5778 = vpop.permute.xlu0 %5777
  %5779 = vrot.lane.b32.xlu0 %v4687, 24
  %v5780 = vpop.permute.xlu0 %5779
  %5781 = vrot.lane.b32.xlu0 %v4882, 24
  %v5782 = vpop.permute.xlu0 %5781
  %5783 = vrot.lane.b32.xlu0 %v4690, 24
  %v5784 = vpop.permute.xlu0 %5783
  %5785 = vrot.lane.b32.xlu0 %v4883, 24
  %v5786 = vpop.permute.xlu0 %5785
  %5787 = vrot.lane.b32.xlu0 %v4693, 24
  %v5788 = vpop.permute.xlu0 %5787
  %5853 = vrot.lane.b32.xlu0 %v4984, 32
  %v5854 = vpop.permute.xlu0 %5853
  %5855 = vrot.lane.b32.xlu0 %v4986, 32
  %v5856 = vpop.permute.xlu0 %5855
  %5857 = vrot.lane.b32.xlu0 %v4979, 32
  %v5858 = vpop.permute.xlu0 %5857
  %5859 = vrot.lane.b32.xlu0 %v4981, 32
  %v5860 = vpop.permute.xlu0 %5859
  %5861 = vrot.lane.b32.xlu0 %v4989, 32
  %v5862 = vpop.permute.xlu0 %5861
  %5863 = vrot.lane.b32.xlu0 %v4991, 32
  %v5864 = vpop.permute.xlu0 %5863
  %5865 = vrot.lane.b32.xlu0 %v4994, 32
  %v5866 = vpop.permute.xlu0 %5865
  %5867 = vrot.lane.b32.xlu0 %v4996, 32
  %v5868 = vpop.permute.xlu0 %5867
  %5869 = vrot.lane.b32.xlu0 %v4999, 32
  %v5870 = vpop.permute.xlu0 %5869
  %5871 = vrot.lane.b32.xlu0 %v5001, 32
  %v5872 = vpop.permute.xlu0 %5871
  %5873 = vrot.lane.b32.xlu0 %v5004, 32
  %v5874 = vpop.permute.xlu0 %5873
  %5875 = vrot.lane.b32.xlu0 %v5006, 32
  %v5876 = vpop.permute.xlu0 %5875
  %5877 = vrot.lane.b32.xlu0 %v5009, 32
  %v5878 = vpop.permute.xlu0 %5877
  %5879 = vrot.lane.b32.xlu0 %v5011, 32
  %v5880 = vpop.permute.xlu0 %5879
  %5881 = vrot.lane.b32.xlu0 %v5014, 32
  %v5882 = vpop.permute.xlu0 %5881
  %5883 = vrot.lane.b32.xlu0 %v5016, 32
  %v5884 = vpop.permute.xlu0 %5883
  %5885 = vrot.lane.b32.xlu0 %v5019, 32
  %v5886 = vpop.permute.xlu0 %5885
  %5887 = vrot.lane.b32.xlu0 %v5021, 32
  %v5888 = vpop.permute.xlu0 %5887
  %5889 = vrot.lane.b32.xlu0 %v5024, 32
  %v5890 = vpop.permute.xlu0 %5889
  %5891 = vrot.lane.b32.xlu0 %v5026, 32
  %v5892 = vpop.permute.xlu0 %5891
  %5893 = vrot.lane.b32.xlu0 %v5029, 32
  %v5894 = vpop.permute.xlu0 %5893
  %5895 = vrot.lane.b32.xlu0 %v5031, 32
  %v5896 = vpop.permute.xlu0 %5895
  %5897 = vrot.lane.b32.xlu0 %v5034, 32
  %v5898 = vpop.permute.xlu0 %5897
  %5899 = vrot.lane.b32.xlu0 %v5036, 32
  %v5900 = vpop.permute.xlu0 %5899
  %5901 = vrot.lane.b32.xlu0 %v5039, 32
  %v5902 = vpop.permute.xlu0 %5901
  %5903 = vrot.lane.b32.xlu0 %v5041, 32
  %v5904 = vpop.permute.xlu0 %5903
  %5905 = vrot.lane.b32.xlu0 %v5044, 32
  %v5906 = vpop.permute.xlu0 %5905
  %5907 = vrot.lane.b32.xlu0 %v5046, 32
  %v5908 = vpop.permute.xlu0 %5907
  %5909 = vrot.lane.b32.xlu0 %v5049, 32
  %v5910 = vpop.permute.xlu0 %5909
  %5911 = vrot.lane.b32.xlu0 %v5051, 32
  %v5912 = vpop.permute.xlu0 %5911
  %5913 = vrot.lane.b32.xlu0 %v5283, 32
  %v5914 = vpop.permute.xlu0 %5913
  %5915 = vrot.lane.b32.xlu0 %v5285, 32
  %v5916 = vpop.permute.xlu0 %5915
  %5917 = vrot.lane.b32.xlu0 %v5059, 32
  %v5918 = vpop.permute.xlu0 %5917
  %5919 = vrot.lane.b32.xlu0 %v5061, 32
  %v5920 = vpop.permute.xlu0 %5919
  %5921 = vrot.lane.b32.xlu0 %v5054, 32
  %v5922 = vpop.permute.xlu0 %5921
  %5923 = vrot.lane.b32.xlu0 %v5056, 32
  %v5924 = vpop.permute.xlu0 %5923
  %5925 = vrot.lane.b32.xlu0 %v5064, 32
  %v5926 = vpop.permute.xlu0 %5925
  %5927 = vrot.lane.b32.xlu0 %v5066, 32
  %v5928 = vpop.permute.xlu0 %5927
  %5929 = vrot.lane.b32.xlu0 %v5069, 32
  %v5930 = vpop.permute.xlu0 %5929
  %5931 = vrot.lane.b32.xlu0 %v5071, 32
  %v5932 = vpop.permute.xlu0 %5931
  %5933 = vrot.lane.b32.xlu0 %v5074, 32
  %v5934 = vpop.permute.xlu0 %5933
  %5935 = vrot.lane.b32.xlu0 %v5076, 32
  %v5936 = vpop.permute.xlu0 %5935
  %5937 = vrot.lane.b32.xlu0 %v5079, 32
  %v5938 = vpop.permute.xlu0 %5937
  %5939 = vrot.lane.b32.xlu0 %v5081, 32
  %v5940 = vpop.permute.xlu0 %5939
  %5941 = vrot.lane.b32.xlu0 %v5084, 32
  %v5942 = vpop.permute.xlu0 %5941
  %5943 = vrot.lane.b32.xlu0 %v5086, 32
  %v5944 = vpop.permute.xlu0 %5943
  %5945 = vrot.lane.b32.xlu0 %v5089, 32
  %v5946 = vpop.permute.xlu0 %5945
  %5947 = vrot.lane.b32.xlu0 %v5091, 32
  %v5948 = vpop.permute.xlu0 %5947
  %5949 = vrot.lane.b32.xlu0 %v5094, 32
  %v5950 = vpop.permute.xlu0 %5949
  %5951 = vrot.lane.b32.xlu0 %v5096, 32
  %v5952 = vpop.permute.xlu0 %5951
  %5953 = vrot.lane.b32.xlu0 %v5099, 32
  %v5954 = vpop.permute.xlu0 %5953
  %5955 = vrot.lane.b32.xlu0 %v5101, 32
  %v5956 = vpop.permute.xlu0 %5955
  %5957 = vrot.lane.b32.xlu0 %v5104, 32
  %v5958 = vpop.permute.xlu0 %5957
  %5959 = vrot.lane.b32.xlu0 %v5106, 32
  %v5960 = vpop.permute.xlu0 %5959
  %5961 = vrot.lane.b32.xlu0 %v5109, 32
  %v5962 = vpop.permute.xlu0 %5961
  %5963 = vrot.lane.b32.xlu0 %v5111, 32
  %v5964 = vpop.permute.xlu0 %5963
  %5965 = vrot.lane.b32.xlu0 %v5114, 32
  %v5966 = vpop.permute.xlu0 %5965
  %5967 = vrot.lane.b32.xlu0 %v5116, 32
  %v5968 = vpop.permute.xlu0 %5967
  %5969 = vrot.lane.b32.xlu0 %v5119, 32
  %v5970 = vpop.permute.xlu0 %5969
  %5971 = vrot.lane.b32.xlu0 %v5121, 32
  %v5972 = vpop.permute.xlu0 %5971
  %5973 = vrot.lane.b32.xlu0 %v5124, 32
  %v5974 = vpop.permute.xlu0 %5973
  %5975 = vrot.lane.b32.xlu0 %v5126, 32
  %v5976 = vpop.permute.xlu0 %5975
  %5977 = vrot.lane.b32.xlu0 %v5288, 32
  %v5978 = vpop.permute.xlu0 %5977
  %5979 = vrot.lane.b32.xlu0 %v5290, 32
  %v5980 = vpop.permute.xlu0 %5979
  %6045 = vrot.lane.b32.xlu0 %v5134, 40
  %v6046 = vpop.permute.xlu0 %6045
  %6047 = vrot.lane.b32.xlu0 %v5136, 40
  %v6048 = vpop.permute.xlu0 %6047
  %6049 = vrot.lane.b32.xlu0 %v5129, 40
  %v6050 = vpop.permute.xlu0 %6049
  %6051 = vrot.lane.b32.xlu0 %v5131, 40
  %v6052 = vpop.permute.xlu0 %6051
  %6053 = vrot.lane.b32.xlu0 %v5139, 40
  %v6054 = vpop.permute.xlu0 %6053
  %6055 = vrot.lane.b32.xlu0 %v5141, 40
  %v6056 = vpop.permute.xlu0 %6055
  %6057 = vrot.lane.b32.xlu0 %v5144, 40
  %v6058 = vpop.permute.xlu0 %6057
  %6059 = vrot.lane.b32.xlu0 %v5146, 40
  %v6060 = vpop.permute.xlu0 %6059
  %6061 = vrot.lane.b32.xlu0 %v5149, 40
  %v6062 = vpop.permute.xlu0 %6061
  %6063 = vrot.lane.b32.xlu0 %v5151, 40
  %v6064 = vpop.permute.xlu0 %6063
  %6065 = vrot.lane.b32.xlu0 %v5154, 40
  %v6066 = vpop.permute.xlu0 %6065
  %6067 = vrot.lane.b32.xlu0 %v5156, 40
  %v6068 = vpop.permute.xlu0 %6067
  %6069 = vrot.lane.b32.xlu0 %v5159, 40
  %v6070 = vpop.permute.xlu0 %6069
  %6071 = vrot.lane.b32.xlu0 %v5161, 40
  %v6072 = vpop.permute.xlu0 %6071
  %6073 = vrot.lane.b32.xlu0 %v5164, 40
  %v6074 = vpop.permute.xlu0 %6073
  %6075 = vrot.lane.b32.xlu0 %v5166, 40
  %v6076 = vpop.permute.xlu0 %6075
  %6077 = vrot.lane.b32.xlu0 %v5169, 40
  %v6078 = vpop.permute.xlu0 %6077
  %6079 = vrot.lane.b32.xlu0 %v5171, 40
  %v6080 = vpop.permute.xlu0 %6079
  %6081 = vrot.lane.b32.xlu0 %v5174, 40
  %v6082 = vpop.permute.xlu0 %6081
  %6083 = vrot.lane.b32.xlu0 %v5176, 40
  %v6084 = vpop.permute.xlu0 %6083
  %6085 = vrot.lane.b32.xlu0 %v5179, 40
  %v6086 = vpop.permute.xlu0 %6085
  %6087 = vrot.lane.b32.xlu0 %v5181, 40
  %v6088 = vpop.permute.xlu0 %6087
  %6089 = vrot.lane.b32.xlu0 %v5184, 40
  %v6090 = vpop.permute.xlu0 %6089
  %6091 = vrot.lane.b32.xlu0 %v5186, 40
  %v6092 = vpop.permute.xlu0 %6091
  %6093 = vrot.lane.b32.xlu0 %v5189, 40
  %v6094 = vpop.permute.xlu0 %6093
  %6095 = vrot.lane.b32.xlu0 %v5191, 40
  %v6096 = vpop.permute.xlu0 %6095
  %6097 = vrot.lane.b32.xlu0 %v5194, 40
  %v6098 = vpop.permute.xlu0 %6097
  %6099 = vrot.lane.b32.xlu0 %v5196, 40
  %v6100 = vpop.permute.xlu0 %6099
  %6101 = vrot.lane.b32.xlu0 %v5199, 40
  %v6102 = vpop.permute.xlu0 %6101
  %6103 = vrot.lane.b32.xlu0 %v5201, 40
  %v6104 = vpop.permute.xlu0 %6103
  %6105 = vrot.lane.b32.xlu0 %v5293, 40
  %v6106 = vpop.permute.xlu0 %6105
  %6107 = vrot.lane.b32.xlu0 %v5295, 40
  %v6108 = vpop.permute.xlu0 %6107
  %6109 = vrot.lane.b32.xlu0 %v5209, 40
  %v6110 = vpop.permute.xlu0 %6109
  %6111 = vrot.lane.b32.xlu0 %v5211, 40
  %v6112 = vpop.permute.xlu0 %6111
  %6113 = vrot.lane.b32.xlu0 %v5204, 40
  %v6114 = vpop.permute.xlu0 %6113
  %6115 = vrot.lane.b32.xlu0 %v5206, 40
  %v6116 = vpop.permute.xlu0 %6115
  %6117 = vrot.lane.b32.xlu0 %v5214, 40
  %v6118 = vpop.permute.xlu0 %6117
  %6119 = vrot.lane.b32.xlu0 %v5216, 40
  %v6120 = vpop.permute.xlu0 %6119
  %6121 = vrot.lane.b32.xlu0 %v5219, 40
  %v6122 = vpop.permute.xlu0 %6121
  %6123 = vrot.lane.b32.xlu0 %v5221, 40
  %v6124 = vpop.permute.xlu0 %6123
  %6125 = vrot.lane.b32.xlu0 %v5224, 40
  %v6126 = vpop.permute.xlu0 %6125
  %6127 = vrot.lane.b32.xlu0 %v5226, 40
  %v6128 = vpop.permute.xlu0 %6127
  %6129 = vrot.lane.b32.xlu0 %v5229, 40
  %v6130 = vpop.permute.xlu0 %6129
  %6131 = vrot.lane.b32.xlu0 %v5231, 40
  %v6132 = vpop.permute.xlu0 %6131
  %6133 = vrot.lane.b32.xlu0 %v5234, 40
  %v6134 = vpop.permute.xlu0 %6133
  %6135 = vrot.lane.b32.xlu0 %v5236, 40
  %v6136 = vpop.permute.xlu0 %6135
  %6137 = vrot.lane.b32.xlu0 %v5239, 40
  %v6138 = vpop.permute.xlu0 %6137
  %6139 = vrot.lane.b32.xlu0 %v5241, 40
  %v6140 = vpop.permute.xlu0 %6139
  %6141 = vrot.lane.b32.xlu0 %v5244, 40
  %v6142 = vpop.permute.xlu0 %6141
  %6143 = vrot.lane.b32.xlu0 %v5246, 40
  %v6144 = vpop.permute.xlu0 %6143
  %6145 = vrot.lane.b32.xlu0 %v5249, 40
  %v6146 = vpop.permute.xlu0 %6145
  %6147 = vrot.lane.b32.xlu0 %v5251, 40
  %v6148 = vpop.permute.xlu0 %6147
  %6149 = vrot.lane.b32.xlu0 %v5254, 40
  %v6150 = vpop.permute.xlu0 %6149
  %6151 = vrot.lane.b32.xlu0 %v5256, 40
  %v6152 = vpop.permute.xlu0 %6151
  %6153 = vrot.lane.b32.xlu0 %v5259, 40
  %v6154 = vpop.permute.xlu0 %6153
  %6155 = vrot.lane.b32.xlu0 %v5261, 40
  %v6156 = vpop.permute.xlu0 %6155
  %6157 = vrot.lane.b32.xlu0 %v5264, 40
  %v6158 = vpop.permute.xlu0 %6157
  %6159 = vrot.lane.b32.xlu0 %v5266, 40
  %v6160 = vpop.permute.xlu0 %6159
  %6161 = vrot.lane.b32.xlu0 %v5269, 40
  %v6162 = vpop.permute.xlu0 %6161
  %6163 = vrot.lane.b32.xlu0 %v5271, 40
  %v6164 = vpop.permute.xlu0 %6163
  %6165 = vrot.lane.b32.xlu0 %v5274, 40
  %v6166 = vpop.permute.xlu0 %6165
  %6167 = vrot.lane.b32.xlu0 %v5276, 40
  %v6168 = vpop.permute.xlu0 %6167
  %6169 = vrot.lane.b32.xlu0 %v5298, 40
  %v6170 = vpop.permute.xlu0 %6169
  %6171 = vrot.lane.b32.xlu0 %v5300, 40
  %v6172 = vpop.permute.xlu0 %6171
  %6237 = vrot.lane.b32.xlu0 %v4852, 48
  %v6238 = vpop.permute.xlu0 %6237
  %6239 = vrot.lane.b32.xlu0 %v4600, 48
  %v6240 = vpop.permute.xlu0 %6239
  %6241 = vrot.lane.b32.xlu0 %v4854, 48
  %v6242 = vpop.permute.xlu0 %6241
  %6243 = vrot.lane.b32.xlu0 %v4606, 48
  %v6244 = vpop.permute.xlu0 %6243
  %6245 = vrot.lane.b32.xlu0 %v4855, 48
  %v6246 = vpop.permute.xlu0 %6245
  %6247 = vrot.lane.b32.xlu0 %v4609, 48
  %v6248 = vpop.permute.xlu0 %6247
  %6249 = vrot.lane.b32.xlu0 %v4856, 48
  %v6250 = vpop.permute.xlu0 %6249
  %6251 = vrot.lane.b32.xlu0 %v4612, 48
  %v6252 = vpop.permute.xlu0 %6251
  %6253 = vrot.lane.b32.xlu0 %v4857, 48
  %v6254 = vpop.permute.xlu0 %6253
  %6255 = vrot.lane.b32.xlu0 %v4615, 48
  %v6256 = vpop.permute.xlu0 %6255
  %6257 = vrot.lane.b32.xlu0 %v4858, 48
  %v6258 = vpop.permute.xlu0 %6257
  %6259 = vrot.lane.b32.xlu0 %v4618, 48
  %v6260 = vpop.permute.xlu0 %6259
  %6261 = vrot.lane.b32.xlu0 %v4859, 48
  %v6262 = vpop.permute.xlu0 %6261
  %6263 = vrot.lane.b32.xlu0 %v4621, 48
  %v6264 = vpop.permute.xlu0 %6263
  %6265 = vrot.lane.b32.xlu0 %v4860, 48
  %v6266 = vpop.permute.xlu0 %6265
  %6267 = vrot.lane.b32.xlu0 %v4624, 48
  %v6268 = vpop.permute.xlu0 %6267
  %6269 = vrot.lane.b32.xlu0 %v4861, 48
  %v6270 = vpop.permute.xlu0 %6269
  %6271 = vrot.lane.b32.xlu0 %v4627, 48
  %v6272 = vpop.permute.xlu0 %6271
  %6273 = vrot.lane.b32.xlu0 %v4862, 48
  %v6274 = vpop.permute.xlu0 %6273
  %6275 = vrot.lane.b32.xlu0 %v4630, 48
  %v6276 = vpop.permute.xlu0 %6275
  %6277 = vrot.lane.b32.xlu0 %v4863, 48
  %v6278 = vpop.permute.xlu0 %6277
  %6279 = vrot.lane.b32.xlu0 %v4633, 48
  %v6280 = vpop.permute.xlu0 %6279
  %6281 = vrot.lane.b32.xlu0 %v4864, 48
  %v6282 = vpop.permute.xlu0 %6281
  %6283 = vrot.lane.b32.xlu0 %v4636, 48
  %v6284 = vpop.permute.xlu0 %6283
  %6285 = vrot.lane.b32.xlu0 %v4865, 48
  %v6286 = vpop.permute.xlu0 %6285
  %6287 = vrot.lane.b32.xlu0 %v4639, 48
  %v6288 = vpop.permute.xlu0 %6287
  %6289 = vrot.lane.b32.xlu0 %v4866, 48
  %v6290 = vpop.permute.xlu0 %6289
  %6291 = vrot.lane.b32.xlu0 %v4642, 48
  %v6292 = vpop.permute.xlu0 %6291
  %6293 = vrot.lane.b32.xlu0 %v4867, 48
  %v6294 = vpop.permute.xlu0 %6293
  %6295 = vrot.lane.b32.xlu0 %v4645, 48
  %v6296 = vpop.permute.xlu0 %6295
  %6297 = vrot.lane.b32.xlu0 %v4868, 48
  %v6298 = vpop.permute.xlu0 %6297
  %6299 = vrot.lane.b32.xlu0 %v4648, 48
  %v6300 = vpop.permute.xlu0 %6299
  %6301 = vrot.lane.b32.xlu0 %v4870, 48
  %v6302 = vpop.permute.xlu0 %6301
  %6303 = vrot.lane.b32.xlu0 %v4654, 48
  %v6304 = vpop.permute.xlu0 %6303
  %6305 = vrot.lane.b32.xlu0 %v4871, 48
  %v6306 = vpop.permute.xlu0 %6305
  %6307 = vrot.lane.b32.xlu0 %v4657, 48
  %v6308 = vpop.permute.xlu0 %6307
  %6309 = vrot.lane.b32.xlu0 %v4872, 48
  %v6310 = vpop.permute.xlu0 %6309
  %6311 = vrot.lane.b32.xlu0 %v4660, 48
  %v6312 = vpop.permute.xlu0 %6311
  %6313 = vrot.lane.b32.xlu0 %v4873, 48
  %v6314 = vpop.permute.xlu0 %6313
  %6315 = vrot.lane.b32.xlu0 %v4663, 48
  %v6316 = vpop.permute.xlu0 %6315
  %6317 = vrot.lane.b32.xlu0 %v4874, 48
  %v6318 = vpop.permute.xlu0 %6317
  %6319 = vrot.lane.b32.xlu0 %v4666, 48
  %v6320 = vpop.permute.xlu0 %6319
  %6321 = vrot.lane.b32.xlu0 %v4875, 48
  %v6322 = vpop.permute.xlu0 %6321
  %6323 = vrot.lane.b32.xlu0 %v4669, 48
  %v6324 = vpop.permute.xlu0 %6323
  %6325 = vrot.lane.b32.xlu0 %v4876, 48
  %v6326 = vpop.permute.xlu0 %6325
  %6327 = vrot.lane.b32.xlu0 %v4672, 48
  %v6328 = vpop.permute.xlu0 %6327
  %6329 = vrot.lane.b32.xlu0 %v4877, 48
  %v6330 = vpop.permute.xlu0 %6329
  %6331 = vrot.lane.b32.xlu0 %v4675, 48
  %v6332 = vpop.permute.xlu0 %6331
  %6333 = vrot.lane.b32.xlu0 %v4878, 48
  %v6334 = vpop.permute.xlu0 %6333
  %6335 = vrot.lane.b32.xlu0 %v4678, 48
  %v6336 = vpop.permute.xlu0 %6335
  %6337 = vrot.lane.b32.xlu0 %v4879, 48
  %v6338 = vpop.permute.xlu0 %6337
  %6339 = vrot.lane.b32.xlu0 %v4681, 48
  %v6340 = vpop.permute.xlu0 %6339
  %6341 = vrot.lane.b32.xlu0 %v4880, 48
  %v6342 = vpop.permute.xlu0 %6341
  %6343 = vrot.lane.b32.xlu0 %v4684, 48
  %v6344 = vpop.permute.xlu0 %6343
  %6345 = vrot.lane.b32.xlu0 %v4881, 48
  %v6346 = vpop.permute.xlu0 %6345
  %6347 = vrot.lane.b32.xlu0 %v4687, 48
  %v6348 = vpop.permute.xlu0 %6347
  %6349 = vrot.lane.b32.xlu0 %v4882, 48
  %v6350 = vpop.permute.xlu0 %6349
  %6351 = vrot.lane.b32.xlu0 %v4690, 48
  %v6352 = vpop.permute.xlu0 %6351
  %6353 = vrot.lane.b32.xlu0 %v4883, 48
  %v6354 = vpop.permute.xlu0 %6353
  %6355 = vrot.lane.b32.xlu0 %v4693, 48
  %v6356 = vpop.permute.xlu0 %6355
  %6417 = vrot.lane.b32.xlu0 %v4979, 56
  %v6418 = vpop.permute.xlu0 %6417
  %6419 = vrot.lane.b32.xlu0 %v4981, 56
  %v6420 = vpop.permute.xlu0 %6419
  %6421 = vrot.lane.b32.xlu0 %v4989, 56
  %v6422 = vpop.permute.xlu0 %6421
  %6423 = vrot.lane.b32.xlu0 %v4991, 56
  %v6424 = vpop.permute.xlu0 %6423
  %6425 = vrot.lane.b32.xlu0 %v4994, 56
  %v6426 = vpop.permute.xlu0 %6425
  %6427 = vrot.lane.b32.xlu0 %v4996, 56
  %v6428 = vpop.permute.xlu0 %6427
  %6429 = vrot.lane.b32.xlu0 %v4999, 56
  %v6430 = vpop.permute.xlu0 %6429
  %6431 = vrot.lane.b32.xlu0 %v5001, 56
  %v6432 = vpop.permute.xlu0 %6431
  %6433 = vrot.lane.b32.xlu0 %v5004, 56
  %v6434 = vpop.permute.xlu0 %6433
  %6435 = vrot.lane.b32.xlu0 %v5006, 56
  %v6436 = vpop.permute.xlu0 %6435
  %6437 = vrot.lane.b32.xlu0 %v5009, 56
  %v6438 = vpop.permute.xlu0 %6437
  %6439 = vrot.lane.b32.xlu0 %v5011, 56
  %v6440 = vpop.permute.xlu0 %6439
  %6441 = vrot.lane.b32.xlu0 %v5014, 56
  %v6442 = vpop.permute.xlu0 %6441
  %6443 = vrot.lane.b32.xlu0 %v5016, 56
  %v6444 = vpop.permute.xlu0 %6443
  %6445 = vrot.lane.b32.xlu0 %v5019, 56
  %v6446 = vpop.permute.xlu0 %6445
  %6447 = vrot.lane.b32.xlu0 %v5021, 56
  %v6448 = vpop.permute.xlu0 %6447
  %6449 = vrot.lane.b32.xlu0 %v5024, 56
  %v6450 = vpop.permute.xlu0 %6449
  %6451 = vrot.lane.b32.xlu0 %v5026, 56
  %v6452 = vpop.permute.xlu0 %6451
  %6453 = vrot.lane.b32.xlu0 %v5029, 56
  %v6454 = vpop.permute.xlu0 %6453
  %6455 = vrot.lane.b32.xlu0 %v5031, 56
  %v6456 = vpop.permute.xlu0 %6455
  %6457 = vrot.lane.b32.xlu0 %v5034, 56
  %v6458 = vpop.permute.xlu0 %6457
  %6459 = vrot.lane.b32.xlu0 %v5036, 56
  %v6460 = vpop.permute.xlu0 %6459
  %6461 = vrot.lane.b32.xlu0 %v5039, 56
  %v6462 = vpop.permute.xlu0 %6461
  %6463 = vrot.lane.b32.xlu0 %v5041, 56
  %v6464 = vpop.permute.xlu0 %6463
  %6465 = vrot.lane.b32.xlu0 %v5044, 56
  %v6466 = vpop.permute.xlu0 %6465
  %6467 = vrot.lane.b32.xlu0 %v5046, 56
  %v6468 = vpop.permute.xlu0 %6467
  %6469 = vrot.lane.b32.xlu0 %v5049, 56
  %v6470 = vpop.permute.xlu0 %6469
  %6471 = vrot.lane.b32.xlu0 %v5051, 56
  %v6472 = vpop.permute.xlu0 %6471
  %6473 = vrot.lane.b32.xlu0 %v5283, 56
  %v6474 = vpop.permute.xlu0 %6473
  %6475 = vrot.lane.b32.xlu0 %v5285, 56
  %v6476 = vpop.permute.xlu0 %6475
  %6477 = vrot.lane.b32.xlu0 %v5054, 56
  %v6478 = vpop.permute.xlu0 %6477
  %6479 = vrot.lane.b32.xlu0 %v5056, 56
  %v6480 = vpop.permute.xlu0 %6479
  %6481 = vrot.lane.b32.xlu0 %v5064, 56
  %v6482 = vpop.permute.xlu0 %6481
  %6483 = vrot.lane.b32.xlu0 %v5066, 56
  %v6484 = vpop.permute.xlu0 %6483
  %6485 = vrot.lane.b32.xlu0 %v5069, 56
  %v6486 = vpop.permute.xlu0 %6485
  %6487 = vrot.lane.b32.xlu0 %v5071, 56
  %v6488 = vpop.permute.xlu0 %6487
  %6489 = vrot.lane.b32.xlu0 %v5074, 56
  %v6490 = vpop.permute.xlu0 %6489
  %6491 = vrot.lane.b32.xlu0 %v5076, 56
  %v6492 = vpop.permute.xlu0 %6491
  %6493 = vrot.lane.b32.xlu0 %v5079, 56
  %v6494 = vpop.permute.xlu0 %6493
  %6495 = vrot.lane.b32.xlu0 %v5081, 56
  %v6496 = vpop.permute.xlu0 %6495
  %6497 = vrot.lane.b32.xlu0 %v5084, 56
  %v6498 = vpop.permute.xlu0 %6497
  %6499 = vrot.lane.b32.xlu0 %v5086, 56
  %v6500 = vpop.permute.xlu0 %6499
  %6501 = vrot.lane.b32.xlu0 %v5089, 56
  %v6502 = vpop.permute.xlu0 %6501
  %6503 = vrot.lane.b32.xlu0 %v5091, 56
  %v6504 = vpop.permute.xlu0 %6503
  %6505 = vrot.lane.b32.xlu0 %v5094, 56
  %v6506 = vpop.permute.xlu0 %6505
  %6507 = vrot.lane.b32.xlu0 %v5096, 56
  %v6508 = vpop.permute.xlu0 %6507
  %6509 = vrot.lane.b32.xlu0 %v5099, 56
  %v6510 = vpop.permute.xlu0 %6509
  %6511 = vrot.lane.b32.xlu0 %v5101, 56
  %v6512 = vpop.permute.xlu0 %6511
  %6513 = vrot.lane.b32.xlu0 %v5104, 56
  %v6514 = vpop.permute.xlu0 %6513
  %6515 = vrot.lane.b32.xlu0 %v5106, 56
  %v6516 = vpop.permute.xlu0 %6515
  %6517 = vrot.lane.b32.xlu0 %v5109, 56
  %v6518 = vpop.permute.xlu0 %6517
  %6519 = vrot.lane.b32.xlu0 %v5111, 56
  %v6520 = vpop.permute.xlu0 %6519
  %6521 = vrot.lane.b32.xlu0 %v5114, 56
  %v6522 = vpop.permute.xlu0 %6521
  %6523 = vrot.lane.b32.xlu0 %v5116, 56
  %v6524 = vpop.permute.xlu0 %6523
  %6525 = vrot.lane.b32.xlu0 %v5119, 56
  %v6526 = vpop.permute.xlu0 %6525
  %6527 = vrot.lane.b32.xlu0 %v5121, 56
  %v6528 = vpop.permute.xlu0 %6527
  %6529 = vrot.lane.b32.xlu0 %v5124, 56
  %v6530 = vpop.permute.xlu0 %6529
  %6531 = vrot.lane.b32.xlu0 %v5126, 56
  %v6532 = vpop.permute.xlu0 %6531
  %6533 = vrot.lane.b32.xlu0 %v5288, 56
  %v6534 = vpop.permute.xlu0 %6533
  %6535 = vrot.lane.b32.xlu0 %v5290, 56
  %v6536 = vpop.permute.xlu0 %6535
  %6597 = vrot.lane.b32.xlu0 %v5129, 64
  %v6598 = vpop.permute.xlu0 %6597
  %6599 = vrot.lane.b32.xlu0 %v5131, 64
  %v6600 = vpop.permute.xlu0 %6599
  %6601 = vrot.lane.b32.xlu0 %v5139, 64
  %v6602 = vpop.permute.xlu0 %6601
  %6603 = vrot.lane.b32.xlu0 %v5141, 64
  %v6604 = vpop.permute.xlu0 %6603
  %6605 = vrot.lane.b32.xlu0 %v5144, 64
  %v6606 = vpop.permute.xlu0 %6605
  %6607 = vrot.lane.b32.xlu0 %v5146, 64
  %v6608 = vpop.permute.xlu0 %6607
  %6609 = vrot.lane.b32.xlu0 %v5149, 64
  %v6610 = vpop.permute.xlu0 %6609
  %6611 = vrot.lane.b32.xlu0 %v5151, 64
  %v6612 = vpop.permute.xlu0 %6611
  %6613 = vrot.lane.b32.xlu0 %v5154, 64
  %v6614 = vpop.permute.xlu0 %6613
  %6615 = vrot.lane.b32.xlu0 %v5156, 64
  %v6616 = vpop.permute.xlu0 %6615
  %6617 = vrot.lane.b32.xlu0 %v5159, 64
  %v6618 = vpop.permute.xlu0 %6617
  %6619 = vrot.lane.b32.xlu0 %v5161, 64
  %v6620 = vpop.permute.xlu0 %6619
  %6621 = vrot.lane.b32.xlu0 %v5164, 64
  %v6622 = vpop.permute.xlu0 %6621
  %6623 = vrot.lane.b32.xlu0 %v5166, 64
  %v6624 = vpop.permute.xlu0 %6623
  %6625 = vrot.lane.b32.xlu0 %v5169, 64
  %v6626 = vpop.permute.xlu0 %6625
  %6627 = vrot.lane.b32.xlu0 %v5171, 64
  %v6628 = vpop.permute.xlu0 %6627
  %6629 = vrot.lane.b32.xlu0 %v5174, 64
  %v6630 = vpop.permute.xlu0 %6629
  %6631 = vrot.lane.b32.xlu0 %v5176, 64
  %v6632 = vpop.permute.xlu0 %6631
  %6633 = vrot.lane.b32.xlu0 %v5179, 64
  %v6634 = vpop.permute.xlu0 %6633
  %6635 = vrot.lane.b32.xlu0 %v5181, 64
  %v6636 = vpop.permute.xlu0 %6635
  %6637 = vrot.lane.b32.xlu0 %v5184, 64
  %v6638 = vpop.permute.xlu0 %6637
  %6639 = vrot.lane.b32.xlu0 %v5186, 64
  %v6640 = vpop.permute.xlu0 %6639
  %6641 = vrot.lane.b32.xlu0 %v5189, 64
  %v6642 = vpop.permute.xlu0 %6641
  %6643 = vrot.lane.b32.xlu0 %v5191, 64
  %v6644 = vpop.permute.xlu0 %6643
  %6645 = vrot.lane.b32.xlu0 %v5194, 64
  %v6646 = vpop.permute.xlu0 %6645
  %6647 = vrot.lane.b32.xlu0 %v5196, 64
  %v6648 = vpop.permute.xlu0 %6647
  %6649 = vrot.lane.b32.xlu0 %v5199, 64
  %v6650 = vpop.permute.xlu0 %6649
  %6651 = vrot.lane.b32.xlu0 %v5201, 64
  %v6652 = vpop.permute.xlu0 %6651
  %6653 = vrot.lane.b32.xlu0 %v5293, 64
  %v6654 = vpop.permute.xlu0 %6653
  %6655 = vrot.lane.b32.xlu0 %v5295, 64
  %v6656 = vpop.permute.xlu0 %6655
  %6657 = vrot.lane.b32.xlu0 %v5204, 64
  %v6658 = vpop.permute.xlu0 %6657
  %6659 = vrot.lane.b32.xlu0 %v5206, 64
  %v6660 = vpop.permute.xlu0 %6659
  %6661 = vrot.lane.b32.xlu0 %v5214, 64
  %v6662 = vpop.permute.xlu0 %6661
  %6663 = vrot.lane.b32.xlu0 %v5216, 64
  %v6664 = vpop.permute.xlu0 %6663
  %6665 = vrot.lane.b32.xlu0 %v5219, 64
  %v6666 = vpop.permute.xlu0 %6665
  %6667 = vrot.lane.b32.xlu0 %v5221, 64
  %v6668 = vpop.permute.xlu0 %6667
  %6669 = vrot.lane.b32.xlu0 %v5224, 64
  %v6670 = vpop.permute.xlu0 %6669
  %6671 = vrot.lane.b32.xlu0 %v5226, 64
  %v6672 = vpop.permute.xlu0 %6671
  %6673 = vrot.lane.b32.xlu0 %v5229, 64
  %v6674 = vpop.permute.xlu0 %6673
  %6675 = vrot.lane.b32.xlu0 %v5231, 64
  %v6676 = vpop.permute.xlu0 %6675
  %6677 = vrot.lane.b32.xlu0 %v5234, 64
  %v6678 = vpop.permute.xlu0 %6677
  %6679 = vrot.lane.b32.xlu0 %v5236, 64
  %v6680 = vpop.permute.xlu0 %6679
  %6681 = vrot.lane.b32.xlu0 %v5239, 64
  %v6682 = vpop.permute.xlu0 %6681
  %6683 = vrot.lane.b32.xlu0 %v5241, 64
  %v6684 = vpop.permute.xlu0 %6683
  %6685 = vrot.lane.b32.xlu0 %v5244, 64
  %v6686 = vpop.permute.xlu0 %6685
  %6687 = vrot.lane.b32.xlu0 %v5246, 64
  %v6688 = vpop.permute.xlu0 %6687
  %6689 = vrot.lane.b32.xlu0 %v5249, 64
  %v6690 = vpop.permute.xlu0 %6689
  %6691 = vrot.lane.b32.xlu0 %v5251, 64
  %v6692 = vpop.permute.xlu0 %6691
  %6693 = vrot.lane.b32.xlu0 %v5254, 64
  %v6694 = vpop.permute.xlu0 %6693
  %6695 = vrot.lane.b32.xlu0 %v5256, 64
  %v6696 = vpop.permute.xlu0 %6695
  %6697 = vrot.lane.b32.xlu0 %v5259, 64
  %v6698 = vpop.permute.xlu0 %6697
  %6699 = vrot.lane.b32.xlu0 %v5261, 64
  %v6700 = vpop.permute.xlu0 %6699
  %6701 = vrot.lane.b32.xlu0 %v5264, 64
  %v6702 = vpop.permute.xlu0 %6701
  %6703 = vrot.lane.b32.xlu0 %v5266, 64
  %v6704 = vpop.permute.xlu0 %6703
  %6705 = vrot.lane.b32.xlu0 %v5269, 64
  %v6706 = vpop.permute.xlu0 %6705
  %6707 = vrot.lane.b32.xlu0 %v5271, 64
  %v6708 = vpop.permute.xlu0 %6707
  %6709 = vrot.lane.b32.xlu0 %v5274, 64
  %v6710 = vpop.permute.xlu0 %6709
  %6711 = vrot.lane.b32.xlu0 %v5276, 64
  %v6712 = vpop.permute.xlu0 %6711
  %6713 = vrot.lane.b32.xlu0 %v5298, 64
  %v6714 = vpop.permute.xlu0 %6713
  %6715 = vrot.lane.b32.xlu0 %v5300, 64
  %v6716 = vpop.permute.xlu0 %6715
  %v6777 = vsel %vm2899, %v4852, %v5302
  %v6778 = vsel %vm2899, %v4600, %v5304
  %v6779 = vsel %vm2899, %v4853, %v5306
  %v6780 = vsel %vm2899, %v4603, %v5308
  %v6781 = vsel %vm2899, %v4854, %v5310
  %v6782 = vsel %vm2899, %v4606, %v5312
  %v6783 = vsel %vm2899, %v4855, %v5314
  %v6784 = vsel %vm2899, %v4609, %v5316
  %v6785 = vsel %vm2899, %v4856, %v5318
  %v6786 = vsel %vm2899, %v4612, %v5320
  %v6787 = vsel %vm2899, %v4857, %v5322
  %v6788 = vsel %vm2899, %v4615, %v5324
  %v6789 = vsel %vm2899, %v4858, %v5326
  %v6790 = vsel %vm2899, %v4618, %v5328
  %v6791 = vsel %vm2899, %v4859, %v5330
  %v6792 = vsel %vm2899, %v4621, %v5332
  %v6793 = vsel %vm2899, %v4860, %v5334
  %v6794 = vsel %vm2899, %v4624, %v5336
  %v6795 = vsel %vm2899, %v4861, %v5338
  %v6796 = vsel %vm2899, %v4627, %v5340
  %v6797 = vsel %vm2899, %v4862, %v5342
  %v6798 = vsel %vm2899, %v4630, %v5344
  %v6799 = vsel %vm2899, %v4863, %v5346
  %v6800 = vsel %vm2899, %v4633, %v5348
  %v6801 = vsel %vm2899, %v4864, %v5350
  %v6802 = vsel %vm2899, %v4636, %v5352
  %v6803 = vsel %vm2899, %v4865, %v5354
  %v6804 = vsel %vm2899, %v4639, %v5356
  %v6805 = vsel %vm2899, %v4866, %v5358
  %v6806 = vsel %vm2899, %v4642, %v5360
  %v6807 = vsel %vm2899, %v4868, %v5362
  %v6808 = vsel %vm2899, %v4648, %v5364
  %v6809 = vsel %vm2899, %v4869, %v5366
  %v6810 = vsel %vm2899, %v4651, %v5368
  %v6811 = vsel %vm2899, %v4870, %v5370
  %v6812 = vsel %vm2899, %v4654, %v5372
  %v6813 = vsel %vm2899, %v4871, %v5374
  %v6814 = vsel %vm2899, %v4657, %v5376
  %v6815 = vsel %vm2899, %v4872, %v5378
  %v6816 = vsel %vm2899, %v4660, %v5380
  %v6817 = vsel %vm2899, %v4873, %v5382
  %v6818 = vsel %vm2899, %v4663, %v5384
  %v6819 = vsel %vm2899, %v4874, %v5386
  %v6820 = vsel %vm2899, %v4666, %v5388
  %v6821 = vsel %vm2899, %v4875, %v5390
  %v6822 = vsel %vm2899, %v4669, %v5392
  %v6823 = vsel %vm2899, %v4876, %v5394
  %v6824 = vsel %vm2899, %v4672, %v5396
  %v6825 = vsel %vm2899, %v4877, %v5398
  %v6826 = vsel %vm2899, %v4675, %v5400
  %v6827 = vsel %vm2899, %v4878, %v5402
  %v6828 = vsel %vm2899, %v4678, %v5404
  %v6829 = vsel %vm2899, %v4879, %v5406
  %v6830 = vsel %vm2899, %v4681, %v5408
  %v6831 = vsel %vm2899, %v4880, %v5410
  %v6832 = vsel %vm2899, %v4684, %v5412
  %v6833 = vsel %vm2899, %v4881, %v5414
  %v6834 = vsel %vm2899, %v4687, %v5416
  %v6835 = vsel %vm2899, %v4882, %v5418
  %v6836 = vsel %vm2899, %v4690, %v5420
  %v6837 = vsel %vm2956, %v6777, %v5482
  %v6838 = vsel %vm2956, %v6778, %v5484
  %v6839 = vsel %vm2956, %v6779, %v5486
  %v6840 = vsel %vm2956, %v6780, %v5488
  %v6841 = vsel %vm2956, %v6781, %v5490
  %v6842 = vsel %vm2956, %v6782, %v5492
  %v6843 = vsel %vm2956, %v6783, %v5494
  %v6844 = vsel %vm2956, %v6784, %v5496
  %v6845 = vsel %vm2956, %v6785, %v5498
  %v6846 = vsel %vm2956, %v6786, %v5500
  %v6847 = vsel %vm2956, %v6787, %v5502
  %v6848 = vsel %vm2956, %v6788, %v5504
  %v6849 = vsel %vm2956, %v6789, %v5506
  %v6850 = vsel %vm2956, %v6790, %v5508
  %v6851 = vsel %vm2956, %v6791, %v5510
  %v6852 = vsel %vm2956, %v6792, %v5512
  %v6853 = vsel %vm2956, %v6793, %v5514
  %v6854 = vsel %vm2956, %v6794, %v5516
  %v6855 = vsel %vm2956, %v6795, %v5518
  %v6856 = vsel %vm2956, %v6796, %v5520
  %v6857 = vsel %vm2956, %v6797, %v5522
  %v6858 = vsel %vm2956, %v6798, %v5524
  %v6859 = vsel %vm2956, %v6799, %v5526
  %v6860 = vsel %vm2956, %v6800, %v5528
  %v6861 = vsel %vm2956, %v6801, %v5530
  %v6862 = vsel %vm2956, %v6802, %v5532
  %v6863 = vsel %vm2956, %v6803, %v5534
  %v6864 = vsel %vm2956, %v6804, %v5536
  %v6865 = vsel %vm2956, %v6805, %v5538
  %v6866 = vsel %vm2956, %v6806, %v5540
  %v6867 = vsel %vm2956, %v6807, %v5542
  %v6868 = vsel %vm2956, %v6808, %v5544
  %v6869 = vsel %vm2956, %v6809, %v5546
  %v6870 = vsel %vm2956, %v6810, %v5548
  %v6871 = vsel %vm2956, %v6811, %v5550
  %v6872 = vsel %vm2956, %v6812, %v5552
  %v6873 = vsel %vm2956, %v6813, %v5554
  %v6874 = vsel %vm2956, %v6814, %v5556
  %v6875 = vsel %vm2956, %v6815, %v5558
  %v6876 = vsel %vm2956, %v6816, %v5560
  %v6877 = vsel %vm2956, %v6817, %v5562
  %v6878 = vsel %vm2956, %v6818, %v5564
  %v6879 = vsel %vm2956, %v6819, %v5566
  %v6880 = vsel %vm2956, %v6820, %v5568
  %v6881 = vsel %vm2956, %v6821, %v5570
  %v6882 = vsel %vm2956, %v6822, %v5572
  %v6883 = vsel %vm2956, %v6823, %v5574
  %v6884 = vsel %vm2956, %v6824, %v5576
  %v6885 = vsel %vm2956, %v6825, %v5578
  %v6886 = vsel %vm2956, %v6826, %v5580
  %v6887 = vsel %vm2956, %v6827, %v5582
  %v6888 = vsel %vm2956, %v6828, %v5584
  %v6889 = vsel %vm2956, %v6829, %v5586
  %v6890 = vsel %vm2956, %v6830, %v5588
  %v6891 = vsel %vm2956, %v6831, %v5590
  %v6892 = vsel %vm2956, %v6832, %v5592
  %v6893 = vsel %vm2956, %v6833, %v5594
  %v6894 = vsel %vm2956, %v6834, %v5596
  %v6895 = vsel %vm2956, %v6835, %v5598
  %v6896 = vsel %vm2956, %v6836, %v5600
  %v6897 = vsel %vm3013, %v6837, %v5662
  %v6898 = vsel %vm3013, %v6838, %v5664
  %v6899 = vsel %vm3013, %v6839, %v5666
  %v6900 = vsel %vm3013, %v6840, %v5668
  %v6901 = vsel %vm3013, %v6837, %v5670
  %v6902 = vsel %vm3013, %v6838, %v5672
  %v6903 = vsel %vm3013, %v6841, %v5674
  %v6904 = vsel %vm3013, %v6842, %v5676
  %v6905 = vsel %vm3013, %v6843, %v5678
  %v6906 = vsel %vm3013, %v6844, %v5680
  %v6907 = vsel %vm3013, %v6845, %v5682
  %v6908 = vsel %vm3013, %v6846, %v5684
  %v6909 = vsel %vm3013, %v6847, %v5686
  %v6910 = vsel %vm3013, %v6848, %v5688
  %v6911 = vsel %vm3013, %v6849, %v5690
  %v6912 = vsel %vm3013, %v6850, %v5692
  %v6913 = vsel %vm3013, %v6851, %v5694
  %v6914 = vsel %vm3013, %v6852, %v5696
  %v6915 = vsel %vm3013, %v6853, %v5698
  %v6916 = vsel %vm3013, %v6854, %v5700
  %v6917 = vsel %vm3013, %v6855, %v5702
  %v6918 = vsel %vm3013, %v6856, %v5704
  %v6919 = vsel %vm3013, %v6857, %v5706
  %v6920 = vsel %vm3013, %v6858, %v5708
  %v6921 = vsel %vm3013, %v6859, %v5710
  %v6922 = vsel %vm3013, %v6860, %v5712
  %v6923 = vsel %vm3013, %v6861, %v5714
  %v6924 = vsel %vm3013, %v6862, %v5716
  %v6925 = vsel %vm3013, %v6863, %v5718
  %v6926 = vsel %vm3013, %v6864, %v5720
  %v6927 = vsel %vm3013, %v6865, %v5722
  %v6928 = vsel %vm3013, %v6866, %v5724
  %v6929 = vsel %vm3013, %v6867, %v5726
  %v6930 = vsel %vm3013, %v6868, %v5728
  %v6931 = vsel %vm3013, %v6869, %v5730
  %v6932 = vsel %vm3013, %v6870, %v5732
  %v6933 = vsel %vm3013, %v6867, %v5734
  %v6934 = vsel %vm3013, %v6868, %v5736
  %v6935 = vsel %vm3013, %v6871, %v5738
  %v6936 = vsel %vm3013, %v6872, %v5740
  %v6937 = vsel %vm3013, %v6873, %v5742
  %v6938 = vsel %vm3013, %v6874, %v5744
  %v6939 = vsel %vm3013, %v6875, %v5746
  %v6940 = vsel %vm3013, %v6876, %v5748
  %v6941 = vsel %vm3013, %v6877, %v5750
  %v6942 = vsel %vm3013, %v6878, %v5752
  %v6943 = vsel %vm3013, %v6879, %v5754
  %v6944 = vsel %vm3013, %v6880, %v5756
  %v6945 = vsel %vm3013, %v6881, %v5758
  %v6946 = vsel %vm3013, %v6882, %v5760
  %v6947 = vsel %vm3013, %v6883, %v5762
  %v6948 = vsel %vm3013, %v6884, %v5764
  %v6949 = vsel %vm3013, %v6885, %v5766
  %v6950 = vsel %vm3013, %v6886, %v5768
  %v6951 = vsel %vm3013, %v6887, %v5770
  %v6952 = vsel %vm3013, %v6888, %v5772
  %v6953 = vsel %vm3013, %v6889, %v5774
  %v6954 = vsel %vm3013, %v6890, %v5776
  %v6955 = vsel %vm3013, %v6891, %v5778
  %v6956 = vsel %vm3013, %v6892, %v5780
  %v6957 = vsel %vm3013, %v6893, %v5782
  %v6958 = vsel %vm3013, %v6894, %v5784
  %v6959 = vsel %vm3013, %v6895, %v5786
  %v6960 = vsel %vm3013, %v6896, %v5788
  %v6961 = vsel %vm3078, %v6897, %v5854
  %v6962 = vsel %vm3078, %v6898, %v5856
  %v6963 = vsel %vm3078, %v6899, %v5858
  %v6964 = vsel %vm3078, %v6900, %v5860
  %v6965 = vsel %vm3078, %v6901, %v5862
  %v6966 = vsel %vm3078, %v6902, %v5864
  %v6967 = vsel %vm3078, %v6903, %v5866
  %v6968 = vsel %vm3078, %v6904, %v5868
  %v6969 = vsel %vm3078, %v6905, %v5870
  %v6970 = vsel %vm3078, %v6906, %v5872
  %v6971 = vsel %vm3078, %v6907, %v5874
  %v6972 = vsel %vm3078, %v6908, %v5876
  %v6973 = vsel %vm3078, %v6909, %v5878
  %v6974 = vsel %vm3078, %v6910, %v5880
  %v6975 = vsel %vm3078, %v6911, %v5882
  %v6976 = vsel %vm3078, %v6912, %v5884
  %v6977 = vsel %vm3078, %v6913, %v5886
  %v6978 = vsel %vm3078, %v6914, %v5888
  %v6979 = vsel %vm3078, %v6915, %v5890
  %v6980 = vsel %vm3078, %v6916, %v5892
  %v6981 = vsel %vm3078, %v6917, %v5894
  %v6982 = vsel %vm3078, %v6918, %v5896
  %v6983 = vsel %vm3078, %v6919, %v5898
  %v6984 = vsel %vm3078, %v6920, %v5900
  %v6985 = vsel %vm3078, %v6921, %v5902
  %v6986 = vsel %vm3078, %v6922, %v5904
  %v6987 = vsel %vm3078, %v6923, %v5906
  %v6988 = vsel %vm3078, %v6924, %v5908
  %v6989 = vsel %vm3078, %v6925, %v5910
  %v6990 = vsel %vm3078, %v6926, %v5912
  %v6991 = vsel %vm3078, %v6927, %v5914
  %v6992 = vsel %vm3078, %v6928, %v5916
  %v6993 = vsel %vm3078, %v6929, %v5918
  %v6994 = vsel %vm3078, %v6930, %v5920
  %v6995 = vsel %vm3078, %v6931, %v5922
  %v6996 = vsel %vm3078, %v6932, %v5924
  %v6997 = vsel %vm3078, %v6933, %v5926
  %v6998 = vsel %vm3078, %v6934, %v5928
  %v6999 = vsel %vm3078, %v6935, %v5930
  %v7000 = vsel %vm3078, %v6936, %v5932
  %v7001 = vsel %vm3078, %v6937, %v5934
  %v7002 = vsel %vm3078, %v6938, %v5936
  %v7003 = vsel %vm3078, %v6939, %v5938
  %v7004 = vsel %vm3078, %v6940, %v5940
  %v7005 = vsel %vm3078, %v6941, %v5942
  %v7006 = vsel %vm3078, %v6942, %v5944
  %v7007 = vsel %vm3078, %v6943, %v5946
  %v7008 = vsel %vm3078, %v6944, %v5948
  %v7009 = vsel %vm3078, %v6945, %v5950
  %v7010 = vsel %vm3078, %v6946, %v5952
  %v7011 = vsel %vm3078, %v6947, %v5954
  %v7012 = vsel %vm3078, %v6948, %v5956
  %v7013 = vsel %vm3078, %v6949, %v5958
  %v7014 = vsel %vm3078, %v6950, %v5960
  %v7015 = vsel %vm3078, %v6951, %v5962
  %v7016 = vsel %vm3078, %v6952, %v5964
  %v7017 = vsel %vm3078, %v6953, %v5966
  %v7018 = vsel %vm3078, %v6954, %v5968
  %v7019 = vsel %vm3078, %v6955, %v5970
  %v7020 = vsel %vm3078, %v6956, %v5972
  %v7021 = vsel %vm3078, %v6957, %v5974
  %v7022 = vsel %vm3078, %v6958, %v5976
  %v7023 = vsel %vm3078, %v6959, %v5978
  %v7024 = vsel %vm3078, %v6960, %v5980
  %v7025 = vsel %vm3143, %v6961, %v6046
  %v7026 = vsel %vm3143, %v6962, %v6048
  %v7027 = vsel %vm3143, %v6963, %v6050
  %v7028 = vsel %vm3143, %v6964, %v6052
  %v7029 = vsel %vm3143, %v6965, %v6054
  %v7030 = vsel %vm3143, %v6966, %v6056
  %v7031 = vsel %vm3143, %v6967, %v6058
  %v7032 = vsel %vm3143, %v6968, %v6060
  %v7033 = vsel %vm3143, %v6969, %v6062
  %v7034 = vsel %vm3143, %v6970, %v6064
  %v7035 = vsel %vm3143, %v6971, %v6066
  %v7036 = vsel %vm3143, %v6972, %v6068
  %v7037 = vsel %vm3143, %v6973, %v6070
  %v7038 = vsel %vm3143, %v6974, %v6072
  %v7039 = vsel %vm3143, %v6975, %v6074
  %v7040 = vsel %vm3143, %v6976, %v6076
  %v7041 = vsel %vm3143, %v6977, %v6078
  %v7042 = vsel %vm3143, %v6978, %v6080
  %v7043 = vsel %vm3143, %v6979, %v6082
  %v7044 = vsel %vm3143, %v6980, %v6084
  %v7045 = vsel %vm3143, %v6981, %v6086
  %v7046 = vsel %vm3143, %v6982, %v6088
  %v7047 = vsel %vm3143, %v6983, %v6090
  %v7048 = vsel %vm3143, %v6984, %v6092
  %v7049 = vsel %vm3143, %v6985, %v6094
  %v7050 = vsel %vm3143, %v6986, %v6096
  %v7051 = vsel %vm3143, %v6987, %v6098
  %v7052 = vsel %vm3143, %v6988, %v6100
  %v7053 = vsel %vm3143, %v6989, %v6102
  %v7054 = vsel %vm3143, %v6990, %v6104
  %v7055 = vsel %vm3143, %v6991, %v6106
  %v7056 = vsel %vm3143, %v6992, %v6108
  %v7057 = vsel %vm3143, %v6993, %v6110
  %v7058 = vsel %vm3143, %v6994, %v6112
  %v7059 = vsel %vm3143, %v6995, %v6114
  %v7060 = vsel %vm3143, %v6996, %v6116
  %v7061 = vsel %vm3143, %v6997, %v6118
  %v7062 = vsel %vm3143, %v6998, %v6120
  %v7063 = vsel %vm3143, %v6999, %v6122
  %v7064 = vsel %vm3143, %v7000, %v6124
  %v7065 = vsel %vm3143, %v7001, %v6126
  %v7066 = vsel %vm3143, %v7002, %v6128
  %v7067 = vsel %vm3143, %v7003, %v6130
  %v7068 = vsel %vm3143, %v7004, %v6132
  %v7069 = vsel %vm3143, %v7005, %v6134
  %v7070 = vsel %vm3143, %v7006, %v6136
  %v7071 = vsel %vm3143, %v7007, %v6138
  %v7072 = vsel %vm3143, %v7008, %v6140
  %v7073 = vsel %vm3143, %v7009, %v6142
  %v7074 = vsel %vm3143, %v7010, %v6144
  %v7075 = vsel %vm3143, %v7011, %v6146
  %v7076 = vsel %vm3143, %v7012, %v6148
  %v7077 = vsel %vm3143, %v7013, %v6150
  %v7078 = vsel %vm3143, %v7014, %v6152
  %v7079 = vsel %vm3143, %v7015, %v6154
  %v7080 = vsel %vm3143, %v7016, %v6156
  %v7081 = vsel %vm3143, %v7017, %v6158
  %v7082 = vsel %vm3143, %v7018, %v6160
  %v7083 = vsel %vm3143, %v7019, %v6162
  %v7084 = vsel %vm3143, %v7020, %v6164
  %v7085 = vsel %vm3143, %v7021, %v6166
  %v7086 = vsel %vm3143, %v7022, %v6168
  %v7087 = vsel %vm3143, %v7023, %v6170
  %v7088 = vsel %vm3143, %v7024, %v6172
  %v7089 = vsel %vm3208, %v7025, %v6238
  %v7090 = vsel %vm3208, %v7026, %v6240
  %v7091 = vsel %vm3208, %v7027, %v6242
  %v7092 = vsel %vm3208, %v7028, %v6244
  %v7093 = vsel %vm3208, %v7029, %v6246
  %v7094 = vsel %vm3208, %v7030, %v6248
  %v7095 = vsel %vm3208, %v7031, %v6250
  %v7096 = vsel %vm3208, %v7032, %v6252
  %v7097 = vsel %vm3208, %v7033, %v6254
  %v7098 = vsel %vm3208, %v7034, %v6256
  %v7099 = vsel %vm3208, %v7035, %v6258
  %v7100 = vsel %vm3208, %v7036, %v6260
  %v7101 = vsel %vm3208, %v7037, %v6262
  %v7102 = vsel %vm3208, %v7038, %v6264
  %v7103 = vsel %vm3208, %v7039, %v6266
  %v7104 = vsel %vm3208, %v7040, %v6268
  %v7105 = vsel %vm3208, %v7041, %v6270
  %v7106 = vsel %vm3208, %v7042, %v6272
  %v7107 = vsel %vm3208, %v7043, %v6274
  %v7108 = vsel %vm3208, %v7044, %v6276
  %v7109 = vsel %vm3208, %v7045, %v6278
  %v7110 = vsel %vm3208, %v7046, %v6280
  %v7111 = vsel %vm3208, %v7047, %v6282
  %v7112 = vsel %vm3208, %v7048, %v6284
  %v7113 = vsel %vm3208, %v7049, %v6286
  %v7114 = vsel %vm3208, %v7050, %v6288
  %v7115 = vsel %vm3208, %v7051, %v6290
  %v7116 = vsel %vm3208, %v7052, %v6292
  %v7117 = vsel %vm3208, %v7053, %v6294
  %v7118 = vsel %vm3208, %v7054, %v6296
  %v7119 = vsel %vm3208, %v7055, %v6290
  %v7120 = vsel %vm3208, %v7056, %v6292
  %v7121 = vsel %vm3208, %v7057, %v6298
  %v7122 = vsel %vm3208, %v7058, %v6300
  %v7123 = vsel %vm3208, %v7059, %v6302
  %v7124 = vsel %vm3208, %v7060, %v6304
  %v7125 = vsel %vm3208, %v7061, %v6306
  %v7126 = vsel %vm3208, %v7062, %v6308
  %v7127 = vsel %vm3208, %v7063, %v6310
  %v7128 = vsel %vm3208, %v7064, %v6312
  %v7129 = vsel %vm3208, %v7065, %v6314
  %v7130 = vsel %vm3208, %v7066, %v6316
  %v7131 = vsel %vm3208, %v7067, %v6318
  %v7132 = vsel %vm3208, %v7068, %v6320
  %v7133 = vsel %vm3208, %v7069, %v6322
  %v7134 = vsel %vm3208, %v7070, %v6324
  %v7135 = vsel %vm3208, %v7071, %v6326
  %v7136 = vsel %vm3208, %v7072, %v6328
  %v7137 = vsel %vm3208, %v7073, %v6330
  %v7138 = vsel %vm3208, %v7074, %v6332
  %v7139 = vsel %vm3208, %v7075, %v6334
  %v7140 = vsel %vm3208, %v7076, %v6336
  %v7141 = vsel %vm3208, %v7077, %v6338
  %v7142 = vsel %vm3208, %v7078, %v6340
  %v7143 = vsel %vm3208, %v7079, %v6342
  %v7144 = vsel %vm3208, %v7080, %v6344
  %v7145 = vsel %vm3208, %v7081, %v6346
  %v7146 = vsel %vm3208, %v7082, %v6348
  %v7147 = vsel %vm3208, %v7083, %v6350
  %v7148 = vsel %vm3208, %v7084, %v6352
  %v7149 = vsel %vm3208, %v7085, %v6354
  %v7150 = vsel %vm3208, %v7086, %v6356
  %v7151 = vsel %vm3208, %v7087, %v6350
  %v7152 = vsel %vm3208, %v7088, %v6352
  %v7153 = vsel %vm3273, %v7089, %v6418
  %v7154 = vsel %vm3273, %v7090, %v6420
  %v7155 = vsel %vm3273, %v7091, %v6422
  %v7156 = vsel %vm3273, %v7092, %v6424
  %v7157 = vsel %vm3273, %v7093, %v6426
  %v7158 = vsel %vm3273, %v7094, %v6428
  %v7159 = vsel %vm3273, %v7095, %v6430
  %v7160 = vsel %vm3273, %v7096, %v6432
  %v7161 = vsel %vm3273, %v7097, %v6434
  %v7162 = vsel %vm3273, %v7098, %v6436
  %v7163 = vsel %vm3273, %v7099, %v6438
  %v7164 = vsel %vm3273, %v7100, %v6440
  %v7165 = vsel %vm3273, %v7101, %v6442
  %v7166 = vsel %vm3273, %v7102, %v6444
  %v7167 = vsel %vm3273, %v7103, %v6446
  %v7168 = vsel %vm3273, %v7104, %v6448
  %v7169 = vsel %vm3273, %v7105, %v6450
  %v7170 = vsel %vm3273, %v7106, %v6452
  %v7171 = vsel %vm3273, %v7107, %v6454
  %v7172 = vsel %vm3273, %v7108, %v6456
  %v7173 = vsel %vm3273, %v7109, %v6458
  %v7174 = vsel %vm3273, %v7110, %v6460
  %v7175 = vsel %vm3273, %v7111, %v6462
  %v7176 = vsel %vm3273, %v7112, %v6464
  %v7177 = vsel %vm3273, %v7113, %v6466
  %v7178 = vsel %vm3273, %v7114, %v6468
  %v7179 = vsel %vm3273, %v7115, %v6470
  %v7180 = vsel %vm3273, %v7116, %v6472
  %v7181 = vsel %vm3273, %v7117, %v6474
  %v7182 = vsel %vm3273, %v7118, %v6476
  %v7183 = vsel %vm3273, %v7119, %v6470
  %v7184 = vsel %vm3273, %v7120, %v6472
  %v7185 = vsel %vm3273, %v7121, %v6478
  %v7186 = vsel %vm3273, %v7122, %v6480
  %v7187 = vsel %vm3273, %v7123, %v6482
  %v7188 = vsel %vm3273, %v7124, %v6484
  %v7189 = vsel %vm3273, %v7125, %v6486
  %v7190 = vsel %vm3273, %v7126, %v6488
  %v7191 = vsel %vm3273, %v7127, %v6490
  %v7192 = vsel %vm3273, %v7128, %v6492
  %v7193 = vsel %vm3273, %v7129, %v6494
  %v7194 = vsel %vm3273, %v7130, %v6496
  %v7195 = vsel %vm3273, %v7131, %v6498
  %v7196 = vsel %vm3273, %v7132, %v6500
  %v7197 = vsel %vm3273, %v7133, %v6502
  %v7198 = vsel %vm3273, %v7134, %v6504
  %v7199 = vsel %vm3273, %v7135, %v6506
  %v7200 = vsel %vm3273, %v7136, %v6508
  %v7201 = vsel %vm3273, %v7137, %v6510
  %v7202 = vsel %vm3273, %v7138, %v6512
  %v7203 = vsel %vm3273, %v7139, %v6514
  %v7204 = vsel %vm3273, %v7140, %v6516
  %v7205 = vsel %vm3273, %v7141, %v6518
  %v7206 = vsel %vm3273, %v7142, %v6520
  %v7207 = vsel %vm3273, %v7143, %v6522
  %v7208 = vsel %vm3273, %v7144, %v6524
  %v7209 = vsel %vm3273, %v7145, %v6526
  %v7210 = vsel %vm3273, %v7146, %v6528
  %v7211 = vsel %vm3273, %v7147, %v6530
  %v7212 = vsel %vm3273, %v7148, %v6532
  %v7213 = vsel %vm3273, %v7149, %v6534
  %v7214 = vsel %vm3273, %v7150, %v6536
  %v7215 = vsel %vm3273, %v7151, %v6530
  %v7216 = vsel %vm3273, %v7152, %v6532
  %v7217 = vsel %vm3338, %v7153, %v6598
  %v7218 = vsel %vm3338, %v7154, %v6600
  %v7219 = vsel %vm3338, %v7155, %v6602
  %v7220 = vsel %vm3338, %v7156, %v6604
  %v7221 = vsel %vm3338, %v7157, %v6606
  %v7222 = vsel %vm3338, %v7158, %v6608
  %v7223 = vsel %vm3338, %v7159, %v6610
  %v7224 = vsel %vm3338, %v7160, %v6612
  %v7225 = vsel %vm3338, %v7161, %v6614
  %v7226 = vsel %vm3338, %v7162, %v6616
  %v7227 = vsel %vm3338, %v7163, %v6618
  %v7228 = vsel %vm3338, %v7164, %v6620
  %v7229 = vsel %vm3338, %v7165, %v6622
  %v7230 = vsel %vm3338, %v7166, %v6624
  %v7231 = vsel %vm3338, %v7167, %v6626
  %v7232 = vsel %vm3338, %v7168, %v6628
  %v7233 = vsel %vm3338, %v7169, %v6630
  %v7234 = vsel %vm3338, %v7170, %v6632
  %v7235 = vsel %vm3338, %v7171, %v6634
  %v7236 = vsel %vm3338, %v7172, %v6636
  %v7237 = vsel %vm3338, %v7173, %v6638
  %v7238 = vsel %vm3338, %v7174, %v6640
  %v7239 = vsel %vm3338, %v7175, %v6642
  %v7240 = vsel %vm3338, %v7176, %v6644
  %v7241 = vsel %vm3338, %v7177, %v6646
  %v7242 = vsel %vm3338, %v7178, %v6648
  %v7243 = vsel %vm3338, %v7179, %v6650
  %v7244 = vsel %vm3338, %v7180, %v6652
  %v7245 = vsel %vm3338, %v7181, %v6654
  %v7246 = vsel %vm3338, %v7182, %v6656
  %v7247 = vsel %vm3338, %v7183, %v6650
  %v7248 = vsel %vm3338, %v7184, %v6652
  %v7249 = vsel %vm3338, %v7185, %v6658
  %v7250 = vsel %vm3338, %v7186, %v6660
  %v7251 = vsel %vm3338, %v7187, %v6662
  %v7252 = vsel %vm3338, %v7188, %v6664
  %v7253 = vsel %vm3338, %v7189, %v6666
  %v7254 = vsel %vm3338, %v7190, %v6668
  %v7255 = vsel %vm3338, %v7191, %v6670
  %v7256 = vsel %vm3338, %v7192, %v6672
  %v7257 = vsel %vm3338, %v7193, %v6674
  %v7258 = vsel %vm3338, %v7194, %v6676
  %v7259 = vsel %vm3338, %v7195, %v6678
  %v7260 = vsel %vm3338, %v7196, %v6680
  %v7261 = vsel %vm3338, %v7197, %v6682
  %v7262 = vsel %vm3338, %v7198, %v6684
  %v7263 = vsel %vm3338, %v7199, %v6686
  %v7264 = vsel %vm3338, %v7200, %v6688
  %v7265 = vsel %vm3338, %v7201, %v6690
  %v7266 = vsel %vm3338, %v7202, %v6692
  %v7267 = vsel %vm3338, %v7203, %v6694
  %v7268 = vsel %vm3338, %v7204, %v6696
  %v7269 = vsel %vm3338, %v7205, %v6698
  %v7270 = vsel %vm3338, %v7206, %v6700
  %v7271 = vsel %vm3338, %v7207, %v6702
  %v7272 = vsel %vm3338, %v7208, %v6704
  %v7273 = vsel %vm3338, %v7209, %v6706
  %v7274 = vsel %vm3338, %v7210, %v6708
  %v7275 = vsel %vm3338, %v7211, %v6710
  %v7276 = vsel %vm3338, %v7212, %v6712
  %v7277 = vsel %vm3338, %v7213, %v6714
  %v7278 = vsel %vm3338, %v7214, %v6716
  %v7279 = vsel %vm3338, %v7215, %v6710
  %v7280 = vsel %vm3338, %v7216, %v6712
  %v7281 = vpack.c.bf16 %v7218, %v7217
  %v7282 = vpack.c.bf16 %v7220, %v7219
  %v7283 = vpack.c.bf16 %v7222, %v7221
  %v7284 = vpack.c.bf16 %v7224, %v7223
  %v7285 = vpack.c.bf16 %v7226, %v7225
  %v7286 = vpack.c.bf16 %v7228, %v7227
  %v7287 = vpack.c.bf16 %v7230, %v7229
  %v7288 = vpack.c.bf16 %v7232, %v7231
  %v7289 = vpack.c.bf16 %v7234, %v7233
  %v7290 = vpack.c.bf16 %v7236, %v7235
  %v7291 = vpack.c.bf16 %v7238, %v7237
  %v7292 = vpack.c.bf16 %v7240, %v7239
  %v7293 = vpack.c.bf16 %v7242, %v7241
  %v7294 = vpack.c.bf16 %v7244, %v7243
  %v7295 = vpack.c.bf16 %v7246, %v7245
  %v7296 = vpack.c.bf16 %v7248, %v7247
  %v7297 = vpack.c.bf16 %v7250, %v7249
  %v7298 = vpack.c.bf16 %v7252, %v7251
  %v7299 = vpack.c.bf16 %v7254, %v7253
  %v7300 = vpack.c.bf16 %v7256, %v7255
  %v7301 = vpack.c.bf16 %v7258, %v7257
  %v7302 = vpack.c.bf16 %v7260, %v7259
  %v7303 = vpack.c.bf16 %v7262, %v7261
  %v7304 = vpack.c.bf16 %v7264, %v7263
  %v7305 = vpack.c.bf16 %v7266, %v7265
  %v7306 = vpack.c.bf16 %v7268, %v7267
  %v7307 = vpack.c.bf16 %v7270, %v7269
  %v7308 = vpack.c.bf16 %v7272, %v7271
  %v7309 = vpack.c.bf16 %v7274, %v7273
  %v7310 = vpack.c.bf16 %v7276, %v7275
  %v7311 = vpack.c.bf16 %v7278, %v7277
  %v7312 = vpack.c.bf16 %v7280, %v7279
  %v7313 = vld [vmem:[%s6] sm:$0xf]
  %v7314 = vld [vmem:[%s6 + $0x4] sm:$0xf]
  %v7315 = vld [vmem:[%s6 + $0x8] sm:$0xf]
  %v7316 = vld [vmem:[%s6 + $0xc] sm:$0xf]
  %v7317 = vld [vmem:[%s6 + $0x10] sm:$0xf]
  %v7318 = vld [vmem:[%s6 + $0x14] sm:$0xf]
  %v7319 = vld [vmem:[%s6 + $0x18] sm:$0xf]
  %v7320 = vld [vmem:[%s6 + $0x1c] sm:$0xf]
  %v7321 = vld [vmem:[%s6 + $0x20] sm:$0xf]
  %v7322 = vld [vmem:[%s7] sm:$0x1]
  %v7324 = vlaneseq
  %v7325 = vshrl.u32 %v7324, 7
  %v7326 = vsub.s32 0, %v7325
  %v7327 = vrot.slane %v7322, %v7326
  %v7338 = vunpack.c.l.b16 %v7313
  %v7339 = vunpack.c.l.b16 %v7314
  %v7340 = vunpack.c.l.b16 %v7315
  %v7341 = vunpack.c.l.b16 %v7316
  %v7342 = vunpack.c.l.b16 %v7317
  %v7343 = vunpack.c.l.b16 %v7318
  %v7344 = vunpack.c.l.b16 %v7319
  %v7345 = vunpack.c.l.b16 %v7320
  %v7346 = vunpack.c.l.b16 %v7321
  %v7347 = vpack.c.b16 %v7339, %v7338
  %v7348 = vpack.c.b16 %v7341, %v7340
  %v7349 = vpack.c.b16 %v7343, %v7342
  %v7350 = vpack.c.b16 %v7345, %v7344
  %v7351 = vpack.c.b16 %v7346, %v7346
  %v7357 = vsel %vm3478, %v7281, 0
  %v7360 = vsel %vm3478, %v7282, 0
  %v7363 = vsel %vm3478, %v7283, 0
  %v7366 = vsel %vm3478, %v7284, 0
  %v7369 = vsel %vm3478, %v7285, 0
  %v7372 = vsel %vm3478, %v7286, 0
  %v7375 = vsel %vm3478, %v7287, 0
  %v7378 = vsel %vm3478, %v7288, 0
  %v7381 = vsel %vm3478, %v7289, 0
  %v7384 = vsel %vm3478, %v7290, 0
  %v7387 = vsel %vm3478, %v7291, 0
  %v7390 = vsel %vm3478, %v7292, 0
  %v7393 = vsel %vm3478, %v7293, 0
  %v7396 = vsel %vm3478, %v7294, 0
  %v7399 = vsel %vm3478, %v7295, 0
  %v7402 = vsel %vm3478, %v7296, 0
  %v7405 = vsel %vm3478, %v7297, 0
  %v7408 = vsel %vm3478, %v7298, 0
  %v7411 = vsel %vm3478, %v7299, 0
  %v7414 = vsel %vm3478, %v7300, 0
  %v7417 = vsel %vm3478, %v7301, 0
  %v7420 = vsel %vm3478, %v7302, 0
  %v7423 = vsel %vm3478, %v7303, 0
  %v7426 = vsel %vm3478, %v7304, 0
  %v7429 = vsel %vm3478, %v7305, 0
  %v7432 = vsel %vm3478, %v7306, 0
  %v7435 = vsel %vm3478, %v7307, 0
  %v7438 = vsel %vm3478, %v7308, 0
  %v7441 = vsel %vm3478, %v7309, 0
  %v7444 = vsel %vm3478, %v7310, 0
  %v7447 = vsel %vm3478, %v7311, 0
  %v7450 = vsel %vm3478, %v7312, 0
  %v7453 = vsel %vm1294, %v7351, 0
  %7455 = vmatprep.subr.bf16.mxu0 0
  %7456 = vmatpush1.bf16.msra.mxu0 0
  %7457 = vmatprep.subr.bf16.mxu0 0
  %7458 = vmatpush1.bf16.msra.mxu0 0
  %7459 = vmatprep.subr.bf16.mxu0 0
  %7460 = vmatpush1.bf16.msra.mxu0 0
  %7461 = vmatprep.subr.bf16.mxu0 0
  %7462 = vmatpush1.bf16.msra.mxu0 %v7453
  %7463 = vmatprep.subr.bf16.mxu0 0
  %7464 = vmatpush1.bf16.msra.mxu0 %v7350
  %7465 = vmatprep.subr.bf16.mxu0 0
  %7466 = vmatpush1.bf16.msra.mxu0 %v7349
  %7467 = vmatprep.subr.bf16.mxu0 0
  %7468 = vmatpush1.bf16.msra.mxu0 %v7348
  %7469 = vmatprep.subr.bf16.mxu0 0
  %7470 = vmatpush1.bf16.msra.mxu0 %v7347
  %7471 = vmatprep.subr.bf16.mxu0 0
  %7472 = vmatpush2.bf16.msra.mxu0 0
  %7473 = vmatprep.subr.bf16.mxu0 0
  %7474 = vmatpush2.bf16.msra.mxu0 0
  %7475 = vmatprep.subr.bf16.mxu0 0
  %7476 = vmatpush2.bf16.msra.mxu0 0
  %7477 = vmatprep.subr.bf16.mxu0 0
  %7478 = vmatpush2.bf16.msra.mxu0 0
  %7479 = vmatprep.subr.bf16.mxu0 0
  %7480 = vmatpush2.bf16.msra.mxu0 0
  %7481 = vmatprep.subr.bf16.mxu0 0
  %7482 = vmatpush2.bf16.msra.mxu0 0
  %7483 = vmatprep.subr.bf16.mxu0 0
  %7484 = vmatpush2.bf16.msra.mxu0 0
  %7485 = vmatprep.subr.bf16.mxu0 0
  %7486 = vmatpush2.bf16.msra.mxu0 0
  %7487 = vmatprep.mubr.bf16.mxu0 0
  %7488 = vmatmul.mubr.bf16.gmra.mxu0 %v7357
  %v7489 = vpop.f32.mrf.mxu0
  %v7490 = vadd.f32 %v7327, %v7489
  %v7491 = vpop.f32.mrf.mxu0
  %v7492 = vpop.f32.mrf.mxu0
  %v7493 = vadd.f32 %v7327, %v7492
  %v7494 = vpop.f32.mrf.mxu0
  %7495 = vmatprep.mubr.bf16.mxu0 0
  %7496 = vmatmul.mubr.bf16.gmra.mxu0 %v7360
  %v7497 = vpop.f32.mrf.mxu0
  %v7498 = vadd.f32 %v7327, %v7497
  %v7499 = vpop.f32.mrf.mxu0
  %v7500 = vpop.f32.mrf.mxu0
  %v7501 = vadd.f32 %v7327, %v7500
  %v7502 = vpop.f32.mrf.mxu0
  %7503 = vmatprep.mubr.bf16.mxu0 0
  %7504 = vmatmul.mubr.bf16.gmra.mxu0 %v7363
  %v7505 = vpop.f32.mrf.mxu0
  %v7506 = vadd.f32 %v7327, %v7505
  %v7507 = vpop.f32.mrf.mxu0
  %v7508 = vpop.f32.mrf.mxu0
  %v7509 = vadd.f32 %v7327, %v7508
  %v7510 = vpop.f32.mrf.mxu0
  %7511 = vmatprep.mubr.bf16.mxu0 0
  %7512 = vmatmul.mubr.bf16.gmra.mxu0 %v7366
  %v7513 = vpop.f32.mrf.mxu0
  %v7514 = vadd.f32 %v7327, %v7513
  %v7515 = vpop.f32.mrf.mxu0
  %v7516 = vpop.f32.mrf.mxu0
  %v7517 = vadd.f32 %v7327, %v7516
  %v7518 = vpop.f32.mrf.mxu0
  %7519 = vmatprep.mubr.bf16.mxu0 0
  %7520 = vmatmul.mubr.bf16.gmra.mxu0 %v7369
  %v7521 = vpop.f32.mrf.mxu0
  %v7522 = vadd.f32 %v7327, %v7521
  %v7523 = vpop.f32.mrf.mxu0
  %v7524 = vpop.f32.mrf.mxu0
  %v7525 = vadd.f32 %v7327, %v7524
  %v7526 = vpop.f32.mrf.mxu0
  %7527 = vmatprep.mubr.bf16.mxu0 0
  %7528 = vmatmul.mubr.bf16.gmra.mxu0 %v7372
  %v7529 = vpop.f32.mrf.mxu0
  %v7530 = vadd.f32 %v7327, %v7529
  %v7531 = vpop.f32.mrf.mxu0
  %v7532 = vpop.f32.mrf.mxu0
  %v7533 = vadd.f32 %v7327, %v7532
  %v7534 = vpop.f32.mrf.mxu0
  %7535 = vmatprep.mubr.bf16.mxu0 0
  %7536 = vmatmul.mubr.bf16.gmra.mxu0 %v7375
  %v7537 = vpop.f32.mrf.mxu0
  %v7538 = vadd.f32 %v7327, %v7537
  %v7539 = vpop.f32.mrf.mxu0
  %v7540 = vpop.f32.mrf.mxu0
  %v7541 = vadd.f32 %v7327, %v7540
  %v7542 = vpop.f32.mrf.mxu0
  %7543 = vmatprep.mubr.bf16.mxu0 0
  %7544 = vmatmul.mubr.bf16.gmra.mxu0 %v7378
  %v7545 = vpop.f32.mrf.mxu0
  %v7546 = vadd.f32 %v7327, %v7545
  %v7547 = vpop.f32.mrf.mxu0
  %v7548 = vpop.f32.mrf.mxu0
  %v7549 = vadd.f32 %v7327, %v7548
  %v7550 = vpop.f32.mrf.mxu0
  %7551 = vmatprep.mubr.bf16.mxu0 0
  %7552 = vmatmul.mubr.bf16.gmra.mxu0 %v7381
  %v7553 = vpop.f32.mrf.mxu0
  %v7554 = vadd.f32 %v7327, %v7553
  %v7555 = vpop.f32.mrf.mxu0
  %v7556 = vpop.f32.mrf.mxu0
  %v7557 = vadd.f32 %v7327, %v7556
  %v7558 = vpop.f32.mrf.mxu0
  %7559 = vmatprep.mubr.bf16.mxu0 0
  %7560 = vmatmul.mubr.bf16.gmra.mxu0 %v7384
  %v7561 = vpop.f32.mrf.mxu0
  %v7562 = vadd.f32 %v7327, %v7561
  %v7563 = vpop.f32.mrf.mxu0
  %v7564 = vpop.f32.mrf.mxu0
  %v7565 = vadd.f32 %v7327, %v7564
  %v7566 = vpop.f32.mrf.mxu0
  %7567 = vmatprep.mubr.bf16.mxu0 0
  %7568 = vmatmul.mubr.bf16.gmra.mxu0 %v7387
  %v7569 = vpop.f32.mrf.mxu0
  %v7570 = vadd.f32 %v7327, %v7569
  %v7571 = vpop.f32.mrf.mxu0
  %v7572 = vpop.f32.mrf.mxu0
  %v7573 = vadd.f32 %v7327, %v7572
  %v7574 = vpop.f32.mrf.mxu0
  %7575 = vmatprep.mubr.bf16.mxu0 0
  %7576 = vmatmul.mubr.bf16.gmra.mxu0 %v7390
  %v7577 = vpop.f32.mrf.mxu0
  %v7578 = vadd.f32 %v7327, %v7577
  %v7579 = vpop.f32.mrf.mxu0
  %v7580 = vpop.f32.mrf.mxu0
  %v7581 = vadd.f32 %v7327, %v7580
  %v7582 = vpop.f32.mrf.mxu0
  %7583 = vmatprep.mubr.bf16.mxu0 0
  %7584 = vmatmul.mubr.bf16.gmra.mxu0 %v7393
  %v7585 = vpop.f32.mrf.mxu0
  %v7586 = vadd.f32 %v7327, %v7585
  %v7587 = vpop.f32.mrf.mxu0
  %v7588 = vpop.f32.mrf.mxu0
  %v7589 = vadd.f32 %v7327, %v7588
  %v7590 = vpop.f32.mrf.mxu0
  %7591 = vmatprep.mubr.bf16.mxu0 0
  %7592 = vmatmul.mubr.bf16.gmra.mxu0 %v7396
  %v7593 = vpop.f32.mrf.mxu0
  %v7594 = vadd.f32 %v7327, %v7593
  %v7595 = vpop.f32.mrf.mxu0
  %v7596 = vpop.f32.mrf.mxu0
  %v7597 = vadd.f32 %v7327, %v7596
  %v7598 = vpop.f32.mrf.mxu0
  %7599 = vmatprep.mubr.bf16.mxu0 0
  %7600 = vmatmul.mubr.bf16.gmra.mxu0 %v7399
  %v7601 = vpop.f32.mrf.mxu0
  %v7602 = vadd.f32 %v7327, %v7601
  %v7603 = vpop.f32.mrf.mxu0
  %v7604 = vpop.f32.mrf.mxu0
  %v7605 = vadd.f32 %v7327, %v7604
  %v7606 = vpop.f32.mrf.mxu0
  %7607 = vmatprep.mubr.bf16.mxu0 0
  %7608 = vmatmul.mubr.bf16.gmra.mxu0 %v7402
  %v7609 = vpop.f32.mrf.mxu0
  %v7610 = vadd.f32 %v7327, %v7609
  %v7611 = vpop.f32.mrf.mxu0
  %v7612 = vpop.f32.mrf.mxu0
  %v7613 = vadd.f32 %v7327, %v7612
  %v7614 = vpop.f32.mrf.mxu0
  %7615 = vmatprep.mubr.bf16.mxu0 0
  %7616 = vmatmul.mubr.bf16.gmra.mxu0 %v7405
  %v7617 = vpop.f32.mrf.mxu0
  %v7618 = vadd.f32 %v7327, %v7617
  %v7619 = vpop.f32.mrf.mxu0
  %v7620 = vpop.f32.mrf.mxu0
  %v7621 = vadd.f32 %v7327, %v7620
  %v7622 = vpop.f32.mrf.mxu0
  %7623 = vmatprep.mubr.bf16.mxu0 0
  %7624 = vmatmul.mubr.bf16.gmra.mxu0 %v7408
  %v7625 = vpop.f32.mrf.mxu0
  %v7626 = vadd.f32 %v7327, %v7625
  %v7627 = vpop.f32.mrf.mxu0
  %v7628 = vpop.f32.mrf.mxu0
  %v7629 = vadd.f32 %v7327, %v7628
  %v7630 = vpop.f32.mrf.mxu0
  %7631 = vmatprep.mubr.bf16.mxu0 0
  %7632 = vmatmul.mubr.bf16.gmra.mxu0 %v7411
  %v7633 = vpop.f32.mrf.mxu0
  %v7634 = vadd.f32 %v7327, %v7633
  %v7635 = vpop.f32.mrf.mxu0
  %v7636 = vpop.f32.mrf.mxu0
  %v7637 = vadd.f32 %v7327, %v7636
  %v7638 = vpop.f32.mrf.mxu0
  %7639 = vmatprep.mubr.bf16.mxu0 0
  %7640 = vmatmul.mubr.bf16.gmra.mxu0 %v7414
  %v7641 = vpop.f32.mrf.mxu0
  %v7642 = vadd.f32 %v7327, %v7641
  %v7643 = vpop.f32.mrf.mxu0
  %v7644 = vpop.f32.mrf.mxu0
  %v7645 = vadd.f32 %v7327, %v7644
  %v7646 = vpop.f32.mrf.mxu0
  %7647 = vmatprep.mubr.bf16.mxu0 0
  %7648 = vmatmul.mubr.bf16.gmra.mxu0 %v7417
  %v7649 = vpop.f32.mrf.mxu0
  %v7650 = vadd.f32 %v7327, %v7649
  %v7651 = vpop.f32.mrf.mxu0
  %v7652 = vpop.f32.mrf.mxu0
  %v7653 = vadd.f32 %v7327, %v7652
  %v7654 = vpop.f32.mrf.mxu0
  %7655 = vmatprep.mubr.bf16.mxu0 0
  %7656 = vmatmul.mubr.bf16.gmra.mxu0 %v7420
  %v7657 = vpop.f32.mrf.mxu0
  %v7658 = vadd.f32 %v7327, %v7657
  %v7659 = vpop.f32.mrf.mxu0
  %v7660 = vpop.f32.mrf.mxu0
  %v7661 = vadd.f32 %v7327, %v7660
  %v7662 = vpop.f32.mrf.mxu0
  %7663 = vmatprep.mubr.bf16.mxu0 0
  %7664 = vmatmul.mubr.bf16.gmra.mxu0 %v7423
  %v7665 = vpop.f32.mrf.mxu0
  %v7666 = vadd.f32 %v7327, %v7665
  %v7667 = vpop.f32.mrf.mxu0
  %v7668 = vpop.f32.mrf.mxu0
  %v7669 = vadd.f32 %v7327, %v7668
  %v7670 = vpop.f32.mrf.mxu0
  %7671 = vmatprep.mubr.bf16.mxu0 0
  %7672 = vmatmul.mubr.bf16.gmra.mxu0 %v7426
  %v7673 = vpop.f32.mrf.mxu0
  %v7674 = vadd.f32 %v7327, %v7673
  %v7675 = vpop.f32.mrf.mxu0
  %v7676 = vpop.f32.mrf.mxu0
  %v7677 = vadd.f32 %v7327, %v7676
  %v7678 = vpop.f32.mrf.mxu0
  %7679 = vmatprep.mubr.bf16.mxu0 0
  %7680 = vmatmul.mubr.bf16.gmra.mxu0 %v7429
  %v7681 = vpop.f32.mrf.mxu0
  %v7682 = vadd.f32 %v7327, %v7681
  %v7683 = vpop.f32.mrf.mxu0
  %v7684 = vpop.f32.mrf.mxu0
  %v7685 = vadd.f32 %v7327, %v7684
  %v7686 = vpop.f32.mrf.mxu0
  %7687 = vmatprep.mubr.bf16.mxu0 0
  %7688 = vmatmul.mubr.bf16.gmra.mxu0 %v7432
  %v7689 = vpop.f32.mrf.mxu0
  %v7690 = vadd.f32 %v7327, %v7689
  %v7691 = vpop.f32.mrf.mxu0
  %v7692 = vpop.f32.mrf.mxu0
  %v7693 = vadd.f32 %v7327, %v7692
  %v7694 = vpop.f32.mrf.mxu0
  %7695 = vmatprep.mubr.bf16.mxu0 0
  %7696 = vmatmul.mubr.bf16.gmra.mxu0 %v7435
  %v7697 = vpop.f32.mrf.mxu0
  %v7698 = vadd.f32 %v7327, %v7697
  %v7699 = vpop.f32.mrf.mxu0
  %v7700 = vpop.f32.mrf.mxu0
  %v7701 = vadd.f32 %v7327, %v7700
  %v7702 = vpop.f32.mrf.mxu0
  %7703 = vmatprep.mubr.bf16.mxu0 0
  %7704 = vmatmul.mubr.bf16.gmra.mxu0 %v7438
  %v7705 = vpop.f32.mrf.mxu0
  %v7706 = vadd.f32 %v7327, %v7705
  %v7707 = vpop.f32.mrf.mxu0
  %v7708 = vpop.f32.mrf.mxu0
  %v7709 = vadd.f32 %v7327, %v7708
  %v7710 = vpop.f32.mrf.mxu0
  %7711 = vmatprep.mubr.bf16.mxu0 0
  %7712 = vmatmul.mubr.bf16.gmra.mxu0 %v7441
  %v7713 = vpop.f32.mrf.mxu0
  %v7714 = vadd.f32 %v7327, %v7713
  %v7715 = vpop.f32.mrf.mxu0
  %v7716 = vpop.f32.mrf.mxu0
  %v7717 = vadd.f32 %v7327, %v7716
  %v7718 = vpop.f32.mrf.mxu0
  %7719 = vmatprep.mubr.bf16.mxu0 0
  %7720 = vmatmul.mubr.bf16.gmra.mxu0 %v7444
  %v7721 = vpop.f32.mrf.mxu0
  %v7722 = vadd.f32 %v7327, %v7721
  %v7723 = vpop.f32.mrf.mxu0
  %v7724 = vpop.f32.mrf.mxu0
  %v7725 = vadd.f32 %v7327, %v7724
  %v7726 = vpop.f32.mrf.mxu0
  %7727 = vmatprep.mubr.bf16.mxu0 0
  %7728 = vmatmul.mubr.bf16.gmra.mxu0 %v7447
  %v7729 = vpop.f32.mrf.mxu0
  %v7730 = vadd.f32 %v7327, %v7729
  %v7731 = vpop.f32.mrf.mxu0
  %v7732 = vpop.f32.mrf.mxu0
  %v7733 = vadd.f32 %v7327, %v7732
  %v7734 = vpop.f32.mrf.mxu0
  %7735 = vmatprep.mubr.bf16.mxu0 0
  %7736 = vmatmul.mubr.bf16.gmra.mxu0 %v7450
  %v7737 = vpop.f32.mrf.mxu0
  %v7738 = vadd.f32 %v7327, %v7737
  %v7739 = vpop.f32.mrf.mxu0
  %v7740 = vpop.f32.mrf.mxu0
  %v7741 = vadd.f32 %v7327, %v7740
  %v7742 = vpop.f32.mrf.mxu0
  %7743 = vdwg.mxu0
  %v7744 = vsel %vm2899, %v7490, 0.0
  %v7745 = vsel %vm2899, %v7493, 0.0
  %v7746 = vadd.f32 %v7744, %v7745
  %v7747 = vsel %vm2899, %v7498, 0.0
  %v7748 = vadd.f32 %v7746, %v7747
  %v7749 = vsel %vm2899, %v7501, 0.0
  %v7750 = vadd.f32 %v7748, %v7749
  %v7751 = vsel %vm2899, %v7506, 0.0
  %v7752 = vadd.f32 %v7750, %v7751
  %v7753 = vsel %vm2899, %v7509, 0.0
  %v7754 = vadd.f32 %v7752, %v7753
  %v7755 = vsel %vm2899, %v7514, 0.0
  %v7756 = vadd.f32 %v7754, %v7755
  %v7757 = vsel %vm2899, %v7517, 0.0
  %v7758 = vadd.f32 %v7756, %v7757
  %v7759 = vsel %vm2899, %v7522, 0.0
  %v7760 = vadd.f32 %v7758, %v7759
  %v7761 = vsel %vm2899, %v7525, 0.0
  %v7762 = vadd.f32 %v7760, %v7761
  %v7763 = vsel %vm2899, %v7530, 0.0
  %v7764 = vadd.f32 %v7762, %v7763
  %v7765 = vsel %vm2899, %v7533, 0.0
  %v7766 = vadd.f32 %v7764, %v7765
  %v7767 = vsel %vm2899, %v7538, 0.0
  %v7768 = vadd.f32 %v7766, %v7767
  %v7769 = vsel %vm2899, %v7541, 0.0
  %v7770 = vadd.f32 %v7768, %v7769
  %v7771 = vsel %vm2899, %v7546, 0.0
  %v7772 = vadd.f32 %v7770, %v7771
  %v7773 = vsel %vm2899, %v7549, 0.0
  %v7774 = vadd.f32 %v7772, %v7773
  %v7775 = vsel %vm2899, %v7554, 0.0
  %v7776 = vadd.f32 %v7774, %v7775
  %v7777 = vsel %vm2899, %v7557, 0.0
  %v7778 = vadd.f32 %v7776, %v7777
  %v7779 = vsel %vm2899, %v7562, 0.0
  %v7780 = vadd.f32 %v7778, %v7779
  %v7781 = vsel %vm2899, %v7565, 0.0
  %v7782 = vadd.f32 %v7780, %v7781
  %v7783 = vsel %vm2899, %v7570, 0.0
  %v7784 = vadd.f32 %v7782, %v7783
  %v7785 = vsel %vm2899, %v7573, 0.0
  %v7786 = vadd.f32 %v7784, %v7785
  %v7787 = vsel %vm2899, %v7578, 0.0
  %v7788 = vadd.f32 %v7786, %v7787
  %v7789 = vsel %vm2899, %v7581, 0.0
  %v7790 = vadd.f32 %v7788, %v7789
  %v7791 = vsel %vm2899, %v7586, 0.0
  %v7792 = vadd.f32 %v7790, %v7791
  %v7793 = vsel %vm2899, %v7589, 0.0
  %v7794 = vadd.f32 %v7792, %v7793
  %v7795 = vsel %vm2899, %v7594, 0.0
  %v7796 = vadd.f32 %v7794, %v7795
  %v7797 = vsel %vm2899, %v7597, 0.0
  %v7798 = vadd.f32 %v7796, %v7797
  %v7799 = vsel %vm2899, %v7602, 0.0
  %v7800 = vadd.f32 %v7798, %v7799
  %v7801 = vsel %vm2899, %v7605, 0.0
  %v7802 = vadd.f32 %v7800, %v7801
  %v7803 = vsel %vm2899, %v7610, 0.0
  %v7804 = vadd.f32 %v7802, %v7803
  %v7805 = vsel %vm2899, %v7613, 0.0
  %v7806 = vadd.f32 %v7804, %v7805
  %v7807 = vsel %vm2899, %v7618, 0.0
  %v7808 = vadd.f32 %v7806, %v7807
  %v7809 = vsel %vm2899, %v7621, 0.0
  %v7810 = vadd.f32 %v7808, %v7809
  %v7811 = vsel %vm2899, %v7626, 0.0
  %v7812 = vadd.f32 %v7810, %v7811
  %v7813 = vsel %vm2899, %v7629, 0.0
  %v7814 = vadd.f32 %v7812, %v7813
  %v7815 = vsel %vm2899, %v7634, 0.0
  %v7816 = vadd.f32 %v7814, %v7815
  %v7817 = vsel %vm2899, %v7637, 0.0
  %v7818 = vadd.f32 %v7816, %v7817
  %v7819 = vsel %vm2899, %v7642, 0.0
  %v7820 = vadd.f32 %v7818, %v7819
  %v7821 = vsel %vm2899, %v7645, 0.0
  %v7822 = vadd.f32 %v7820, %v7821
  %v7823 = vsel %vm2899, %v7650, 0.0
  %v7824 = vadd.f32 %v7822, %v7823
  %v7825 = vsel %vm2899, %v7653, 0.0
  %v7826 = vadd.f32 %v7824, %v7825
  %v7827 = vsel %vm2899, %v7658, 0.0
  %v7828 = vadd.f32 %v7826, %v7827
  %v7829 = vsel %vm2899, %v7661, 0.0
  %v7830 = vadd.f32 %v7828, %v7829
  %v7831 = vsel %vm2899, %v7666, 0.0
  %v7832 = vadd.f32 %v7830, %v7831
  %v7833 = vsel %vm2899, %v7669, 0.0
  %v7834 = vadd.f32 %v7832, %v7833
  %v7835 = vsel %vm2899, %v7674, 0.0
  %v7836 = vadd.f32 %v7834, %v7835
  %v7837 = vsel %vm2899, %v7677, 0.0
  %v7838 = vadd.f32 %v7836, %v7837
  %v7839 = vsel %vm2899, %v7682, 0.0
  %v7840 = vadd.f32 %v7838, %v7839
  %v7841 = vsel %vm2899, %v7685, 0.0
  %v7842 = vadd.f32 %v7840, %v7841
  %v7843 = vsel %vm2899, %v7690, 0.0
  %v7844 = vadd.f32 %v7842, %v7843
  %v7845 = vsel %vm2899, %v7693, 0.0
  %v7846 = vadd.f32 %v7844, %v7845
  %v7847 = vsel %vm2899, %v7698, 0.0
  %v7848 = vadd.f32 %v7846, %v7847
  %v7849 = vsel %vm2899, %v7701, 0.0
  %v7850 = vadd.f32 %v7848, %v7849
  %v7851 = vsel %vm2899, %v7706, 0.0
  %v7852 = vadd.f32 %v7850, %v7851
  %v7853 = vsel %vm2899, %v7709, 0.0
  %v7854 = vadd.f32 %v7852, %v7853
  %v7855 = vsel %vm2899, %v7714, 0.0
  %v7856 = vadd.f32 %v7854, %v7855
  %v7857 = vsel %vm2899, %v7717, 0.0
  %v7858 = vadd.f32 %v7856, %v7857
  %v7859 = vsel %vm2899, %v7722, 0.0
  %v7860 = vadd.f32 %v7858, %v7859
  %v7861 = vsel %vm2899, %v7725, 0.0
  %v7862 = vadd.f32 %v7860, %v7861
  %v7863 = vsel %vm2899, %v7730, 0.0
  %v7864 = vadd.f32 %v7862, %v7863
  %v7865 = vsel %vm2899, %v7733, 0.0
  %v7866 = vadd.f32 %v7864, %v7865
  %v7867 = vsel %vm2899, %v7738, 0.0
  %v7868 = vadd.f32 %v7866, %v7867
  %v7869 = vsel %vm2899, %v7741, 0.0
  %v7870 = vadd.f32 %v7868, %v7869
  %v7871 = vrot.slane %v7870, 4
  %v7872 = vadd.f32 %v7870, %v7871
  %v7873 = vrot.slane %v7872, 2
  %v7874 = vadd.f32 %v7872, %v7873
  %v7875 = vrot.slane %v7874, 1
  %v7876 = vadd.f32 %v7874, %v7875
  %v7877 = vmul.f32 %v7876, 0.001953125
  %v7878 = vsub.f32 %v7490, %v7877
  %v7879 = vsub.f32 %v7493, %v7877
  %v7880 = vsub.f32 %v7498, %v7877
  %v7881 = vsub.f32 %v7501, %v7877
  %v7882 = vsub.f32 %v7506, %v7877
  %v7883 = vsub.f32 %v7509, %v7877
  %v7884 = vsub.f32 %v7514, %v7877
  %v7885 = vsub.f32 %v7517, %v7877
  %v7886 = vsub.f32 %v7522, %v7877
  %v7887 = vsub.f32 %v7525, %v7877
  %v7888 = vsub.f32 %v7530, %v7877
  %v7889 = vsub.f32 %v7533, %v7877
  %v7890 = vsub.f32 %v7538, %v7877
  %v7891 = vsub.f32 %v7541, %v7877
  %v7892 = vsub.f32 %v7546, %v7877
  %v7893 = vsub.f32 %v7549, %v7877
  %v7894 = vsub.f32 %v7554, %v7877
  %v7895 = vsub.f32 %v7557, %v7877
  %v7896 = vsub.f32 %v7562, %v7877
  %v7897 = vsub.f32 %v7565, %v7877
  %v7898 = vsub.f32 %v7570, %v7877
  %v7899 = vsub.f32 %v7573, %v7877
  %v7900 = vsub.f32 %v7578, %v7877
  %v7901 = vsub.f32 %v7581, %v7877
  %v7902 = vsub.f32 %v7586, %v7877
  %v7903 = vsub.f32 %v7589, %v7877
  %v7904 = vsub.f32 %v7594, %v7877
  %v7905 = vsub.f32 %v7597, %v7877
  %v7906 = vsub.f32 %v7602, %v7877
  %v7907 = vsub.f32 %v7605, %v7877
  %v7908 = vsub.f32 %v7610, %v7877
  %v7909 = vsub.f32 %v7613, %v7877
  %v7910 = vsub.f32 %v7618, %v7877
  %v7911 = vsub.f32 %v7621, %v7877
  %v7912 = vsub.f32 %v7626, %v7877
  %v7913 = vsub.f32 %v7629, %v7877
  %v7914 = vsub.f32 %v7634, %v7877
  %v7915 = vsub.f32 %v7637, %v7877
  %v7916 = vsub.f32 %v7642, %v7877
  %v7917 = vsub.f32 %v7645, %v7877
  %v7918 = vsub.f32 %v7650, %v7877
  %v7919 = vsub.f32 %v7653, %v7877
  %v7920 = vsub.f32 %v7658, %v7877
  %v7921 = vsub.f32 %v7661, %v7877
  %v7922 = vsub.f32 %v7666, %v7877
  %v7923 = vsub.f32 %v7669, %v7877
  %v7924 = vsub.f32 %v7674, %v7877
  %v7925 = vsub.f32 %v7677, %v7877
  %v7926 = vsub.f32 %v7682, %v7877
  %v7927 = vsub.f32 %v7685, %v7877
  %v7928 = vsub.f32 %v7690, %v7877
  %v7929 = vsub.f32 %v7693, %v7877
  %v7930 = vsub.f32 %v7698, %v7877
  %v7931 = vsub.f32 %v7701, %v7877
  %v7932 = vsub.f32 %v7706, %v7877
  %v7933 = vsub.f32 %v7709, %v7877
  %v7934 = vsub.f32 %v7714, %v7877
  %v7935 = vsub.f32 %v7717, %v7877
  %v7936 = vsub.f32 %v7722, %v7877
  %v7937 = vsub.f32 %v7725, %v7877
  %v7938 = vsub.f32 %v7730, %v7877
  %v7939 = vsub.f32 %v7733, %v7877
  %v7940 = vsub.f32 %v7738, %v7877
  %v7941 = vsub.f32 %v7741, %v7877
  %v7942 = vmul.f32 %v7878, %v7878
  %v7943 = vmul.f32 %v7879, %v7879
  %v7944 = vmul.f32 %v7880, %v7880
  %v7945 = vmul.f32 %v7881, %v7881
  %v7946 = vmul.f32 %v7882, %v7882
  %v7947 = vmul.f32 %v7883, %v7883
  %v7948 = vmul.f32 %v7884, %v7884
  %v7949 = vmul.f32 %v7885, %v7885
  %v7950 = vmul.f32 %v7886, %v7886
  %v7951 = vmul.f32 %v7887, %v7887
  %v7952 = vmul.f32 %v7888, %v7888
  %v7953 = vmul.f32 %v7889, %v7889
  %v7954 = vmul.f32 %v7890, %v7890
  %v7955 = vmul.f32 %v7891, %v7891
  %v7956 = vmul.f32 %v7892, %v7892
  %v7957 = vmul.f32 %v7893, %v7893
  %v7958 = vmul.f32 %v7894, %v7894
  %v7959 = vmul.f32 %v7895, %v7895
  %v7960 = vmul.f32 %v7896, %v7896
  %v7961 = vmul.f32 %v7897, %v7897
  %v7962 = vmul.f32 %v7898, %v7898
  %v7963 = vmul.f32 %v7899, %v7899
  %v7964 = vmul.f32 %v7900, %v7900
  %v7965 = vmul.f32 %v7901, %v7901
  %v7966 = vmul.f32 %v7902, %v7902
  %v7967 = vmul.f32 %v7903, %v7903
  %v7968 = vmul.f32 %v7904, %v7904
  %v7969 = vmul.f32 %v7905, %v7905
  %v7970 = vmul.f32 %v7906, %v7906
  %v7971 = vmul.f32 %v7907, %v7907
  %v7972 = vmul.f32 %v7908, %v7908
  %v7973 = vmul.f32 %v7909, %v7909
  %v7974 = vmul.f32 %v7910, %v7910
  %v7975 = vmul.f32 %v7911, %v7911
  %v7976 = vmul.f32 %v7912, %v7912
  %v7977 = vmul.f32 %v7913, %v7913
  %v7978 = vmul.f32 %v7914, %v7914
  %v7979 = vmul.f32 %v7915, %v7915
  %v7980 = vmul.f32 %v7916, %v7916
  %v7981 = vmul.f32 %v7917, %v7917
  %v7982 = vmul.f32 %v7918, %v7918
  %v7983 = vmul.f32 %v7919, %v7919
  %v7984 = vmul.f32 %v7920, %v7920
  %v7985 = vmul.f32 %v7921, %v7921
  %v7986 = vmul.f32 %v7922, %v7922
  %v7987 = vmul.f32 %v7923, %v7923
  %v7988 = vmul.f32 %v7924, %v7924
  %v7989 = vmul.f32 %v7925, %v7925
  %v7990 = vmul.f32 %v7926, %v7926
  %v7991 = vmul.f32 %v7927, %v7927
  %v7992 = vmul.f32 %v7928, %v7928
  %v7993 = vmul.f32 %v7929, %v7929
  %v7994 = vmul.f32 %v7930, %v7930
  %v7995 = vmul.f32 %v7931, %v7931
  %v7996 = vmul.f32 %v7932, %v7932
  %v7997 = vmul.f32 %v7933, %v7933
  %v7998 = vmul.f32 %v7934, %v7934
  %v7999 = vmul.f32 %v7935, %v7935
  %v8000 = vmul.f32 %v7936, %v7936
  %v8001 = vmul.f32 %v7937, %v7937
  %v8002 = vmul.f32 %v7938, %v7938
  %v8003 = vmul.f32 %v7939, %v7939
  %v8004 = vmul.f32 %v7940, %v7940
  %v8005 = vmul.f32 %v7941, %v7941
  %v8006 = vsel %vm2899, %v7942, 0.0
  %v8007 = vsel %vm2899, %v7943, 0.0
  %v8008 = vadd.f32 %v8006, %v8007
  %v8009 = vsel %vm2899, %v7944, 0.0
  %v8010 = vadd.f32 %v8008, %v8009
  %v8011 = vsel %vm2899, %v7945, 0.0
  %v8012 = vadd.f32 %v8010, %v8011
  %v8013 = vsel %vm2899, %v7946, 0.0
  %v8014 = vadd.f32 %v8012, %v8013
  %v8015 = vsel %vm2899, %v7947, 0.0
  %v8016 = vadd.f32 %v8014, %v8015
  %v8017 = vsel %vm2899, %v7948, 0.0
  %v8018 = vadd.f32 %v8016, %v8017
  %v8019 = vsel %vm2899, %v7949, 0.0
  %v8020 = vadd.f32 %v8018, %v8019
  %v8021 = vsel %vm2899, %v7950, 0.0
  %v8022 = vadd.f32 %v8020, %v8021
  %v8023 = vsel %vm2899, %v7951, 0.0
  %v8024 = vadd.f32 %v8022, %v8023
  %v8025 = vsel %vm2899, %v7952, 0.0
  %v8026 = vadd.f32 %v8024, %v8025
  %v8027 = vsel %vm2899, %v7953, 0.0
  %v8028 = vadd.f32 %v8026, %v8027
  %v8029 = vsel %vm2899, %v7954, 0.0
  %v8030 = vadd.f32 %v8028, %v8029
  %v8031 = vsel %vm2899, %v7955, 0.0
  %v8032 = vadd.f32 %v8030, %v8031
  %v8033 = vsel %vm2899, %v7956, 0.0
  %v8034 = vadd.f32 %v8032, %v8033
  %v8035 = vsel %vm2899, %v7957, 0.0
  %v8036 = vadd.f32 %v8034, %v8035
  %v8037 = vsel %vm2899, %v7958, 0.0
  %v8038 = vadd.f32 %v8036, %v8037
  %v8039 = vsel %vm2899, %v7959, 0.0
  %v8040 = vadd.f32 %v8038, %v8039
  %v8041 = vsel %vm2899, %v7960, 0.0
  %v8042 = vadd.f32 %v8040, %v8041
  %v8043 = vsel %vm2899, %v7961, 0.0
  %v8044 = vadd.f32 %v8042, %v8043
  %v8045 = vsel %vm2899, %v7962, 0.0
  %v8046 = vadd.f32 %v8044, %v8045
  %v8047 = vsel %vm2899, %v7963, 0.0
  %v8048 = vadd.f32 %v8046, %v8047
  %v8049 = vsel %vm2899, %v7964, 0.0
  %v8050 = vadd.f32 %v8048, %v8049
  %v8051 = vsel %vm2899, %v7965, 0.0
  %v8052 = vadd.f32 %v8050, %v8051
  %v8053 = vsel %vm2899, %v7966, 0.0
  %v8054 = vadd.f32 %v8052, %v8053
  %v8055 = vsel %vm2899, %v7967, 0.0
  %v8056 = vadd.f32 %v8054, %v8055
  %v8057 = vsel %vm2899, %v7968, 0.0
  %v8058 = vadd.f32 %v8056, %v8057
  %v8059 = vsel %vm2899, %v7969, 0.0
  %v8060 = vadd.f32 %v8058, %v8059
  %v8061 = vsel %vm2899, %v7970, 0.0
  %v8062 = vadd.f32 %v8060, %v8061
  %v8063 = vsel %vm2899, %v7971, 0.0
  %v8064 = vadd.f32 %v8062, %v8063
  %v8065 = vsel %vm2899, %v7972, 0.0
  %v8066 = vadd.f32 %v8064, %v8065
  %v8067 = vsel %vm2899, %v7973, 0.0
  %v8068 = vadd.f32 %v8066, %v8067
  %v8069 = vsel %vm2899, %v7974, 0.0
  %v8070 = vadd.f32 %v8068, %v8069
  %v8071 = vsel %vm2899, %v7975, 0.0
  %v8072 = vadd.f32 %v8070, %v8071
  %v8073 = vsel %vm2899, %v7976, 0.0
  %v8074 = vadd.f32 %v8072, %v8073
  %v8075 = vsel %vm2899, %v7977, 0.0
  %v8076 = vadd.f32 %v8074, %v8075
  %v8077 = vsel %vm2899, %v7978, 0.0
  %v8078 = vadd.f32 %v8076, %v8077
  %v8079 = vsel %vm2899, %v7979, 0.0
  %v8080 = vadd.f32 %v8078, %v8079
  %v8081 = vsel %vm2899, %v7980, 0.0
  %v8082 = vadd.f32 %v8080, %v8081
  %v8083 = vsel %vm2899, %v7981, 0.0
  %v8084 = vadd.f32 %v8082, %v8083
  %v8085 = vsel %vm2899, %v7982, 0.0
  %v8086 = vadd.f32 %v8084, %v8085
  %v8087 = vsel %vm2899, %v7983, 0.0
  %v8088 = vadd.f32 %v8086, %v8087
  %v8089 = vsel %vm2899, %v7984, 0.0
  %v8090 = vadd.f32 %v8088, %v8089
  %v8091 = vsel %vm2899, %v7985, 0.0
  %v8092 = vadd.f32 %v8090, %v8091
  %v8093 = vsel %vm2899, %v7986, 0.0
  %v8094 = vadd.f32 %v8092, %v8093
  %v8095 = vsel %vm2899, %v7987, 0.0
  %v8096 = vadd.f32 %v8094, %v8095
  %v8097 = vsel %vm2899, %v7988, 0.0
  %v8098 = vadd.f32 %v8096, %v8097
  %v8099 = vsel %vm2899, %v7989, 0.0
  %v8100 = vadd.f32 %v8098, %v8099
  %v8101 = vsel %vm2899, %v7990, 0.0
  %v8102 = vadd.f32 %v8100, %v8101
  %v8103 = vsel %vm2899, %v7991, 0.0
  %v8104 = vadd.f32 %v8102, %v8103
  %v8105 = vsel %vm2899, %v7992, 0.0
  %v8106 = vadd.f32 %v8104, %v8105
  %v8107 = vsel %vm2899, %v7993, 0.0
  %v8108 = vadd.f32 %v8106, %v8107
  %v8109 = vsel %vm2899, %v7994, 0.0
  %v8110 = vadd.f32 %v8108, %v8109
  %v8111 = vsel %vm2899, %v7995, 0.0
  %v8112 = vadd.f32 %v8110, %v8111
  %v8113 = vsel %vm2899, %v7996, 0.0
  %v8114 = vadd.f32 %v8112, %v8113
  %v8115 = vsel %vm2899, %v7997, 0.0
  %v8116 = vadd.f32 %v8114, %v8115
  %v8117 = vsel %vm2899, %v7998, 0.0
  %v8118 = vadd.f32 %v8116, %v8117
  %v8119 = vsel %vm2899, %v7999, 0.0
  %v8120 = vadd.f32 %v8118, %v8119
  %v8121 = vsel %vm2899, %v8000, 0.0
  %v8122 = vadd.f32 %v8120, %v8121
  %v8123 = vsel %vm2899, %v8001, 0.0
  %v8124 = vadd.f32 %v8122, %v8123
  %v8125 = vsel %vm2899, %v8002, 0.0
  %v8126 = vadd.f32 %v8124, %v8125
  %v8127 = vsel %vm2899, %v8003, 0.0
  %v8128 = vadd.f32 %v8126, %v8127
  %v8129 = vsel %vm2899, %v8004, 0.0
  %v8130 = vadd.f32 %v8128, %v8129
  %v8131 = vsel %vm2899, %v8005, 0.0
  %v8132 = vadd.f32 %v8130, %v8131
  %v8133 = vrot.slane %v8132, 4
  %v8134 = vadd.f32 %v8132, %v8133
  %v8135 = vrot.slane %v8134, 2
  %v8136 = vadd.f32 %v8134, %v8135
  %v8137 = vrot.slane %v8136, 1
  %v8138 = vadd.f32 %v8136, %v8137
  %v8139 = vmul.f32 %v8138, 0.001953125
  %v8140 = vadd.f32 %v8139, 1e-05
  %v8141 = vrsqrt.pop %v8140
  %v8142 = vld [vmem:[%s8] sm:$0x1]
  %v8143 = vmul.f32 %v8141, %v8142
  %v8144 = vlaneseq
  %v8145 = vshrl.u32 %v8144, 7
  %v8146 = vsub.s32 0, %v8145
  %v8147 = vrot.slane %v8143, %v8146
  %v8148 = vmul.f32 %v7878, %v8147
  %v8149 = vmul.f32 %v7879, %v8147
  %v8150 = vmul.f32 %v7880, %v8147
  %v8151 = vmul.f32 %v7881, %v8147
  %v8152 = vmul.f32 %v7882, %v8147
  %v8153 = vmul.f32 %v7883, %v8147
  %v8154 = vmul.f32 %v7884, %v8147
  %v8155 = vmul.f32 %v7885, %v8147
  %v8156 = vmul.f32 %v7886, %v8147
  %v8157 = vmul.f32 %v7887, %v8147
  %v8158 = vmul.f32 %v7888, %v8147
  %v8159 = vmul.f32 %v7889, %v8147
  %v8160 = vmul.f32 %v7890, %v8147
  %v8161 = vmul.f32 %v7891, %v8147
  %v8162 = vmul.f32 %v7892, %v8147
  %v8163 = vmul.f32 %v7893, %v8147
  %v8164 = vmul.f32 %v7894, %v8147
  %v8165 = vmul.f32 %v7895, %v8147
  %v8166 = vmul.f32 %v7896, %v8147
  %v8167 = vmul.f32 %v7897, %v8147
  %v8168 = vmul.f32 %v7898, %v8147
  %v8169 = vmul.f32 %v7899, %v8147
  %v8170 = vmul.f32 %v7900, %v8147
  %v8171 = vmul.f32 %v7901, %v8147
  %v8172 = vmul.f32 %v7902, %v8147
  %v8173 = vmul.f32 %v7903, %v8147
  %v8174 = vmul.f32 %v7904, %v8147
  %v8175 = vmul.f32 %v7905, %v8147
  %v8176 = vmul.f32 %v7906, %v8147
  %v8177 = vmul.f32 %v7907, %v8147
  %v8178 = vmul.f32 %v7908, %v8147
  %v8179 = vmul.f32 %v7909, %v8147
  %v8180 = vmul.f32 %v7910, %v8147
  %v8181 = vmul.f32 %v7911, %v8147
  %v8182 = vmul.f32 %v7912, %v8147
  %v8183 = vmul.f32 %v7913, %v8147
  %v8184 = vmul.f32 %v7914, %v8147
  %v8185 = vmul.f32 %v7915, %v8147
  %v8186 = vmul.f32 %v7916, %v8147
  %v8187 = vmul.f32 %v7917, %v8147
  %v8188 = vmul.f32 %v7918, %v8147
  %v8189 = vmul.f32 %v7919, %v8147
  %v8190 = vmul.f32 %v7920, %v8147
  %v8191 = vmul.f32 %v7921, %v8147
  %v8192 = vmul.f32 %v7922, %v8147
  %v8193 = vmul.f32 %v7923, %v8147
  %v8194 = vmul.f32 %v7924, %v8147
  %v8195 = vmul.f32 %v7925, %v8147
  %v8196 = vmul.f32 %v7926, %v8147
  %v8197 = vmul.f32 %v7927, %v8147
  %v8198 = vmul.f32 %v7928, %v8147
  %v8199 = vmul.f32 %v7929, %v8147
  %v8200 = vmul.f32 %v7930, %v8147
  %v8201 = vmul.f32 %v7931, %v8147
  %v8202 = vmul.f32 %v7932, %v8147
  %v8203 = vmul.f32 %v7933, %v8147
  %v8204 = vmul.f32 %v7934, %v8147
  %v8205 = vmul.f32 %v7935, %v8147
  %v8206 = vmul.f32 %v7936, %v8147
  %v8207 = vmul.f32 %v7937, %v8147
  %v8208 = vmul.f32 %v7938, %v8147
  %v8209 = vmul.f32 %v7939, %v8147
  %v8210 = vmul.f32 %v7940, %v8147
  %v8211 = vmul.f32 %v7941, %v8147
  %v8212 = vld [vmem:[%s9] sm:$0x1]
  %v8214 = vlaneseq
  %v8215 = vshrl.u32 %v8214, 7
  %v8216 = vsub.s32 0, %v8215
  %v8217 = vrot.slane %v8212, %v8216
  %v8219 = vadd.f32 %v8148, %v8217
  %v8220 = vadd.f32 %v8149, %v8217
  %v8221 = vadd.f32 %v8150, %v8217
  %v8222 = vadd.f32 %v8151, %v8217
  %v8223 = vadd.f32 %v8152, %v8217
  %v8224 = vadd.f32 %v8153, %v8217
  %v8225 = vadd.f32 %v8154, %v8217
  %v8226 = vadd.f32 %v8155, %v8217
  %v8227 = vadd.f32 %v8156, %v8217
  %v8228 = vadd.f32 %v8157, %v8217
  %v8229 = vadd.f32 %v8158, %v8217
  %v8230 = vadd.f32 %v8159, %v8217
  %v8231 = vadd.f32 %v8160, %v8217
  %v8232 = vadd.f32 %v8161, %v8217
  %v8233 = vadd.f32 %v8162, %v8217
  %v8234 = vadd.f32 %v8163, %v8217
  %v8235 = vadd.f32 %v8164, %v8217
  %v8236 = vadd.f32 %v8165, %v8217
  %v8237 = vadd.f32 %v8166, %v8217
  %v8238 = vadd.f32 %v8167, %v8217
  %v8239 = vadd.f32 %v8168, %v8217
  %v8240 = vadd.f32 %v8169, %v8217
  %v8241 = vadd.f32 %v8170, %v8217
  %v8242 = vadd.f32 %v8171, %v8217
  %v8243 = vadd.f32 %v8172, %v8217
  %v8244 = vadd.f32 %v8173, %v8217
  %v8245 = vadd.f32 %v8174, %v8217
  %v8246 = vadd.f32 %v8175, %v8217
  %v8247 = vadd.f32 %v8176, %v8217
  %v8248 = vadd.f32 %v8177, %v8217
  %v8249 = vadd.f32 %v8178, %v8217
  %v8250 = vadd.f32 %v8179, %v8217
  %v8251 = vadd.f32 %v8180, %v8217
  %v8252 = vadd.f32 %v8181, %v8217
  %v8253 = vadd.f32 %v8182, %v8217
  %v8254 = vadd.f32 %v8183, %v8217
  %v8255 = vadd.f32 %v8184, %v8217
  %v8256 = vadd.f32 %v8185, %v8217
  %v8257 = vadd.f32 %v8186, %v8217
  %v8258 = vadd.f32 %v8187, %v8217
  %v8259 = vadd.f32 %v8188, %v8217
  %v8260 = vadd.f32 %v8189, %v8217
  %v8261 = vadd.f32 %v8190, %v8217
  %v8262 = vadd.f32 %v8191, %v8217
  %v8263 = vadd.f32 %v8192, %v8217
  %v8264 = vadd.f32 %v8193, %v8217
  %v8265 = vadd.f32 %v8194, %v8217
  %v8266 = vadd.f32 %v8195, %v8217
  %v8267 = vadd.f32 %v8196, %v8217
  %v8268 = vadd.f32 %v8197, %v8217
  %v8269 = vadd.f32 %v8198, %v8217
  %v8270 = vadd.f32 %v8199, %v8217
  %v8271 = vadd.f32 %v8200, %v8217
  %v8272 = vadd.f32 %v8201, %v8217
  %v8273 = vadd.f32 %v8202, %v8217
  %v8274 = vadd.f32 %v8203, %v8217
  %v8275 = vadd.f32 %v8204, %v8217
  %v8276 = vadd.f32 %v8205, %v8217
  %v8277 = vadd.f32 %v8206, %v8217
  %v8278 = vadd.f32 %v8207, %v8217
  %v8279 = vadd.f32 %v8208, %v8217
  %v8280 = vadd.f32 %v8209, %v8217
  %v8281 = vadd.f32 %v8210, %v8217
  %v8282 = vadd.f32 %v8211, %v8217
  %v8283 = vadd.f32 %v269, %v8219
  %v8284 = vadd.f32 %v272, %v8220
  %v8285 = vadd.f32 %v277, %v8221
  %v8286 = vadd.f32 %v280, %v8222
  %v8287 = vadd.f32 %v285, %v8223
  %v8288 = vadd.f32 %v288, %v8224
  %v8289 = vadd.f32 %v293, %v8225
  %v8290 = vadd.f32 %v296, %v8226
  %v8291 = vadd.f32 %v301, %v8227
  %v8292 = vadd.f32 %v304, %v8228
  %v8293 = vadd.f32 %v309, %v8229
  %v8294 = vadd.f32 %v312, %v8230
  %v8295 = vadd.f32 %v317, %v8231
  %v8296 = vadd.f32 %v320, %v8232
  %v8297 = vadd.f32 %v325, %v8233
  %v8298 = vadd.f32 %v328, %v8234
  %v8299 = vadd.f32 %v333, %v8235
  %v8300 = vadd.f32 %v336, %v8236
  %v8301 = vadd.f32 %v341, %v8237
  %v8302 = vadd.f32 %v344, %v8238
  %v8303 = vadd.f32 %v349, %v8239
  %v8304 = vadd.f32 %v352, %v8240
  %v8305 = vadd.f32 %v357, %v8241
  %v8306 = vadd.f32 %v360, %v8242
  %v8307 = vadd.f32 %v365, %v8243
  %v8308 = vadd.f32 %v368, %v8244
  %v8309 = vadd.f32 %v373, %v8245
  %v8310 = vadd.f32 %v376, %v8246
  %v8311 = vadd.f32 %v381, %v8247
  %v8312 = vadd.f32 %v384, %v8248
  %v8313 = vadd.f32 %v389, %v8249
  %v8314 = vadd.f32 %v392, %v8250
  %v8315 = vadd.f32 %v397, %v8251
  %v8316 = vadd.f32 %v400, %v8252
  %v8317 = vadd.f32 %v405, %v8253
  %v8318 = vadd.f32 %v408, %v8254
  %v8319 = vadd.f32 %v413, %v8255
  %v8320 = vadd.f32 %v416, %v8256
  %v8321 = vadd.f32 %v421, %v8257
  %v8322 = vadd.f32 %v424, %v8258
  %v8323 = vadd.f32 %v429, %v8259
  %v8324 = vadd.f32 %v432, %v8260
  %v8325 = vadd.f32 %v437, %v8261
  %v8326 = vadd.f32 %v440, %v8262
  %v8327 = vadd.f32 %v445, %v8263
  %v8328 = vadd.f32 %v448, %v8264
  %v8329 = vadd.f32 %v453, %v8265
  %v8330 = vadd.f32 %v456, %v8266
  %v8331 = vadd.f32 %v461, %v8267
  %v8332 = vadd.f32 %v464, %v8268
  %v8333 = vadd.f32 %v469, %v8269
  %v8334 = vadd.f32 %v472, %v8270
  %v8335 = vadd.f32 %v477, %v8271
  %v8336 = vadd.f32 %v480, %v8272
  %v8337 = vadd.f32 %v485, %v8273
  %v8338 = vadd.f32 %v488, %v8274
  %v8339 = vadd.f32 %v493, %v8275
  %v8340 = vadd.f32 %v496, %v8276
  %v8341 = vadd.f32 %v501, %v8277
  %v8342 = vadd.f32 %v504, %v8278
  %v8343 = vadd.f32 %v509, %v8279
  %v8344 = vadd.f32 %v512, %v8280
  %v8345 = vadd.f32 %v517, %v8281
  %v8346 = vadd.f32 %v520, %v8282
  %8347 = vst.msk [vmem:[%s10] sm:$0xff] %vm2899, %v8283
  %8348 = vst.msk [vmem:[%s10 + $0x8] sm:$0xff] %vm2899, %v8284
  %8349 = vst.msk [vmem:[%s10 + $0x10] sm:$0xff] %vm2899, %v8285
  %8350 = vst.msk [vmem:[%s10 + $0x18] sm:$0xff] %vm2899, %v8286
  %8351 = vst.msk [vmem:[%s10 + $0x20] sm:$0xff] %vm2899, %v8287
  %8352 = vst.msk [vmem:[%s10 + $0x28] sm:$0xff] %vm2899, %v8288
  %8353 = vst.msk [vmem:[%s10 + $0x30] sm:$0xff] %vm2899, %v8289
  %8354 = vst.msk [vmem:[%s10 + $0x38] sm:$0xff] %vm2899, %v8290
  %8355 = vst.msk [vmem:[%s10 + $0x40] sm:$0xff] %vm2899, %v8291
  %8356 = vst.msk [vmem:[%s10 + $0x48] sm:$0xff] %vm2899, %v8292
  %8357 = vst.msk [vmem:[%s10 + $0x50] sm:$0xff] %vm2899, %v8293
  %8358 = vst.msk [vmem:[%s10 + $0x58] sm:$0xff] %vm2899, %v8294
  %8359 = vst.msk [vmem:[%s10 + $0x60] sm:$0xff] %vm2899, %v8295
  %8360 = vst.msk [vmem:[%s10 + $0x68] sm:$0xff] %vm2899, %v8296
  %8361 = vst.msk [vmem:[%s10 + $0x70] sm:$0xff] %vm2899, %v8297
  %8362 = vst.msk [vmem:[%s10 + $0x78] sm:$0xff] %vm2899, %v8298
  %8363 = vst.msk [vmem:[%s10 + $0x80] sm:$0xff] %vm2899, %v8299
  %8364 = vst.msk [vmem:[%s10 + $0x88] sm:$0xff] %vm2899, %v8300
  %8365 = vst.msk [vmem:[%s10 + $0x90] sm:$0xff] %vm2899, %v8301
  %8366 = vst.msk [vmem:[%s10 + $0x98] sm:$0xff] %vm2899, %v8302
  %8367 = vst.msk [vmem:[%s10 + $0xa0] sm:$0xff] %vm2899, %v8303
  %8368 = vst.msk [vmem:[%s10 + $0xa8] sm:$0xff] %vm2899, %v8304
  %8369 = vst.msk [vmem:[%s10 + $0xb0] sm:$0xff] %vm2899, %v8305
  %8370 = vst.msk [vmem:[%s10 + $0xb8] sm:$0xff] %vm2899, %v8306
  %8371 = vst.msk [vmem:[%s10 + $0xc0] sm:$0xff] %vm2899, %v8307
  %8372 = vst.msk [vmem:[%s10 + $0xc8] sm:$0xff] %vm2899, %v8308
  %8373 = vst.msk [vmem:[%s10 + $0xd0] sm:$0xff] %vm2899, %v8309
  %8374 = vst.msk [vmem:[%s10 + $0xd8] sm:$0xff] %vm2899, %v8310
  %8375 = vst.msk [vmem:[%s10 + $0xe0] sm:$0xff] %vm2899, %v8311
  %8376 = vst.msk [vmem:[%s10 + $0xe8] sm:$0xff] %vm2899, %v8312
  %8377 = vst.msk [vmem:[%s10 + $0xf0] sm:$0xff] %vm2899, %v8313
  %8378 = vst.msk [vmem:[%s10 + $0xf8] sm:$0xff] %vm2899, %v8314
  %8379 = vst.msk [vmem:[%s10 + $0x100] sm:$0xff] %vm2899, %v8315
  %8380 = vst.msk [vmem:[%s10 + $0x108] sm:$0xff] %vm2899, %v8316
  %8381 = vst.msk [vmem:[%s10 + $0x110] sm:$0xff] %vm2899, %v8317
  %8382 = vst.msk [vmem:[%s10 + $0x118] sm:$0xff] %vm2899, %v8318
  %8383 = vst.msk [vmem:[%s10 + $0x120] sm:$0xff] %vm2899, %v8319
  %8384 = vst.msk [vmem:[%s10 + $0x128] sm:$0xff] %vm2899, %v8320
  %8385 = vst.msk [vmem:[%s10 + $0x130] sm:$0xff] %vm2899, %v8321
  %8386 = vst.msk [vmem:[%s10 + $0x138] sm:$0xff] %vm2899, %v8322
  %8387 = vst.msk [vmem:[%s10 + $0x140] sm:$0xff] %vm2899, %v8323
  %8388 = vst.msk [vmem:[%s10 + $0x148] sm:$0xff] %vm2899, %v8324
  %8389 = vst.msk [vmem:[%s10 + $0x150] sm:$0xff] %vm2899, %v8325
  %8390 = vst.msk [vmem:[%s10 + $0x158] sm:$0xff] %vm2899, %v8326
  %8391 = vst.msk [vmem:[%s10 + $0x160] sm:$0xff] %vm2899, %v8327
  %8392 = vst.msk [vmem:[%s10 + $0x168] sm:$0xff] %vm2899, %v8328
  %8393 = vst.msk [vmem:[%s10 + $0x170] sm:$0xff] %vm2899, %v8329
  %8394 = vst.msk [vmem:[%s10 + $0x178] sm:$0xff] %vm2899, %v8330
  %8395 = vst.msk [vmem:[%s10 + $0x180] sm:$0xff] %vm2899, %v8331
  %8396 = vst.msk [vmem:[%s10 + $0x188] sm:$0xff] %vm2899, %v8332
  %8397 = vst.msk [vmem:[%s10 + $0x190] sm:$0xff] %vm2899, %v8333
  %8398 = vst.msk [vmem:[%s10 + $0x198] sm:$0xff] %vm2899, %v8334
  %8399 = vst.msk [vmem:[%s10 + $0x1a0] sm:$0xff] %vm2899, %v8335
  %8400 = vst.msk [vmem:[%s10 + $0x1a8] sm:$0xff] %vm2899, %v8336
  %8401 = vst.msk [vmem:[%s10 + $0x1b0] sm:$0xff] %vm2899, %v8337
  %8402 = vst.msk [vmem:[%s10 + $0x1b8] sm:$0xff] %vm2899, %v8338
  %8403 = vst.msk [vmem:[%s10 + $0x1c0] sm:$0xff] %vm2899, %v8339
  %8404 = vst.msk [vmem:[%s10 + $0x1c8] sm:$0xff] %vm2899, %v8340
  %8405 = vst.msk [vmem:[%s10 + $0x1d0] sm:$0xff] %vm2899, %v8341
  %8406 = vst.msk [vmem:[%s10 + $0x1d8] sm:$0xff] %vm2899, %v8342
  %8407 = vst.msk [vmem:[%s10 + $0x1e0] sm:$0xff] %vm2899, %v8343
  %8408 = vst.msk [vmem:[%s10 + $0x1e8] sm:$0xff] %vm2899, %v8344
  %8409 = vst.msk [vmem:[%s10 + $0x1f0] sm:$0xff] %vm2899, %v8345
  %8410 = vst.msk [vmem:[%s10 + $0x1f8] sm:$0xff] %vm2899, %v8346
  // Predicated region
  $region42: #{resnet_block_forward.1} parent=0 // pred_check
    _
  $region43: #{resnet_block_forward.1} parent=0 // pred_check_branch
    %8412 = sbr.rel (0) target = $region45
  $region44: #{resnet_block_forward.1} parent=0 // pred_region
    _
  $region45: #{resnet_block_forward.1} parent=0 // pred_fallthru
    _
  // Predicated region
  $region46: #{resnet_block_forward.1} parent=0 // pred_check
    _
  $region47: #{resnet_block_forward.1} parent=0 // pred_check_branch
    %8414 = sbr.rel (0) target = $region49
  $region48: #{resnet_block_forward.1} parent=0 // pred_region
    _
  $region49: #{resnet_block_forward.1} parent=0 // pred_fallthru
    _

</llo_original>
